<compile_context>
chip_gen: v7x
topology: tpu7x:2x2x1
jax: 0.10.0
libtpu: 0.0.40
codegen_flags: <defaults>
</compile_context>

<pallas_src>
import numpy as np

import jax
import jax.numpy as jnp
from jax.experimental import pallas as pl
from jax.experimental.pallas import tpu as pltpu

# ---------------------------------------------------------------------------
# Fixed LeNet geometry (required by the 16*5*5 flatten in Net.forward).
# ---------------------------------------------------------------------------
H0 = W0 = 32          # input spatial size
C0 = 3                # input channels
KS = 5                # conv kernel size
C1 = 6                # conv1 output channels
P1 = 14               # pool1 output spatial (28 // 2) == conv2 input grid
C2 = 16               # conv2 output channels
P2 = 5                # pool2 output spatial (10 // 2)
F1, F2, F3 = 120, 84, 10
LANES = 128

B = 8                                   # images per grid step (batch tile)
NP1 = P1 * P1                           # 196 pool1 / conv2-grid positions
ROWS = NP1 * B                          # 1568 rows per tile (pos-major, img-minor)
PATCH = (KS + 1) * (KS + 1) * C0        # 108 = 6*6*3 patch under one pool window
TAIL = ((KS - 1) * P1 + (KS - 1)) * B   # 480: overrun of conv2 shifted reads
CH1 = 56                                # conv1 row chunk (mult of 8, divides ROWS)
CH2 = 56                                # conv2 row chunk (mult of 8, divides ROWS)


# ---------------------------------------------------------------------------
# The fused Pallas kernel (one batch tile of B images per grid step).
# ---------------------------------------------------------------------------
def _lenet_kernel(xw_ref, w1_ref, b1_ref, w2_ref, b2_ref,
                  fc1_ref, fb1_ref, fc2_ref, fb2_ref, fc3_ref, fb3_ref,
                  out_ref, pool1_ref, acc2_ref):
    f32 = jnp.float32

    w1 = w1_ref[...]                                   # (128, 128)
    b1 = b1_ref[...]                                   # (1, 128)
    b2 = b2_ref[...]                                   # (1, 128)
    lane = jax.lax.broadcasted_iota(jnp.int32, (1, LANES), 1)
    cmask = (lane < C1).astype(f32)                    # keep conv1 channels only

    # conv2's shifted reads run up to TAIL rows past the valid pool1 region
    # (those contributions only land in acc2 grid positions >= 10 in row or
    # column, which pool2 never reads); zero the tail once so stale VMEM
    # (NaN/Inf) can never leak in.
    pool1_ref[pl.ds(ROWS, TAIL), :] = jnp.zeros((TAIL, LANES), f32)

    # ---- conv1 + maxpool1 + bias + ReLU (fused epilogue, no conv1 scratch).
    # Each xw row holds the whole 6x6x3 patch under one 2x2 pool window, so a
    # single K=108 dot produces the window's 4 conv outputs in four 32-lane
    # groups; max over groups = 3 lane rolls (XLU) + maxes.
    @pl.loop(0, ROWS // CH1)
    def _conv1(i):
        r0 = pl.multiple_of(i * CH1, CH1)
        acc = jnp.dot(xw_ref[pl.ds(r0, CH1), :], w1,
                      preferred_element_type=f32)              # (CH1, 128)
        m = jnp.maximum(acc, pltpu.roll(acc, shift=32, axis=1))
        m = jnp.maximum(m, pltpu.roll(acc, shift=64, axis=1))
        m = jnp.maximum(m, pltpu.roll(acc, shift=96, axis=1))
        # channels land in lanes [0, C1); zero everything else so conv2 can
        # consume full 128-lane rows against a zero K-padded w2.
        pool1_ref[pl.ds(r0, CH1), :] = jnp.maximum(m + b1, 0.0) * cmask

    # ---- conv2: offset loop hoisted across all B images of the tile.
    # Rows are (grid position, image), so every shifted read is contiguous,
    # lane-dense and 8-row aligned (off * B is a multiple of 8).  Positions
    # with row/col >= 10 are invalid conv2 outputs and are never read later.
    @pl.loop(0, ROWS // CH2)
    def _conv2(i):
        m0 = pl.multiple_of(i * CH2, CH2)
        acc = jnp.zeros((CH2, LANES), f32)
        for ky in range(KS):
            for kx in range(KS):
                off = (ky * P1 + kx) * B
                acc = acc + jnp.dot(pool1_ref[pl.ds(m0 + off, CH2), :],
                                    w2_ref[ky * KS + kx],
                                    preferred_element_type=f32)
        acc2_ref[pl.ds(m0, CH2), :] = acc

    # ---- maxpool2 + bias + ReLU fused directly into the fc1 contraction
    # (no pool2 scratch, no strided gathers: each load is B contiguous rows).
    h = jnp.zeros((B, LANES), f32)
    for p2h in range(P2):
        for p2w in range(P2):
            q = (2 * p2h) * P1 + 2 * p2w
            t00 = acc2_ref[pl.ds(q * B, B), :]
            t01 = acc2_ref[pl.ds((q + 1) * B, B), :]
            t10 = acc2_ref[pl.ds((q + P1) * B, B), :]
            t11 = acc2_ref[pl.ds((q + P1 + 1) * B, B), :]
            z = jnp.maximum(jnp.maximum(t00, t01), jnp.maximum(t10, t11))
            z = jnp.maximum(z + b2, 0.0)                       # (B, 128)
            h = h + jnp.dot(z, fc1_ref[p2h * P2 + p2w],
                            preferred_element_type=f32)

    # ---- fc1 bias/ReLU -> fc2 -> ReLU -> fc3 (all 128-lane padded operands).
    h = jnp.maximum(h + fb1_ref[...], 0.0)
    h = jnp.maximum(jnp.dot(h, fc2_ref[...], preferred_element_type=f32)
                    + fb2_ref[...], 0.0)
    out_ref[...] = (jnp.dot(h, fc3_ref[...], preferred_element_type=f32)
                    + fb3_ref[...])


# ---------------------------------------------------------------------------
# Wrapper-side input prep: 6x6x3 patches per pool window, position-major /
# image-minor rows within each batch tile, lanes padded to 128.
# ---------------------------------------------------------------------------
def _prep_input(x, n_pad):
    n = x.shape[0]
    x = jnp.pad(x, ((0, n_pad - n), (0, 0), (0, 0), (0, 0)))
    xh = jnp.transpose(x, (0, 2, 3, 1)).astype(jnp.float32)        # (np,32,32,3)
    cols = [xh[:, u:u + 2 * P1:2, v:v + 2 * P1:2, :]               # (np,14,14,3)
            for u in range(KS + 1) for v in range(KS + 1)]
    xw = jnp.concatenate(cols, axis=-1)                            # (np,14,14,108)
    xw = xw.reshape(n_pad, NP1, PATCH)
    xw = jnp.pad(xw, ((0, 0), (0, 0), (0, LANES - PATCH)))         # -> 128 lanes
    nt = n_pad // B
    xw = xw.reshape(nt, B, NP1, LANES).transpose(0, 2, 1, 3)       # (nt,196,B,128)
    return xw.reshape(nt * ROWS, LANES)


# ---------------------------------------------------------------------------
# One-time weight repacking (torch layout -> kernel layout, all lane padded).
# ---------------------------------------------------------------------------
def pack_params(p):
    f32 = np.float32

    # conv1: one (108->128, 4*32->128) matrix producing the 4 pool-window
    # positions (dy,dx) in 32-lane groups.  Patch lane = (u*6 + v)*3 + c.
    w1 = np.asarray(p["conv1_w"], f32)                 # (6,3,5,5)
    W1 = np.zeros((LANES, LANES), f32)
    for dy in range(2):
        for dx in range(2):
            g = 2 * dy + dx
            for ky in range(KS):
                for kx in range(KS):
                    u, v = ky + dy, kx + dx
                    k0 = (u * (KS + 1) + v) * C0
                    W1[k0:k0 + C0, 32 * g:32 * g + C1] = w1[:, :, ky, kx].T
    b1 = np.zeros((1, LANES), f32); b1[0, :C1] = np.asarray(p["conv1_b"], f32)

    # conv2: 25 offset matrices, K and N zero-padded to 128 lanes.
    w2 = np.asarray(p["conv2_w"], f32)                 # (16,6,5,5)
    W2 = np.zeros((KS * KS, LANES, LANES), f32)
    for ky in range(KS):
        for kx in range(KS):
            W2[ky * KS + kx, :C1, :C2] = w2[:, :, ky, kx].T
    b2 = np.zeros((1, LANES), f32); b2[0, :C2] = np.asarray(p["conv2_b"], f32)

    # fc1: torch input index = c*25 + (p2h*5 + p2w); one (128,128) slab per
    # pool2 position so pool2+fc1 fuse into 25 lane-dense dots.
    fw1 = np.asarray(p["fc1_w"], f32).reshape(F1, C2, P2 * P2)     # (120,16,25)
    FC1 = np.zeros((P2 * P2, LANES, LANES), f32)
    for q in range(P2 * P2):
        FC1[q, :C2, :F1] = fw1[:, :, q].T
    fb1 = np.zeros((1, LANES), f32); fb1[0, :F1] = np.asarray(p["fc1_b"], f32)

    FC2 = np.zeros((LANES, LANES), f32)
    FC2[:F1, :F2] = np.asarray(p["fc2_w"], f32).T
    fb2 = np.zeros((1, LANES), f32); fb2[0, :F2] = np.asarray(p["fc2_b"], f32)

    FC3 = np.zeros((LANES, LANES), f32)
    FC3[:F2, :F3] = np.asarray(p["fc3_w"], f32).T
    fb3 = np.zeros((1, LANES), f32); fb3[0, :F3] = np.asarray(p["fc3_b"], f32)

    return {k: jnp.asarray(v) for k, v in dict(
        w1=W1, b1=b1, w2=W2, b2=b2, fc1=FC1, fb1=fb1,
        fc2=FC2, fb2=fb2, fc3=FC3, fb3=fb3).items()}


def _stationary(shape):
    nd = len(shape)
    return pl.BlockSpec(shape, lambda i, _nd=nd: (0,) * _nd)


@jax.jit
def net_forward(packed, x):
    """x: (N, 3, 32, 32) float32 NCHW -> logits (N, 10)."""
    n = x.shape[0]
    nt = -(-n // B)
    n_pad = nt * B
    xw = _prep_input(x, n_pad)

    weights = (packed["w1"], packed["b1"], packed["w2"], packed["b2"],
               packed["fc1"], packed["fb1"], packed["fc2"], packed["fb2"],
               packed["fc3"], packed["fb3"])

    in_specs = [pl.BlockSpec((ROWS, LANES), lambda i: (i, 0))]
    in_specs += [_stationary(w.shape) for w in weights]

    # Per-step VMEM budget derived from the actual buffers (input tile is
    # double-buffered, weights stay resident, O(B) scratch) -- ~20 MiB, well
    # inside v7x's 64 MiB physical VMEM and the scoped limits on v5e/v6e.
    vmem_bytes = (2 * ROWS * LANES * 4
                  + 2 * sum(int(np.prod(w.shape)) * 4 for w in weights)
                  + (ROWS + TAIL) * LANES * 4
                  + ROWS * LANES * 4
                  + 2 * B * LANES * 4)
    vmem_limit = int(min(96 * 1024 * 1024,
                         max(16 * 1024 * 1024, 2 * vmem_bytes)))

    out = pl.pallas_call(
        _lenet_kernel,
        out_shape=jax.ShapeDtypeStruct((n_pad, LANES), jnp.float32),
        grid_spec=pltpu.PrefetchScalarGridSpec(
            num_scalar_prefetch=0,
            grid=(nt,),
            in_specs=in_specs,
            out_specs=pl.BlockSpec((B, LANES), lambda i: (i, 0)),
            scratch_shapes=[
                pltpu.VMEM((ROWS + TAIL, LANES), jnp.float32),   # pool1 (+tail)
                pltpu.VMEM((ROWS, LANES), jnp.float32),          # conv2 acc grid
            ]),
        compiler_params=pltpu.CompilerParams(
            dimension_semantics=("parallel",),
            vmem_limit_bytes=vmem_limit),
    )(xw, *weights)

    return out[:n, :F3]


# ---------------------------------------------------------------------------
# Parameter init (deterministic, PyTorch-default-like uniform(+-1/sqrt(fan_in)))
# ---------------------------------------------------------------------------
def _uniform(key, shape, fan_in):
    bound = 1.0 / jnp.sqrt(jnp.float32(fan_in))
    return jax.random.uniform(key, shape, jnp.float32, -bound, bound)


def init_params(key):
    ks = jax.random.split(key, 10)
    return {
        "conv1_w": _uniform(ks[0], (C1, C0, KS, KS), C0 * KS * KS),
        "conv1_b": _uniform(ks[1], (C1,), C0 * KS * KS),
        "conv2_w": _uniform(ks[2], (C2, C1, KS, KS), C1 * KS * KS),
        "conv2_b": _uniform(ks[3], (C2,), C1 * KS * KS),
        "fc1_w": _uniform(ks[4], (F1, C2 * P2 * P2), C2 * P2 * P2),
        "fc1_b": _uniform(ks[5], (F1,), C2 * P2 * P2),
        "fc2_w": _uniform(ks[6], (F2, F1), F1),
        "fc2_b": _uniform(ks[7], (F2,), F1),
        "fc3_w": _uniform(ks[8], (F3, F2), F2),
        "fc3_b": _uniform(ks[9], (F3,), F2),
    }


# ---------------------------------------------------------------------------
# Pure-JAX reference (mirrors PyTorch Net.forward) for the sanity check.
# ---------------------------------------------------------------------------
def _reference_forward(params, x):
    def conv(y, w, b):
        y = jax.lax.conv_general_dilated(
            y, w, window_strides=(1, 1), padding="VALID",
            dimension_numbers=("NCHW", "OIHW", "NCHW"))
        return y + b.reshape(1, -1, 1, 1)

    def pool(y):
        return jax.lax.reduce_window(
            y, -jnp.inf, jax.lax.max, (1, 1, 2, 2), (1, 1, 2, 2), "VALID")

    y = pool(jax.nn.relu(conv(x, params["conv1_w"], params["conv1_b"])))
    y = pool(jax.nn.relu(conv(y, params["conv2_w"], params["conv2_b"])))
    y = y.reshape(y.shape[0], -1)                     # NCHW flatten == torch .view
    y = jax.nn.relu(y @ params["fc1_w"].T + params["fc1_b"])
    y = jax.nn.relu(y @ params["fc2_w"].T + params["fc2_b"])
    return y @ params["fc3_w"].T + params["fc3_b"]


if __name__ == "__main__":
    key = jax.random.PRNGKey(0)
    # CIFAR-shaped input: the 16*5*5 flatten in Net.forward requires 3x32x32.
    x = jax.random.normal(key, (2, C0, H0, W0), dtype=jnp.float32)
    params = init_params(jax.random.PRNGKey(1))
    packed = pack_params(params)

    out = jax.block_until_ready(net_forward(packed, x))
    assert out.shape == (2, F3), out.shape
    assert out.dtype == jnp.float32

    # Sanity check against plain JAX (both paths use default TPU matmul
    # precision, i.e. bf16 passes, hence the loose absolute tolerance).
    ref = _reference_forward(params, x)
    err = float(jnp.max(jnp.abs(out - ref)))
    assert err < 5e-2, f"mismatch vs reference: max abs err = {err}"

    print("KERNEL_OK")
</pallas_src>

<mosaic_0001>
module attributes {stable_mosaic.version = 11 : i64} {
  func.func @_lenet_kernel(%arg0: i32, %arg1: memref<1568x128xf32, #tpu.memory_space<vmem>>, %arg2: memref<128x128xf32, #tpu.memory_space<vmem>>, %arg3: memref<1x128xf32, #tpu.memory_space<vmem>>, %arg4: memref<25x128x128xf32, #tpu.memory_space<vmem>>, %arg5: memref<1x128xf32, #tpu.memory_space<vmem>>, %arg6: memref<25x128x128xf32, #tpu.memory_space<vmem>>, %arg7: memref<1x128xf32, #tpu.memory_space<vmem>>, %arg8: memref<128x128xf32, #tpu.memory_space<vmem>>, %arg9: memref<1x128xf32, #tpu.memory_space<vmem>>, %arg10: memref<128x128xf32, #tpu.memory_space<vmem>>, %arg11: memref<1x128xf32, #tpu.memory_space<vmem>>, %arg12: memref<8x128xf32, #tpu.memory_space<vmem>>, %arg13: memref<2048x128xf32, #tpu.memory_space<vmem>>, %arg14: memref<1568x128xf32, #tpu.memory_space<vmem>>) attributes {dimension_semantics = [#tpu.dimension_semantics<parallel>], iteration_bounds = array<i64: 1>, scalar_prefetch = 0 : i64, scratch_operands = 2 : i64, tpu.core_type = #tpu.core_type<tc>, window_params = [{transform_indices = @transform_0, window_bounds = array<i64: 1568, 128>}, {pipeline_mode = #tpu.pipeline_mode<synchronous>, transform_indices = @transform_1, window_bounds = array<i64: 128, 128>}, {pipeline_mode = #tpu.pipeline_mode<synchronous>, transform_indices = @transform_2, window_bounds = array<i64: 1, 128>}, {pipeline_mode = #tpu.pipeline_mode<synchronous>, transform_indices = @transform_3, window_bounds = array<i64: 25, 128, 128>}, {pipeline_mode = #tpu.pipeline_mode<synchronous>, transform_indices = @transform_4, window_bounds = array<i64: 1, 128>}, {pipeline_mode = #tpu.pipeline_mode<synchronous>, transform_indices = @transform_5, window_bounds = array<i64: 25, 128, 128>}, {pipeline_mode = #tpu.pipeline_mode<synchronous>, transform_indices = @transform_6, window_bounds = array<i64: 1, 128>}, {pipeline_mode = #tpu.pipeline_mode<synchronous>, transform_indices = @transform_7, window_bounds = array<i64: 128, 128>}, {pipeline_mode = #tpu.pipeline_mode<synchronous>, transform_indices = @transform_8, window_bounds = array<i64: 1, 128>}, {pipeline_mode = #tpu.pipeline_mode<synchronous>, transform_indices = @transform_9, window_bounds = array<i64: 128, 128>}, {pipeline_mode = #tpu.pipeline_mode<synchronous>, transform_indices = @transform_10, window_bounds = array<i64: 1, 128>}, {transform_indices = @transform_11, window_bounds = array<i64: 8, 128>}]} {
    %c0 = arith.constant 0 : index
    %c0_0 = arith.constant 0 : index
    %0 = vector.load %arg2[%c0, %c0_0] : memref<128x128xf32, #tpu.memory_space<vmem>>, vector<128x128xf32>
    %c0_1 = arith.constant 0 : index
    %c0_2 = arith.constant 0 : index
    %1 = vector.load %arg3[%c0_1, %c0_2] : memref<1x128xf32, #tpu.memory_space<vmem>>, vector<1x128xf32>
    %c0_3 = arith.constant 0 : index
    %c0_4 = arith.constant 0 : index
    %2 = vector.load %arg5[%c0_3, %c0_4] : memref<1x128xf32, #tpu.memory_space<vmem>>, vector<1x128xf32>
    %3 = tpu.iota {dimensions = array<i32: 1>} : vector<1x128xi32>
    %c6_i32 = arith.constant 6 : i32
    %4 = vector.broadcast %c6_i32 : i32 to vector<1x128xi32>
    %5 = arith.cmpi slt, %3, %4 : vector<1x128xi32>
    %6 = arith.extui %5 : vector<1x128xi1> to vector<1x128xi32>
    %7 = arith.sitofp %6 : vector<1x128xi32> to vector<1x128xf32>
    %cst = arith.constant 0.000000e+00 : f32
    %8 = vector.broadcast %cst : f32 to vector<480x128xf32>
    %c1568 = arith.constant 1568 : index
    %c0_5 = arith.constant 0 : index
    %9 = vector.load %arg13[%c1568, %c0_5] : memref<2048x128xf32, #tpu.memory_space<vmem>>, vector<480x128xf32>
    tpu.vector_store %arg13[%c1568, %c0_5], %8 {strides = array<i32>} : memref<2048x128xf32, #tpu.memory_space<vmem>>, vector<480x128xf32>,
    %c0_i32 = arith.constant 0 : i32
    %c28_i32 = arith.constant 28 : i32
    %10 = arith.addi %c0_i32, %c28_i32 : i32
    %c1_i32 = arith.constant 1 : i32
    scf.for %arg15 = %c0_i32 to %10 step %c1_i32  : i32 {
      %c1_i32_233 = arith.constant 1 : i32
      %406 = arith.muli %arg15, %c1_i32_233 : i32
      %c0_i32_234 = arith.constant 0 : i32
      %407 = arith.addi %c0_i32_234, %406 : i32
      %c56_i32 = arith.constant 56 : i32
      %408 = arith.muli %407, %c56_i32 : i32
      %409 = tpu.assume_multiple %408, 56 : i32
      %410 = arith.index_cast %409 : i32 to index
      %c0_235 = arith.constant 0 : index
      %411 = vector.load %arg1[%410, %c0_235] : memref<1568x128xf32, #tpu.memory_space<vmem>>, vector<56x128xf32>
      %cst_236 = arith.constant dense<0.000000e+00> : vector<56x128xf32>
      %412 = tpu.matmul %411, %0, %cst_236 {dimension_numbers = #tpu.dot_dimension_numbers<[1], [0], [0], [1], [0, 0, 1, 1], [], []>} : vector<56x128xf32>, vector<128x128xf32>, vector<56x128xf32> -> vector<56x128xf32>
      %c32_i32 = arith.constant 32 : i32
      %413 = tpu.dynamic_rotate %412 by %c32_i32 dim 1 : vector<56x128xf32>, i32 -> vector<56x128xf32>
      %414 = arith.maximumf %412, %413 : vector<56x128xf32>
      %c64_i32 = arith.constant 64 : i32
      %415 = tpu.dynamic_rotate %412 by %c64_i32 dim 1 : vector<56x128xf32>, i32 -> vector<56x128xf32>
      %416 = arith.maximumf %414, %415 : vector<56x128xf32>
      %c96_i32 = arith.constant 96 : i32
      %417 = tpu.dynamic_rotate %412 by %c96_i32 dim 1 : vector<56x128xf32>, i32 -> vector<56x128xf32>
      %418 = arith.maximumf %416, %417 : vector<56x128xf32>
      %419 = vector.broadcast %1 : vector<1x128xf32> to vector<56x128xf32>
      %420 = arith.addf %418, %419 : vector<56x128xf32>
      %cst_237 = arith.constant 0.000000e+00 : f32
      %421 = vector.broadcast %cst_237 : f32 to vector<56x128xf32>
      %422 = arith.maximumf %420, %421 : vector<56x128xf32>
      %423 = vector.broadcast %7 : vector<1x128xf32> to vector<56x128xf32>
      %424 = arith.mulf %422, %423 : vector<56x128xf32>
      %425 = arith.index_cast %409 : i32 to index
      %c0_238 = arith.constant 0 : index
      %426 = vector.load %arg13[%425, %c0_238] : memref<2048x128xf32, #tpu.memory_space<vmem>>, vector<56x128xf32>
      tpu.vector_store %arg13[%425, %c0_238], %424 {strides = array<i32>} : memref<2048x128xf32, #tpu.memory_space<vmem>>, vector<56x128xf32>,
    }
    %c28_i32_6 = arith.constant 28 : i32
    %c0_i32_7 = arith.constant 0 : i32
    %c28_i32_8 = arith.constant 28 : i32
    %11 = arith.addi %c0_i32_7, %c28_i32_8 : i32
    %c1_i32_9 = arith.constant 1 : i32
    scf.for %arg15 = %c0_i32_7 to %11 step %c1_i32_9  : i32 {
      %c1_i32_233 = arith.constant 1 : i32
      %406 = arith.muli %arg15, %c1_i32_233 : i32
      %c0_i32_234 = arith.constant 0 : i32
      %407 = arith.addi %c0_i32_234, %406 : i32
      %c56_i32 = arith.constant 56 : i32
      %408 = arith.muli %407, %c56_i32 : i32
      %409 = tpu.assume_multiple %408, 56 : i32
      %cst_235 = arith.constant 0.000000e+00 : f32
      %410 = vector.broadcast %cst_235 : f32 to vector<56x128xf32>
      %c0_i32_236 = arith.constant 0 : i32
      %411 = arith.addi %409, %c0_i32_236 : i32
      %412 = arith.index_cast %411 : i32 to index
      %c0_237 = arith.constant 0 : index
      %413 = vector.load %arg13[%412, %c0_237] : memref<2048x128xf32, #tpu.memory_space<vmem>>, vector<56x128xf32>
      %c0_238 = arith.constant 0 : index
      %c0_239 = arith.constant 0 : index
      %c0_240 = arith.constant 0 : index
      %414 = vector.load %arg4[%c0_238, %c0_239, %c0_240] : memref<25x128x128xf32, #tpu.memory_space<vmem>>, vector<1x128x128xf32>
      %415 = vector.shape_cast %414 : vector<1x128x128xf32> to vector<128x128xf32>
      %cst_241 = arith.constant dense<0.000000e+00> : vector<56x128xf32>
      %416 = tpu.matmul %413, %415, %cst_241 {dimension_numbers = #tpu.dot_dimension_numbers<[1], [0], [0], [1], [0, 0, 1, 1], [], []>} : vector<56x128xf32>, vector<128x128xf32>, vector<56x128xf32> -> vector<56x128xf32>
      %417 = arith.addf %410, %416 : vector<56x128xf32>
      %c8_i32 = arith.constant 8 : i32
      %418 = arith.addi %409, %c8_i32 : i32
      %419 = arith.index_cast %418 : i32 to index
      %c0_242 = arith.constant 0 : index
      %420 = vector.load %arg13[%419, %c0_242] : memref<2048x128xf32, #tpu.memory_space<vmem>>, vector<56x128xf32>
      %c1_243 = arith.constant 1 : index
      %c0_244 = arith.constant 0 : index
      %c0_245 = arith.constant 0 : index
      %421 = vector.load %arg4[%c1_243, %c0_244, %c0_245] : memref<25x128x128xf32, #tpu.memory_space<vmem>>, vector<1x128x128xf32>
      %422 = vector.shape_cast %421 : vector<1x128x128xf32> to vector<128x128xf32>
      %cst_246 = arith.constant dense<0.000000e+00> : vector<56x128xf32>
      %423 = tpu.matmul %420, %422, %cst_246 {dimension_numbers = #tpu.dot_dimension_numbers<[1], [0], [0], [1], [0, 0, 1, 1], [], []>} : vector<56x128xf32>, vector<128x128xf32>, vector<56x128xf32> -> vector<56x128xf32>
      %424 = arith.addf %417, %423 : vector<56x128xf32>
      %c16_i32 = arith.constant 16 : i32
      %425 = arith.addi %409, %c16_i32 : i32
      %426 = arith.index_cast %425 : i32 to index
      %c0_247 = arith.constant 0 : index
      %427 = vector.load %arg13[%426, %c0_247] : memref<2048x128xf32, #tpu.memory_space<vmem>>, vector<56x128xf32>
      %c2_248 = arith.constant 2 : index
      %c0_249 = arith.constant 0 : index
      %c0_250 = arith.constant 0 : index
      %428 = vector.load %arg4[%c2_248, %c0_249, %c0_250] : memref<25x128x128xf32, #tpu.memory_space<vmem>>, vector<1x128x128xf32>
      %429 = vector.shape_cast %428 : vector<1x128x128xf32> to vector<128x128xf32>
      %cst_251 = arith.constant dense<0.000000e+00> : vector<56x128xf32>
      %430 = tpu.matmul %427, %429, %cst_251 {dimension_numbers = #tpu.dot_dimension_numbers<[1], [0], [0], [1], [0, 0, 1, 1], [], []>} : vector<56x128xf32>, vector<128x128xf32>, vector<56x128xf32> -> vector<56x128xf32>
      %431 = arith.addf %424, %430 : vector<56x128xf32>
      %c24_i32 = arith.constant 24 : i32
      %432 = arith.addi %409, %c24_i32 : i32
      %433 = arith.index_cast %432 : i32 to index
      %c0_252 = arith.constant 0 : index
      %434 = vector.load %arg13[%433, %c0_252] : memref<2048x128xf32, #tpu.memory_space<vmem>>, vector<56x128xf32>
      %c3_253 = arith.constant 3 : index
      %c0_254 = arith.constant 0 : index
      %c0_255 = arith.constant 0 : index
      %435 = vector.load %arg4[%c3_253, %c0_254, %c0_255] : memref<25x128x128xf32, #tpu.memory_space<vmem>>, vector<1x128x128xf32>
      %436 = vector.shape_cast %435 : vector<1x128x128xf32> to vector<128x128xf32>
      %cst_256 = arith.constant dense<0.000000e+00> : vector<56x128xf32>
      %437 = tpu.matmul %434, %436, %cst_256 {dimension_numbers = #tpu.dot_dimension_numbers<[1], [0], [0], [1], [0, 0, 1, 1], [], []>} : vector<56x128xf32>, vector<128x128xf32>, vector<56x128xf32> -> vector<56x128xf32>
      %438 = arith.addf %431, %437 : vector<56x128xf32>
      %c32_i32 = arith.constant 32 : i32
      %439 = arith.addi %409, %c32_i32 : i32
      %440 = arith.index_cast %439 : i32 to index
      %c0_257 = arith.constant 0 : index
      %441 = vector.load %arg13[%440, %c0_257] : memref<2048x128xf32, #tpu.memory_space<vmem>>, vector<56x128xf32>
      %c4_258 = arith.constant 4 : index
      %c0_259 = arith.constant 0 : index
      %c0_260 = arith.constant 0 : index
      %442 = vector.load %arg4[%c4_258, %c0_259, %c0_260] : memref<25x128x128xf32, #tpu.memory_space<vmem>>, vector<1x128x128xf32>
      %443 = vector.shape_cast %442 : vector<1x128x128xf32> to vector<128x128xf32>
      %cst_261 = arith.constant dense<0.000000e+00> : vector<56x128xf32>
      %444 = tpu.matmul %441, %443, %cst_261 {dimension_numbers = #tpu.dot_dimension_numbers<[1], [0], [0], [1], [0, 0, 1, 1], [], []>} : vector<56x128xf32>, vector<128x128xf32>, vector<56x128xf32> -> vector<56x128xf32>
      %445 = arith.addf %438, %444 : vector<56x128xf32>
      %c112_i32 = arith.constant 112 : i32
      %446 = arith.addi %409, %c112_i32 : i32
      %447 = arith.index_cast %446 : i32 to index
      %c0_262 = arith.constant 0 : index
      %448 = vector.load %arg13[%447, %c0_262] : memref<2048x128xf32, #tpu.memory_space<vmem>>, vector<56x128xf32>
      %c5_263 = arith.constant 5 : index
      %c0_264 = arith.constant 0 : index
      %c0_265 = arith.constant 0 : index
      %449 = vector.load %arg4[%c5_263, %c0_264, %c0_265] : memref<25x128x128xf32, #tpu.memory_space<vmem>>, vector<1x128x128xf32>
      %450 = vector.shape_cast %449 : vector<1x128x128xf32> to vector<128x128xf32>
      %cst_266 = arith.constant dense<0.000000e+00> : vector<56x128xf32>
      %451 = tpu.matmul %448, %450, %cst_266 {dimension_numbers = #tpu.dot_dimension_numbers<[1], [0], [0], [1], [0, 0, 1, 1], [], []>} : vector<56x128xf32>, vector<128x128xf32>, vector<56x128xf32> -> vector<56x128xf32>
      %452 = arith.addf %445, %451 : vector<56x128xf32>
      %c120_i32 = arith.constant 120 : i32
      %453 = arith.addi %409, %c120_i32 : i32
      %454 = arith.index_cast %453 : i32 to index
      %c0_267 = arith.constant 0 : index
      %455 = vector.load %arg13[%454, %c0_267] : memref<2048x128xf32, #tpu.memory_space<vmem>>, vector<56x128xf32>
      %c6_268 = arith.constant 6 : index
      %c0_269 = arith.constant 0 : index
      %c0_270 = arith.constant 0 : index
      %456 = vector.load %arg4[%c6_268, %c0_269, %c0_270] : memref<25x128x128xf32, #tpu.memory_space<vmem>>, vector<1x128x128xf32>
      %457 = vector.shape_cast %456 : vector<1x128x128xf32> to vector<128x128xf32>
      %cst_271 = arith.constant dense<0.000000e+00> : vector<56x128xf32>
      %458 = tpu.matmul %455, %457, %cst_271 {dimension_numbers = #tpu.dot_dimension_numbers<[1], [0], [0], [1], [0, 0, 1, 1], [], []>} : vector<56x128xf32>, vector<128x128xf32>, vector<56x128xf32> -> vector<56x128xf32>
      %459 = arith.addf %452, %458 : vector<56x128xf32>
      %c128_i32 = arith.constant 128 : i32
      %460 = arith.addi %409, %c128_i32 : i32
      %461 = arith.index_cast %460 : i32 to index
      %c0_272 = arith.constant 0 : index
      %462 = vector.load %arg13[%461, %c0_272] : memref<2048x128xf32, #tpu.memory_space<vmem>>, vector<56x128xf32>
      %c7_273 = arith.constant 7 : index
      %c0_274 = arith.constant 0 : index
      %c0_275 = arith.constant 0 : index
      %463 = vector.load %arg4[%c7_273, %c0_274, %c0_275] : memref<25x128x128xf32, #tpu.memory_space<vmem>>, vector<1x128x128xf32>
      %464 = vector.shape_cast %463 : vector<1x128x128xf32> to vector<128x128xf32>
      %cst_276 = arith.constant dense<0.000000e+00> : vector<56x128xf32>
      %465 = tpu.matmul %462, %464, %cst_276 {dimension_numbers = #tpu.dot_dimension_numbers<[1], [0], [0], [1], [0, 0, 1, 1], [], []>} : vector<56x128xf32>, vector<128x128xf32>, vector<56x128xf32> -> vector<56x128xf32>
      %466 = arith.addf %459, %465 : vector<56x128xf32>
      %c136_i32 = arith.constant 136 : i32
      %467 = arith.addi %409, %c136_i32 : i32
      %468 = arith.index_cast %467 : i32 to index
      %c0_277 = arith.constant 0 : index
      %469 = vector.load %arg13[%468, %c0_277] : memref<2048x128xf32, #tpu.memory_space<vmem>>, vector<56x128xf32>
      %c8_278 = arith.constant 8 : index
      %c0_279 = arith.constant 0 : index
      %c0_280 = arith.constant 0 : index
      %470 = vector.load %arg4[%c8_278, %c0_279, %c0_280] : memref<25x128x128xf32, #tpu.memory_space<vmem>>, vector<1x128x128xf32>
      %471 = vector.shape_cast %470 : vector<1x128x128xf32> to vector<128x128xf32>
      %cst_281 = arith.constant dense<0.000000e+00> : vector<56x128xf32>
      %472 = tpu.matmul %469, %471, %cst_281 {dimension_numbers = #tpu.dot_dimension_numbers<[1], [0], [0], [1], [0, 0, 1, 1], [], []>} : vector<56x128xf32>, vector<128x128xf32>, vector<56x128xf32> -> vector<56x128xf32>
      %473 = arith.addf %466, %472 : vector<56x128xf32>
      %c144_i32 = arith.constant 144 : i32
      %474 = arith.addi %409, %c144_i32 : i32
      %475 = arith.index_cast %474 : i32 to index
      %c0_282 = arith.constant 0 : index
      %476 = vector.load %arg13[%475, %c0_282] : memref<2048x128xf32, #tpu.memory_space<vmem>>, vector<56x128xf32>
      %c9_283 = arith.constant 9 : index
      %c0_284 = arith.constant 0 : index
      %c0_285 = arith.constant 0 : index
      %477 = vector.load %arg4[%c9_283, %c0_284, %c0_285] : memref<25x128x128xf32, #tpu.memory_space<vmem>>, vector<1x128x128xf32>
      %478 = vector.shape_cast %477 : vector<1x128x128xf32> to vector<128x128xf32>
      %cst_286 = arith.constant dense<0.000000e+00> : vector<56x128xf32>
      %479 = tpu.matmul %476, %478, %cst_286 {dimension_numbers = #tpu.dot_dimension_numbers<[1], [0], [0], [1], [0, 0, 1, 1], [], []>} : vector<56x128xf32>, vector<128x128xf32>, vector<56x128xf32> -> vector<56x128xf32>
      %480 = arith.addf %473, %479 : vector<56x128xf32>
      %c224_i32 = arith.constant 224 : i32
      %481 = arith.addi %409, %c224_i32 : i32
      %482 = arith.index_cast %481 : i32 to index
      %c0_287 = arith.constant 0 : index
      %483 = vector.load %arg13[%482, %c0_287] : memref<2048x128xf32, #tpu.memory_space<vmem>>, vector<56x128xf32>
      %c10_288 = arith.constant 10 : index
      %c0_289 = arith.constant 0 : index
      %c0_290 = arith.constant 0 : index
      %484 = vector.load %arg4[%c10_288, %c0_289, %c0_290] : memref<25x128x128xf32, #tpu.memory_space<vmem>>, vector<1x128x128xf32>
      %485 = vector.shape_cast %484 : vector<1x128x128xf32> to vector<128x128xf32>
      %cst_291 = arith.constant dense<0.000000e+00> : vector<56x128xf32>
      %486 = tpu.matmul %483, %485, %cst_291 {dimension_numbers = #tpu.dot_dimension_numbers<[1], [0], [0], [1], [0, 0, 1, 1], [], []>} : vector<56x128xf32>, vector<128x128xf32>, vector<56x128xf32> -> vector<56x128xf32>
      %487 = arith.addf %480, %486 : vector<56x128xf32>
      %c232_i32 = arith.constant 232 : i32
      %488 = arith.addi %409, %c232_i32 : i32
      %489 = arith.index_cast %488 : i32 to index
      %c0_292 = arith.constant 0 : index
      %490 = vector.load %arg13[%489, %c0_292] : memref<2048x128xf32, #tpu.memory_space<vmem>>, vector<56x128xf32>
      %c11_293 = arith.constant 11 : index
      %c0_294 = arith.constant 0 : index
      %c0_295 = arith.constant 0 : index
      %491 = vector.load %arg4[%c11_293, %c0_294, %c0_295] : memref<25x128x128xf32, #tpu.memory_space<vmem>>, vector<1x128x128xf32>
      %492 = vector.shape_cast %491 : vector<1x128x128xf32> to vector<128x128xf32>
      %cst_296 = arith.constant dense<0.000000e+00> : vector<56x128xf32>
      %493 = tpu.matmul %490, %492, %cst_296 {dimension_numbers = #tpu.dot_dimension_numbers<[1], [0], [0], [1], [0, 0, 1, 1], [], []>} : vector<56x128xf32>, vector<128x128xf32>, vector<56x128xf32> -> vector<56x128xf32>
      %494 = arith.addf %487, %493 : vector<56x128xf32>
      %c240_i32 = arith.constant 240 : i32
      %495 = arith.addi %409, %c240_i32 : i32
      %496 = arith.index_cast %495 : i32 to index
      %c0_297 = arith.constant 0 : index
      %497 = vector.load %arg13[%496, %c0_297] : memref<2048x128xf32, #tpu.memory_space<vmem>>, vector<56x128xf32>
      %c12_298 = arith.constant 12 : index
      %c0_299 = arith.constant 0 : index
      %c0_300 = arith.constant 0 : index
      %498 = vector.load %arg4[%c12_298, %c0_299, %c0_300] : memref<25x128x128xf32, #tpu.memory_space<vmem>>, vector<1x128x128xf32>
      %499 = vector.shape_cast %498 : vector<1x128x128xf32> to vector<128x128xf32>
      %cst_301 = arith.constant dense<0.000000e+00> : vector<56x128xf32>
      %500 = tpu.matmul %497, %499, %cst_301 {dimension_numbers = #tpu.dot_dimension_numbers<[1], [0], [0], [1], [0, 0, 1, 1], [], []>} : vector<56x128xf32>, vector<128x128xf32>, vector<56x128xf32> -> vector<56x128xf32>
      %501 = arith.addf %494, %500 : vector<56x128xf32>
      %c248_i32 = arith.constant 248 : i32
      %502 = arith.addi %409, %c248_i32 : i32
      %503 = arith.index_cast %502 : i32 to index
      %c0_302 = arith.constant 0 : index
      %504 = vector.load %arg13[%503, %c0_302] : memref<2048x128xf32, #tpu.memory_space<vmem>>, vector<56x128xf32>
      %c13_303 = arith.constant 13 : index
      %c0_304 = arith.constant 0 : index
      %c0_305 = arith.constant 0 : index
      %505 = vector.load %arg4[%c13_303, %c0_304, %c0_305] : memref<25x128x128xf32, #tpu.memory_space<vmem>>, vector<1x128x128xf32>
      %506 = vector.shape_cast %505 : vector<1x128x128xf32> to vector<128x128xf32>
      %cst_306 = arith.constant dense<0.000000e+00> : vector<56x128xf32>
      %507 = tpu.matmul %504, %506, %cst_306 {dimension_numbers = #tpu.dot_dimension_numbers<[1], [0], [0], [1], [0, 0, 1, 1], [], []>} : vector<56x128xf32>, vector<128x128xf32>, vector<56x128xf32> -> vector<56x128xf32>
      %508 = arith.addf %501, %507 : vector<56x128xf32>
      %c256_i32 = arith.constant 256 : i32
      %509 = arith.addi %409, %c256_i32 : i32
      %510 = arith.index_cast %509 : i32 to index
      %c0_307 = arith.constant 0 : index
      %511 = vector.load %arg13[%510, %c0_307] : memref<2048x128xf32, #tpu.memory_space<vmem>>, vector<56x128xf32>
      %c14_308 = arith.constant 14 : index
      %c0_309 = arith.constant 0 : index
      %c0_310 = arith.constant 0 : index
      %512 = vector.load %arg4[%c14_308, %c0_309, %c0_310] : memref<25x128x128xf32, #tpu.memory_space<vmem>>, vector<1x128x128xf32>
      %513 = vector.shape_cast %512 : vector<1x128x128xf32> to vector<128x128xf32>
      %cst_311 = arith.constant dense<0.000000e+00> : vector<56x128xf32>
      %514 = tpu.matmul %511, %513, %cst_311 {dimension_numbers = #tpu.dot_dimension_numbers<[1], [0], [0], [1], [0, 0, 1, 1], [], []>} : vector<56x128xf32>, vector<128x128xf32>, vector<56x128xf32> -> vector<56x128xf32>
      %515 = arith.addf %508, %514 : vector<56x128xf32>
      %c336_i32 = arith.constant 336 : i32
      %516 = arith.addi %409, %c336_i32 : i32
      %517 = arith.index_cast %516 : i32 to index
      %c0_312 = arith.constant 0 : index
      %518 = vector.load %arg13[%517, %c0_312] : memref<2048x128xf32, #tpu.memory_space<vmem>>, vector<56x128xf32>
      %c15_313 = arith.constant 15 : index
      %c0_314 = arith.constant 0 : index
      %c0_315 = arith.constant 0 : index
      %519 = vector.load %arg4[%c15_313, %c0_314, %c0_315] : memref<25x128x128xf32, #tpu.memory_space<vmem>>, vector<1x128x128xf32>
      %520 = vector.shape_cast %519 : vector<1x128x128xf32> to vector<128x128xf32>
      %cst_316 = arith.constant dense<0.000000e+00> : vector<56x128xf32>
      %521 = tpu.matmul %518, %520, %cst_316 {dimension_numbers = #tpu.dot_dimension_numbers<[1], [0], [0], [1], [0, 0, 1, 1], [], []>} : vector<56x128xf32>, vector<128x128xf32>, vector<56x128xf32> -> vector<56x128xf32>
      %522 = arith.addf %515, %521 : vector<56x128xf32>
      %c344_i32 = arith.constant 344 : i32
      %523 = arith.addi %409, %c344_i32 : i32
      %524 = arith.index_cast %523 : i32 to index
      %c0_317 = arith.constant 0 : index
      %525 = vector.load %arg13[%524, %c0_317] : memref<2048x128xf32, #tpu.memory_space<vmem>>, vector<56x128xf32>
      %c16_318 = arith.constant 16 : index
      %c0_319 = arith.constant 0 : index
      %c0_320 = arith.constant 0 : index
      %526 = vector.load %arg4[%c16_318, %c0_319, %c0_320] : memref<25x128x128xf32, #tpu.memory_space<vmem>>, vector<1x128x128xf32>
      %527 = vector.shape_cast %526 : vector<1x128x128xf32> to vector<128x128xf32>
      %cst_321 = arith.constant dense<0.000000e+00> : vector<56x128xf32>
      %528 = tpu.matmul %525, %527, %cst_321 {dimension_numbers = #tpu.dot_dimension_numbers<[1], [0], [0], [1], [0, 0, 1, 1], [], []>} : vector<56x128xf32>, vector<128x128xf32>, vector<56x128xf32> -> vector<56x128xf32>
      %529 = arith.addf %522, %528 : vector<56x128xf32>
      %c352_i32 = arith.constant 352 : i32
      %530 = arith.addi %409, %c352_i32 : i32
      %531 = arith.index_cast %530 : i32 to index
      %c0_322 = arith.constant 0 : index
      %532 = vector.load %arg13[%531, %c0_322] : memref<2048x128xf32, #tpu.memory_space<vmem>>, vector<56x128xf32>
      %c17_323 = arith.constant 17 : index
      %c0_324 = arith.constant 0 : index
      %c0_325 = arith.constant 0 : index
      %533 = vector.load %arg4[%c17_323, %c0_324, %c0_325] : memref<25x128x128xf32, #tpu.memory_space<vmem>>, vector<1x128x128xf32>
      %534 = vector.shape_cast %533 : vector<1x128x128xf32> to vector<128x128xf32>
      %cst_326 = arith.constant dense<0.000000e+00> : vector<56x128xf32>
      %535 = tpu.matmul %532, %534, %cst_326 {dimension_numbers = #tpu.dot_dimension_numbers<[1], [0], [0], [1], [0, 0, 1, 1], [], []>} : vector<56x128xf32>, vector<128x128xf32>, vector<56x128xf32> -> vector<56x128xf32>
      %536 = arith.addf %529, %535 : vector<56x128xf32>
      %c360_i32 = arith.constant 360 : i32
      %537 = arith.addi %409, %c360_i32 : i32
      %538 = arith.index_cast %537 : i32 to index
      %c0_327 = arith.constant 0 : index
      %539 = vector.load %arg13[%538, %c0_327] : memref<2048x128xf32, #tpu.memory_space<vmem>>, vector<56x128xf32>
      %c18_328 = arith.constant 18 : index
      %c0_329 = arith.constant 0 : index
      %c0_330 = arith.constant 0 : index
      %540 = vector.load %arg4[%c18_328, %c0_329, %c0_330] : memref<25x128x128xf32, #tpu.memory_space<vmem>>, vector<1x128x128xf32>
      %541 = vector.shape_cast %540 : vector<1x128x128xf32> to vector<128x128xf32>
      %cst_331 = arith.constant dense<0.000000e+00> : vector<56x128xf32>
      %542 = tpu.matmul %539, %541, %cst_331 {dimension_numbers = #tpu.dot_dimension_numbers<[1], [0], [0], [1], [0, 0, 1, 1], [], []>} : vector<56x128xf32>, vector<128x128xf32>, vector<56x128xf32> -> vector<56x128xf32>
      %543 = arith.addf %536, %542 : vector<56x128xf32>
      %c368_i32 = arith.constant 368 : i32
      %544 = arith.addi %409, %c368_i32 : i32
      %545 = arith.index_cast %544 : i32 to index
      %c0_332 = arith.constant 0 : index
      %546 = vector.load %arg13[%545, %c0_332] : memref<2048x128xf32, #tpu.memory_space<vmem>>, vector<56x128xf32>
      %c19_333 = arith.constant 19 : index
      %c0_334 = arith.constant 0 : index
      %c0_335 = arith.constant 0 : index
      %547 = vector.load %arg4[%c19_333, %c0_334, %c0_335] : memref<25x128x128xf32, #tpu.memory_space<vmem>>, vector<1x128x128xf32>
      %548 = vector.shape_cast %547 : vector<1x128x128xf32> to vector<128x128xf32>
      %cst_336 = arith.constant dense<0.000000e+00> : vector<56x128xf32>
      %549 = tpu.matmul %546, %548, %cst_336 {dimension_numbers = #tpu.dot_dimension_numbers<[1], [0], [0], [1], [0, 0, 1, 1], [], []>} : vector<56x128xf32>, vector<128x128xf32>, vector<56x128xf32> -> vector<56x128xf32>
      %550 = arith.addf %543, %549 : vector<56x128xf32>
      %c448_i32 = arith.constant 448 : i32
      %551 = arith.addi %409, %c448_i32 : i32
      %552 = arith.index_cast %551 : i32 to index
      %c0_337 = arith.constant 0 : index
      %553 = vector.load %arg13[%552, %c0_337] : memref<2048x128xf32, #tpu.memory_space<vmem>>, vector<56x128xf32>
      %c20_338 = arith.constant 20 : index
      %c0_339 = arith.constant 0 : index
      %c0_340 = arith.constant 0 : index
      %554 = vector.load %arg4[%c20_338, %c0_339, %c0_340] : memref<25x128x128xf32, #tpu.memory_space<vmem>>, vector<1x128x128xf32>
      %555 = vector.shape_cast %554 : vector<1x128x128xf32> to vector<128x128xf32>
      %cst_341 = arith.constant dense<0.000000e+00> : vector<56x128xf32>
      %556 = tpu.matmul %553, %555, %cst_341 {dimension_numbers = #tpu.dot_dimension_numbers<[1], [0], [0], [1], [0, 0, 1, 1], [], []>} : vector<56x128xf32>, vector<128x128xf32>, vector<56x128xf32> -> vector<56x128xf32>
      %557 = arith.addf %550, %556 : vector<56x128xf32>
      %c456_i32 = arith.constant 456 : i32
      %558 = arith.addi %409, %c456_i32 : i32
      %559 = arith.index_cast %558 : i32 to index
      %c0_342 = arith.constant 0 : index
      %560 = vector.load %arg13[%559, %c0_342] : memref<2048x128xf32, #tpu.memory_space<vmem>>, vector<56x128xf32>
      %c21_343 = arith.constant 21 : index
      %c0_344 = arith.constant 0 : index
      %c0_345 = arith.constant 0 : index
      %561 = vector.load %arg4[%c21_343, %c0_344, %c0_345] : memref<25x128x128xf32, #tpu.memory_space<vmem>>, vector<1x128x128xf32>
      %562 = vector.shape_cast %561 : vector<1x128x128xf32> to vector<128x128xf32>
      %cst_346 = arith.constant dense<0.000000e+00> : vector<56x128xf32>
      %563 = tpu.matmul %560, %562, %cst_346 {dimension_numbers = #tpu.dot_dimension_numbers<[1], [0], [0], [1], [0, 0, 1, 1], [], []>} : vector<56x128xf32>, vector<128x128xf32>, vector<56x128xf32> -> vector<56x128xf32>
      %564 = arith.addf %557, %563 : vector<56x128xf32>
      %c464_i32 = arith.constant 464 : i32
      %565 = arith.addi %409, %c464_i32 : i32
      %566 = arith.index_cast %565 : i32 to index
      %c0_347 = arith.constant 0 : index
      %567 = vector.load %arg13[%566, %c0_347] : memref<2048x128xf32, #tpu.memory_space<vmem>>, vector<56x128xf32>
      %c22_348 = arith.constant 22 : index
      %c0_349 = arith.constant 0 : index
      %c0_350 = arith.constant 0 : index
      %568 = vector.load %arg4[%c22_348, %c0_349, %c0_350] : memref<25x128x128xf32, #tpu.memory_space<vmem>>, vector<1x128x128xf32>
      %569 = vector.shape_cast %568 : vector<1x128x128xf32> to vector<128x128xf32>
      %cst_351 = arith.constant dense<0.000000e+00> : vector<56x128xf32>
      %570 = tpu.matmul %567, %569, %cst_351 {dimension_numbers = #tpu.dot_dimension_numbers<[1], [0], [0], [1], [0, 0, 1, 1], [], []>} : vector<56x128xf32>, vector<128x128xf32>, vector<56x128xf32> -> vector<56x128xf32>
      %571 = arith.addf %564, %570 : vector<56x128xf32>
      %c472_i32 = arith.constant 472 : i32
      %572 = arith.addi %409, %c472_i32 : i32
      %573 = arith.index_cast %572 : i32 to index
      %c0_352 = arith.constant 0 : index
      %574 = vector.load %arg13[%573, %c0_352] : memref<2048x128xf32, #tpu.memory_space<vmem>>, vector<56x128xf32>
      %c23_353 = arith.constant 23 : index
      %c0_354 = arith.constant 0 : index
      %c0_355 = arith.constant 0 : index
      %575 = vector.load %arg4[%c23_353, %c0_354, %c0_355] : memref<25x128x128xf32, #tpu.memory_space<vmem>>, vector<1x128x128xf32>
      %576 = vector.shape_cast %575 : vector<1x128x128xf32> to vector<128x128xf32>
      %cst_356 = arith.constant dense<0.000000e+00> : vector<56x128xf32>
      %577 = tpu.matmul %574, %576, %cst_356 {dimension_numbers = #tpu.dot_dimension_numbers<[1], [0], [0], [1], [0, 0, 1, 1], [], []>} : vector<56x128xf32>, vector<128x128xf32>, vector<56x128xf32> -> vector<56x128xf32>
      %578 = arith.addf %571, %577 : vector<56x128xf32>
      %c480_i32 = arith.constant 480 : i32
      %579 = arith.addi %409, %c480_i32 : i32
      %580 = arith.index_cast %579 : i32 to index
      %c0_357 = arith.constant 0 : index
      %581 = vector.load %arg13[%580, %c0_357] : memref<2048x128xf32, #tpu.memory_space<vmem>>, vector<56x128xf32>
      %c24_358 = arith.constant 24 : index
      %c0_359 = arith.constant 0 : index
      %c0_360 = arith.constant 0 : index
      %582 = vector.load %arg4[%c24_358, %c0_359, %c0_360] : memref<25x128x128xf32, #tpu.memory_space<vmem>>, vector<1x128x128xf32>
      %583 = vector.shape_cast %582 : vector<1x128x128xf32> to vector<128x128xf32>
      %cst_361 = arith.constant dense<0.000000e+00> : vector<56x128xf32>
      %584 = tpu.matmul %581, %583, %cst_361 {dimension_numbers = #tpu.dot_dimension_numbers<[1], [0], [0], [1], [0, 0, 1, 1], [], []>} : vector<56x128xf32>, vector<128x128xf32>, vector<56x128xf32> -> vector<56x128xf32>
      %585 = arith.addf %578, %584 : vector<56x128xf32>
      %586 = arith.index_cast %409 : i32 to index
      %c0_362 = arith.constant 0 : index
      %587 = vector.load %arg14[%586, %c0_362] : memref<1568x128xf32, #tpu.memory_space<vmem>>, vector<56x128xf32>
      tpu.vector_store %arg14[%586, %c0_362], %585 {strides = array<i32>} : memref<1568x128xf32, #tpu.memory_space<vmem>>, vector<56x128xf32>,
    }
    %c28_i32_10 = arith.constant 28 : i32
    %cst_11 = arith.constant 0.000000e+00 : f32
    %12 = vector.broadcast %cst_11 : f32 to vector<8x128xf32>
    %c0_12 = arith.constant 0 : index
    %c0_13 = arith.constant 0 : index
    %13 = vector.load %arg14[%c0_12, %c0_13] : memref<1568x128xf32, #tpu.memory_space<vmem>>, vector<8x128xf32>
    %c8 = arith.constant 8 : index
    %c0_14 = arith.constant 0 : index
    %14 = vector.load %arg14[%c8, %c0_14] : memref<1568x128xf32, #tpu.memory_space<vmem>>, vector<8x128xf32>
    %c112 = arith.constant 112 : index
    %c0_15 = arith.constant 0 : index
    %15 = vector.load %arg14[%c112, %c0_15] : memref<1568x128xf32, #tpu.memory_space<vmem>>, vector<8x128xf32>
    %c120 = arith.constant 120 : index
    %c0_16 = arith.constant 0 : index
    %16 = vector.load %arg14[%c120, %c0_16] : memref<1568x128xf32, #tpu.memory_space<vmem>>, vector<8x128xf32>
    %17 = arith.maximumf %13, %14 : vector<8x128xf32>
    %18 = arith.maximumf %15, %16 : vector<8x128xf32>
    %19 = arith.maximumf %17, %18 : vector<8x128xf32>
    %20 = vector.broadcast %2 : vector<1x128xf32> to vector<8x128xf32>
    %21 = arith.addf %19, %20 : vector<8x128xf32>
    %cst_17 = arith.constant 0.000000e+00 : f32
    %22 = vector.broadcast %cst_17 : f32 to vector<8x128xf32>
    %23 = arith.maximumf %21, %22 : vector<8x128xf32>
    %c0_18 = arith.constant 0 : index
    %c0_19 = arith.constant 0 : index
    %c0_20 = arith.constant 0 : index
    %24 = vector.load %arg6[%c0_18, %c0_19, %c0_20] : memref<25x128x128xf32, #tpu.memory_space<vmem>>, vector<1x128x128xf32>
    %25 = vector.shape_cast %24 : vector<1x128x128xf32> to vector<128x128xf32>
    %cst_21 = arith.constant dense<0.000000e+00> : vector<8x128xf32>
    %26 = tpu.matmul %23, %25, %cst_21 {dimension_numbers = #tpu.dot_dimension_numbers<[1], [0], [0], [1], [0, 0, 1, 1], [], []>} : vector<8x128xf32>, vector<128x128xf32>, vector<8x128xf32> -> vector<8x128xf32>
    %27 = arith.addf %12, %26 : vector<8x128xf32>
    %c16 = arith.constant 16 : index
    %c0_22 = arith.constant 0 : index
    %28 = vector.load %arg14[%c16, %c0_22] : memref<1568x128xf32, #tpu.memory_space<vmem>>, vector<8x128xf32>
    %c24 = arith.constant 24 : index
    %c0_23 = arith.constant 0 : index
    %29 = vector.load %arg14[%c24, %c0_23] : memref<1568x128xf32, #tpu.memory_space<vmem>>, vector<8x128xf32>
    %c128 = arith.constant 128 : index
    %c0_24 = arith.constant 0 : index
    %30 = vector.load %arg14[%c128, %c0_24] : memref<1568x128xf32, #tpu.memory_space<vmem>>, vector<8x128xf32>
    %c136 = arith.constant 136 : index
    %c0_25 = arith.constant 0 : index
    %31 = vector.load %arg14[%c136, %c0_25] : memref<1568x128xf32, #tpu.memory_space<vmem>>, vector<8x128xf32>
    %32 = arith.maximumf %28, %29 : vector<8x128xf32>
    %33 = arith.maximumf %30, %31 : vector<8x128xf32>
    %34 = arith.maximumf %32, %33 : vector<8x128xf32>
    %35 = vector.broadcast %2 : vector<1x128xf32> to vector<8x128xf32>
    %36 = arith.addf %34, %35 : vector<8x128xf32>
    %cst_26 = arith.constant 0.000000e+00 : f32
    %37 = vector.broadcast %cst_26 : f32 to vector<8x128xf32>
    %38 = arith.maximumf %36, %37 : vector<8x128xf32>
    %c1 = arith.constant 1 : index
    %c0_27 = arith.constant 0 : index
    %c0_28 = arith.constant 0 : index
    %39 = vector.load %arg6[%c1, %c0_27, %c0_28] : memref<25x128x128xf32, #tpu.memory_space<vmem>>, vector<1x128x128xf32>
    %40 = vector.shape_cast %39 : vector<1x128x128xf32> to vector<128x128xf32>
    %cst_29 = arith.constant dense<0.000000e+00> : vector<8x128xf32>
    %41 = tpu.matmul %38, %40, %cst_29 {dimension_numbers = #tpu.dot_dimension_numbers<[1], [0], [0], [1], [0, 0, 1, 1], [], []>} : vector<8x128xf32>, vector<128x128xf32>, vector<8x128xf32> -> vector<8x128xf32>
    %42 = arith.addf %27, %41 : vector<8x128xf32>
    %c32 = arith.constant 32 : index
    %c0_30 = arith.constant 0 : index
    %43 = vector.load %arg14[%c32, %c0_30] : memref<1568x128xf32, #tpu.memory_space<vmem>>, vector<8x128xf32>
    %c40 = arith.constant 40 : index
    %c0_31 = arith.constant 0 : index
    %44 = vector.load %arg14[%c40, %c0_31] : memref<1568x128xf32, #tpu.memory_space<vmem>>, vector<8x128xf32>
    %c144 = arith.constant 144 : index
    %c0_32 = arith.constant 0 : index
    %45 = vector.load %arg14[%c144, %c0_32] : memref<1568x128xf32, #tpu.memory_space<vmem>>, vector<8x128xf32>
    %c152 = arith.constant 152 : index
    %c0_33 = arith.constant 0 : index
    %46 = vector.load %arg14[%c152, %c0_33] : memref<1568x128xf32, #tpu.memory_space<vmem>>, vector<8x128xf32>
    %47 = arith.maximumf %43, %44 : vector<8x128xf32>
    %48 = arith.maximumf %45, %46 : vector<8x128xf32>
    %49 = arith.maximumf %47, %48 : vector<8x128xf32>
    %50 = vector.broadcast %2 : vector<1x128xf32> to vector<8x128xf32>
    %51 = arith.addf %49, %50 : vector<8x128xf32>
    %cst_34 = arith.constant 0.000000e+00 : f32
    %52 = vector.broadcast %cst_34 : f32 to vector<8x128xf32>
    %53 = arith.maximumf %51, %52 : vector<8x128xf32>
    %c2 = arith.constant 2 : index
    %c0_35 = arith.constant 0 : index
    %c0_36 = arith.constant 0 : index
    %54 = vector.load %arg6[%c2, %c0_35, %c0_36] : memref<25x128x128xf32, #tpu.memory_space<vmem>>, vector<1x128x128xf32>
    %55 = vector.shape_cast %54 : vector<1x128x128xf32> to vector<128x128xf32>
    %cst_37 = arith.constant dense<0.000000e+00> : vector<8x128xf32>
    %56 = tpu.matmul %53, %55, %cst_37 {dimension_numbers = #tpu.dot_dimension_numbers<[1], [0], [0], [1], [0, 0, 1, 1], [], []>} : vector<8x128xf32>, vector<128x128xf32>, vector<8x128xf32> -> vector<8x128xf32>
    %57 = arith.addf %42, %56 : vector<8x128xf32>
    %c48 = arith.constant 48 : index
    %c0_38 = arith.constant 0 : index
    %58 = vector.load %arg14[%c48, %c0_38] : memref<1568x128xf32, #tpu.memory_space<vmem>>, vector<8x128xf32>
    %c56 = arith.constant 56 : index
    %c0_39 = arith.constant 0 : index
    %59 = vector.load %arg14[%c56, %c0_39] : memref<1568x128xf32, #tpu.memory_space<vmem>>, vector<8x128xf32>
    %c160 = arith.constant 160 : index
    %c0_40 = arith.constant 0 : index
    %60 = vector.load %arg14[%c160, %c0_40] : memref<1568x128xf32, #tpu.memory_space<vmem>>, vector<8x128xf32>
    %c168 = arith.constant 168 : index
    %c0_41 = arith.constant 0 : index
    %61 = vector.load %arg14[%c168, %c0_41] : memref<1568x128xf32, #tpu.memory_space<vmem>>, vector<8x128xf32>
    %62 = arith.maximumf %58, %59 : vector<8x128xf32>
    %63 = arith.maximumf %60, %61 : vector<8x128xf32>
    %64 = arith.maximumf %62, %63 : vector<8x128xf32>
    %65 = vector.broadcast %2 : vector<1x128xf32> to vector<8x128xf32>
    %66 = arith.addf %64, %65 : vector<8x128xf32>
    %cst_42 = arith.constant 0.000000e+00 : f32
    %67 = vector.broadcast %cst_42 : f32 to vector<8x128xf32>
    %68 = arith.maximumf %66, %67 : vector<8x128xf32>
    %c3 = arith.constant 3 : index
    %c0_43 = arith.constant 0 : index
    %c0_44 = arith.constant 0 : index
    %69 = vector.load %arg6[%c3, %c0_43, %c0_44] : memref<25x128x128xf32, #tpu.memory_space<vmem>>, vector<1x128x128xf32>
    %70 = vector.shape_cast %69 : vector<1x128x128xf32> to vector<128x128xf32>
    %cst_45 = arith.constant dense<0.000000e+00> : vector<8x128xf32>
    %71 = tpu.matmul %68, %70, %cst_45 {dimension_numbers = #tpu.dot_dimension_numbers<[1], [0], [0], [1], [0, 0, 1, 1], [], []>} : vector<8x128xf32>, vector<128x128xf32>, vector<8x128xf32> -> vector<8x128xf32>
    %72 = arith.addf %57, %71 : vector<8x128xf32>
    %c64 = arith.constant 64 : index
    %c0_46 = arith.constant 0 : index
    %73 = vector.load %arg14[%c64, %c0_46] : memref<1568x128xf32, #tpu.memory_space<vmem>>, vector<8x128xf32>
    %c72 = arith.constant 72 : index
    %c0_47 = arith.constant 0 : index
    %74 = vector.load %arg14[%c72, %c0_47] : memref<1568x128xf32, #tpu.memory_space<vmem>>, vector<8x128xf32>
    %c176 = arith.constant 176 : index
    %c0_48 = arith.constant 0 : index
    %75 = vector.load %arg14[%c176, %c0_48] : memref<1568x128xf32, #tpu.memory_space<vmem>>, vector<8x128xf32>
    %c184 = arith.constant 184 : index
    %c0_49 = arith.constant 0 : index
    %76 = vector.load %arg14[%c184, %c0_49] : memref<1568x128xf32, #tpu.memory_space<vmem>>, vector<8x128xf32>
    %77 = arith.maximumf %73, %74 : vector<8x128xf32>
    %78 = arith.maximumf %75, %76 : vector<8x128xf32>
    %79 = arith.maximumf %77, %78 : vector<8x128xf32>
    %80 = vector.broadcast %2 : vector<1x128xf32> to vector<8x128xf32>
    %81 = arith.addf %79, %80 : vector<8x128xf32>
    %cst_50 = arith.constant 0.000000e+00 : f32
    %82 = vector.broadcast %cst_50 : f32 to vector<8x128xf32>
    %83 = arith.maximumf %81, %82 : vector<8x128xf32>
    %c4 = arith.constant 4 : index
    %c0_51 = arith.constant 0 : index
    %c0_52 = arith.constant 0 : index
    %84 = vector.load %arg6[%c4, %c0_51, %c0_52] : memref<25x128x128xf32, #tpu.memory_space<vmem>>, vector<1x128x128xf32>
    %85 = vector.shape_cast %84 : vector<1x128x128xf32> to vector<128x128xf32>
    %cst_53 = arith.constant dense<0.000000e+00> : vector<8x128xf32>
    %86 = tpu.matmul %83, %85, %cst_53 {dimension_numbers = #tpu.dot_dimension_numbers<[1], [0], [0], [1], [0, 0, 1, 1], [], []>} : vector<8x128xf32>, vector<128x128xf32>, vector<8x128xf32> -> vector<8x128xf32>
    %87 = arith.addf %72, %86 : vector<8x128xf32>
    %c224 = arith.constant 224 : index
    %c0_54 = arith.constant 0 : index
    %88 = vector.load %arg14[%c224, %c0_54] : memref<1568x128xf32, #tpu.memory_space<vmem>>, vector<8x128xf32>
    %c232 = arith.constant 232 : index
    %c0_55 = arith.constant 0 : index
    %89 = vector.load %arg14[%c232, %c0_55] : memref<1568x128xf32, #tpu.memory_space<vmem>>, vector<8x128xf32>
    %c336 = arith.constant 336 : index
    %c0_56 = arith.constant 0 : index
    %90 = vector.load %arg14[%c336, %c0_56] : memref<1568x128xf32, #tpu.memory_space<vmem>>, vector<8x128xf32>
    %c344 = arith.constant 344 : index
    %c0_57 = arith.constant 0 : index
    %91 = vector.load %arg14[%c344, %c0_57] : memref<1568x128xf32, #tpu.memory_space<vmem>>, vector<8x128xf32>
    %92 = arith.maximumf %88, %89 : vector<8x128xf32>
    %93 = arith.maximumf %90, %91 : vector<8x128xf32>
    %94 = arith.maximumf %92, %93 : vector<8x128xf32>
    %95 = vector.broadcast %2 : vector<1x128xf32> to vector<8x128xf32>
    %96 = arith.addf %94, %95 : vector<8x128xf32>
    %cst_58 = arith.constant 0.000000e+00 : f32
    %97 = vector.broadcast %cst_58 : f32 to vector<8x128xf32>
    %98 = arith.maximumf %96, %97 : vector<8x128xf32>
    %c5 = arith.constant 5 : index
    %c0_59 = arith.constant 0 : index
    %c0_60 = arith.constant 0 : index
    %99 = vector.load %arg6[%c5, %c0_59, %c0_60] : memref<25x128x128xf32, #tpu.memory_space<vmem>>, vector<1x128x128xf32>
    %100 = vector.shape_cast %99 : vector<1x128x128xf32> to vector<128x128xf32>
    %cst_61 = arith.constant dense<0.000000e+00> : vector<8x128xf32>
    %101 = tpu.matmul %98, %100, %cst_61 {dimension_numbers = #tpu.dot_dimension_numbers<[1], [0], [0], [1], [0, 0, 1, 1], [], []>} : vector<8x128xf32>, vector<128x128xf32>, vector<8x128xf32> -> vector<8x128xf32>
    %102 = arith.addf %87, %101 : vector<8x128xf32>
    %c240 = arith.constant 240 : index
    %c0_62 = arith.constant 0 : index
    %103 = vector.load %arg14[%c240, %c0_62] : memref<1568x128xf32, #tpu.memory_space<vmem>>, vector<8x128xf32>
    %c248 = arith.constant 248 : index
    %c0_63 = arith.constant 0 : index
    %104 = vector.load %arg14[%c248, %c0_63] : memref<1568x128xf32, #tpu.memory_space<vmem>>, vector<8x128xf32>
    %c352 = arith.constant 352 : index
    %c0_64 = arith.constant 0 : index
    %105 = vector.load %arg14[%c352, %c0_64] : memref<1568x128xf32, #tpu.memory_space<vmem>>, vector<8x128xf32>
    %c360 = arith.constant 360 : index
    %c0_65 = arith.constant 0 : index
    %106 = vector.load %arg14[%c360, %c0_65] : memref<1568x128xf32, #tpu.memory_space<vmem>>, vector<8x128xf32>
    %107 = arith.maximumf %103, %104 : vector<8x128xf32>
    %108 = arith.maximumf %105, %106 : vector<8x128xf32>
    %109 = arith.maximumf %107, %108 : vector<8x128xf32>
    %110 = vector.broadcast %2 : vector<1x128xf32> to vector<8x128xf32>
    %111 = arith.addf %109, %110 : vector<8x128xf32>
    %cst_66 = arith.constant 0.000000e+00 : f32
    %112 = vector.broadcast %cst_66 : f32 to vector<8x128xf32>
    %113 = arith.maximumf %111, %112 : vector<8x128xf32>
    %c6 = arith.constant 6 : index
    %c0_67 = arith.constant 0 : index
    %c0_68 = arith.constant 0 : index
    %114 = vector.load %arg6[%c6, %c0_67, %c0_68] : memref<25x128x128xf32, #tpu.memory_space<vmem>>, vector<1x128x128xf32>
    %115 = vector.shape_cast %114 : vector<1x128x128xf32> to vector<128x128xf32>
    %cst_69 = arith.constant dense<0.000000e+00> : vector<8x128xf32>
    %116 = tpu.matmul %113, %115, %cst_69 {dimension_numbers = #tpu.dot_dimension_numbers<[1], [0], [0], [1], [0, 0, 1, 1], [], []>} : vector<8x128xf32>, vector<128x128xf32>, vector<8x128xf32> -> vector<8x128xf32>
    %117 = arith.addf %102, %116 : vector<8x128xf32>
    %c256 = arith.constant 256 : index
    %c0_70 = arith.constant 0 : index
    %118 = vector.load %arg14[%c256, %c0_70] : memref<1568x128xf32, #tpu.memory_space<vmem>>, vector<8x128xf32>
    %c264 = arith.constant 264 : index
    %c0_71 = arith.constant 0 : index
    %119 = vector.load %arg14[%c264, %c0_71] : memref<1568x128xf32, #tpu.memory_space<vmem>>, vector<8x128xf32>
    %c368 = arith.constant 368 : index
    %c0_72 = arith.constant 0 : index
    %120 = vector.load %arg14[%c368, %c0_72] : memref<1568x128xf32, #tpu.memory_space<vmem>>, vector<8x128xf32>
    %c376 = arith.constant 376 : index
    %c0_73 = arith.constant 0 : index
    %121 = vector.load %arg14[%c376, %c0_73] : memref<1568x128xf32, #tpu.memory_space<vmem>>, vector<8x128xf32>
    %122 = arith.maximumf %118, %119 : vector<8x128xf32>
    %123 = arith.maximumf %120, %121 : vector<8x128xf32>
    %124 = arith.maximumf %122, %123 : vector<8x128xf32>
    %125 = vector.broadcast %2 : vector<1x128xf32> to vector<8x128xf32>
    %126 = arith.addf %124, %125 : vector<8x128xf32>
    %cst_74 = arith.constant 0.000000e+00 : f32
    %127 = vector.broadcast %cst_74 : f32 to vector<8x128xf32>
    %128 = arith.maximumf %126, %127 : vector<8x128xf32>
    %c7 = arith.constant 7 : index
    %c0_75 = arith.constant 0 : index
    %c0_76 = arith.constant 0 : index
    %129 = vector.load %arg6[%c7, %c0_75, %c0_76] : memref<25x128x128xf32, #tpu.memory_space<vmem>>, vector<1x128x128xf32>
    %130 = vector.shape_cast %129 : vector<1x128x128xf32> to vector<128x128xf32>
    %cst_77 = arith.constant dense<0.000000e+00> : vector<8x128xf32>
    %131 = tpu.matmul %128, %130, %cst_77 {dimension_numbers = #tpu.dot_dimension_numbers<[1], [0], [0], [1], [0, 0, 1, 1], [], []>} : vector<8x128xf32>, vector<128x128xf32>, vector<8x128xf32> -> vector<8x128xf32>
    %132 = arith.addf %117, %131 : vector<8x128xf32>
    %c272 = arith.constant 272 : index
    %c0_78 = arith.constant 0 : index
    %133 = vector.load %arg14[%c272, %c0_78] : memref<1568x128xf32, #tpu.memory_space<vmem>>, vector<8x128xf32>
    %c280 = arith.constant 280 : index
    %c0_79 = arith.constant 0 : index
    %134 = vector.load %arg14[%c280, %c0_79] : memref<1568x128xf32, #tpu.memory_space<vmem>>, vector<8x128xf32>
    %c384 = arith.constant 384 : index
    %c0_80 = arith.constant 0 : index
    %135 = vector.load %arg14[%c384, %c0_80] : memref<1568x128xf32, #tpu.memory_space<vmem>>, vector<8x128xf32>
    %c392 = arith.constant 392 : index
    %c0_81 = arith.constant 0 : index
    %136 = vector.load %arg14[%c392, %c0_81] : memref<1568x128xf32, #tpu.memory_space<vmem>>, vector<8x128xf32>
    %137 = arith.maximumf %133, %134 : vector<8x128xf32>
    %138 = arith.maximumf %135, %136 : vector<8x128xf32>
    %139 = arith.maximumf %137, %138 : vector<8x128xf32>
    %140 = vector.broadcast %2 : vector<1x128xf32> to vector<8x128xf32>
    %141 = arith.addf %139, %140 : vector<8x128xf32>
    %cst_82 = arith.constant 0.000000e+00 : f32
    %142 = vector.broadcast %cst_82 : f32 to vector<8x128xf32>
    %143 = arith.maximumf %141, %142 : vector<8x128xf32>
    %c8_83 = arith.constant 8 : index
    %c0_84 = arith.constant 0 : index
    %c0_85 = arith.constant 0 : index
    %144 = vector.load %arg6[%c8_83, %c0_84, %c0_85] : memref<25x128x128xf32, #tpu.memory_space<vmem>>, vector<1x128x128xf32>
    %145 = vector.shape_cast %144 : vector<1x128x128xf32> to vector<128x128xf32>
    %cst_86 = arith.constant dense<0.000000e+00> : vector<8x128xf32>
    %146 = tpu.matmul %143, %145, %cst_86 {dimension_numbers = #tpu.dot_dimension_numbers<[1], [0], [0], [1], [0, 0, 1, 1], [], []>} : vector<8x128xf32>, vector<128x128xf32>, vector<8x128xf32> -> vector<8x128xf32>
    %147 = arith.addf %132, %146 : vector<8x128xf32>
    %c288 = arith.constant 288 : index
    %c0_87 = arith.constant 0 : index
    %148 = vector.load %arg14[%c288, %c0_87] : memref<1568x128xf32, #tpu.memory_space<vmem>>, vector<8x128xf32>
    %c296 = arith.constant 296 : index
    %c0_88 = arith.constant 0 : index
    %149 = vector.load %arg14[%c296, %c0_88] : memref<1568x128xf32, #tpu.memory_space<vmem>>, vector<8x128xf32>
    %c400 = arith.constant 400 : index
    %c0_89 = arith.constant 0 : index
    %150 = vector.load %arg14[%c400, %c0_89] : memref<1568x128xf32, #tpu.memory_space<vmem>>, vector<8x128xf32>
    %c408 = arith.constant 408 : index
    %c0_90 = arith.constant 0 : index
    %151 = vector.load %arg14[%c408, %c0_90] : memref<1568x128xf32, #tpu.memory_space<vmem>>, vector<8x128xf32>
    %152 = arith.maximumf %148, %149 : vector<8x128xf32>
    %153 = arith.maximumf %150, %151 : vector<8x128xf32>
    %154 = arith.maximumf %152, %153 : vector<8x128xf32>
    %155 = vector.broadcast %2 : vector<1x128xf32> to vector<8x128xf32>
    %156 = arith.addf %154, %155 : vector<8x128xf32>
    %cst_91 = arith.constant 0.000000e+00 : f32
    %157 = vector.broadcast %cst_91 : f32 to vector<8x128xf32>
    %158 = arith.maximumf %156, %157 : vector<8x128xf32>
    %c9 = arith.constant 9 : index
    %c0_92 = arith.constant 0 : index
    %c0_93 = arith.constant 0 : index
    %159 = vector.load %arg6[%c9, %c0_92, %c0_93] : memref<25x128x128xf32, #tpu.memory_space<vmem>>, vector<1x128x128xf32>
    %160 = vector.shape_cast %159 : vector<1x128x128xf32> to vector<128x128xf32>
    %cst_94 = arith.constant dense<0.000000e+00> : vector<8x128xf32>
    %161 = tpu.matmul %158, %160, %cst_94 {dimension_numbers = #tpu.dot_dimension_numbers<[1], [0], [0], [1], [0, 0, 1, 1], [], []>} : vector<8x128xf32>, vector<128x128xf32>, vector<8x128xf32> -> vector<8x128xf32>
    %162 = arith.addf %147, %161 : vector<8x128xf32>
    %c448 = arith.constant 448 : index
    %c0_95 = arith.constant 0 : index
    %163 = vector.load %arg14[%c448, %c0_95] : memref<1568x128xf32, #tpu.memory_space<vmem>>, vector<8x128xf32>
    %c456 = arith.constant 456 : index
    %c0_96 = arith.constant 0 : index
    %164 = vector.load %arg14[%c456, %c0_96] : memref<1568x128xf32, #tpu.memory_space<vmem>>, vector<8x128xf32>
    %c560 = arith.constant 560 : index
    %c0_97 = arith.constant 0 : index
    %165 = vector.load %arg14[%c560, %c0_97] : memref<1568x128xf32, #tpu.memory_space<vmem>>, vector<8x128xf32>
    %c568 = arith.constant 568 : index
    %c0_98 = arith.constant 0 : index
    %166 = vector.load %arg14[%c568, %c0_98] : memref<1568x128xf32, #tpu.memory_space<vmem>>, vector<8x128xf32>
    %167 = arith.maximumf %163, %164 : vector<8x128xf32>
    %168 = arith.maximumf %165, %166 : vector<8x128xf32>
    %169 = arith.maximumf %167, %168 : vector<8x128xf32>
    %170 = vector.broadcast %2 : vector<1x128xf32> to vector<8x128xf32>
    %171 = arith.addf %169, %170 : vector<8x128xf32>
    %cst_99 = arith.constant 0.000000e+00 : f32
    %172 = vector.broadcast %cst_99 : f32 to vector<8x128xf32>
    %173 = arith.maximumf %171, %172 : vector<8x128xf32>
    %c10 = arith.constant 10 : index
    %c0_100 = arith.constant 0 : index
    %c0_101 = arith.constant 0 : index
    %174 = vector.load %arg6[%c10, %c0_100, %c0_101] : memref<25x128x128xf32, #tpu.memory_space<vmem>>, vector<1x128x128xf32>
    %175 = vector.shape_cast %174 : vector<1x128x128xf32> to vector<128x128xf32>
    %cst_102 = arith.constant dense<0.000000e+00> : vector<8x128xf32>
    %176 = tpu.matmul %173, %175, %cst_102 {dimension_numbers = #tpu.dot_dimension_numbers<[1], [0], [0], [1], [0, 0, 1, 1], [], []>} : vector<8x128xf32>, vector<128x128xf32>, vector<8x128xf32> -> vector<8x128xf32>
    %177 = arith.addf %162, %176 : vector<8x128xf32>
    %c464 = arith.constant 464 : index
    %c0_103 = arith.constant 0 : index
    %178 = vector.load %arg14[%c464, %c0_103] : memref<1568x128xf32, #tpu.memory_space<vmem>>, vector<8x128xf32>
    %c472 = arith.constant 472 : index
    %c0_104 = arith.constant 0 : index
    %179 = vector.load %arg14[%c472, %c0_104] : memref<1568x128xf32, #tpu.memory_space<vmem>>, vector<8x128xf32>
    %c576 = arith.constant 576 : index
    %c0_105 = arith.constant 0 : index
    %180 = vector.load %arg14[%c576, %c0_105] : memref<1568x128xf32, #tpu.memory_space<vmem>>, vector<8x128xf32>
    %c584 = arith.constant 584 : index
    %c0_106 = arith.constant 0 : index
    %181 = vector.load %arg14[%c584, %c0_106] : memref<1568x128xf32, #tpu.memory_space<vmem>>, vector<8x128xf32>
    %182 = arith.maximumf %178, %179 : vector<8x128xf32>
    %183 = arith.maximumf %180, %181 : vector<8x128xf32>
    %184 = arith.maximumf %182, %183 : vector<8x128xf32>
    %185 = vector.broadcast %2 : vector<1x128xf32> to vector<8x128xf32>
    %186 = arith.addf %184, %185 : vector<8x128xf32>
    %cst_107 = arith.constant 0.000000e+00 : f32
    %187 = vector.broadcast %cst_107 : f32 to vector<8x128xf32>
    %188 = arith.maximumf %186, %187 : vector<8x128xf32>
    %c11 = arith.constant 11 : index
    %c0_108 = arith.constant 0 : index
    %c0_109 = arith.constant 0 : index
    %189 = vector.load %arg6[%c11, %c0_108, %c0_109] : memref<25x128x128xf32, #tpu.memory_space<vmem>>, vector<1x128x128xf32>
    %190 = vector.shape_cast %189 : vector<1x128x128xf32> to vector<128x128xf32>
    %cst_110 = arith.constant dense<0.000000e+00> : vector<8x128xf32>
    %191 = tpu.matmul %188, %190, %cst_110 {dimension_numbers = #tpu.dot_dimension_numbers<[1], [0], [0], [1], [0, 0, 1, 1], [], []>} : vector<8x128xf32>, vector<128x128xf32>, vector<8x128xf32> -> vector<8x128xf32>
    %192 = arith.addf %177, %191 : vector<8x128xf32>
    %c480 = arith.constant 480 : index
    %c0_111 = arith.constant 0 : index
    %193 = vector.load %arg14[%c480, %c0_111] : memref<1568x128xf32, #tpu.memory_space<vmem>>, vector<8x128xf32>
    %c488 = arith.constant 488 : index
    %c0_112 = arith.constant 0 : index
    %194 = vector.load %arg14[%c488, %c0_112] : memref<1568x128xf32, #tpu.memory_space<vmem>>, vector<8x128xf32>
    %c592 = arith.constant 592 : index
    %c0_113 = arith.constant 0 : index
    %195 = vector.load %arg14[%c592, %c0_113] : memref<1568x128xf32, #tpu.memory_space<vmem>>, vector<8x128xf32>
    %c600 = arith.constant 600 : index
    %c0_114 = arith.constant 0 : index
    %196 = vector.load %arg14[%c600, %c0_114] : memref<1568x128xf32, #tpu.memory_space<vmem>>, vector<8x128xf32>
    %197 = arith.maximumf %193, %194 : vector<8x128xf32>
    %198 = arith.maximumf %195, %196 : vector<8x128xf32>
    %199 = arith.maximumf %197, %198 : vector<8x128xf32>
    %200 = vector.broadcast %2 : vector<1x128xf32> to vector<8x128xf32>
    %201 = arith.addf %199, %200 : vector<8x128xf32>
    %cst_115 = arith.constant 0.000000e+00 : f32
    %202 = vector.broadcast %cst_115 : f32 to vector<8x128xf32>
    %203 = arith.maximumf %201, %202 : vector<8x128xf32>
    %c12 = arith.constant 12 : index
    %c0_116 = arith.constant 0 : index
    %c0_117 = arith.constant 0 : index
    %204 = vector.load %arg6[%c12, %c0_116, %c0_117] : memref<25x128x128xf32, #tpu.memory_space<vmem>>, vector<1x128x128xf32>
    %205 = vector.shape_cast %204 : vector<1x128x128xf32> to vector<128x128xf32>
    %cst_118 = arith.constant dense<0.000000e+00> : vector<8x128xf32>
    %206 = tpu.matmul %203, %205, %cst_118 {dimension_numbers = #tpu.dot_dimension_numbers<[1], [0], [0], [1], [0, 0, 1, 1], [], []>} : vector<8x128xf32>, vector<128x128xf32>, vector<8x128xf32> -> vector<8x128xf32>
    %207 = arith.addf %192, %206 : vector<8x128xf32>
    %c496 = arith.constant 496 : index
    %c0_119 = arith.constant 0 : index
    %208 = vector.load %arg14[%c496, %c0_119] : memref<1568x128xf32, #tpu.memory_space<vmem>>, vector<8x128xf32>
    %c504 = arith.constant 504 : index
    %c0_120 = arith.constant 0 : index
    %209 = vector.load %arg14[%c504, %c0_120] : memref<1568x128xf32, #tpu.memory_space<vmem>>, vector<8x128xf32>
    %c608 = arith.constant 608 : index
    %c0_121 = arith.constant 0 : index
    %210 = vector.load %arg14[%c608, %c0_121] : memref<1568x128xf32, #tpu.memory_space<vmem>>, vector<8x128xf32>
    %c616 = arith.constant 616 : index
    %c0_122 = arith.constant 0 : index
    %211 = vector.load %arg14[%c616, %c0_122] : memref<1568x128xf32, #tpu.memory_space<vmem>>, vector<8x128xf32>
    %212 = arith.maximumf %208, %209 : vector<8x128xf32>
    %213 = arith.maximumf %210, %211 : vector<8x128xf32>
    %214 = arith.maximumf %212, %213 : vector<8x128xf32>
    %215 = vector.broadcast %2 : vector<1x128xf32> to vector<8x128xf32>
    %216 = arith.addf %214, %215 : vector<8x128xf32>
    %cst_123 = arith.constant 0.000000e+00 : f32
    %217 = vector.broadcast %cst_123 : f32 to vector<8x128xf32>
    %218 = arith.maximumf %216, %217 : vector<8x128xf32>
    %c13 = arith.constant 13 : index
    %c0_124 = arith.constant 0 : index
    %c0_125 = arith.constant 0 : index
    %219 = vector.load %arg6[%c13, %c0_124, %c0_125] : memref<25x128x128xf32, #tpu.memory_space<vmem>>, vector<1x128x128xf32>
    %220 = vector.shape_cast %219 : vector<1x128x128xf32> to vector<128x128xf32>
    %cst_126 = arith.constant dense<0.000000e+00> : vector<8x128xf32>
    %221 = tpu.matmul %218, %220, %cst_126 {dimension_numbers = #tpu.dot_dimension_numbers<[1], [0], [0], [1], [0, 0, 1, 1], [], []>} : vector<8x128xf32>, vector<128x128xf32>, vector<8x128xf32> -> vector<8x128xf32>
    %222 = arith.addf %207, %221 : vector<8x128xf32>
    %c512 = arith.constant 512 : index
    %c0_127 = arith.constant 0 : index
    %223 = vector.load %arg14[%c512, %c0_127] : memref<1568x128xf32, #tpu.memory_space<vmem>>, vector<8x128xf32>
    %c520 = arith.constant 520 : index
    %c0_128 = arith.constant 0 : index
    %224 = vector.load %arg14[%c520, %c0_128] : memref<1568x128xf32, #tpu.memory_space<vmem>>, vector<8x128xf32>
    %c624 = arith.constant 624 : index
    %c0_129 = arith.constant 0 : index
    %225 = vector.load %arg14[%c624, %c0_129] : memref<1568x128xf32, #tpu.memory_space<vmem>>, vector<8x128xf32>
    %c632 = arith.constant 632 : index
    %c0_130 = arith.constant 0 : index
    %226 = vector.load %arg14[%c632, %c0_130] : memref<1568x128xf32, #tpu.memory_space<vmem>>, vector<8x128xf32>
    %227 = arith.maximumf %223, %224 : vector<8x128xf32>
    %228 = arith.maximumf %225, %226 : vector<8x128xf32>
    %229 = arith.maximumf %227, %228 : vector<8x128xf32>
    %230 = vector.broadcast %2 : vector<1x128xf32> to vector<8x128xf32>
    %231 = arith.addf %229, %230 : vector<8x128xf32>
    %cst_131 = arith.constant 0.000000e+00 : f32
    %232 = vector.broadcast %cst_131 : f32 to vector<8x128xf32>
    %233 = arith.maximumf %231, %232 : vector<8x128xf32>
    %c14 = arith.constant 14 : index
    %c0_132 = arith.constant 0 : index
    %c0_133 = arith.constant 0 : index
    %234 = vector.load %arg6[%c14, %c0_132, %c0_133] : memref<25x128x128xf32, #tpu.memory_space<vmem>>, vector<1x128x128xf32>
    %235 = vector.shape_cast %234 : vector<1x128x128xf32> to vector<128x128xf32>
    %cst_134 = arith.constant dense<0.000000e+00> : vector<8x128xf32>
    %236 = tpu.matmul %233, %235, %cst_134 {dimension_numbers = #tpu.dot_dimension_numbers<[1], [0], [0], [1], [0, 0, 1, 1], [], []>} : vector<8x128xf32>, vector<128x128xf32>, vector<8x128xf32> -> vector<8x128xf32>
    %237 = arith.addf %222, %236 : vector<8x128xf32>
    %c672 = arith.constant 672 : index
    %c0_135 = arith.constant 0 : index
    %238 = vector.load %arg14[%c672, %c0_135] : memref<1568x128xf32, #tpu.memory_space<vmem>>, vector<8x128xf32>
    %c680 = arith.constant 680 : index
    %c0_136 = arith.constant 0 : index
    %239 = vector.load %arg14[%c680, %c0_136] : memref<1568x128xf32, #tpu.memory_space<vmem>>, vector<8x128xf32>
    %c784 = arith.constant 784 : index
    %c0_137 = arith.constant 0 : index
    %240 = vector.load %arg14[%c784, %c0_137] : memref<1568x128xf32, #tpu.memory_space<vmem>>, vector<8x128xf32>
    %c792 = arith.constant 792 : index
    %c0_138 = arith.constant 0 : index
    %241 = vector.load %arg14[%c792, %c0_138] : memref<1568x128xf32, #tpu.memory_space<vmem>>, vector<8x128xf32>
    %242 = arith.maximumf %238, %239 : vector<8x128xf32>
    %243 = arith.maximumf %240, %241 : vector<8x128xf32>
    %244 = arith.maximumf %242, %243 : vector<8x128xf32>
    %245 = vector.broadcast %2 : vector<1x128xf32> to vector<8x128xf32>
    %246 = arith.addf %244, %245 : vector<8x128xf32>
    %cst_139 = arith.constant 0.000000e+00 : f32
    %247 = vector.broadcast %cst_139 : f32 to vector<8x128xf32>
    %248 = arith.maximumf %246, %247 : vector<8x128xf32>
    %c15 = arith.constant 15 : index
    %c0_140 = arith.constant 0 : index
    %c0_141 = arith.constant 0 : index
    %249 = vector.load %arg6[%c15, %c0_140, %c0_141] : memref<25x128x128xf32, #tpu.memory_space<vmem>>, vector<1x128x128xf32>
    %250 = vector.shape_cast %249 : vector<1x128x128xf32> to vector<128x128xf32>
    %cst_142 = arith.constant dense<0.000000e+00> : vector<8x128xf32>
    %251 = tpu.matmul %248, %250, %cst_142 {dimension_numbers = #tpu.dot_dimension_numbers<[1], [0], [0], [1], [0, 0, 1, 1], [], []>} : vector<8x128xf32>, vector<128x128xf32>, vector<8x128xf32> -> vector<8x128xf32>
    %252 = arith.addf %237, %251 : vector<8x128xf32>
    %c688 = arith.constant 688 : index
    %c0_143 = arith.constant 0 : index
    %253 = vector.load %arg14[%c688, %c0_143] : memref<1568x128xf32, #tpu.memory_space<vmem>>, vector<8x128xf32>
    %c696 = arith.constant 696 : index
    %c0_144 = arith.constant 0 : index
    %254 = vector.load %arg14[%c696, %c0_144] : memref<1568x128xf32, #tpu.memory_space<vmem>>, vector<8x128xf32>
    %c800 = arith.constant 800 : index
    %c0_145 = arith.constant 0 : index
    %255 = vector.load %arg14[%c800, %c0_145] : memref<1568x128xf32, #tpu.memory_space<vmem>>, vector<8x128xf32>
    %c808 = arith.constant 808 : index
    %c0_146 = arith.constant 0 : index
    %256 = vector.load %arg14[%c808, %c0_146] : memref<1568x128xf32, #tpu.memory_space<vmem>>, vector<8x128xf32>
    %257 = arith.maximumf %253, %254 : vector<8x128xf32>
    %258 = arith.maximumf %255, %256 : vector<8x128xf32>
    %259 = arith.maximumf %257, %258 : vector<8x128xf32>
    %260 = vector.broadcast %2 : vector<1x128xf32> to vector<8x128xf32>
    %261 = arith.addf %259, %260 : vector<8x128xf32>
    %cst_147 = arith.constant 0.000000e+00 : f32
    %262 = vector.broadcast %cst_147 : f32 to vector<8x128xf32>
    %263 = arith.maximumf %261, %262 : vector<8x128xf32>
    %c16_148 = arith.constant 16 : index
    %c0_149 = arith.constant 0 : index
    %c0_150 = arith.constant 0 : index
    %264 = vector.load %arg6[%c16_148, %c0_149, %c0_150] : memref<25x128x128xf32, #tpu.memory_space<vmem>>, vector<1x128x128xf32>
    %265 = vector.shape_cast %264 : vector<1x128x128xf32> to vector<128x128xf32>
    %cst_151 = arith.constant dense<0.000000e+00> : vector<8x128xf32>
    %266 = tpu.matmul %263, %265, %cst_151 {dimension_numbers = #tpu.dot_dimension_numbers<[1], [0], [0], [1], [0, 0, 1, 1], [], []>} : vector<8x128xf32>, vector<128x128xf32>, vector<8x128xf32> -> vector<8x128xf32>
    %267 = arith.addf %252, %266 : vector<8x128xf32>
    %c704 = arith.constant 704 : index
    %c0_152 = arith.constant 0 : index
    %268 = vector.load %arg14[%c704, %c0_152] : memref<1568x128xf32, #tpu.memory_space<vmem>>, vector<8x128xf32>
    %c712 = arith.constant 712 : index
    %c0_153 = arith.constant 0 : index
    %269 = vector.load %arg14[%c712, %c0_153] : memref<1568x128xf32, #tpu.memory_space<vmem>>, vector<8x128xf32>
    %c816 = arith.constant 816 : index
    %c0_154 = arith.constant 0 : index
    %270 = vector.load %arg14[%c816, %c0_154] : memref<1568x128xf32, #tpu.memory_space<vmem>>, vector<8x128xf32>
    %c824 = arith.constant 824 : index
    %c0_155 = arith.constant 0 : index
    %271 = vector.load %arg14[%c824, %c0_155] : memref<1568x128xf32, #tpu.memory_space<vmem>>, vector<8x128xf32>
    %272 = arith.maximumf %268, %269 : vector<8x128xf32>
    %273 = arith.maximumf %270, %271 : vector<8x128xf32>
    %274 = arith.maximumf %272, %273 : vector<8x128xf32>
    %275 = vector.broadcast %2 : vector<1x128xf32> to vector<8x128xf32>
    %276 = arith.addf %274, %275 : vector<8x128xf32>
    %cst_156 = arith.constant 0.000000e+00 : f32
    %277 = vector.broadcast %cst_156 : f32 to vector<8x128xf32>
    %278 = arith.maximumf %276, %277 : vector<8x128xf32>
    %c17 = arith.constant 17 : index
    %c0_157 = arith.constant 0 : index
    %c0_158 = arith.constant 0 : index
    %279 = vector.load %arg6[%c17, %c0_157, %c0_158] : memref<25x128x128xf32, #tpu.memory_space<vmem>>, vector<1x128x128xf32>
    %280 = vector.shape_cast %279 : vector<1x128x128xf32> to vector<128x128xf32>
    %cst_159 = arith.constant dense<0.000000e+00> : vector<8x128xf32>
    %281 = tpu.matmul %278, %280, %cst_159 {dimension_numbers = #tpu.dot_dimension_numbers<[1], [0], [0], [1], [0, 0, 1, 1], [], []>} : vector<8x128xf32>, vector<128x128xf32>, vector<8x128xf32> -> vector<8x128xf32>
    %282 = arith.addf %267, %281 : vector<8x128xf32>
    %c720 = arith.constant 720 : index
    %c0_160 = arith.constant 0 : index
    %283 = vector.load %arg14[%c720, %c0_160] : memref<1568x128xf32, #tpu.memory_space<vmem>>, vector<8x128xf32>
    %c728 = arith.constant 728 : index
    %c0_161 = arith.constant 0 : index
    %284 = vector.load %arg14[%c728, %c0_161] : memref<1568x128xf32, #tpu.memory_space<vmem>>, vector<8x128xf32>
    %c832 = arith.constant 832 : index
    %c0_162 = arith.constant 0 : index
    %285 = vector.load %arg14[%c832, %c0_162] : memref<1568x128xf32, #tpu.memory_space<vmem>>, vector<8x128xf32>
    %c840 = arith.constant 840 : index
    %c0_163 = arith.constant 0 : index
    %286 = vector.load %arg14[%c840, %c0_163] : memref<1568x128xf32, #tpu.memory_space<vmem>>, vector<8x128xf32>
    %287 = arith.maximumf %283, %284 : vector<8x128xf32>
    %288 = arith.maximumf %285, %286 : vector<8x128xf32>
    %289 = arith.maximumf %287, %288 : vector<8x128xf32>
    %290 = vector.broadcast %2 : vector<1x128xf32> to vector<8x128xf32>
    %291 = arith.addf %289, %290 : vector<8x128xf32>
    %cst_164 = arith.constant 0.000000e+00 : f32
    %292 = vector.broadcast %cst_164 : f32 to vector<8x128xf32>
    %293 = arith.maximumf %291, %292 : vector<8x128xf32>
    %c18 = arith.constant 18 : index
    %c0_165 = arith.constant 0 : index
    %c0_166 = arith.constant 0 : index
    %294 = vector.load %arg6[%c18, %c0_165, %c0_166] : memref<25x128x128xf32, #tpu.memory_space<vmem>>, vector<1x128x128xf32>
    %295 = vector.shape_cast %294 : vector<1x128x128xf32> to vector<128x128xf32>
    %cst_167 = arith.constant dense<0.000000e+00> : vector<8x128xf32>
    %296 = tpu.matmul %293, %295, %cst_167 {dimension_numbers = #tpu.dot_dimension_numbers<[1], [0], [0], [1], [0, 0, 1, 1], [], []>} : vector<8x128xf32>, vector<128x128xf32>, vector<8x128xf32> -> vector<8x128xf32>
    %297 = arith.addf %282, %296 : vector<8x128xf32>
    %c736 = arith.constant 736 : index
    %c0_168 = arith.constant 0 : index
    %298 = vector.load %arg14[%c736, %c0_168] : memref<1568x128xf32, #tpu.memory_space<vmem>>, vector<8x128xf32>
    %c744 = arith.constant 744 : index
    %c0_169 = arith.constant 0 : index
    %299 = vector.load %arg14[%c744, %c0_169] : memref<1568x128xf32, #tpu.memory_space<vmem>>, vector<8x128xf32>
    %c848 = arith.constant 848 : index
    %c0_170 = arith.constant 0 : index
    %300 = vector.load %arg14[%c848, %c0_170] : memref<1568x128xf32, #tpu.memory_space<vmem>>, vector<8x128xf32>
    %c856 = arith.constant 856 : index
    %c0_171 = arith.constant 0 : index
    %301 = vector.load %arg14[%c856, %c0_171] : memref<1568x128xf32, #tpu.memory_space<vmem>>, vector<8x128xf32>
    %302 = arith.maximumf %298, %299 : vector<8x128xf32>
    %303 = arith.maximumf %300, %301 : vector<8x128xf32>
    %304 = arith.maximumf %302, %303 : vector<8x128xf32>
    %305 = vector.broadcast %2 : vector<1x128xf32> to vector<8x128xf32>
    %306 = arith.addf %304, %305 : vector<8x128xf32>
    %cst_172 = arith.constant 0.000000e+00 : f32
    %307 = vector.broadcast %cst_172 : f32 to vector<8x128xf32>
    %308 = arith.maximumf %306, %307 : vector<8x128xf32>
    %c19 = arith.constant 19 : index
    %c0_173 = arith.constant 0 : index
    %c0_174 = arith.constant 0 : index
    %309 = vector.load %arg6[%c19, %c0_173, %c0_174] : memref<25x128x128xf32, #tpu.memory_space<vmem>>, vector<1x128x128xf32>
    %310 = vector.shape_cast %309 : vector<1x128x128xf32> to vector<128x128xf32>
    %cst_175 = arith.constant dense<0.000000e+00> : vector<8x128xf32>
    %311 = tpu.matmul %308, %310, %cst_175 {dimension_numbers = #tpu.dot_dimension_numbers<[1], [0], [0], [1], [0, 0, 1, 1], [], []>} : vector<8x128xf32>, vector<128x128xf32>, vector<8x128xf32> -> vector<8x128xf32>
    %312 = arith.addf %297, %311 : vector<8x128xf32>
    %c896 = arith.constant 896 : index
    %c0_176 = arith.constant 0 : index
    %313 = vector.load %arg14[%c896, %c0_176] : memref<1568x128xf32, #tpu.memory_space<vmem>>, vector<8x128xf32>
    %c904 = arith.constant 904 : index
    %c0_177 = arith.constant 0 : index
    %314 = vector.load %arg14[%c904, %c0_177] : memref<1568x128xf32, #tpu.memory_space<vmem>>, vector<8x128xf32>
    %c1008 = arith.constant 1008 : index
    %c0_178 = arith.constant 0 : index
    %315 = vector.load %arg14[%c1008, %c0_178] : memref<1568x128xf32, #tpu.memory_space<vmem>>, vector<8x128xf32>
    %c1016 = arith.constant 1016 : index
    %c0_179 = arith.constant 0 : index
    %316 = vector.load %arg14[%c1016, %c0_179] : memref<1568x128xf32, #tpu.memory_space<vmem>>, vector<8x128xf32>
    %317 = arith.maximumf %313, %314 : vector<8x128xf32>
    %318 = arith.maximumf %315, %316 : vector<8x128xf32>
    %319 = arith.maximumf %317, %318 : vector<8x128xf32>
    %320 = vector.broadcast %2 : vector<1x128xf32> to vector<8x128xf32>
    %321 = arith.addf %319, %320 : vector<8x128xf32>
    %cst_180 = arith.constant 0.000000e+00 : f32
    %322 = vector.broadcast %cst_180 : f32 to vector<8x128xf32>
    %323 = arith.maximumf %321, %322 : vector<8x128xf32>
    %c20 = arith.constant 20 : index
    %c0_181 = arith.constant 0 : index
    %c0_182 = arith.constant 0 : index
    %324 = vector.load %arg6[%c20, %c0_181, %c0_182] : memref<25x128x128xf32, #tpu.memory_space<vmem>>, vector<1x128x128xf32>
    %325 = vector.shape_cast %324 : vector<1x128x128xf32> to vector<128x128xf32>
    %cst_183 = arith.constant dense<0.000000e+00> : vector<8x128xf32>
    %326 = tpu.matmul %323, %325, %cst_183 {dimension_numbers = #tpu.dot_dimension_numbers<[1], [0], [0], [1], [0, 0, 1, 1], [], []>} : vector<8x128xf32>, vector<128x128xf32>, vector<8x128xf32> -> vector<8x128xf32>
    %327 = arith.addf %312, %326 : vector<8x128xf32>
    %c912 = arith.constant 912 : index
    %c0_184 = arith.constant 0 : index
    %328 = vector.load %arg14[%c912, %c0_184] : memref<1568x128xf32, #tpu.memory_space<vmem>>, vector<8x128xf32>
    %c920 = arith.constant 920 : index
    %c0_185 = arith.constant 0 : index
    %329 = vector.load %arg14[%c920, %c0_185] : memref<1568x128xf32, #tpu.memory_space<vmem>>, vector<8x128xf32>
    %c1024 = arith.constant 1024 : index
    %c0_186 = arith.constant 0 : index
    %330 = vector.load %arg14[%c1024, %c0_186] : memref<1568x128xf32, #tpu.memory_space<vmem>>, vector<8x128xf32>
    %c1032 = arith.constant 1032 : index
    %c0_187 = arith.constant 0 : index
    %331 = vector.load %arg14[%c1032, %c0_187] : memref<1568x128xf32, #tpu.memory_space<vmem>>, vector<8x128xf32>
    %332 = arith.maximumf %328, %329 : vector<8x128xf32>
    %333 = arith.maximumf %330, %331 : vector<8x128xf32>
    %334 = arith.maximumf %332, %333 : vector<8x128xf32>
    %335 = vector.broadcast %2 : vector<1x128xf32> to vector<8x128xf32>
    %336 = arith.addf %334, %335 : vector<8x128xf32>
    %cst_188 = arith.constant 0.000000e+00 : f32
    %337 = vector.broadcast %cst_188 : f32 to vector<8x128xf32>
    %338 = arith.maximumf %336, %337 : vector<8x128xf32>
    %c21 = arith.constant 21 : index
    %c0_189 = arith.constant 0 : index
    %c0_190 = arith.constant 0 : index
    %339 = vector.load %arg6[%c21, %c0_189, %c0_190] : memref<25x128x128xf32, #tpu.memory_space<vmem>>, vector<1x128x128xf32>
    %340 = vector.shape_cast %339 : vector<1x128x128xf32> to vector<128x128xf32>
    %cst_191 = arith.constant dense<0.000000e+00> : vector<8x128xf32>
    %341 = tpu.matmul %338, %340, %cst_191 {dimension_numbers = #tpu.dot_dimension_numbers<[1], [0], [0], [1], [0, 0, 1, 1], [], []>} : vector<8x128xf32>, vector<128x128xf32>, vector<8x128xf32> -> vector<8x128xf32>
    %342 = arith.addf %327, %341 : vector<8x128xf32>
    %c928 = arith.constant 928 : index
    %c0_192 = arith.constant 0 : index
    %343 = vector.load %arg14[%c928, %c0_192] : memref<1568x128xf32, #tpu.memory_space<vmem>>, vector<8x128xf32>
    %c936 = arith.constant 936 : index
    %c0_193 = arith.constant 0 : index
    %344 = vector.load %arg14[%c936, %c0_193] : memref<1568x128xf32, #tpu.memory_space<vmem>>, vector<8x128xf32>
    %c1040 = arith.constant 1040 : index
    %c0_194 = arith.constant 0 : index
    %345 = vector.load %arg14[%c1040, %c0_194] : memref<1568x128xf32, #tpu.memory_space<vmem>>, vector<8x128xf32>
    %c1048 = arith.constant 1048 : index
    %c0_195 = arith.constant 0 : index
    %346 = vector.load %arg14[%c1048, %c0_195] : memref<1568x128xf32, #tpu.memory_space<vmem>>, vector<8x128xf32>
    %347 = arith.maximumf %343, %344 : vector<8x128xf32>
    %348 = arith.maximumf %345, %346 : vector<8x128xf32>
    %349 = arith.maximumf %347, %348 : vector<8x128xf32>
    %350 = vector.broadcast %2 : vector<1x128xf32> to vector<8x128xf32>
    %351 = arith.addf %349, %350 : vector<8x128xf32>
    %cst_196 = arith.constant 0.000000e+00 : f32
    %352 = vector.broadcast %cst_196 : f32 to vector<8x128xf32>
    %353 = arith.maximumf %351, %352 : vector<8x128xf32>
    %c22 = arith.constant 22 : index
    %c0_197 = arith.constant 0 : index
    %c0_198 = arith.constant 0 : index
    %354 = vector.load %arg6[%c22, %c0_197, %c0_198] : memref<25x128x128xf32, #tpu.memory_space<vmem>>, vector<1x128x128xf32>
    %355 = vector.shape_cast %354 : vector<1x128x128xf32> to vector<128x128xf32>
    %cst_199 = arith.constant dense<0.000000e+00> : vector<8x128xf32>
    %356 = tpu.matmul %353, %355, %cst_199 {dimension_numbers = #tpu.dot_dimension_numbers<[1], [0], [0], [1], [0, 0, 1, 1], [], []>} : vector<8x128xf32>, vector<128x128xf32>, vector<8x128xf32> -> vector<8x128xf32>
    %357 = arith.addf %342, %356 : vector<8x128xf32>
    %c944 = arith.constant 944 : index
    %c0_200 = arith.constant 0 : index
    %358 = vector.load %arg14[%c944, %c0_200] : memref<1568x128xf32, #tpu.memory_space<vmem>>, vector<8x128xf32>
    %c952 = arith.constant 952 : index
    %c0_201 = arith.constant 0 : index
    %359 = vector.load %arg14[%c952, %c0_201] : memref<1568x128xf32, #tpu.memory_space<vmem>>, vector<8x128xf32>
    %c1056 = arith.constant 1056 : index
    %c0_202 = arith.constant 0 : index
    %360 = vector.load %arg14[%c1056, %c0_202] : memref<1568x128xf32, #tpu.memory_space<vmem>>, vector<8x128xf32>
    %c1064 = arith.constant 1064 : index
    %c0_203 = arith.constant 0 : index
    %361 = vector.load %arg14[%c1064, %c0_203] : memref<1568x128xf32, #tpu.memory_space<vmem>>, vector<8x128xf32>
    %362 = arith.maximumf %358, %359 : vector<8x128xf32>
    %363 = arith.maximumf %360, %361 : vector<8x128xf32>
    %364 = arith.maximumf %362, %363 : vector<8x128xf32>
    %365 = vector.broadcast %2 : vector<1x128xf32> to vector<8x128xf32>
    %366 = arith.addf %364, %365 : vector<8x128xf32>
    %cst_204 = arith.constant 0.000000e+00 : f32
    %367 = vector.broadcast %cst_204 : f32 to vector<8x128xf32>
    %368 = arith.maximumf %366, %367 : vector<8x128xf32>
    %c23 = arith.constant 23 : index
    %c0_205 = arith.constant 0 : index
    %c0_206 = arith.constant 0 : index
    %369 = vector.load %arg6[%c23, %c0_205, %c0_206] : memref<25x128x128xf32, #tpu.memory_space<vmem>>, vector<1x128x128xf32>
    %370 = vector.shape_cast %369 : vector<1x128x128xf32> to vector<128x128xf32>
    %cst_207 = arith.constant dense<0.000000e+00> : vector<8x128xf32>
    %371 = tpu.matmul %368, %370, %cst_207 {dimension_numbers = #tpu.dot_dimension_numbers<[1], [0], [0], [1], [0, 0, 1, 1], [], []>} : vector<8x128xf32>, vector<128x128xf32>, vector<8x128xf32> -> vector<8x128xf32>
    %372 = arith.addf %357, %371 : vector<8x128xf32>
    %c960 = arith.constant 960 : index
    %c0_208 = arith.constant 0 : index
    %373 = vector.load %arg14[%c960, %c0_208] : memref<1568x128xf32, #tpu.memory_space<vmem>>, vector<8x128xf32>
    %c968 = arith.constant 968 : index
    %c0_209 = arith.constant 0 : index
    %374 = vector.load %arg14[%c968, %c0_209] : memref<1568x128xf32, #tpu.memory_space<vmem>>, vector<8x128xf32>
    %c1072 = arith.constant 1072 : index
    %c0_210 = arith.constant 0 : index
    %375 = vector.load %arg14[%c1072, %c0_210] : memref<1568x128xf32, #tpu.memory_space<vmem>>, vector<8x128xf32>
    %c1080 = arith.constant 1080 : index
    %c0_211 = arith.constant 0 : index
    %376 = vector.load %arg14[%c1080, %c0_211] : memref<1568x128xf32, #tpu.memory_space<vmem>>, vector<8x128xf32>
    %377 = arith.maximumf %373, %374 : vector<8x128xf32>
    %378 = arith.maximumf %375, %376 : vector<8x128xf32>
    %379 = arith.maximumf %377, %378 : vector<8x128xf32>
    %380 = vector.broadcast %2 : vector<1x128xf32> to vector<8x128xf32>
    %381 = arith.addf %379, %380 : vector<8x128xf32>
    %cst_212 = arith.constant 0.000000e+00 : f32
    %382 = vector.broadcast %cst_212 : f32 to vector<8x128xf32>
    %383 = arith.maximumf %381, %382 : vector<8x128xf32>
    %c24_213 = arith.constant 24 : index
    %c0_214 = arith.constant 0 : index
    %c0_215 = arith.constant 0 : index
    %384 = vector.load %arg6[%c24_213, %c0_214, %c0_215] : memref<25x128x128xf32, #tpu.memory_space<vmem>>, vector<1x128x128xf32>
    %385 = vector.shape_cast %384 : vector<1x128x128xf32> to vector<128x128xf32>
    %cst_216 = arith.constant dense<0.000000e+00> : vector<8x128xf32>
    %386 = tpu.matmul %383, %385, %cst_216 {dimension_numbers = #tpu.dot_dimension_numbers<[1], [0], [0], [1], [0, 0, 1, 1], [], []>} : vector<8x128xf32>, vector<128x128xf32>, vector<8x128xf32> -> vector<8x128xf32>
    %387 = arith.addf %372, %386 : vector<8x128xf32>
    %c0_217 = arith.constant 0 : index
    %c0_218 = arith.constant 0 : index
    %388 = vector.load %arg7[%c0_217, %c0_218] : memref<1x128xf32, #tpu.memory_space<vmem>>, vector<1x128xf32>
    %389 = vector.broadcast %388 : vector<1x128xf32> to vector<8x128xf32>
    %390 = arith.addf %387, %389 : vector<8x128xf32>
    %cst_219 = arith.constant 0.000000e+00 : f32
    %391 = vector.broadcast %cst_219 : f32 to vector<8x128xf32>
    %392 = arith.maximumf %390, %391 : vector<8x128xf32>
    %c0_220 = arith.constant 0 : index
    %c0_221 = arith.constant 0 : index
    %393 = vector.load %arg8[%c0_220, %c0_221] : memref<128x128xf32, #tpu.memory_space<vmem>>, vector<128x128xf32>
    %cst_222 = arith.constant dense<0.000000e+00> : vector<8x128xf32>
    %394 = tpu.matmul %392, %393, %cst_222 {dimension_numbers = #tpu.dot_dimension_numbers<[1], [0], [0], [1], [0, 0, 1, 1], [], []>} : vector<8x128xf32>, vector<128x128xf32>, vector<8x128xf32> -> vector<8x128xf32>
    %c0_223 = arith.constant 0 : index
    %c0_224 = arith.constant 0 : index
    %395 = vector.load %arg9[%c0_223, %c0_224] : memref<1x128xf32, #tpu.memory_space<vmem>>, vector<1x128xf32>
    %396 = vector.broadcast %395 : vector<1x128xf32> to vector<8x128xf32>
    %397 = arith.addf %394, %396 : vector<8x128xf32>
    %cst_225 = arith.constant 0.000000e+00 : f32
    %398 = vector.broadcast %cst_225 : f32 to vector<8x128xf32>
    %399 = arith.maximumf %397, %398 : vector<8x128xf32>
    %c0_226 = arith.constant 0 : index
    %c0_227 = arith.constant 0 : index
    %400 = vector.load %arg10[%c0_226, %c0_227] : memref<128x128xf32, #tpu.memory_space<vmem>>, vector<128x128xf32>
    %cst_228 = arith.constant dense<0.000000e+00> : vector<8x128xf32>
    %401 = tpu.matmul %399, %400, %cst_228 {dimension_numbers = #tpu.dot_dimension_numbers<[1], [0], [0], [1], [0, 0, 1, 1], [], []>} : vector<8x128xf32>, vector<128x128xf32>, vector<8x128xf32> -> vector<8x128xf32>
    %c0_229 = arith.constant 0 : index
    %c0_230 = arith.constant 0 : index
    %402 = vector.load %arg11[%c0_229, %c0_230] : memref<1x128xf32, #tpu.memory_space<vmem>>, vector<1x128xf32>
    %403 = vector.broadcast %402 : vector<1x128xf32> to vector<8x128xf32>
    %404 = arith.addf %401, %403 : vector<8x128xf32>
    %c0_231 = arith.constant 0 : index
    %c0_232 = arith.constant 0 : index
    %405 = vector.load %arg12[%c0_231, %c0_232] : memref<8x128xf32, #tpu.memory_space<vmem>>, vector<8x128xf32>
    tpu.vector_store %arg12[%c0_231, %c0_232], %404 {strides = array<i32>} : memref<8x128xf32, #tpu.memory_space<vmem>>, vector<8x128xf32>,
    return
  }
  func.func @transform_0(%arg0: i32) -> (i32, i32) {
    %c0_i32 = arith.constant 0 : i32
    %c0_i32_0 = arith.constant 0 : i32
    return %arg0, %c0_i32 : i32, i32
  }
  func.func @transform_1(%arg0: i32) -> (i32, i32) {
    %c0_i32 = arith.constant 0 : i32
    %c0_i32_0 = arith.constant 0 : i32
    %c0_i32_1 = arith.constant 0 : i32
    return %c0_i32, %c0_i32_0 : i32, i32
  }
  func.func @transform_2(%arg0: i32) -> (i32, i32) {
    %c0_i32 = arith.constant 0 : i32
    %c0_i32_0 = arith.constant 0 : i32
    %c0_i32_1 = arith.constant 0 : i32
    return %c0_i32, %c0_i32_0 : i32, i32
  }
  func.func @transform_3(%arg0: i32) -> (i32, i32, i32) {
    %c0_i32 = arith.constant 0 : i32
    %c0_i32_0 = arith.constant 0 : i32
    %c0_i32_1 = arith.constant 0 : i32
    %c0_i32_2 = arith.constant 0 : i32
    return %c0_i32, %c0_i32_0, %c0_i32_1 : i32, i32, i32
  }
  func.func @transform_4(%arg0: i32) -> (i32, i32) {
    %c0_i32 = arith.constant 0 : i32
    %c0_i32_0 = arith.constant 0 : i32
    %c0_i32_1 = arith.constant 0 : i32
    return %c0_i32, %c0_i32_0 : i32, i32
  }
  func.func @transform_5(%arg0: i32) -> (i32, i32, i32) {
    %c0_i32 = arith.constant 0 : i32
    %c0_i32_0 = arith.constant 0 : i32
    %c0_i32_1 = arith.constant 0 : i32
    %c0_i32_2 = arith.constant 0 : i32
    return %c0_i32, %c0_i32_0, %c0_i32_1 : i32, i32, i32
  }
  func.func @transform_6(%arg0: i32) -> (i32, i32) {
    %c0_i32 = arith.constant 0 : i32
    %c0_i32_0 = arith.constant 0 : i32
    %c0_i32_1 = arith.constant 0 : i32
    return %c0_i32, %c0_i32_0 : i32, i32
  }
  func.func @transform_7(%arg0: i32) -> (i32, i32) {
    %c0_i32 = arith.constant 0 : i32
    %c0_i32_0 = arith.constant 0 : i32
    %c0_i32_1 = arith.constant 0 : i32
    return %c0_i32, %c0_i32_0 : i32, i32
  }
  func.func @transform_8(%arg0: i32) -> (i32, i32) {
    %c0_i32 = arith.constant 0 : i32
    %c0_i32_0 = arith.constant 0 : i32
    %c0_i32_1 = arith.constant 0 : i32
    return %c0_i32, %c0_i32_0 : i32, i32
  }
  func.func @transform_9(%arg0: i32) -> (i32, i32) {
    %c0_i32 = arith.constant 0 : i32
    %c0_i32_0 = arith.constant 0 : i32
    %c0_i32_1 = arith.constant 0 : i32
    return %c0_i32, %c0_i32_0 : i32, i32
  }
  func.func @transform_10(%arg0: i32) -> (i32, i32) {
    %c0_i32 = arith.constant 0 : i32
    %c0_i32_0 = arith.constant 0 : i32
    %c0_i32_1 = arith.constant 0 : i32
    return %c0_i32, %c0_i32_0 : i32, i32
  }
  func.func @transform_11(%arg0: i32) -> (i32, i32) {
    %c0_i32 = arith.constant 0 : i32
    %c0_i32_0 = arith.constant 0 : i32
    return %arg0, %c0_i32 : i32, i32
  }
}

</mosaic_0001>

<llo_original>
// kernel: net_forward.1
$region0: #{net_forward.1}
  #allocation0 [shape = 'u32[]', space=smem, size = 0x4, offset = 0x4, fixed_abs, tag = 'smem constant byte address 0x4 - core index']
  #allocation1 [shape = 'u32[144,128]{1,0:T(1,128)}', space=vmem, size = 0x12000, scoped, tag = 'internal scratch']
  #allocation2 [shape = 'f32[2048,128]{1,0:T(8,128)}', space=vmem, size = 0x100000, scoped, tag = 'scratch operand']
  #allocation3 [shape = 'f32[1568,128]{1,0:T(8,128)}', space=vmem, size = 0xc4000, scoped, tag = 'scratch operand']
  %s0 = inlined_call_operand.vmem [shape: f32[1568,128], index: 0, kind: input, shape index: {}]
  %s1 = inlined_call_operand.vmem [shape: f32[128,128], index: 1, kind: input, shape index: {}]
  %s2 = inlined_call_operand.vmem [shape: f32[1,128], index: 2, kind: input, shape index: {}]
  %s3 = inlined_call_operand.vmem [shape: f32[25,128,128], index: 3, kind: input, shape index: {}]
  %s4 = inlined_call_operand.vmem [shape: f32[1,128], index: 4, kind: input, shape index: {}]
  %s5 = inlined_call_operand.vmem [shape: f32[25,128,128], index: 5, kind: input, shape index: {}]
  %s6 = inlined_call_operand.vmem [shape: f32[1,128], index: 6, kind: input, shape index: {}]
  %s7 = inlined_call_operand.vmem [shape: f32[128,128], index: 7, kind: input, shape index: {}]
  %s8 = inlined_call_operand.vmem [shape: f32[1,128], index: 8, kind: input, shape index: {}]
  %s9 = inlined_call_operand.vmem [shape: f32[128,128], index: 9, kind: input, shape index: {}]
  %s10 = inlined_call_operand.vmem [shape: f32[1,128], index: 10, kind: input, shape index: {}]
  %s11 = inlined_call_operand.vmem [shape: f32[8,128], index: 11, kind: output, shape index: {}]
  %s12 = sld [smem:[#allocation0]]
  $region68: #{net_forward.1} parent=0
    _
  %s14 = ssub.s32 1, %s12
  %s15 = scalar_select 0, %s14, %s12
  // Predicated region
  $region2: #{net_forward.1} parent=0 // pred_check
    _
  $region3: #{net_forward.1} parent=0 // pred_check_branch
    %17 = sbr.rel (0) target = $region5
  $region4: #{net_forward.1} parent=0 // pred_region
    _
  $region5: #{net_forward.1} parent=0 // pred_fallthru
    _
  // Predicated region
  $region6: #{net_forward.1} parent=0 // pred_check
    _
  $region7: #{net_forward.1} parent=0 // pred_check_branch
    %19 = sbr.rel (0) target = $region9
  $region8: #{net_forward.1} parent=0 // pred_region
    _
  $region9: #{net_forward.1} parent=0 // pred_fallthru
    _
  // Predicated region
  $region10: #{net_forward.1} parent=0 // pred_check
    _
  $region11: #{net_forward.1} parent=0 // pred_check_branch
    %21 = sbr.rel (0) target = $region13
  $region12: #{net_forward.1} parent=0 // pred_region
    _
  $region13: #{net_forward.1} parent=0 // pred_fallthru
    _
  // Predicated region
  $region14: #{net_forward.1} parent=0 // pred_check
    _
  $region15: #{net_forward.1} parent=0 // pred_check_branch
    %23 = sbr.rel (0) target = $region17
  $region16: #{net_forward.1} parent=0 // pred_region
    _
  $region17: #{net_forward.1} parent=0 // pred_fallthru
    _
  // Predicated region
  $region18: #{net_forward.1} parent=0 // pred_check
    _
  $region19: #{net_forward.1} parent=0 // pred_check_branch
    %25 = sbr.rel (0) target = $region21
  $region20: #{net_forward.1} parent=0 // pred_region
    _
  $region21: #{net_forward.1} parent=0 // pred_fallthru
    _
  // Predicated region
  $region22: #{net_forward.1} parent=0 // pred_check
    _
  $region23: #{net_forward.1} parent=0 // pred_check_branch
    %27 = sbr.rel (0) target = $region25
  $region24: #{net_forward.1} parent=0 // pred_region
    _
  $region25: #{net_forward.1} parent=0 // pred_fallthru
    _
  // Predicated region
  $region26: #{net_forward.1} parent=0 // pred_check
    _
  $region27: #{net_forward.1} parent=0 // pred_check_branch
    %29 = sbr.rel (0) target = $region29
  $region28: #{net_forward.1} parent=0 // pred_region
    _
  $region29: #{net_forward.1} parent=0 // pred_fallthru
    _
  // Predicated region
  $region30: #{net_forward.1} parent=0 // pred_check
    _
  $region31: #{net_forward.1} parent=0 // pred_check_branch
    %31 = sbr.rel (0) target = $region33
  $region32: #{net_forward.1} parent=0 // pred_region
    _
  $region33: #{net_forward.1} parent=0 // pred_fallthru
    _
  // Predicated region
  $region34: #{net_forward.1} parent=0 // pred_check
    _
  $region35: #{net_forward.1} parent=0 // pred_check_branch
    %33 = sbr.rel (0) target = $region37
  $region36: #{net_forward.1} parent=0 // pred_region
    _
  $region37: #{net_forward.1} parent=0 // pred_fallthru
    _
  // Predicated region
  $region38: #{net_forward.1} parent=0 // pred_check
    _
  $region39: #{net_forward.1} parent=0 // pred_check_branch
    %35 = sbr.rel (0) target = $region41
  $region40: #{net_forward.1} parent=0 // pred_region
    _
  $region41: #{net_forward.1} parent=0 // pred_fallthru
    _
  // Predicated region
  $region42: #{net_forward.1} parent=0 // pred_check
    _
  $region43: #{net_forward.1} parent=0 // pred_check_branch
    %37 = sbr.rel (0) target = $region45
  $region44: #{net_forward.1} parent=0 // pred_region
    _
  $region45: #{net_forward.1} parent=0 // pred_fallthru
    _
  %v38 = vld [vmem:[%s1] sm:$0xff]
  %v39 = vld [vmem:[%s1 + $0x8] sm:$0xff]
  %v40 = vld [vmem:[%s1 + $0x10] sm:$0xff]
  %v41 = vld [vmem:[%s1 + $0x18] sm:$0xff]
  %v42 = vld [vmem:[%s1 + $0x20] sm:$0xff]
  %v43 = vld [vmem:[%s1 + $0x28] sm:$0xff]
  %v44 = vld [vmem:[%s1 + $0x30] sm:$0xff]
  %v45 = vld [vmem:[%s1 + $0x38] sm:$0xff]
  %v46 = vld [vmem:[%s1 + $0x40] sm:$0xff]
  %v47 = vld [vmem:[%s1 + $0x48] sm:$0xff]
  %v48 = vld [vmem:[%s1 + $0x50] sm:$0xff]
  %v49 = vld [vmem:[%s1 + $0x58] sm:$0xff]
  %v50 = vld [vmem:[%s1 + $0x60] sm:$0xff]
  %v51 = vld [vmem:[%s1 + $0x68] sm:$0xff]
  %v52 = vld [vmem:[%s1 + $0x70] sm:$0xff]
  %v53 = vld [vmem:[%s1 + $0x78] sm:$0xff]
  %v54 = vld [vmem:[%s2] sm:$0x1]
  %v55 = vld [vmem:[%s4] sm:$0x1]
  %v56 = vlaneseq
  %v57 = vand.u32 %v56, 127
  %vm58 = vcmp.lt.s32.totalorder %v57, 6
  %v59 = vsel %vm58, 1, 0
  %v60 = vcvt.s32.f32 %v59
  %61 = vst [vmem:[#allocation2 + $0x620] sm:$0xff] 0.0
  %62 = vst [vmem:[#allocation2 + $0x628] sm:$0xff] 0.0
  %63 = vst [vmem:[#allocation2 + $0x630] sm:$0xff] 0.0
  %64 = vst [vmem:[#allocation2 + $0x638] sm:$0xff] 0.0
  %65 = vst [vmem:[#allocation2 + $0x640] sm:$0xff] 0.0
  %66 = vst [vmem:[#allocation2 + $0x648] sm:$0xff] 0.0
  %67 = vst [vmem:[#allocation2 + $0x650] sm:$0xff] 0.0
  %68 = vst [vmem:[#allocation2 + $0x658] sm:$0xff] 0.0
  %69 = vst [vmem:[#allocation2 + $0x660] sm:$0xff] 0.0
  %70 = vst [vmem:[#allocation2 + $0x668] sm:$0xff] 0.0
  %71 = vst [vmem:[#allocation2 + $0x670] sm:$0xff] 0.0
  %72 = vst [vmem:[#allocation2 + $0x678] sm:$0xff] 0.0
  %73 = vst [vmem:[#allocation2 + $0x680] sm:$0xff] 0.0
  %74 = vst [vmem:[#allocation2 + $0x688] sm:$0xff] 0.0
  %75 = vst [vmem:[#allocation2 + $0x690] sm:$0xff] 0.0
  %76 = vst [vmem:[#allocation2 + $0x698] sm:$0xff] 0.0
  %77 = vst [vmem:[#allocation2 + $0x6a0] sm:$0xff] 0.0
  %78 = vst [vmem:[#allocation2 + $0x6a8] sm:$0xff] 0.0
  %79 = vst [vmem:[#allocation2 + $0x6b0] sm:$0xff] 0.0
  %80 = vst [vmem:[#allocation2 + $0x6b8] sm:$0xff] 0.0
  %81 = vst [vmem:[#allocation2 + $0x6c0] sm:$0xff] 0.0
  %82 = vst [vmem:[#allocation2 + $0x6c8] sm:$0xff] 0.0
  %83 = vst [vmem:[#allocation2 + $0x6d0] sm:$0xff] 0.0
  %84 = vst [vmem:[#allocation2 + $0x6d8] sm:$0xff] 0.0
  %85 = vst [vmem:[#allocation2 + $0x6e0] sm:$0xff] 0.0
  %86 = vst [vmem:[#allocation2 + $0x6e8] sm:$0xff] 0.0
  %87 = vst [vmem:[#allocation2 + $0x6f0] sm:$0xff] 0.0
  %88 = vst [vmem:[#allocation2 + $0x6f8] sm:$0xff] 0.0
  %89 = vst [vmem:[#allocation2 + $0x700] sm:$0xff] 0.0
  %90 = vst [vmem:[#allocation2 + $0x708] sm:$0xff] 0.0
  %91 = vst [vmem:[#allocation2 + $0x710] sm:$0xff] 0.0
  %92 = vst [vmem:[#allocation2 + $0x718] sm:$0xff] 0.0
  %93 = vst [vmem:[#allocation2 + $0x720] sm:$0xff] 0.0
  %94 = vst [vmem:[#allocation2 + $0x728] sm:$0xff] 0.0
  %95 = vst [vmem:[#allocation2 + $0x730] sm:$0xff] 0.0
  %96 = vst [vmem:[#allocation2 + $0x738] sm:$0xff] 0.0
  %97 = vst [vmem:[#allocation2 + $0x740] sm:$0xff] 0.0
  %98 = vst [vmem:[#allocation2 + $0x748] sm:$0xff] 0.0
  %99 = vst [vmem:[#allocation2 + $0x750] sm:$0xff] 0.0
  %100 = vst [vmem:[#allocation2 + $0x758] sm:$0xff] 0.0
  %101 = vst [vmem:[#allocation2 + $0x760] sm:$0xff] 0.0
  %102 = vst [vmem:[#allocation2 + $0x768] sm:$0xff] 0.0
  %103 = vst [vmem:[#allocation2 + $0x770] sm:$0xff] 0.0
  %104 = vst [vmem:[#allocation2 + $0x778] sm:$0xff] 0.0
  %105 = vst [vmem:[#allocation2 + $0x780] sm:$0xff] 0.0
  %106 = vst [vmem:[#allocation2 + $0x788] sm:$0xff] 0.0
  %107 = vst [vmem:[#allocation2 + $0x790] sm:$0xff] 0.0
  %108 = vst [vmem:[#allocation2 + $0x798] sm:$0xff] 0.0
  %109 = vst [vmem:[#allocation2 + $0x7a0] sm:$0xff] 0.0
  %110 = vst [vmem:[#allocation2 + $0x7a8] sm:$0xff] 0.0
  %111 = vst [vmem:[#allocation2 + $0x7b0] sm:$0xff] 0.0
  %112 = vst [vmem:[#allocation2 + $0x7b8] sm:$0xff] 0.0
  %113 = vst [vmem:[#allocation2 + $0x7c0] sm:$0xff] 0.0
  %114 = vst [vmem:[#allocation2 + $0x7c8] sm:$0xff] 0.0
  %115 = vst [vmem:[#allocation2 + $0x7d0] sm:$0xff] 0.0
  %116 = vst [vmem:[#allocation2 + $0x7d8] sm:$0xff] 0.0
  %117 = vst [vmem:[#allocation2 + $0x7e0] sm:$0xff] 0.0
  %118 = vst [vmem:[#allocation2 + $0x7e8] sm:$0xff] 0.0
  %119 = vst [vmem:[#allocation2 + $0x7f0] sm:$0xff] 0.0
  %120 = vst [vmem:[#allocation2 + $0x7f8] sm:$0xff] 0.0
  loop: start=0, step=1, limit=28
  $region46: #{net_forward.1} parent=0 // loop_pre_header
    _
  $region47: #{net_forward.1} parent=0 // loop_header
    %s122 = sphi 0, %s126
    %p123 = scmp.ge.s32.totalorder %s122, 28
  $region48: #{net_forward.1} parent=0 // loop_header_branch
    %125 = sbr.rel (%p123) target = $region52
  $region49: #{net_forward.1} parent=0 // loop_body
    %s127 = smul.u32 %s122, 56
    %s128 = scalar_lea.vmem %s0, %s127
    %v129 = vld [vmem:[%s128] sm:$0xff]
    %v130 = vld [vmem:[%s128 + $0x8] sm:$0xff]
    %v131 = vld [vmem:[%s128 + $0x10] sm:$0xff]
    %v132 = vld [vmem:[%s128 + $0x18] sm:$0xff]
    %v133 = vld [vmem:[%s128 + $0x20] sm:$0xff]
    %v134 = vld [vmem:[%s128 + $0x28] sm:$0xff]
    %v135 = vld [vmem:[%s128 + $0x30] sm:$0xff]
    %136 = vmatprep.subr.mxu0 0.0
    %137 = vmatpush1.msra.mxu0 %v38
    %138 = vmatprep.subr.mxu0 0.0
    %139 = vmatpush1.msra.mxu0 %v39
    %140 = vmatprep.subr.mxu0 0.0
    %141 = vmatpush1.msra.mxu0 %v40
    %142 = vmatprep.subr.mxu0 0.0
    %143 = vmatpush1.msra.mxu0 %v41
    %144 = vmatprep.subr.mxu0 0.0
    %145 = vmatpush1.msra.mxu0 %v42
    %146 = vmatprep.subr.mxu0 0.0
    %147 = vmatpush1.msra.mxu0 %v43
    %148 = vmatprep.subr.mxu0 0.0
    %149 = vmatpush1.msra.mxu0 %v44
    %150 = vmatprep.subr.mxu0 0.0
    %151 = vmatpush1.msra.mxu0 %v45
    %152 = vmatprep.subr.mxu0 0.0
    %153 = vmatpush1.msra.mxu0 %v46
    %154 = vmatprep.subr.mxu0 0.0
    %155 = vmatpush1.msra.mxu0 %v47
    %156 = vmatprep.subr.mxu0 0.0
    %157 = vmatpush1.msra.mxu0 %v48
    %158 = vmatprep.subr.mxu0 0.0
    %159 = vmatpush1.msra.mxu0 %v49
    %160 = vmatprep.subr.mxu0 0.0
    %161 = vmatpush1.msra.mxu0 %v50
    %162 = vmatprep.subr.mxu0 0.0
    %163 = vmatpush1.msra.mxu0 %v51
    %164 = vmatprep.subr.mxu0 0.0
    %165 = vmatpush1.msra.mxu0 %v52
    %166 = vmatprep.subr.mxu0 0.0
    %167 = vmatpush1.msra.mxu0 %v53
    %168 = vmatprep.subr.mxu0 0.0
    %169 = vmatpush1.msra.mxu0 0.0
    %170 = vmatprep.subr.mxu0 0.0
    %171 = vmatpush1.msra.mxu0 0.0
    %172 = vmatprep.subr.mxu0 0.0
    %173 = vmatpush1.msra.mxu0 0.0
    %174 = vmatprep.subr.mxu0 0.0
    %175 = vmatpush1.msra.mxu0 0.0
    %176 = vmatprep.subr.mxu0 0.0
    %177 = vmatpush1.msra.mxu0 0.0
    %178 = vmatprep.subr.mxu0 0.0
    %179 = vmatpush1.msra.mxu0 0.0
    %180 = vmatprep.subr.mxu0 0.0
    %181 = vmatpush1.msra.mxu0 0.0
    %182 = vmatprep.subr.mxu0 0.0
    %183 = vmatpush1.msra.mxu0 0.0
    %184 = vmatprep.subr.mxu0 0.0
    %185 = vmatpush1.msra.mxu0 0.0
    %186 = vmatprep.subr.mxu0 0.0
    %187 = vmatpush1.msra.mxu0 0.0
    %188 = vmatprep.subr.mxu0 0.0
    %189 = vmatpush1.msra.mxu0 0.0
    %190 = vmatprep.subr.mxu0 0.0
    %191 = vmatpush1.msra.mxu0 0.0
    %192 = vmatprep.subr.mxu0 0.0
    %193 = vmatpush1.msra.mxu0 0.0
    %194 = vmatprep.subr.mxu0 0.0
    %195 = vmatpush1.msra.mxu0 0.0
    %196 = vmatprep.subr.mxu0 0.0
    %197 = vmatpush1.msra.mxu0 0.0
    %198 = vmatprep.subr.mxu0 0.0
    %199 = vmatpush1.msra.mxu0 0.0
    %200 = vmatprep.mubr.f32.mxu0 0.0
    %201 = vmatmul.mubr.f32.gmra.mrb[0].mxu0 %v129
    %v202 = vpop.f32.mrb[0].mxu0
    %v203 = vadd.f32 0.0, %v202
    %v204 = vpop.f32.mrb[0].mxu0
    %205 = vmatprep.mubr.f32.mxu0 0.0
    %206 = vmatmul.mubr.f32.gmra.mrb[0].mxu0 %v130
    %v207 = vpop.f32.mrb[0].mxu0
    %v208 = vadd.f32 0.0, %v207
    %v209 = vpop.f32.mrb[0].mxu0
    %210 = vmatprep.mubr.f32.mxu0 0.0
    %211 = vmatmul.mubr.f32.gmra.mrb[0].mxu0 %v131
    %v212 = vpop.f32.mrb[0].mxu0
    %v213 = vadd.f32 0.0, %v212
    %v214 = vpop.f32.mrb[0].mxu0
    %215 = vmatprep.mubr.f32.mxu0 0.0
    %216 = vmatmul.mubr.f32.gmra.mrb[0].mxu0 %v132
    %v217 = vpop.f32.mrb[0].mxu0
    %v218 = vadd.f32 0.0, %v217
    %v219 = vpop.f32.mrb[0].mxu0
    %220 = vmatprep.mubr.f32.mxu0 0.0
    %221 = vmatmul.mubr.f32.gmra.mrb[0].mxu0 %v133
    %v222 = vpop.f32.mrb[0].mxu0
    %v223 = vadd.f32 0.0, %v222
    %v224 = vpop.f32.mrb[0].mxu0
    %225 = vmatprep.mubr.f32.mxu0 0.0
    %226 = vmatmul.mubr.f32.gmra.mrb[0].mxu0 %v134
    %v227 = vpop.f32.mrb[0].mxu0
    %v228 = vadd.f32 0.0, %v227
    %v229 = vpop.f32.mrb[0].mxu0
    %230 = vmatprep.mubr.f32.mxu0 0.0
    %231 = vmatmul.mubr.f32.gmra.mrb[0].mxu0 %v135
    %v232 = vpop.f32.mrb[0].mxu0
    %v233 = vadd.f32 0.0, %v232
    %v234 = vpop.f32.mrb[0].mxu0
    %235 = vdwg.mxu0
    %236 = vrot.lane.b32.xlu0 %v203, 32
    %v237 = vpop.permute.xlu0 %236
    %238 = vrot.lane.b32.xlu0 %v208, 32
    %v239 = vpop.permute.xlu0 %238
    %240 = vrot.lane.b32.xlu0 %v213, 32
    %v241 = vpop.permute.xlu0 %240
    %242 = vrot.lane.b32.xlu0 %v218, 32
    %v243 = vpop.permute.xlu0 %242
    %244 = vrot.lane.b32.xlu0 %v223, 32
    %v245 = vpop.permute.xlu0 %244
    %246 = vrot.lane.b32.xlu0 %v228, 32
    %v247 = vpop.permute.xlu0 %246
    %248 = vrot.lane.b32.xlu0 %v233, 32
    %v249 = vpop.permute.xlu0 %248
    %v250 = vmax.f32 %v203, %v237
    %v251 = vmax.f32 %v208, %v239
    %v252 = vmax.f32 %v213, %v241
    %v253 = vmax.f32 %v218, %v243
    %v254 = vmax.f32 %v223, %v245
    %v255 = vmax.f32 %v228, %v247
    %v256 = vmax.f32 %v233, %v249
    %257 = vrot.lane.b32.xlu0 %v203, 64
    %v258 = vpop.permute.xlu0 %257
    %259 = vrot.lane.b32.xlu0 %v208, 64
    %v260 = vpop.permute.xlu0 %259
    %261 = vrot.lane.b32.xlu0 %v213, 64
    %v262 = vpop.permute.xlu0 %261
    %263 = vrot.lane.b32.xlu0 %v218, 64
    %v264 = vpop.permute.xlu0 %263
    %265 = vrot.lane.b32.xlu0 %v223, 64
    %v266 = vpop.permute.xlu0 %265
    %267 = vrot.lane.b32.xlu0 %v228, 64
    %v268 = vpop.permute.xlu0 %267
    %269 = vrot.lane.b32.xlu0 %v233, 64
    %v270 = vpop.permute.xlu0 %269
    %v271 = vmax.f32 %v250, %v258
    %v272 = vmax.f32 %v251, %v260
    %v273 = vmax.f32 %v252, %v262
    %v274 = vmax.f32 %v253, %v264
    %v275 = vmax.f32 %v254, %v266
    %v276 = vmax.f32 %v255, %v268
    %v277 = vmax.f32 %v256, %v270
    %278 = vrot.lane.b32.xlu0 %v203, 96
    %v279 = vpop.permute.xlu0 %278
    %280 = vrot.lane.b32.xlu0 %v208, 96
    %v281 = vpop.permute.xlu0 %280
    %282 = vrot.lane.b32.xlu0 %v213, 96
    %v283 = vpop.permute.xlu0 %282
    %284 = vrot.lane.b32.xlu0 %v218, 96
    %v285 = vpop.permute.xlu0 %284
    %286 = vrot.lane.b32.xlu0 %v223, 96
    %v287 = vpop.permute.xlu0 %286
    %288 = vrot.lane.b32.xlu0 %v228, 96
    %v289 = vpop.permute.xlu0 %288
    %290 = vrot.lane.b32.xlu0 %v233, 96
    %v291 = vpop.permute.xlu0 %290
    %v292 = vmax.f32 %v271, %v279
    %v293 = vmax.f32 %v272, %v281
    %v294 = vmax.f32 %v273, %v283
    %v295 = vmax.f32 %v274, %v285
    %v296 = vmax.f32 %v275, %v287
    %v297 = vmax.f32 %v276, %v289
    %v298 = vmax.f32 %v277, %v291
    %v300 = vlaneseq
    %v301 = vshrl.u32 %v300, 7
    %v302 = vsub.s32 0, %v301
    %v303 = vrot.slane %v54, %v302
    %v305 = vadd.f32 %v292, %v303
    %v306 = vadd.f32 %v293, %v303
    %v307 = vadd.f32 %v294, %v303
    %v308 = vadd.f32 %v295, %v303
    %v309 = vadd.f32 %v296, %v303
    %v310 = vadd.f32 %v297, %v303
    %v311 = vadd.f32 %v298, %v303
    %v312 = vmax.f32 %v305, 0.0
    %v313 = vmax.f32 %v306, 0.0
    %v314 = vmax.f32 %v307, 0.0
    %v315 = vmax.f32 %v308, 0.0
    %v316 = vmax.f32 %v309, 0.0
    %v317 = vmax.f32 %v310, 0.0
    %v318 = vmax.f32 %v311, 0.0
    %v319 = vmul.f32 %v312, %v60
    %v320 = vmul.f32 %v313, %v60
    %v321 = vmul.f32 %v314, %v60
    %v322 = vmul.f32 %v315, %v60
    %v323 = vmul.f32 %v316, %v60
    %v324 = vmul.f32 %v317, %v60
    %v325 = vmul.f32 %v318, %v60
    %s326 = scalar_lea.vmem [#allocation2], %s127
    %327 = vst [vmem:[%s326] sm:$0xff] %v319
    %328 = vst [vmem:[%s326 + $0x8] sm:$0xff] %v320
    %329 = vst [vmem:[%s326 + $0x10] sm:$0xff] %v321
    %330 = vst [vmem:[%s326 + $0x18] sm:$0xff] %v322
    %331 = vst [vmem:[%s326 + $0x20] sm:$0xff] %v323
    %332 = vst [vmem:[%s326 + $0x28] sm:$0xff] %v324
    %333 = vst [vmem:[%s326 + $0x30] sm:$0xff] %v325
  $region50: #{net_forward.1} parent=0 // loop_footer
    %s126 = sadd.s32 1, %s122
  $region51: #{net_forward.1} parent=0 // loop_footer_branch
    %121 = sbr.rel target = $region47
  $region52: #{net_forward.1} parent=0 // loop_exit
    _
  loop: start=0, step=1, limit=28
  $region53: #{net_forward.1} parent=0 // loop_pre_header
    _
  $region54: #{net_forward.1} parent=0 // loop_header
    %s335 = sphi 0, %s339
    %p336 = scmp.ge.s32.totalorder %s335, 28
  $region55: #{net_forward.1} parent=0 // loop_header_branch
    %338 = sbr.rel (%p336) target = $region59
  $region56: #{net_forward.1} parent=0 // loop_body
    %s340 = smul.u32 %s335, 56
    %s341 = scalar_lea.vmem [#allocation2], %s340
    %v342 = vld [vmem:[%s341] sm:$0xff]
    %v343 = vld [vmem:[%s341 + $0x8] sm:$0xff]
    %v344 = vld [vmem:[%s341 + $0x10] sm:$0xff]
    %v345 = vld [vmem:[%s341 + $0x18] sm:$0xff]
    %v346 = vld [vmem:[%s341 + $0x20] sm:$0xff]
    %v347 = vld [vmem:[%s341 + $0x28] sm:$0xff]
    %v348 = vld [vmem:[%s341 + $0x30] sm:$0xff]
    %v349 = vld [vmem:[%s3] sm:$0xff]
    %v350 = vld [vmem:[%s3 + $0x8] sm:$0xff]
    %v351 = vld [vmem:[%s3 + $0x10] sm:$0xff]
    %v352 = vld [vmem:[%s3 + $0x18] sm:$0xff]
    %v353 = vld [vmem:[%s3 + $0x20] sm:$0xff]
    %v354 = vld [vmem:[%s3 + $0x28] sm:$0xff]
    %v355 = vld [vmem:[%s3 + $0x30] sm:$0xff]
    %v356 = vld [vmem:[%s3 + $0x38] sm:$0xff]
    %v357 = vld [vmem:[%s3 + $0x40] sm:$0xff]
    %v358 = vld [vmem:[%s3 + $0x48] sm:$0xff]
    %v359 = vld [vmem:[%s3 + $0x50] sm:$0xff]
    %v360 = vld [vmem:[%s3 + $0x58] sm:$0xff]
    %v361 = vld [vmem:[%s3 + $0x60] sm:$0xff]
    %v362 = vld [vmem:[%s3 + $0x68] sm:$0xff]
    %v363 = vld [vmem:[%s3 + $0x70] sm:$0xff]
    %v364 = vld [vmem:[%s3 + $0x78] sm:$0xff]
    %s365 = sadd.s32 %s340, 8
    %s366 = scalar_lea.vmem [#allocation2], %s365
    %v367 = vld [vmem:[%s366] sm:$0xff]
    %v368 = vld [vmem:[%s366 + $0x8] sm:$0xff]
    %v369 = vld [vmem:[%s366 + $0x10] sm:$0xff]
    %v370 = vld [vmem:[%s366 + $0x18] sm:$0xff]
    %v371 = vld [vmem:[%s366 + $0x20] sm:$0xff]
    %v372 = vld [vmem:[%s366 + $0x28] sm:$0xff]
    %v373 = vld [vmem:[%s366 + $0x30] sm:$0xff]
    %s374 = scalar_lea.vmem %s3, 128
    %v375 = vld [vmem:[%s374] sm:$0xff]
    %v376 = vld [vmem:[%s374 + $0x8] sm:$0xff]
    %v377 = vld [vmem:[%s374 + $0x10] sm:$0xff]
    %v378 = vld [vmem:[%s374 + $0x18] sm:$0xff]
    %v379 = vld [vmem:[%s374 + $0x20] sm:$0xff]
    %v380 = vld [vmem:[%s374 + $0x28] sm:$0xff]
    %v381 = vld [vmem:[%s374 + $0x30] sm:$0xff]
    %v382 = vld [vmem:[%s374 + $0x38] sm:$0xff]
    %v383 = vld [vmem:[%s374 + $0x40] sm:$0xff]
    %v384 = vld [vmem:[%s374 + $0x48] sm:$0xff]
    %v385 = vld [vmem:[%s374 + $0x50] sm:$0xff]
    %v386 = vld [vmem:[%s374 + $0x58] sm:$0xff]
    %v387 = vld [vmem:[%s374 + $0x60] sm:$0xff]
    %v388 = vld [vmem:[%s374 + $0x68] sm:$0xff]
    %v389 = vld [vmem:[%s374 + $0x70] sm:$0xff]
    %v390 = vld [vmem:[%s374 + $0x78] sm:$0xff]
    %391 = vmatprep.subr.mxu0 0.0
    %392 = vmatpush1.msra.mxu0 %v375
    %393 = vmatprep.subr.mxu0 0.0
    %394 = vmatpush1.msra.mxu0 %v376
    %395 = vmatprep.subr.mxu0 0.0
    %396 = vmatpush1.msra.mxu0 %v377
    %397 = vmatprep.subr.mxu0 0.0
    %398 = vmatpush1.msra.mxu0 %v378
    %399 = vmatprep.subr.mxu0 0.0
    %400 = vmatpush1.msra.mxu0 %v379
    %401 = vmatprep.subr.mxu0 0.0
    %402 = vmatpush1.msra.mxu0 %v380
    %403 = vmatprep.subr.mxu0 0.0
    %404 = vmatpush1.msra.mxu0 %v381
    %405 = vmatprep.subr.mxu0 0.0
    %406 = vmatpush1.msra.mxu0 %v382
    %407 = vmatprep.subr.mxu0 0.0
    %408 = vmatpush1.msra.mxu0 %v383
    %409 = vmatprep.subr.mxu0 0.0
    %410 = vmatpush1.msra.mxu0 %v384
    %411 = vmatprep.subr.mxu0 0.0
    %412 = vmatpush1.msra.mxu0 %v385
    %413 = vmatprep.subr.mxu0 0.0
    %414 = vmatpush1.msra.mxu0 %v386
    %415 = vmatprep.subr.mxu0 0.0
    %416 = vmatpush1.msra.mxu0 %v387
    %417 = vmatprep.subr.mxu0 0.0
    %418 = vmatpush1.msra.mxu0 %v388
    %419 = vmatprep.subr.mxu0 0.0
    %420 = vmatpush1.msra.mxu0 %v389
    %421 = vmatprep.subr.mxu0 0.0
    %422 = vmatpush1.msra.mxu0 %v390
    %423 = vmatprep.subr.mxu0 0.0
    %424 = vmatpush1.msra.mxu0 0.0
    %425 = vmatprep.subr.mxu0 0.0
    %426 = vmatpush1.msra.mxu0 0.0
    %427 = vmatprep.subr.mxu0 0.0
    %428 = vmatpush1.msra.mxu0 0.0
    %429 = vmatprep.subr.mxu0 0.0
    %430 = vmatpush1.msra.mxu0 0.0
    %431 = vmatprep.subr.mxu0 0.0
    %432 = vmatpush1.msra.mxu0 0.0
    %433 = vmatprep.subr.mxu0 0.0
    %434 = vmatpush1.msra.mxu0 0.0
    %435 = vmatprep.subr.mxu0 0.0
    %436 = vmatpush1.msra.mxu0 0.0
    %437 = vmatprep.subr.mxu0 0.0
    %438 = vmatpush1.msra.mxu0 0.0
    %439 = vmatprep.subr.mxu0 0.0
    %440 = vmatpush1.msra.mxu0 0.0
    %441 = vmatprep.subr.mxu0 0.0
    %442 = vmatpush1.msra.mxu0 0.0
    %443 = vmatprep.subr.mxu0 0.0
    %444 = vmatpush1.msra.mxu0 0.0
    %445 = vmatprep.subr.mxu0 0.0
    %446 = vmatpush1.msra.mxu0 0.0
    %447 = vmatprep.subr.mxu0 0.0
    %448 = vmatpush1.msra.mxu0 0.0
    %449 = vmatprep.subr.mxu0 0.0
    %450 = vmatpush1.msra.mxu0 0.0
    %451 = vmatprep.subr.mxu0 0.0
    %452 = vmatpush1.msra.mxu0 0.0
    %453 = vmatprep.subr.mxu0 0.0
    %454 = vmatpush1.msra.mxu0 0.0
    %455 = vmatprep.mubr.f32.mxu0 0.0
    %456 = vmatmul.mubr.f32.gmra.mrb[0].mxu0 %v367
    %v457 = vpop.f32.mrb[0].mxu0
    %v458 = vadd.f32 0.0, %v457
    %v459 = vpop.f32.mrb[0].mxu0
    %460 = vmatprep.mubr.f32.mxu0 0.0
    %461 = vmatmul.mubr.f32.gmra.mrb[0].mxu0 %v368
    %v462 = vpop.f32.mrb[0].mxu0
    %v463 = vadd.f32 0.0, %v462
    %v464 = vpop.f32.mrb[0].mxu0
    %465 = vmatprep.mubr.f32.mxu0 0.0
    %466 = vmatmul.mubr.f32.gmra.mrb[0].mxu0 %v369
    %v467 = vpop.f32.mrb[0].mxu0
    %v468 = vadd.f32 0.0, %v467
    %v469 = vpop.f32.mrb[0].mxu0
    %470 = vmatprep.mubr.f32.mxu0 0.0
    %471 = vmatmul.mubr.f32.gmra.mrb[0].mxu0 %v370
    %v472 = vpop.f32.mrb[0].mxu0
    %v473 = vadd.f32 0.0, %v472
    %v474 = vpop.f32.mrb[0].mxu0
    %475 = vmatprep.mubr.f32.mxu0 0.0
    %476 = vmatmul.mubr.f32.gmra.mrb[0].mxu0 %v371
    %v477 = vpop.f32.mrb[0].mxu0
    %v478 = vadd.f32 0.0, %v477
    %v479 = vpop.f32.mrb[0].mxu0
    %480 = vmatprep.mubr.f32.mxu0 0.0
    %481 = vmatmul.mubr.f32.gmra.mrb[0].mxu0 %v372
    %v482 = vpop.f32.mrb[0].mxu0
    %v483 = vadd.f32 0.0, %v482
    %v484 = vpop.f32.mrb[0].mxu0
    %485 = vmatprep.mubr.f32.mxu0 0.0
    %486 = vmatmul.mubr.f32.gmra.mrb[0].mxu0 %v373
    %v487 = vpop.f32.mrb[0].mxu0
    %v488 = vadd.f32 0.0, %v487
    %v489 = vpop.f32.mrb[0].mxu0
    %490 = vdwg.mxu0
    %491 = vmatprep.subr.mxu0 0.0
    %492 = vmatpush1.msra.mxu0 %v349
    %493 = vmatprep.subr.mxu0 0.0
    %494 = vmatpush1.msra.mxu0 %v350
    %495 = vmatprep.subr.mxu0 0.0
    %496 = vmatpush1.msra.mxu0 %v351
    %497 = vmatprep.subr.mxu0 0.0
    %498 = vmatpush1.msra.mxu0 %v352
    %499 = vmatprep.subr.mxu0 0.0
    %500 = vmatpush1.msra.mxu0 %v353
    %501 = vmatprep.subr.mxu0 0.0
    %502 = vmatpush1.msra.mxu0 %v354
    %503 = vmatprep.subr.mxu0 0.0
    %504 = vmatpush1.msra.mxu0 %v355
    %505 = vmatprep.subr.mxu0 0.0
    %506 = vmatpush1.msra.mxu0 %v356
    %507 = vmatprep.subr.mxu0 0.0
    %508 = vmatpush1.msra.mxu0 %v357
    %509 = vmatprep.subr.mxu0 0.0
    %510 = vmatpush1.msra.mxu0 %v358
    %511 = vmatprep.subr.mxu0 0.0
    %512 = vmatpush1.msra.mxu0 %v359
    %513 = vmatprep.subr.mxu0 0.0
    %514 = vmatpush1.msra.mxu0 %v360
    %515 = vmatprep.subr.mxu0 0.0
    %516 = vmatpush1.msra.mxu0 %v361
    %517 = vmatprep.subr.mxu0 0.0
    %518 = vmatpush1.msra.mxu0 %v362
    %519 = vmatprep.subr.mxu0 0.0
    %520 = vmatpush1.msra.mxu0 %v363
    %521 = vmatprep.subr.mxu0 0.0
    %522 = vmatpush1.msra.mxu0 %v364
    %523 = vmatprep.subr.mxu0 0.0
    %524 = vmatpush1.msra.mxu0 0.0
    %525 = vmatprep.subr.mxu0 0.0
    %526 = vmatpush1.msra.mxu0 0.0
    %527 = vmatprep.subr.mxu0 0.0
    %528 = vmatpush1.msra.mxu0 0.0
    %529 = vmatprep.subr.mxu0 0.0
    %530 = vmatpush1.msra.mxu0 0.0
    %531 = vmatprep.subr.mxu0 0.0
    %532 = vmatpush1.msra.mxu0 0.0
    %533 = vmatprep.subr.mxu0 0.0
    %534 = vmatpush1.msra.mxu0 0.0
    %535 = vmatprep.subr.mxu0 0.0
    %536 = vmatpush1.msra.mxu0 0.0
    %537 = vmatprep.subr.mxu0 0.0
    %538 = vmatpush1.msra.mxu0 0.0
    %539 = vmatprep.subr.mxu0 0.0
    %540 = vmatpush1.msra.mxu0 0.0
    %541 = vmatprep.subr.mxu0 0.0
    %542 = vmatpush1.msra.mxu0 0.0
    %543 = vmatprep.subr.mxu0 0.0
    %544 = vmatpush1.msra.mxu0 0.0
    %545 = vmatprep.subr.mxu0 0.0
    %546 = vmatpush1.msra.mxu0 0.0
    %547 = vmatprep.subr.mxu0 0.0
    %548 = vmatpush1.msra.mxu0 0.0
    %549 = vmatprep.subr.mxu0 0.0
    %550 = vmatpush1.msra.mxu0 0.0
    %551 = vmatprep.subr.mxu0 0.0
    %552 = vmatpush1.msra.mxu0 0.0
    %553 = vmatprep.subr.mxu0 0.0
    %554 = vmatpush1.msra.mxu0 0.0
    %555 = vmatprep.mubr.f32.mxu0 0.0
    %556 = vmatmul.mubr.f32.gmra.mrb[0].mxu0 %v342
    %v557 = vpop.f32.mrb[0].mxu0
    %v558 = vadd.f32 %v458, %v557
    %v559 = vpop.f32.mrb[0].mxu0
    %560 = vmatprep.mubr.f32.mxu0 0.0
    %561 = vmatmul.mubr.f32.gmra.mrb[0].mxu0 %v343
    %v562 = vpop.f32.mrb[0].mxu0
    %v563 = vadd.f32 %v463, %v562
    %v564 = vpop.f32.mrb[0].mxu0
    %565 = vmatprep.mubr.f32.mxu0 0.0
    %566 = vmatmul.mubr.f32.gmra.mrb[0].mxu0 %v344
    %v567 = vpop.f32.mrb[0].mxu0
    %v568 = vadd.f32 %v468, %v567
    %v569 = vpop.f32.mrb[0].mxu0
    %570 = vmatprep.mubr.f32.mxu0 0.0
    %571 = vmatmul.mubr.f32.gmra.mrb[0].mxu0 %v345
    %v572 = vpop.f32.mrb[0].mxu0
    %v573 = vadd.f32 %v473, %v572
    %v574 = vpop.f32.mrb[0].mxu0
    %575 = vmatprep.mubr.f32.mxu0 0.0
    %576 = vmatmul.mubr.f32.gmra.mrb[0].mxu0 %v346
    %v577 = vpop.f32.mrb[0].mxu0
    %v578 = vadd.f32 %v478, %v577
    %v579 = vpop.f32.mrb[0].mxu0
    %580 = vmatprep.mubr.f32.mxu0 0.0
    %581 = vmatmul.mubr.f32.gmra.mrb[0].mxu0 %v347
    %v582 = vpop.f32.mrb[0].mxu0
    %v583 = vadd.f32 %v483, %v582
    %v584 = vpop.f32.mrb[0].mxu0
    %585 = vmatprep.mubr.f32.mxu0 0.0
    %586 = vmatmul.mubr.f32.gmra.mrb[0].mxu0 %v348
    %v587 = vpop.f32.mrb[0].mxu0
    %v588 = vadd.f32 %v488, %v587
    %v589 = vpop.f32.mrb[0].mxu0
    %590 = vdwg.mxu0
    %s591 = sadd.s32 %s340, 16
    %s592 = scalar_lea.vmem [#allocation2], %s591
    %v593 = vld [vmem:[%s592] sm:$0xff]
    %v594 = vld [vmem:[%s592 + $0x8] sm:$0xff]
    %v595 = vld [vmem:[%s592 + $0x10] sm:$0xff]
    %v596 = vld [vmem:[%s592 + $0x18] sm:$0xff]
    %v597 = vld [vmem:[%s592 + $0x20] sm:$0xff]
    %v598 = vld [vmem:[%s592 + $0x28] sm:$0xff]
    %v599 = vld [vmem:[%s592 + $0x30] sm:$0xff]
    %s600 = scalar_lea.vmem %s3, 256
    %v601 = vld [vmem:[%s600] sm:$0xff]
    %v602 = vld [vmem:[%s600 + $0x8] sm:$0xff]
    %v603 = vld [vmem:[%s600 + $0x10] sm:$0xff]
    %v604 = vld [vmem:[%s600 + $0x18] sm:$0xff]
    %v605 = vld [vmem:[%s600 + $0x20] sm:$0xff]
    %v606 = vld [vmem:[%s600 + $0x28] sm:$0xff]
    %v607 = vld [vmem:[%s600 + $0x30] sm:$0xff]
    %v608 = vld [vmem:[%s600 + $0x38] sm:$0xff]
    %v609 = vld [vmem:[%s600 + $0x40] sm:$0xff]
    %v610 = vld [vmem:[%s600 + $0x48] sm:$0xff]
    %v611 = vld [vmem:[%s600 + $0x50] sm:$0xff]
    %v612 = vld [vmem:[%s600 + $0x58] sm:$0xff]
    %v613 = vld [vmem:[%s600 + $0x60] sm:$0xff]
    %v614 = vld [vmem:[%s600 + $0x68] sm:$0xff]
    %v615 = vld [vmem:[%s600 + $0x70] sm:$0xff]
    %v616 = vld [vmem:[%s600 + $0x78] sm:$0xff]
    %617 = vmatprep.subr.mxu0 0.0
    %618 = vmatpush1.msra.mxu0 %v601
    %619 = vmatprep.subr.mxu0 0.0
    %620 = vmatpush1.msra.mxu0 %v602
    %621 = vmatprep.subr.mxu0 0.0
    %622 = vmatpush1.msra.mxu0 %v603
    %623 = vmatprep.subr.mxu0 0.0
    %624 = vmatpush1.msra.mxu0 %v604
    %625 = vmatprep.subr.mxu0 0.0
    %626 = vmatpush1.msra.mxu0 %v605
    %627 = vmatprep.subr.mxu0 0.0
    %628 = vmatpush1.msra.mxu0 %v606
    %629 = vmatprep.subr.mxu0 0.0
    %630 = vmatpush1.msra.mxu0 %v607
    %631 = vmatprep.subr.mxu0 0.0
    %632 = vmatpush1.msra.mxu0 %v608
    %633 = vmatprep.subr.mxu0 0.0
    %634 = vmatpush1.msra.mxu0 %v609
    %635 = vmatprep.subr.mxu0 0.0
    %636 = vmatpush1.msra.mxu0 %v610
    %637 = vmatprep.subr.mxu0 0.0
    %638 = vmatpush1.msra.mxu0 %v611
    %639 = vmatprep.subr.mxu0 0.0
    %640 = vmatpush1.msra.mxu0 %v612
    %641 = vmatprep.subr.mxu0 0.0
    %642 = vmatpush1.msra.mxu0 %v613
    %643 = vmatprep.subr.mxu0 0.0
    %644 = vmatpush1.msra.mxu0 %v614
    %645 = vmatprep.subr.mxu0 0.0
    %646 = vmatpush1.msra.mxu0 %v615
    %647 = vmatprep.subr.mxu0 0.0
    %648 = vmatpush1.msra.mxu0 %v616
    %649 = vmatprep.subr.mxu0 0.0
    %650 = vmatpush1.msra.mxu0 0.0
    %651 = vmatprep.subr.mxu0 0.0
    %652 = vmatpush1.msra.mxu0 0.0
    %653 = vmatprep.subr.mxu0 0.0
    %654 = vmatpush1.msra.mxu0 0.0
    %655 = vmatprep.subr.mxu0 0.0
    %656 = vmatpush1.msra.mxu0 0.0
    %657 = vmatprep.subr.mxu0 0.0
    %658 = vmatpush1.msra.mxu0 0.0
    %659 = vmatprep.subr.mxu0 0.0
    %660 = vmatpush1.msra.mxu0 0.0
    %661 = vmatprep.subr.mxu0 0.0
    %662 = vmatpush1.msra.mxu0 0.0
    %663 = vmatprep.subr.mxu0 0.0
    %664 = vmatpush1.msra.mxu0 0.0
    %665 = vmatprep.subr.mxu0 0.0
    %666 = vmatpush1.msra.mxu0 0.0
    %667 = vmatprep.subr.mxu0 0.0
    %668 = vmatpush1.msra.mxu0 0.0
    %669 = vmatprep.subr.mxu0 0.0
    %670 = vmatpush1.msra.mxu0 0.0
    %671 = vmatprep.subr.mxu0 0.0
    %672 = vmatpush1.msra.mxu0 0.0
    %673 = vmatprep.subr.mxu0 0.0
    %674 = vmatpush1.msra.mxu0 0.0
    %675 = vmatprep.subr.mxu0 0.0
    %676 = vmatpush1.msra.mxu0 0.0
    %677 = vmatprep.subr.mxu0 0.0
    %678 = vmatpush1.msra.mxu0 0.0
    %679 = vmatprep.subr.mxu0 0.0
    %680 = vmatpush1.msra.mxu0 0.0
    %681 = vmatprep.mubr.f32.mxu0 0.0
    %682 = vmatmul.mubr.f32.gmra.mrb[0].mxu0 %v593
    %v683 = vpop.f32.mrb[0].mxu0
    %v684 = vadd.f32 0.0, %v683
    %v685 = vpop.f32.mrb[0].mxu0
    %686 = vmatprep.mubr.f32.mxu0 0.0
    %687 = vmatmul.mubr.f32.gmra.mrb[0].mxu0 %v594
    %v688 = vpop.f32.mrb[0].mxu0
    %v689 = vadd.f32 0.0, %v688
    %v690 = vpop.f32.mrb[0].mxu0
    %691 = vmatprep.mubr.f32.mxu0 0.0
    %692 = vmatmul.mubr.f32.gmra.mrb[0].mxu0 %v595
    %v693 = vpop.f32.mrb[0].mxu0
    %v694 = vadd.f32 0.0, %v693
    %v695 = vpop.f32.mrb[0].mxu0
    %696 = vmatprep.mubr.f32.mxu0 0.0
    %697 = vmatmul.mubr.f32.gmra.mrb[0].mxu0 %v596
    %v698 = vpop.f32.mrb[0].mxu0
    %v699 = vadd.f32 0.0, %v698
    %v700 = vpop.f32.mrb[0].mxu0
    %701 = vmatprep.mubr.f32.mxu0 0.0
    %702 = vmatmul.mubr.f32.gmra.mrb[0].mxu0 %v597
    %v703 = vpop.f32.mrb[0].mxu0
    %v704 = vadd.f32 0.0, %v703
    %v705 = vpop.f32.mrb[0].mxu0
    %706 = vmatprep.mubr.f32.mxu0 0.0
    %707 = vmatmul.mubr.f32.gmra.mrb[0].mxu0 %v598
    %v708 = vpop.f32.mrb[0].mxu0
    %v709 = vadd.f32 0.0, %v708
    %v710 = vpop.f32.mrb[0].mxu0
    %711 = vmatprep.mubr.f32.mxu0 0.0
    %712 = vmatmul.mubr.f32.gmra.mrb[0].mxu0 %v599
    %v713 = vpop.f32.mrb[0].mxu0
    %v714 = vadd.f32 0.0, %v713
    %v715 = vpop.f32.mrb[0].mxu0
    %716 = vdwg.mxu0
    %v717 = vadd.f32 %v558, %v684
    %v718 = vadd.f32 %v563, %v689
    %v719 = vadd.f32 %v568, %v694
    %v720 = vadd.f32 %v573, %v699
    %v721 = vadd.f32 %v578, %v704
    %v722 = vadd.f32 %v583, %v709
    %v723 = vadd.f32 %v588, %v714
    %s724 = sadd.s32 %s340, 24
    %s725 = scalar_lea.vmem [#allocation2], %s724
    %v726 = vld [vmem:[%s725] sm:$0xff]
    %v727 = vld [vmem:[%s725 + $0x8] sm:$0xff]
    %v728 = vld [vmem:[%s725 + $0x10] sm:$0xff]
    %v729 = vld [vmem:[%s725 + $0x18] sm:$0xff]
    %v730 = vld [vmem:[%s725 + $0x20] sm:$0xff]
    %v731 = vld [vmem:[%s725 + $0x28] sm:$0xff]
    %v732 = vld [vmem:[%s725 + $0x30] sm:$0xff]
    %s733 = scalar_lea.vmem %s3, 384
    %v734 = vld [vmem:[%s733] sm:$0xff]
    %v735 = vld [vmem:[%s733 + $0x8] sm:$0xff]
    %v736 = vld [vmem:[%s733 + $0x10] sm:$0xff]
    %v737 = vld [vmem:[%s733 + $0x18] sm:$0xff]
    %v738 = vld [vmem:[%s733 + $0x20] sm:$0xff]
    %v739 = vld [vmem:[%s733 + $0x28] sm:$0xff]
    %v740 = vld [vmem:[%s733 + $0x30] sm:$0xff]
    %v741 = vld [vmem:[%s733 + $0x38] sm:$0xff]
    %v742 = vld [vmem:[%s733 + $0x40] sm:$0xff]
    %v743 = vld [vmem:[%s733 + $0x48] sm:$0xff]
    %v744 = vld [vmem:[%s733 + $0x50] sm:$0xff]
    %v745 = vld [vmem:[%s733 + $0x58] sm:$0xff]
    %v746 = vld [vmem:[%s733 + $0x60] sm:$0xff]
    %v747 = vld [vmem:[%s733 + $0x68] sm:$0xff]
    %v748 = vld [vmem:[%s733 + $0x70] sm:$0xff]
    %v749 = vld [vmem:[%s733 + $0x78] sm:$0xff]
    %750 = vmatprep.subr.mxu0 0.0
    %751 = vmatpush1.msra.mxu0 %v734
    %752 = vmatprep.subr.mxu0 0.0
    %753 = vmatpush1.msra.mxu0 %v735
    %754 = vmatprep.subr.mxu0 0.0
    %755 = vmatpush1.msra.mxu0 %v736
    %756 = vmatprep.subr.mxu0 0.0
    %757 = vmatpush1.msra.mxu0 %v737
    %758 = vmatprep.subr.mxu0 0.0
    %759 = vmatpush1.msra.mxu0 %v738
    %760 = vmatprep.subr.mxu0 0.0
    %761 = vmatpush1.msra.mxu0 %v739
    %762 = vmatprep.subr.mxu0 0.0
    %763 = vmatpush1.msra.mxu0 %v740
    %764 = vmatprep.subr.mxu0 0.0
    %765 = vmatpush1.msra.mxu0 %v741
    %766 = vmatprep.subr.mxu0 0.0
    %767 = vmatpush1.msra.mxu0 %v742
    %768 = vmatprep.subr.mxu0 0.0
    %769 = vmatpush1.msra.mxu0 %v743
    %770 = vmatprep.subr.mxu0 0.0
    %771 = vmatpush1.msra.mxu0 %v744
    %772 = vmatprep.subr.mxu0 0.0
    %773 = vmatpush1.msra.mxu0 %v745
    %774 = vmatprep.subr.mxu0 0.0
    %775 = vmatpush1.msra.mxu0 %v746
    %776 = vmatprep.subr.mxu0 0.0
    %777 = vmatpush1.msra.mxu0 %v747
    %778 = vmatprep.subr.mxu0 0.0
    %779 = vmatpush1.msra.mxu0 %v748
    %780 = vmatprep.subr.mxu0 0.0
    %781 = vmatpush1.msra.mxu0 %v749
    %782 = vmatprep.subr.mxu0 0.0
    %783 = vmatpush1.msra.mxu0 0.0
    %784 = vmatprep.subr.mxu0 0.0
    %785 = vmatpush1.msra.mxu0 0.0
    %786 = vmatprep.subr.mxu0 0.0
    %787 = vmatpush1.msra.mxu0 0.0
    %788 = vmatprep.subr.mxu0 0.0
    %789 = vmatpush1.msra.mxu0 0.0
    %790 = vmatprep.subr.mxu0 0.0
    %791 = vmatpush1.msra.mxu0 0.0
    %792 = vmatprep.subr.mxu0 0.0
    %793 = vmatpush1.msra.mxu0 0.0
    %794 = vmatprep.subr.mxu0 0.0
    %795 = vmatpush1.msra.mxu0 0.0
    %796 = vmatprep.subr.mxu0 0.0
    %797 = vmatpush1.msra.mxu0 0.0
    %798 = vmatprep.subr.mxu0 0.0
    %799 = vmatpush1.msra.mxu0 0.0
    %800 = vmatprep.subr.mxu0 0.0
    %801 = vmatpush1.msra.mxu0 0.0
    %802 = vmatprep.subr.mxu0 0.0
    %803 = vmatpush1.msra.mxu0 0.0
    %804 = vmatprep.subr.mxu0 0.0
    %805 = vmatpush1.msra.mxu0 0.0
    %806 = vmatprep.subr.mxu0 0.0
    %807 = vmatpush1.msra.mxu0 0.0
    %808 = vmatprep.subr.mxu0 0.0
    %809 = vmatpush1.msra.mxu0 0.0
    %810 = vmatprep.subr.mxu0 0.0
    %811 = vmatpush1.msra.mxu0 0.0
    %812 = vmatprep.subr.mxu0 0.0
    %813 = vmatpush1.msra.mxu0 0.0
    %814 = vmatprep.mubr.f32.mxu0 0.0
    %815 = vmatmul.mubr.f32.gmra.mrb[0].mxu0 %v726
    %v816 = vpop.f32.mrb[0].mxu0
    %v817 = vadd.f32 0.0, %v816
    %v818 = vpop.f32.mrb[0].mxu0
    %819 = vmatprep.mubr.f32.mxu0 0.0
    %820 = vmatmul.mubr.f32.gmra.mrb[0].mxu0 %v727
    %v821 = vpop.f32.mrb[0].mxu0
    %v822 = vadd.f32 0.0, %v821
    %v823 = vpop.f32.mrb[0].mxu0
    %824 = vmatprep.mubr.f32.mxu0 0.0
    %825 = vmatmul.mubr.f32.gmra.mrb[0].mxu0 %v728
    %v826 = vpop.f32.mrb[0].mxu0
    %v827 = vadd.f32 0.0, %v826
    %v828 = vpop.f32.mrb[0].mxu0
    %829 = vmatprep.mubr.f32.mxu0 0.0
    %830 = vmatmul.mubr.f32.gmra.mrb[0].mxu0 %v729
    %v831 = vpop.f32.mrb[0].mxu0
    %v832 = vadd.f32 0.0, %v831
    %v833 = vpop.f32.mrb[0].mxu0
    %834 = vmatprep.mubr.f32.mxu0 0.0
    %835 = vmatmul.mubr.f32.gmra.mrb[0].mxu0 %v730
    %v836 = vpop.f32.mrb[0].mxu0
    %v837 = vadd.f32 0.0, %v836
    %v838 = vpop.f32.mrb[0].mxu0
    %839 = vmatprep.mubr.f32.mxu0 0.0
    %840 = vmatmul.mubr.f32.gmra.mrb[0].mxu0 %v731
    %v841 = vpop.f32.mrb[0].mxu0
    %v842 = vadd.f32 0.0, %v841
    %v843 = vpop.f32.mrb[0].mxu0
    %844 = vmatprep.mubr.f32.mxu0 0.0
    %845 = vmatmul.mubr.f32.gmra.mrb[0].mxu0 %v732
    %v846 = vpop.f32.mrb[0].mxu0
    %v847 = vadd.f32 0.0, %v846
    %v848 = vpop.f32.mrb[0].mxu0
    %849 = vdwg.mxu0
    %v850 = vadd.f32 %v717, %v817
    %v851 = vadd.f32 %v718, %v822
    %v852 = vadd.f32 %v719, %v827
    %v853 = vadd.f32 %v720, %v832
    %v854 = vadd.f32 %v721, %v837
    %v855 = vadd.f32 %v722, %v842
    %v856 = vadd.f32 %v723, %v847
    %s857 = sadd.s32 %s340, 32
    %s858 = scalar_lea.vmem [#allocation2], %s857
    %v859 = vld [vmem:[%s858] sm:$0xff]
    %v860 = vld [vmem:[%s858 + $0x8] sm:$0xff]
    %v861 = vld [vmem:[%s858 + $0x10] sm:$0xff]
    %v862 = vld [vmem:[%s858 + $0x18] sm:$0xff]
    %v863 = vld [vmem:[%s858 + $0x20] sm:$0xff]
    %v864 = vld [vmem:[%s858 + $0x28] sm:$0xff]
    %v865 = vld [vmem:[%s858 + $0x30] sm:$0xff]
    %s866 = scalar_lea.vmem %s3, 512
    %v867 = vld [vmem:[%s866] sm:$0xff]
    %v868 = vld [vmem:[%s866 + $0x8] sm:$0xff]
    %v869 = vld [vmem:[%s866 + $0x10] sm:$0xff]
    %v870 = vld [vmem:[%s866 + $0x18] sm:$0xff]
    %v871 = vld [vmem:[%s866 + $0x20] sm:$0xff]
    %v872 = vld [vmem:[%s866 + $0x28] sm:$0xff]
    %v873 = vld [vmem:[%s866 + $0x30] sm:$0xff]
    %v874 = vld [vmem:[%s866 + $0x38] sm:$0xff]
    %v875 = vld [vmem:[%s866 + $0x40] sm:$0xff]
    %v876 = vld [vmem:[%s866 + $0x48] sm:$0xff]
    %v877 = vld [vmem:[%s866 + $0x50] sm:$0xff]
    %v878 = vld [vmem:[%s866 + $0x58] sm:$0xff]
    %v879 = vld [vmem:[%s866 + $0x60] sm:$0xff]
    %v880 = vld [vmem:[%s866 + $0x68] sm:$0xff]
    %v881 = vld [vmem:[%s866 + $0x70] sm:$0xff]
    %v882 = vld [vmem:[%s866 + $0x78] sm:$0xff]
    %883 = vmatprep.subr.mxu0 0.0
    %884 = vmatpush1.msra.mxu0 %v867
    %885 = vmatprep.subr.mxu0 0.0
    %886 = vmatpush1.msra.mxu0 %v868
    %887 = vmatprep.subr.mxu0 0.0
    %888 = vmatpush1.msra.mxu0 %v869
    %889 = vmatprep.subr.mxu0 0.0
    %890 = vmatpush1.msra.mxu0 %v870
    %891 = vmatprep.subr.mxu0 0.0
    %892 = vmatpush1.msra.mxu0 %v871
    %893 = vmatprep.subr.mxu0 0.0
    %894 = vmatpush1.msra.mxu0 %v872
    %895 = vmatprep.subr.mxu0 0.0
    %896 = vmatpush1.msra.mxu0 %v873
    %897 = vmatprep.subr.mxu0 0.0
    %898 = vmatpush1.msra.mxu0 %v874
    %899 = vmatprep.subr.mxu0 0.0
    %900 = vmatpush1.msra.mxu0 %v875
    %901 = vmatprep.subr.mxu0 0.0
    %902 = vmatpush1.msra.mxu0 %v876
    %903 = vmatprep.subr.mxu0 0.0
    %904 = vmatpush1.msra.mxu0 %v877
    %905 = vmatprep.subr.mxu0 0.0
    %906 = vmatpush1.msra.mxu0 %v878
    %907 = vmatprep.subr.mxu0 0.0
    %908 = vmatpush1.msra.mxu0 %v879
    %909 = vmatprep.subr.mxu0 0.0
    %910 = vmatpush1.msra.mxu0 %v880
    %911 = vmatprep.subr.mxu0 0.0
    %912 = vmatpush1.msra.mxu0 %v881
    %913 = vmatprep.subr.mxu0 0.0
    %914 = vmatpush1.msra.mxu0 %v882
    %915 = vmatprep.subr.mxu0 0.0
    %916 = vmatpush1.msra.mxu0 0.0
    %917 = vmatprep.subr.mxu0 0.0
    %918 = vmatpush1.msra.mxu0 0.0
    %919 = vmatprep.subr.mxu0 0.0
    %920 = vmatpush1.msra.mxu0 0.0
    %921 = vmatprep.subr.mxu0 0.0
    %922 = vmatpush1.msra.mxu0 0.0
    %923 = vmatprep.subr.mxu0 0.0
    %924 = vmatpush1.msra.mxu0 0.0
    %925 = vmatprep.subr.mxu0 0.0
    %926 = vmatpush1.msra.mxu0 0.0
    %927 = vmatprep.subr.mxu0 0.0
    %928 = vmatpush1.msra.mxu0 0.0
    %929 = vmatprep.subr.mxu0 0.0
    %930 = vmatpush1.msra.mxu0 0.0
    %931 = vmatprep.subr.mxu0 0.0
    %932 = vmatpush1.msra.mxu0 0.0
    %933 = vmatprep.subr.mxu0 0.0
    %934 = vmatpush1.msra.mxu0 0.0
    %935 = vmatprep.subr.mxu0 0.0
    %936 = vmatpush1.msra.mxu0 0.0
    %937 = vmatprep.subr.mxu0 0.0
    %938 = vmatpush1.msra.mxu0 0.0
    %939 = vmatprep.subr.mxu0 0.0
    %940 = vmatpush1.msra.mxu0 0.0
    %941 = vmatprep.subr.mxu0 0.0
    %942 = vmatpush1.msra.mxu0 0.0
    %943 = vmatprep.subr.mxu0 0.0
    %944 = vmatpush1.msra.mxu0 0.0
    %945 = vmatprep.subr.mxu0 0.0
    %946 = vmatpush1.msra.mxu0 0.0
    %947 = vmatprep.mubr.f32.mxu0 0.0
    %948 = vmatmul.mubr.f32.gmra.mrb[0].mxu0 %v859
    %v949 = vpop.f32.mrb[0].mxu0
    %v950 = vadd.f32 0.0, %v949
    %v951 = vpop.f32.mrb[0].mxu0
    %952 = vmatprep.mubr.f32.mxu0 0.0
    %953 = vmatmul.mubr.f32.gmra.mrb[0].mxu0 %v860
    %v954 = vpop.f32.mrb[0].mxu0
    %v955 = vadd.f32 0.0, %v954
    %v956 = vpop.f32.mrb[0].mxu0
    %957 = vmatprep.mubr.f32.mxu0 0.0
    %958 = vmatmul.mubr.f32.gmra.mrb[0].mxu0 %v861
    %v959 = vpop.f32.mrb[0].mxu0
    %v960 = vadd.f32 0.0, %v959
    %v961 = vpop.f32.mrb[0].mxu0
    %962 = vmatprep.mubr.f32.mxu0 0.0
    %963 = vmatmul.mubr.f32.gmra.mrb[0].mxu0 %v862
    %v964 = vpop.f32.mrb[0].mxu0
    %v965 = vadd.f32 0.0, %v964
    %v966 = vpop.f32.mrb[0].mxu0
    %967 = vmatprep.mubr.f32.mxu0 0.0
    %968 = vmatmul.mubr.f32.gmra.mrb[0].mxu0 %v863
    %v969 = vpop.f32.mrb[0].mxu0
    %v970 = vadd.f32 0.0, %v969
    %v971 = vpop.f32.mrb[0].mxu0
    %972 = vmatprep.mubr.f32.mxu0 0.0
    %973 = vmatmul.mubr.f32.gmra.mrb[0].mxu0 %v864
    %v974 = vpop.f32.mrb[0].mxu0
    %v975 = vadd.f32 0.0, %v974
    %v976 = vpop.f32.mrb[0].mxu0
    %977 = vmatprep.mubr.f32.mxu0 0.0
    %978 = vmatmul.mubr.f32.gmra.mrb[0].mxu0 %v865
    %v979 = vpop.f32.mrb[0].mxu0
    %v980 = vadd.f32 0.0, %v979
    %v981 = vpop.f32.mrb[0].mxu0
    %982 = vdwg.mxu0
    %v983 = vadd.f32 %v850, %v950
    %v984 = vadd.f32 %v851, %v955
    %v985 = vadd.f32 %v852, %v960
    %v986 = vadd.f32 %v853, %v965
    %v987 = vadd.f32 %v854, %v970
    %v988 = vadd.f32 %v855, %v975
    %v989 = vadd.f32 %v856, %v980
    %s990 = sadd.s32 %s340, 112
    %s991 = scalar_lea.vmem [#allocation2], %s990
    %v992 = vld [vmem:[%s991] sm:$0xff]
    %v993 = vld [vmem:[%s991 + $0x8] sm:$0xff]
    %v994 = vld [vmem:[%s991 + $0x10] sm:$0xff]
    %v995 = vld [vmem:[%s991 + $0x18] sm:$0xff]
    %v996 = vld [vmem:[%s991 + $0x20] sm:$0xff]
    %v997 = vld [vmem:[%s991 + $0x28] sm:$0xff]
    %v998 = vld [vmem:[%s991 + $0x30] sm:$0xff]
    %s999 = scalar_lea.vmem %s3, 640
    %v1000 = vld [vmem:[%s999] sm:$0xff]
    %v1001 = vld [vmem:[%s999 + $0x8] sm:$0xff]
    %v1002 = vld [vmem:[%s999 + $0x10] sm:$0xff]
    %v1003 = vld [vmem:[%s999 + $0x18] sm:$0xff]
    %v1004 = vld [vmem:[%s999 + $0x20] sm:$0xff]
    %v1005 = vld [vmem:[%s999 + $0x28] sm:$0xff]
    %v1006 = vld [vmem:[%s999 + $0x30] sm:$0xff]
    %v1007 = vld [vmem:[%s999 + $0x38] sm:$0xff]
    %v1008 = vld [vmem:[%s999 + $0x40] sm:$0xff]
    %v1009 = vld [vmem:[%s999 + $0x48] sm:$0xff]
    %v1010 = vld [vmem:[%s999 + $0x50] sm:$0xff]
    %v1011 = vld [vmem:[%s999 + $0x58] sm:$0xff]
    %v1012 = vld [vmem:[%s999 + $0x60] sm:$0xff]
    %v1013 = vld [vmem:[%s999 + $0x68] sm:$0xff]
    %v1014 = vld [vmem:[%s999 + $0x70] sm:$0xff]
    %v1015 = vld [vmem:[%s999 + $0x78] sm:$0xff]
    %1016 = vmatprep.subr.mxu0 0.0
    %1017 = vmatpush1.msra.mxu0 %v1000
    %1018 = vmatprep.subr.mxu0 0.0
    %1019 = vmatpush1.msra.mxu0 %v1001
    %1020 = vmatprep.subr.mxu0 0.0
    %1021 = vmatpush1.msra.mxu0 %v1002
    %1022 = vmatprep.subr.mxu0 0.0
    %1023 = vmatpush1.msra.mxu0 %v1003
    %1024 = vmatprep.subr.mxu0 0.0
    %1025 = vmatpush1.msra.mxu0 %v1004
    %1026 = vmatprep.subr.mxu0 0.0
    %1027 = vmatpush1.msra.mxu0 %v1005
    %1028 = vmatprep.subr.mxu0 0.0
    %1029 = vmatpush1.msra.mxu0 %v1006
    %1030 = vmatprep.subr.mxu0 0.0
    %1031 = vmatpush1.msra.mxu0 %v1007
    %1032 = vmatprep.subr.mxu0 0.0
    %1033 = vmatpush1.msra.mxu0 %v1008
    %1034 = vmatprep.subr.mxu0 0.0
    %1035 = vmatpush1.msra.mxu0 %v1009
    %1036 = vmatprep.subr.mxu0 0.0
    %1037 = vmatpush1.msra.mxu0 %v1010
    %1038 = vmatprep.subr.mxu0 0.0
    %1039 = vmatpush1.msra.mxu0 %v1011
    %1040 = vmatprep.subr.mxu0 0.0
    %1041 = vmatpush1.msra.mxu0 %v1012
    %1042 = vmatprep.subr.mxu0 0.0
    %1043 = vmatpush1.msra.mxu0 %v1013
    %1044 = vmatprep.subr.mxu0 0.0
    %1045 = vmatpush1.msra.mxu0 %v1014
    %1046 = vmatprep.subr.mxu0 0.0
    %1047 = vmatpush1.msra.mxu0 %v1015
    %1048 = vmatprep.subr.mxu0 0.0
    %1049 = vmatpush1.msra.mxu0 0.0
    %1050 = vmatprep.subr.mxu0 0.0
    %1051 = vmatpush1.msra.mxu0 0.0
    %1052 = vmatprep.subr.mxu0 0.0
    %1053 = vmatpush1.msra.mxu0 0.0
    %1054 = vmatprep.subr.mxu0 0.0
    %1055 = vmatpush1.msra.mxu0 0.0
    %1056 = vmatprep.subr.mxu0 0.0
    %1057 = vmatpush1.msra.mxu0 0.0
    %1058 = vmatprep.subr.mxu0 0.0
    %1059 = vmatpush1.msra.mxu0 0.0
    %1060 = vmatprep.subr.mxu0 0.0
    %1061 = vmatpush1.msra.mxu0 0.0
    %1062 = vmatprep.subr.mxu0 0.0
    %1063 = vmatpush1.msra.mxu0 0.0
    %1064 = vmatprep.subr.mxu0 0.0
    %1065 = vmatpush1.msra.mxu0 0.0
    %1066 = vmatprep.subr.mxu0 0.0
    %1067 = vmatpush1.msra.mxu0 0.0
    %1068 = vmatprep.subr.mxu0 0.0
    %1069 = vmatpush1.msra.mxu0 0.0
    %1070 = vmatprep.subr.mxu0 0.0
    %1071 = vmatpush1.msra.mxu0 0.0
    %1072 = vmatprep.subr.mxu0 0.0
    %1073 = vmatpush1.msra.mxu0 0.0
    %1074 = vmatprep.subr.mxu0 0.0
    %1075 = vmatpush1.msra.mxu0 0.0
    %1076 = vmatprep.subr.mxu0 0.0
    %1077 = vmatpush1.msra.mxu0 0.0
    %1078 = vmatprep.subr.mxu0 0.0
    %1079 = vmatpush1.msra.mxu0 0.0
    %1080 = vmatprep.mubr.f32.mxu0 0.0
    %1081 = vmatmul.mubr.f32.gmra.mrb[0].mxu0 %v992
    %v1082 = vpop.f32.mrb[0].mxu0
    %v1083 = vadd.f32 0.0, %v1082
    %v1084 = vpop.f32.mrb[0].mxu0
    %1085 = vmatprep.mubr.f32.mxu0 0.0
    %1086 = vmatmul.mubr.f32.gmra.mrb[0].mxu0 %v993
    %v1087 = vpop.f32.mrb[0].mxu0
    %v1088 = vadd.f32 0.0, %v1087
    %v1089 = vpop.f32.mrb[0].mxu0
    %1090 = vmatprep.mubr.f32.mxu0 0.0
    %1091 = vmatmul.mubr.f32.gmra.mrb[0].mxu0 %v994
    %v1092 = vpop.f32.mrb[0].mxu0
    %v1093 = vadd.f32 0.0, %v1092
    %v1094 = vpop.f32.mrb[0].mxu0
    %1095 = vmatprep.mubr.f32.mxu0 0.0
    %1096 = vmatmul.mubr.f32.gmra.mrb[0].mxu0 %v995
    %v1097 = vpop.f32.mrb[0].mxu0
    %v1098 = vadd.f32 0.0, %v1097
    %v1099 = vpop.f32.mrb[0].mxu0
    %1100 = vmatprep.mubr.f32.mxu0 0.0
    %1101 = vmatmul.mubr.f32.gmra.mrb[0].mxu0 %v996
    %v1102 = vpop.f32.mrb[0].mxu0
    %v1103 = vadd.f32 0.0, %v1102
    %v1104 = vpop.f32.mrb[0].mxu0
    %1105 = vmatprep.mubr.f32.mxu0 0.0
    %1106 = vmatmul.mubr.f32.gmra.mrb[0].mxu0 %v997
    %v1107 = vpop.f32.mrb[0].mxu0
    %v1108 = vadd.f32 0.0, %v1107
    %v1109 = vpop.f32.mrb[0].mxu0
    %1110 = vmatprep.mubr.f32.mxu0 0.0
    %1111 = vmatmul.mubr.f32.gmra.mrb[0].mxu0 %v998
    %v1112 = vpop.f32.mrb[0].mxu0
    %v1113 = vadd.f32 0.0, %v1112
    %v1114 = vpop.f32.mrb[0].mxu0
    %1115 = vdwg.mxu0
    %v1116 = vadd.f32 %v983, %v1083
    %v1117 = vadd.f32 %v984, %v1088
    %v1118 = vadd.f32 %v985, %v1093
    %v1119 = vadd.f32 %v986, %v1098
    %v1120 = vadd.f32 %v987, %v1103
    %v1121 = vadd.f32 %v988, %v1108
    %v1122 = vadd.f32 %v989, %v1113
    %s1123 = sadd.s32 %s340, 120
    %s1124 = scalar_lea.vmem [#allocation2], %s1123
    %v1125 = vld [vmem:[%s1124] sm:$0xff]
    %v1126 = vld [vmem:[%s1124 + $0x8] sm:$0xff]
    %v1127 = vld [vmem:[%s1124 + $0x10] sm:$0xff]
    %v1128 = vld [vmem:[%s1124 + $0x18] sm:$0xff]
    %v1129 = vld [vmem:[%s1124 + $0x20] sm:$0xff]
    %v1130 = vld [vmem:[%s1124 + $0x28] sm:$0xff]
    %v1131 = vld [vmem:[%s1124 + $0x30] sm:$0xff]
    %s1132 = scalar_lea.vmem %s3, 768
    %v1133 = vld [vmem:[%s1132] sm:$0xff]
    %v1134 = vld [vmem:[%s1132 + $0x8] sm:$0xff]
    %v1135 = vld [vmem:[%s1132 + $0x10] sm:$0xff]
    %v1136 = vld [vmem:[%s1132 + $0x18] sm:$0xff]
    %v1137 = vld [vmem:[%s1132 + $0x20] sm:$0xff]
    %v1138 = vld [vmem:[%s1132 + $0x28] sm:$0xff]
    %v1139 = vld [vmem:[%s1132 + $0x30] sm:$0xff]
    %v1140 = vld [vmem:[%s1132 + $0x38] sm:$0xff]
    %v1141 = vld [vmem:[%s1132 + $0x40] sm:$0xff]
    %v1142 = vld [vmem:[%s1132 + $0x48] sm:$0xff]
    %v1143 = vld [vmem:[%s1132 + $0x50] sm:$0xff]
    %v1144 = vld [vmem:[%s1132 + $0x58] sm:$0xff]
    %v1145 = vld [vmem:[%s1132 + $0x60] sm:$0xff]
    %v1146 = vld [vmem:[%s1132 + $0x68] sm:$0xff]
    %v1147 = vld [vmem:[%s1132 + $0x70] sm:$0xff]
    %v1148 = vld [vmem:[%s1132 + $0x78] sm:$0xff]
    %1149 = vmatprep.subr.mxu0 0.0
    %1150 = vmatpush1.msra.mxu0 %v1133
    %1151 = vmatprep.subr.mxu0 0.0
    %1152 = vmatpush1.msra.mxu0 %v1134
    %1153 = vmatprep.subr.mxu0 0.0
    %1154 = vmatpush1.msra.mxu0 %v1135
    %1155 = vmatprep.subr.mxu0 0.0
    %1156 = vmatpush1.msra.mxu0 %v1136
    %1157 = vmatprep.subr.mxu0 0.0
    %1158 = vmatpush1.msra.mxu0 %v1137
    %1159 = vmatprep.subr.mxu0 0.0
    %1160 = vmatpush1.msra.mxu0 %v1138
    %1161 = vmatprep.subr.mxu0 0.0
    %1162 = vmatpush1.msra.mxu0 %v1139
    %1163 = vmatprep.subr.mxu0 0.0
    %1164 = vmatpush1.msra.mxu0 %v1140
    %1165 = vmatprep.subr.mxu0 0.0
    %1166 = vmatpush1.msra.mxu0 %v1141
    %1167 = vmatprep.subr.mxu0 0.0
    %1168 = vmatpush1.msra.mxu0 %v1142
    %1169 = vmatprep.subr.mxu0 0.0
    %1170 = vmatpush1.msra.mxu0 %v1143
    %1171 = vmatprep.subr.mxu0 0.0
    %1172 = vmatpush1.msra.mxu0 %v1144
    %1173 = vmatprep.subr.mxu0 0.0
    %1174 = vmatpush1.msra.mxu0 %v1145
    %1175 = vmatprep.subr.mxu0 0.0
    %1176 = vmatpush1.msra.mxu0 %v1146
    %1177 = vmatprep.subr.mxu0 0.0
    %1178 = vmatpush1.msra.mxu0 %v1147
    %1179 = vmatprep.subr.mxu0 0.0
    %1180 = vmatpush1.msra.mxu0 %v1148
    %1181 = vmatprep.subr.mxu0 0.0
    %1182 = vmatpush1.msra.mxu0 0.0
    %1183 = vmatprep.subr.mxu0 0.0
    %1184 = vmatpush1.msra.mxu0 0.0
    %1185 = vmatprep.subr.mxu0 0.0
    %1186 = vmatpush1.msra.mxu0 0.0
    %1187 = vmatprep.subr.mxu0 0.0
    %1188 = vmatpush1.msra.mxu0 0.0
    %1189 = vmatprep.subr.mxu0 0.0
    %1190 = vmatpush1.msra.mxu0 0.0
    %1191 = vmatprep.subr.mxu0 0.0
    %1192 = vmatpush1.msra.mxu0 0.0
    %1193 = vmatprep.subr.mxu0 0.0
    %1194 = vmatpush1.msra.mxu0 0.0
    %1195 = vmatprep.subr.mxu0 0.0
    %1196 = vmatpush1.msra.mxu0 0.0
    %1197 = vmatprep.subr.mxu0 0.0
    %1198 = vmatpush1.msra.mxu0 0.0
    %1199 = vmatprep.subr.mxu0 0.0
    %1200 = vmatpush1.msra.mxu0 0.0
    %1201 = vmatprep.subr.mxu0 0.0
    %1202 = vmatpush1.msra.mxu0 0.0
    %1203 = vmatprep.subr.mxu0 0.0
    %1204 = vmatpush1.msra.mxu0 0.0
    %1205 = vmatprep.subr.mxu0 0.0
    %1206 = vmatpush1.msra.mxu0 0.0
    %1207 = vmatprep.subr.mxu0 0.0
    %1208 = vmatpush1.msra.mxu0 0.0
    %1209 = vmatprep.subr.mxu0 0.0
    %1210 = vmatpush1.msra.mxu0 0.0
    %1211 = vmatprep.subr.mxu0 0.0
    %1212 = vmatpush1.msra.mxu0 0.0
    %1213 = vmatprep.mubr.f32.mxu0 0.0
    %1214 = vmatmul.mubr.f32.gmra.mrb[0].mxu0 %v1125
    %v1215 = vpop.f32.mrb[0].mxu0
    %v1216 = vadd.f32 0.0, %v1215
    %v1217 = vpop.f32.mrb[0].mxu0
    %1218 = vmatprep.mubr.f32.mxu0 0.0
    %1219 = vmatmul.mubr.f32.gmra.mrb[0].mxu0 %v1126
    %v1220 = vpop.f32.mrb[0].mxu0
    %v1221 = vadd.f32 0.0, %v1220
    %v1222 = vpop.f32.mrb[0].mxu0
    %1223 = vmatprep.mubr.f32.mxu0 0.0
    %1224 = vmatmul.mubr.f32.gmra.mrb[0].mxu0 %v1127
    %v1225 = vpop.f32.mrb[0].mxu0
    %v1226 = vadd.f32 0.0, %v1225
    %v1227 = vpop.f32.mrb[0].mxu0
    %1228 = vmatprep.mubr.f32.mxu0 0.0
    %1229 = vmatmul.mubr.f32.gmra.mrb[0].mxu0 %v1128
    %v1230 = vpop.f32.mrb[0].mxu0
    %v1231 = vadd.f32 0.0, %v1230
    %v1232 = vpop.f32.mrb[0].mxu0
    %1233 = vmatprep.mubr.f32.mxu0 0.0
    %1234 = vmatmul.mubr.f32.gmra.mrb[0].mxu0 %v1129
    %v1235 = vpop.f32.mrb[0].mxu0
    %v1236 = vadd.f32 0.0, %v1235
    %v1237 = vpop.f32.mrb[0].mxu0
    %1238 = vmatprep.mubr.f32.mxu0 0.0
    %1239 = vmatmul.mubr.f32.gmra.mrb[0].mxu0 %v1130
    %v1240 = vpop.f32.mrb[0].mxu0
    %v1241 = vadd.f32 0.0, %v1240
    %v1242 = vpop.f32.mrb[0].mxu0
    %1243 = vmatprep.mubr.f32.mxu0 0.0
    %1244 = vmatmul.mubr.f32.gmra.mrb[0].mxu0 %v1131
    %v1245 = vpop.f32.mrb[0].mxu0
    %v1246 = vadd.f32 0.0, %v1245
    %v1247 = vpop.f32.mrb[0].mxu0
    %1248 = vdwg.mxu0
    %v1249 = vadd.f32 %v1116, %v1216
    %v1250 = vadd.f32 %v1117, %v1221
    %v1251 = vadd.f32 %v1118, %v1226
    %v1252 = vadd.f32 %v1119, %v1231
    %v1253 = vadd.f32 %v1120, %v1236
    %v1254 = vadd.f32 %v1121, %v1241
    %v1255 = vadd.f32 %v1122, %v1246
    %s1256 = sadd.s32 %s340, 128
    %s1257 = scalar_lea.vmem [#allocation2], %s1256
    %v1258 = vld [vmem:[%s1257] sm:$0xff]
    %v1259 = vld [vmem:[%s1257 + $0x8] sm:$0xff]
    %v1260 = vld [vmem:[%s1257 + $0x10] sm:$0xff]
    %v1261 = vld [vmem:[%s1257 + $0x18] sm:$0xff]
    %v1262 = vld [vmem:[%s1257 + $0x20] sm:$0xff]
    %v1263 = vld [vmem:[%s1257 + $0x28] sm:$0xff]
    %v1264 = vld [vmem:[%s1257 + $0x30] sm:$0xff]
    %s1265 = scalar_lea.vmem %s3, 896
    %v1266 = vld [vmem:[%s1265] sm:$0xff]
    %v1267 = vld [vmem:[%s1265 + $0x8] sm:$0xff]
    %v1268 = vld [vmem:[%s1265 + $0x10] sm:$0xff]
    %v1269 = vld [vmem:[%s1265 + $0x18] sm:$0xff]
    %v1270 = vld [vmem:[%s1265 + $0x20] sm:$0xff]
    %v1271 = vld [vmem:[%s1265 + $0x28] sm:$0xff]
    %v1272 = vld [vmem:[%s1265 + $0x30] sm:$0xff]
    %v1273 = vld [vmem:[%s1265 + $0x38] sm:$0xff]
    %v1274 = vld [vmem:[%s1265 + $0x40] sm:$0xff]
    %v1275 = vld [vmem:[%s1265 + $0x48] sm:$0xff]
    %v1276 = vld [vmem:[%s1265 + $0x50] sm:$0xff]
    %v1277 = vld [vmem:[%s1265 + $0x58] sm:$0xff]
    %v1278 = vld [vmem:[%s1265 + $0x60] sm:$0xff]
    %v1279 = vld [vmem:[%s1265 + $0x68] sm:$0xff]
    %v1280 = vld [vmem:[%s1265 + $0x70] sm:$0xff]
    %v1281 = vld [vmem:[%s1265 + $0x78] sm:$0xff]
    %1282 = vmatprep.subr.mxu0 0.0
    %1283 = vmatpush1.msra.mxu0 %v1266
    %1284 = vmatprep.subr.mxu0 0.0
    %1285 = vmatpush1.msra.mxu0 %v1267
    %1286 = vmatprep.subr.mxu0 0.0
    %1287 = vmatpush1.msra.mxu0 %v1268
    %1288 = vmatprep.subr.mxu0 0.0
    %1289 = vmatpush1.msra.mxu0 %v1269
    %1290 = vmatprep.subr.mxu0 0.0
    %1291 = vmatpush1.msra.mxu0 %v1270
    %1292 = vmatprep.subr.mxu0 0.0
    %1293 = vmatpush1.msra.mxu0 %v1271
    %1294 = vmatprep.subr.mxu0 0.0
    %1295 = vmatpush1.msra.mxu0 %v1272
    %1296 = vmatprep.subr.mxu0 0.0
    %1297 = vmatpush1.msra.mxu0 %v1273
    %1298 = vmatprep.subr.mxu0 0.0
    %1299 = vmatpush1.msra.mxu0 %v1274
    %1300 = vmatprep.subr.mxu0 0.0
    %1301 = vmatpush1.msra.mxu0 %v1275
    %1302 = vmatprep.subr.mxu0 0.0
    %1303 = vmatpush1.msra.mxu0 %v1276
    %1304 = vmatprep.subr.mxu0 0.0
    %1305 = vmatpush1.msra.mxu0 %v1277
    %1306 = vmatprep.subr.mxu0 0.0
    %1307 = vmatpush1.msra.mxu0 %v1278
    %1308 = vmatprep.subr.mxu0 0.0
    %1309 = vmatpush1.msra.mxu0 %v1279
    %1310 = vmatprep.subr.mxu0 0.0
    %1311 = vmatpush1.msra.mxu0 %v1280
    %1312 = vmatprep.subr.mxu0 0.0
    %1313 = vmatpush1.msra.mxu0 %v1281
    %1314 = vmatprep.subr.mxu0 0.0
    %1315 = vmatpush1.msra.mxu0 0.0
    %1316 = vmatprep.subr.mxu0 0.0
    %1317 = vmatpush1.msra.mxu0 0.0
    %1318 = vmatprep.subr.mxu0 0.0
    %1319 = vmatpush1.msra.mxu0 0.0
    %1320 = vmatprep.subr.mxu0 0.0
    %1321 = vmatpush1.msra.mxu0 0.0
    %1322 = vmatprep.subr.mxu0 0.0
    %1323 = vmatpush1.msra.mxu0 0.0
    %1324 = vmatprep.subr.mxu0 0.0
    %1325 = vmatpush1.msra.mxu0 0.0
    %1326 = vmatprep.subr.mxu0 0.0
    %1327 = vmatpush1.msra.mxu0 0.0
    %1328 = vmatprep.subr.mxu0 0.0
    %1329 = vmatpush1.msra.mxu0 0.0
    %1330 = vmatprep.subr.mxu0 0.0
    %1331 = vmatpush1.msra.mxu0 0.0
    %1332 = vmatprep.subr.mxu0 0.0
    %1333 = vmatpush1.msra.mxu0 0.0
    %1334 = vmatprep.subr.mxu0 0.0
    %1335 = vmatpush1.msra.mxu0 0.0
    %1336 = vmatprep.subr.mxu0 0.0
    %1337 = vmatpush1.msra.mxu0 0.0
    %1338 = vmatprep.subr.mxu0 0.0
    %1339 = vmatpush1.msra.mxu0 0.0
    %1340 = vmatprep.subr.mxu0 0.0
    %1341 = vmatpush1.msra.mxu0 0.0
    %1342 = vmatprep.subr.mxu0 0.0
    %1343 = vmatpush1.msra.mxu0 0.0
    %1344 = vmatprep.subr.mxu0 0.0
    %1345 = vmatpush1.msra.mxu0 0.0
    %1346 = vmatprep.mubr.f32.mxu0 0.0
    %1347 = vmatmul.mubr.f32.gmra.mrb[0].mxu0 %v1258
    %v1348 = vpop.f32.mrb[0].mxu0
    %v1349 = vadd.f32 0.0, %v1348
    %v1350 = vpop.f32.mrb[0].mxu0
    %1351 = vmatprep.mubr.f32.mxu0 0.0
    %1352 = vmatmul.mubr.f32.gmra.mrb[0].mxu0 %v1259
    %v1353 = vpop.f32.mrb[0].mxu0
    %v1354 = vadd.f32 0.0, %v1353
    %v1355 = vpop.f32.mrb[0].mxu0
    %1356 = vmatprep.mubr.f32.mxu0 0.0
    %1357 = vmatmul.mubr.f32.gmra.mrb[0].mxu0 %v1260
    %v1358 = vpop.f32.mrb[0].mxu0
    %v1359 = vadd.f32 0.0, %v1358
    %v1360 = vpop.f32.mrb[0].mxu0
    %1361 = vmatprep.mubr.f32.mxu0 0.0
    %1362 = vmatmul.mubr.f32.gmra.mrb[0].mxu0 %v1261
    %v1363 = vpop.f32.mrb[0].mxu0
    %v1364 = vadd.f32 0.0, %v1363
    %v1365 = vpop.f32.mrb[0].mxu0
    %1366 = vmatprep.mubr.f32.mxu0 0.0
    %1367 = vmatmul.mubr.f32.gmra.mrb[0].mxu0 %v1262
    %v1368 = vpop.f32.mrb[0].mxu0
    %v1369 = vadd.f32 0.0, %v1368
    %v1370 = vpop.f32.mrb[0].mxu0
    %1371 = vmatprep.mubr.f32.mxu0 0.0
    %1372 = vmatmul.mubr.f32.gmra.mrb[0].mxu0 %v1263
    %v1373 = vpop.f32.mrb[0].mxu0
    %v1374 = vadd.f32 0.0, %v1373
    %v1375 = vpop.f32.mrb[0].mxu0
    %1376 = vmatprep.mubr.f32.mxu0 0.0
    %1377 = vmatmul.mubr.f32.gmra.mrb[0].mxu0 %v1264
    %v1378 = vpop.f32.mrb[0].mxu0
    %v1379 = vadd.f32 0.0, %v1378
    %v1380 = vpop.f32.mrb[0].mxu0
    %1381 = vdwg.mxu0
    %v1382 = vadd.f32 %v1249, %v1349
    %v1383 = vadd.f32 %v1250, %v1354
    %v1384 = vadd.f32 %v1251, %v1359
    %v1385 = vadd.f32 %v1252, %v1364
    %v1386 = vadd.f32 %v1253, %v1369
    %v1387 = vadd.f32 %v1254, %v1374
    %v1388 = vadd.f32 %v1255, %v1379
    %s1389 = sadd.s32 %s340, 136
    %s1390 = scalar_lea.vmem [#allocation2], %s1389
    %v1391 = vld [vmem:[%s1390] sm:$0xff]
    %v1392 = vld [vmem:[%s1390 + $0x8] sm:$0xff]
    %v1393 = vld [vmem:[%s1390 + $0x10] sm:$0xff]
    %v1394 = vld [vmem:[%s1390 + $0x18] sm:$0xff]
    %v1395 = vld [vmem:[%s1390 + $0x20] sm:$0xff]
    %v1396 = vld [vmem:[%s1390 + $0x28] sm:$0xff]
    %v1397 = vld [vmem:[%s1390 + $0x30] sm:$0xff]
    %s1398 = scalar_lea.vmem %s3, 1024
    %v1399 = vld [vmem:[%s1398] sm:$0xff]
    %v1400 = vld [vmem:[%s1398 + $0x8] sm:$0xff]
    %v1401 = vld [vmem:[%s1398 + $0x10] sm:$0xff]
    %v1402 = vld [vmem:[%s1398 + $0x18] sm:$0xff]
    %v1403 = vld [vmem:[%s1398 + $0x20] sm:$0xff]
    %v1404 = vld [vmem:[%s1398 + $0x28] sm:$0xff]
    %v1405 = vld [vmem:[%s1398 + $0x30] sm:$0xff]
    %v1406 = vld [vmem:[%s1398 + $0x38] sm:$0xff]
    %v1407 = vld [vmem:[%s1398 + $0x40] sm:$0xff]
    %v1408 = vld [vmem:[%s1398 + $0x48] sm:$0xff]
    %v1409 = vld [vmem:[%s1398 + $0x50] sm:$0xff]
    %v1410 = vld [vmem:[%s1398 + $0x58] sm:$0xff]
    %v1411 = vld [vmem:[%s1398 + $0x60] sm:$0xff]
    %v1412 = vld [vmem:[%s1398 + $0x68] sm:$0xff]
    %v1413 = vld [vmem:[%s1398 + $0x70] sm:$0xff]
    %v1414 = vld [vmem:[%s1398 + $0x78] sm:$0xff]
    %1415 = vmatprep.subr.mxu0 0.0
    %1416 = vmatpush1.msra.mxu0 %v1399
    %1417 = vmatprep.subr.mxu0 0.0
    %1418 = vmatpush1.msra.mxu0 %v1400
    %1419 = vmatprep.subr.mxu0 0.0
    %1420 = vmatpush1.msra.mxu0 %v1401
    %1421 = vmatprep.subr.mxu0 0.0
    %1422 = vmatpush1.msra.mxu0 %v1402
    %1423 = vmatprep.subr.mxu0 0.0
    %1424 = vmatpush1.msra.mxu0 %v1403
    %1425 = vmatprep.subr.mxu0 0.0
    %1426 = vmatpush1.msra.mxu0 %v1404
    %1427 = vmatprep.subr.mxu0 0.0
    %1428 = vmatpush1.msra.mxu0 %v1405
    %1429 = vmatprep.subr.mxu0 0.0
    %1430 = vmatpush1.msra.mxu0 %v1406
    %1431 = vmatprep.subr.mxu0 0.0
    %1432 = vmatpush1.msra.mxu0 %v1407
    %1433 = vmatprep.subr.mxu0 0.0
    %1434 = vmatpush1.msra.mxu0 %v1408
    %1435 = vmatprep.subr.mxu0 0.0
    %1436 = vmatpush1.msra.mxu0 %v1409
    %1437 = vmatprep.subr.mxu0 0.0
    %1438 = vmatpush1.msra.mxu0 %v1410
    %1439 = vmatprep.subr.mxu0 0.0
    %1440 = vmatpush1.msra.mxu0 %v1411
    %1441 = vmatprep.subr.mxu0 0.0
    %1442 = vmatpush1.msra.mxu0 %v1412
    %1443 = vmatprep.subr.mxu0 0.0
    %1444 = vmatpush1.msra.mxu0 %v1413
    %1445 = vmatprep.subr.mxu0 0.0
    %1446 = vmatpush1.msra.mxu0 %v1414
    %1447 = vmatprep.subr.mxu0 0.0
    %1448 = vmatpush1.msra.mxu0 0.0
    %1449 = vmatprep.subr.mxu0 0.0
    %1450 = vmatpush1.msra.mxu0 0.0
    %1451 = vmatprep.subr.mxu0 0.0
    %1452 = vmatpush1.msra.mxu0 0.0
    %1453 = vmatprep.subr.mxu0 0.0
    %1454 = vmatpush1.msra.mxu0 0.0
    %1455 = vmatprep.subr.mxu0 0.0
    %1456 = vmatpush1.msra.mxu0 0.0
    %1457 = vmatprep.subr.mxu0 0.0
    %1458 = vmatpush1.msra.mxu0 0.0
    %1459 = vmatprep.subr.mxu0 0.0
    %1460 = vmatpush1.msra.mxu0 0.0
    %1461 = vmatprep.subr.mxu0 0.0
    %1462 = vmatpush1.msra.mxu0 0.0
    %1463 = vmatprep.subr.mxu0 0.0
    %1464 = vmatpush1.msra.mxu0 0.0
    %1465 = vmatprep.subr.mxu0 0.0
    %1466 = vmatpush1.msra.mxu0 0.0
    %1467 = vmatprep.subr.mxu0 0.0
    %1468 = vmatpush1.msra.mxu0 0.0
    %1469 = vmatprep.subr.mxu0 0.0
    %1470 = vmatpush1.msra.mxu0 0.0
    %1471 = vmatprep.subr.mxu0 0.0
    %1472 = vmatpush1.msra.mxu0 0.0
    %1473 = vmatprep.subr.mxu0 0.0
    %1474 = vmatpush1.msra.mxu0 0.0
    %1475 = vmatprep.subr.mxu0 0.0
    %1476 = vmatpush1.msra.mxu0 0.0
    %1477 = vmatprep.subr.mxu0 0.0
    %1478 = vmatpush1.msra.mxu0 0.0
    %1479 = vmatprep.mubr.f32.mxu0 0.0
    %1480 = vmatmul.mubr.f32.gmra.mrb[0].mxu0 %v1391
    %v1481 = vpop.f32.mrb[0].mxu0
    %v1482 = vadd.f32 0.0, %v1481
    %v1483 = vpop.f32.mrb[0].mxu0
    %1484 = vmatprep.mubr.f32.mxu0 0.0
    %1485 = vmatmul.mubr.f32.gmra.mrb[0].mxu0 %v1392
    %v1486 = vpop.f32.mrb[0].mxu0
    %v1487 = vadd.f32 0.0, %v1486
    %v1488 = vpop.f32.mrb[0].mxu0
    %1489 = vmatprep.mubr.f32.mxu0 0.0
    %1490 = vmatmul.mubr.f32.gmra.mrb[0].mxu0 %v1393
    %v1491 = vpop.f32.mrb[0].mxu0
    %v1492 = vadd.f32 0.0, %v1491
    %v1493 = vpop.f32.mrb[0].mxu0
    %1494 = vmatprep.mubr.f32.mxu0 0.0
    %1495 = vmatmul.mubr.f32.gmra.mrb[0].mxu0 %v1394
    %v1496 = vpop.f32.mrb[0].mxu0
    %v1497 = vadd.f32 0.0, %v1496
    %v1498 = vpop.f32.mrb[0].mxu0
    %1499 = vmatprep.mubr.f32.mxu0 0.0
    %1500 = vmatmul.mubr.f32.gmra.mrb[0].mxu0 %v1395
    %v1501 = vpop.f32.mrb[0].mxu0
    %v1502 = vadd.f32 0.0, %v1501
    %v1503 = vpop.f32.mrb[0].mxu0
    %1504 = vmatprep.mubr.f32.mxu0 0.0
    %1505 = vmatmul.mubr.f32.gmra.mrb[0].mxu0 %v1396
    %v1506 = vpop.f32.mrb[0].mxu0
    %v1507 = vadd.f32 0.0, %v1506
    %v1508 = vpop.f32.mrb[0].mxu0
    %1509 = vmatprep.mubr.f32.mxu0 0.0
    %1510 = vmatmul.mubr.f32.gmra.mrb[0].mxu0 %v1397
    %v1511 = vpop.f32.mrb[0].mxu0
    %v1512 = vadd.f32 0.0, %v1511
    %v1513 = vpop.f32.mrb[0].mxu0
    %1514 = vdwg.mxu0
    %v1515 = vadd.f32 %v1382, %v1482
    %v1516 = vadd.f32 %v1383, %v1487
    %v1517 = vadd.f32 %v1384, %v1492
    %v1518 = vadd.f32 %v1385, %v1497
    %v1519 = vadd.f32 %v1386, %v1502
    %v1520 = vadd.f32 %v1387, %v1507
    %v1521 = vadd.f32 %v1388, %v1512
    %s1522 = sadd.s32 %s340, 144
    %s1523 = scalar_lea.vmem [#allocation2], %s1522
    %v1524 = vld [vmem:[%s1523] sm:$0xff]
    %v1525 = vld [vmem:[%s1523 + $0x8] sm:$0xff]
    %v1526 = vld [vmem:[%s1523 + $0x10] sm:$0xff]
    %v1527 = vld [vmem:[%s1523 + $0x18] sm:$0xff]
    %v1528 = vld [vmem:[%s1523 + $0x20] sm:$0xff]
    %v1529 = vld [vmem:[%s1523 + $0x28] sm:$0xff]
    %v1530 = vld [vmem:[%s1523 + $0x30] sm:$0xff]
    %s1531 = scalar_lea.vmem %s3, 1152
    %v1532 = vld [vmem:[%s1531] sm:$0xff]
    %v1533 = vld [vmem:[%s1531 + $0x8] sm:$0xff]
    %v1534 = vld [vmem:[%s1531 + $0x10] sm:$0xff]
    %v1535 = vld [vmem:[%s1531 + $0x18] sm:$0xff]
    %v1536 = vld [vmem:[%s1531 + $0x20] sm:$0xff]
    %v1537 = vld [vmem:[%s1531 + $0x28] sm:$0xff]
    %v1538 = vld [vmem:[%s1531 + $0x30] sm:$0xff]
    %v1539 = vld [vmem:[%s1531 + $0x38] sm:$0xff]
    %v1540 = vld [vmem:[%s1531 + $0x40] sm:$0xff]
    %v1541 = vld [vmem:[%s1531 + $0x48] sm:$0xff]
    %v1542 = vld [vmem:[%s1531 + $0x50] sm:$0xff]
    %v1543 = vld [vmem:[%s1531 + $0x58] sm:$0xff]
    %v1544 = vld [vmem:[%s1531 + $0x60] sm:$0xff]
    %v1545 = vld [vmem:[%s1531 + $0x68] sm:$0xff]
    %v1546 = vld [vmem:[%s1531 + $0x70] sm:$0xff]
    %v1547 = vld [vmem:[%s1531 + $0x78] sm:$0xff]
    %1548 = vmatprep.subr.mxu0 0.0
    %1549 = vmatpush1.msra.mxu0 %v1532
    %1550 = vmatprep.subr.mxu0 0.0
    %1551 = vmatpush1.msra.mxu0 %v1533
    %1552 = vmatprep.subr.mxu0 0.0
    %1553 = vmatpush1.msra.mxu0 %v1534
    %1554 = vmatprep.subr.mxu0 0.0
    %1555 = vmatpush1.msra.mxu0 %v1535
    %1556 = vmatprep.subr.mxu0 0.0
    %1557 = vmatpush1.msra.mxu0 %v1536
    %1558 = vmatprep.subr.mxu0 0.0
    %1559 = vmatpush1.msra.mxu0 %v1537
    %1560 = vmatprep.subr.mxu0 0.0
    %1561 = vmatpush1.msra.mxu0 %v1538
    %1562 = vmatprep.subr.mxu0 0.0
    %1563 = vmatpush1.msra.mxu0 %v1539
    %1564 = vmatprep.subr.mxu0 0.0
    %1565 = vmatpush1.msra.mxu0 %v1540
    %1566 = vmatprep.subr.mxu0 0.0
    %1567 = vmatpush1.msra.mxu0 %v1541
    %1568 = vmatprep.subr.mxu0 0.0
    %1569 = vmatpush1.msra.mxu0 %v1542
    %1570 = vmatprep.subr.mxu0 0.0
    %1571 = vmatpush1.msra.mxu0 %v1543
    %1572 = vmatprep.subr.mxu0 0.0
    %1573 = vmatpush1.msra.mxu0 %v1544
    %1574 = vmatprep.subr.mxu0 0.0
    %1575 = vmatpush1.msra.mxu0 %v1545
    %1576 = vmatprep.subr.mxu0 0.0
    %1577 = vmatpush1.msra.mxu0 %v1546
    %1578 = vmatprep.subr.mxu0 0.0
    %1579 = vmatpush1.msra.mxu0 %v1547
    %1580 = vmatprep.subr.mxu0 0.0
    %1581 = vmatpush1.msra.mxu0 0.0
    %1582 = vmatprep.subr.mxu0 0.0
    %1583 = vmatpush1.msra.mxu0 0.0
    %1584 = vmatprep.subr.mxu0 0.0
    %1585 = vmatpush1.msra.mxu0 0.0
    %1586 = vmatprep.subr.mxu0 0.0
    %1587 = vmatpush1.msra.mxu0 0.0
    %1588 = vmatprep.subr.mxu0 0.0
    %1589 = vmatpush1.msra.mxu0 0.0
    %1590 = vmatprep.subr.mxu0 0.0
    %1591 = vmatpush1.msra.mxu0 0.0
    %1592 = vmatprep.subr.mxu0 0.0
    %1593 = vmatpush1.msra.mxu0 0.0
    %1594 = vmatprep.subr.mxu0 0.0
    %1595 = vmatpush1.msra.mxu0 0.0
    %1596 = vmatprep.subr.mxu0 0.0
    %1597 = vmatpush1.msra.mxu0 0.0
    %1598 = vmatprep.subr.mxu0 0.0
    %1599 = vmatpush1.msra.mxu0 0.0
    %1600 = vmatprep.subr.mxu0 0.0
    %1601 = vmatpush1.msra.mxu0 0.0
    %1602 = vmatprep.subr.mxu0 0.0
    %1603 = vmatpush1.msra.mxu0 0.0
    %1604 = vmatprep.subr.mxu0 0.0
    %1605 = vmatpush1.msra.mxu0 0.0
    %1606 = vmatprep.subr.mxu0 0.0
    %1607 = vmatpush1.msra.mxu0 0.0
    %1608 = vmatprep.subr.mxu0 0.0
    %1609 = vmatpush1.msra.mxu0 0.0
    %1610 = vmatprep.subr.mxu0 0.0
    %1611 = vmatpush1.msra.mxu0 0.0
    %1612 = vmatprep.mubr.f32.mxu0 0.0
    %1613 = vmatmul.mubr.f32.gmra.mrb[0].mxu0 %v1524
    %v1614 = vpop.f32.mrb[0].mxu0
    %v1615 = vadd.f32 0.0, %v1614
    %v1616 = vpop.f32.mrb[0].mxu0
    %1617 = vmatprep.mubr.f32.mxu0 0.0
    %1618 = vmatmul.mubr.f32.gmra.mrb[0].mxu0 %v1525
    %v1619 = vpop.f32.mrb[0].mxu0
    %v1620 = vadd.f32 0.0, %v1619
    %v1621 = vpop.f32.mrb[0].mxu0
    %1622 = vmatprep.mubr.f32.mxu0 0.0
    %1623 = vmatmul.mubr.f32.gmra.mrb[0].mxu0 %v1526
    %v1624 = vpop.f32.mrb[0].mxu0
    %v1625 = vadd.f32 0.0, %v1624
    %v1626 = vpop.f32.mrb[0].mxu0
    %1627 = vmatprep.mubr.f32.mxu0 0.0
    %1628 = vmatmul.mubr.f32.gmra.mrb[0].mxu0 %v1527
    %v1629 = vpop.f32.mrb[0].mxu0
    %v1630 = vadd.f32 0.0, %v1629
    %v1631 = vpop.f32.mrb[0].mxu0
    %1632 = vmatprep.mubr.f32.mxu0 0.0
    %1633 = vmatmul.mubr.f32.gmra.mrb[0].mxu0 %v1528
    %v1634 = vpop.f32.mrb[0].mxu0
    %v1635 = vadd.f32 0.0, %v1634
    %v1636 = vpop.f32.mrb[0].mxu0
    %1637 = vmatprep.mubr.f32.mxu0 0.0
    %1638 = vmatmul.mubr.f32.gmra.mrb[0].mxu0 %v1529
    %v1639 = vpop.f32.mrb[0].mxu0
    %v1640 = vadd.f32 0.0, %v1639
    %v1641 = vpop.f32.mrb[0].mxu0
    %1642 = vmatprep.mubr.f32.mxu0 0.0
    %1643 = vmatmul.mubr.f32.gmra.mrb[0].mxu0 %v1530
    %v1644 = vpop.f32.mrb[0].mxu0
    %v1645 = vadd.f32 0.0, %v1644
    %v1646 = vpop.f32.mrb[0].mxu0
    %1647 = vdwg.mxu0
    %v1648 = vadd.f32 %v1515, %v1615
    %v1649 = vadd.f32 %v1516, %v1620
    %v1650 = vadd.f32 %v1517, %v1625
    %v1651 = vadd.f32 %v1518, %v1630
    %v1652 = vadd.f32 %v1519, %v1635
    %v1653 = vadd.f32 %v1520, %v1640
    %v1654 = vadd.f32 %v1521, %v1645
    %s1655 = sadd.s32 %s340, 224
    %s1656 = scalar_lea.vmem [#allocation2], %s1655
    %v1657 = vld [vmem:[%s1656] sm:$0xff]
    %v1658 = vld [vmem:[%s1656 + $0x8] sm:$0xff]
    %v1659 = vld [vmem:[%s1656 + $0x10] sm:$0xff]
    %v1660 = vld [vmem:[%s1656 + $0x18] sm:$0xff]
    %v1661 = vld [vmem:[%s1656 + $0x20] sm:$0xff]
    %v1662 = vld [vmem:[%s1656 + $0x28] sm:$0xff]
    %v1663 = vld [vmem:[%s1656 + $0x30] sm:$0xff]
    %s1664 = scalar_lea.vmem %s3, 1280
    %v1665 = vld [vmem:[%s1664] sm:$0xff]
    %v1666 = vld [vmem:[%s1664 + $0x8] sm:$0xff]
    %v1667 = vld [vmem:[%s1664 + $0x10] sm:$0xff]
    %v1668 = vld [vmem:[%s1664 + $0x18] sm:$0xff]
    %v1669 = vld [vmem:[%s1664 + $0x20] sm:$0xff]
    %v1670 = vld [vmem:[%s1664 + $0x28] sm:$0xff]
    %v1671 = vld [vmem:[%s1664 + $0x30] sm:$0xff]
    %v1672 = vld [vmem:[%s1664 + $0x38] sm:$0xff]
    %v1673 = vld [vmem:[%s1664 + $0x40] sm:$0xff]
    %v1674 = vld [vmem:[%s1664 + $0x48] sm:$0xff]
    %v1675 = vld [vmem:[%s1664 + $0x50] sm:$0xff]
    %v1676 = vld [vmem:[%s1664 + $0x58] sm:$0xff]
    %v1677 = vld [vmem:[%s1664 + $0x60] sm:$0xff]
    %v1678 = vld [vmem:[%s1664 + $0x68] sm:$0xff]
    %v1679 = vld [vmem:[%s1664 + $0x70] sm:$0xff]
    %v1680 = vld [vmem:[%s1664 + $0x78] sm:$0xff]
    %1681 = vmatprep.subr.mxu0 0.0
    %1682 = vmatpush1.msra.mxu0 %v1665
    %1683 = vmatprep.subr.mxu0 0.0
    %1684 = vmatpush1.msra.mxu0 %v1666
    %1685 = vmatprep.subr.mxu0 0.0
    %1686 = vmatpush1.msra.mxu0 %v1667
    %1687 = vmatprep.subr.mxu0 0.0
    %1688 = vmatpush1.msra.mxu0 %v1668
    %1689 = vmatprep.subr.mxu0 0.0
    %1690 = vmatpush1.msra.mxu0 %v1669
    %1691 = vmatprep.subr.mxu0 0.0
    %1692 = vmatpush1.msra.mxu0 %v1670
    %1693 = vmatprep.subr.mxu0 0.0
    %1694 = vmatpush1.msra.mxu0 %v1671
    %1695 = vmatprep.subr.mxu0 0.0
    %1696 = vmatpush1.msra.mxu0 %v1672
    %1697 = vmatprep.subr.mxu0 0.0
    %1698 = vmatpush1.msra.mxu0 %v1673
    %1699 = vmatprep.subr.mxu0 0.0
    %1700 = vmatpush1.msra.mxu0 %v1674
    %1701 = vmatprep.subr.mxu0 0.0
    %1702 = vmatpush1.msra.mxu0 %v1675
    %1703 = vmatprep.subr.mxu0 0.0
    %1704 = vmatpush1.msra.mxu0 %v1676
    %1705 = vmatprep.subr.mxu0 0.0
    %1706 = vmatpush1.msra.mxu0 %v1677
    %1707 = vmatprep.subr.mxu0 0.0
    %1708 = vmatpush1.msra.mxu0 %v1678
    %1709 = vmatprep.subr.mxu0 0.0
    %1710 = vmatpush1.msra.mxu0 %v1679
    %1711 = vmatprep.subr.mxu0 0.0
    %1712 = vmatpush1.msra.mxu0 %v1680
    %1713 = vmatprep.subr.mxu0 0.0
    %1714 = vmatpush1.msra.mxu0 0.0
    %1715 = vmatprep.subr.mxu0 0.0
    %1716 = vmatpush1.msra.mxu0 0.0
    %1717 = vmatprep.subr.mxu0 0.0
    %1718 = vmatpush1.msra.mxu0 0.0
    %1719 = vmatprep.subr.mxu0 0.0
    %1720 = vmatpush1.msra.mxu0 0.0
    %1721 = vmatprep.subr.mxu0 0.0
    %1722 = vmatpush1.msra.mxu0 0.0
    %1723 = vmatprep.subr.mxu0 0.0
    %1724 = vmatpush1.msra.mxu0 0.0
    %1725 = vmatprep.subr.mxu0 0.0
    %1726 = vmatpush1.msra.mxu0 0.0
    %1727 = vmatprep.subr.mxu0 0.0
    %1728 = vmatpush1.msra.mxu0 0.0
    %1729 = vmatprep.subr.mxu0 0.0
    %1730 = vmatpush1.msra.mxu0 0.0
    %1731 = vmatprep.subr.mxu0 0.0
    %1732 = vmatpush1.msra.mxu0 0.0
    %1733 = vmatprep.subr.mxu0 0.0
    %1734 = vmatpush1.msra.mxu0 0.0
    %1735 = vmatprep.subr.mxu0 0.0
    %1736 = vmatpush1.msra.mxu0 0.0
    %1737 = vmatprep.subr.mxu0 0.0
    %1738 = vmatpush1.msra.mxu0 0.0
    %1739 = vmatprep.subr.mxu0 0.0
    %1740 = vmatpush1.msra.mxu0 0.0
    %1741 = vmatprep.subr.mxu0 0.0
    %1742 = vmatpush1.msra.mxu0 0.0
    %1743 = vmatprep.subr.mxu0 0.0
    %1744 = vmatpush1.msra.mxu0 0.0
    %1745 = vmatprep.mubr.f32.mxu0 0.0
    %1746 = vmatmul.mubr.f32.gmra.mrb[0].mxu0 %v1657
    %v1747 = vpop.f32.mrb[0].mxu0
    %v1748 = vadd.f32 0.0, %v1747
    %v1749 = vpop.f32.mrb[0].mxu0
    %1750 = vmatprep.mubr.f32.mxu0 0.0
    %1751 = vmatmul.mubr.f32.gmra.mrb[0].mxu0 %v1658
    %v1752 = vpop.f32.mrb[0].mxu0
    %v1753 = vadd.f32 0.0, %v1752
    %v1754 = vpop.f32.mrb[0].mxu0
    %1755 = vmatprep.mubr.f32.mxu0 0.0
    %1756 = vmatmul.mubr.f32.gmra.mrb[0].mxu0 %v1659
    %v1757 = vpop.f32.mrb[0].mxu0
    %v1758 = vadd.f32 0.0, %v1757
    %v1759 = vpop.f32.mrb[0].mxu0
    %1760 = vmatprep.mubr.f32.mxu0 0.0
    %1761 = vmatmul.mubr.f32.gmra.mrb[0].mxu0 %v1660
    %v1762 = vpop.f32.mrb[0].mxu0
    %v1763 = vadd.f32 0.0, %v1762
    %v1764 = vpop.f32.mrb[0].mxu0
    %1765 = vmatprep.mubr.f32.mxu0 0.0
    %1766 = vmatmul.mubr.f32.gmra.mrb[0].mxu0 %v1661
    %v1767 = vpop.f32.mrb[0].mxu0
    %v1768 = vadd.f32 0.0, %v1767
    %v1769 = vpop.f32.mrb[0].mxu0
    %1770 = vmatprep.mubr.f32.mxu0 0.0
    %1771 = vmatmul.mubr.f32.gmra.mrb[0].mxu0 %v1662
    %v1772 = vpop.f32.mrb[0].mxu0
    %v1773 = vadd.f32 0.0, %v1772
    %v1774 = vpop.f32.mrb[0].mxu0
    %1775 = vmatprep.mubr.f32.mxu0 0.0
    %1776 = vmatmul.mubr.f32.gmra.mrb[0].mxu0 %v1663
    %v1777 = vpop.f32.mrb[0].mxu0
    %v1778 = vadd.f32 0.0, %v1777
    %v1779 = vpop.f32.mrb[0].mxu0
    %1780 = vdwg.mxu0
    %v1781 = vadd.f32 %v1648, %v1748
    %v1782 = vadd.f32 %v1649, %v1753
    %v1783 = vadd.f32 %v1650, %v1758
    %v1784 = vadd.f32 %v1651, %v1763
    %v1785 = vadd.f32 %v1652, %v1768
    %v1786 = vadd.f32 %v1653, %v1773
    %v1787 = vadd.f32 %v1654, %v1778
    %s1788 = sadd.s32 %s340, 232
    %s1789 = scalar_lea.vmem [#allocation2], %s1788
    %v1790 = vld [vmem:[%s1789] sm:$0xff]
    %v1791 = vld [vmem:[%s1789 + $0x8] sm:$0xff]
    %v1792 = vld [vmem:[%s1789 + $0x10] sm:$0xff]
    %v1793 = vld [vmem:[%s1789 + $0x18] sm:$0xff]
    %v1794 = vld [vmem:[%s1789 + $0x20] sm:$0xff]
    %v1795 = vld [vmem:[%s1789 + $0x28] sm:$0xff]
    %v1796 = vld [vmem:[%s1789 + $0x30] sm:$0xff]
    %s1797 = scalar_lea.vmem %s3, 1408
    %v1798 = vld [vmem:[%s1797] sm:$0xff]
    %v1799 = vld [vmem:[%s1797 + $0x8] sm:$0xff]
    %v1800 = vld [vmem:[%s1797 + $0x10] sm:$0xff]
    %v1801 = vld [vmem:[%s1797 + $0x18] sm:$0xff]
    %v1802 = vld [vmem:[%s1797 + $0x20] sm:$0xff]
    %v1803 = vld [vmem:[%s1797 + $0x28] sm:$0xff]
    %v1804 = vld [vmem:[%s1797 + $0x30] sm:$0xff]
    %v1805 = vld [vmem:[%s1797 + $0x38] sm:$0xff]
    %v1806 = vld [vmem:[%s1797 + $0x40] sm:$0xff]
    %v1807 = vld [vmem:[%s1797 + $0x48] sm:$0xff]
    %v1808 = vld [vmem:[%s1797 + $0x50] sm:$0xff]
    %v1809 = vld [vmem:[%s1797 + $0x58] sm:$0xff]
    %v1810 = vld [vmem:[%s1797 + $0x60] sm:$0xff]
    %v1811 = vld [vmem:[%s1797 + $0x68] sm:$0xff]
    %v1812 = vld [vmem:[%s1797 + $0x70] sm:$0xff]
    %v1813 = vld [vmem:[%s1797 + $0x78] sm:$0xff]
    %1814 = vmatprep.subr.mxu0 0.0
    %1815 = vmatpush1.msra.mxu0 %v1798
    %1816 = vmatprep.subr.mxu0 0.0
    %1817 = vmatpush1.msra.mxu0 %v1799
    %1818 = vmatprep.subr.mxu0 0.0
    %1819 = vmatpush1.msra.mxu0 %v1800
    %1820 = vmatprep.subr.mxu0 0.0
    %1821 = vmatpush1.msra.mxu0 %v1801
    %1822 = vmatprep.subr.mxu0 0.0
    %1823 = vmatpush1.msra.mxu0 %v1802
    %1824 = vmatprep.subr.mxu0 0.0
    %1825 = vmatpush1.msra.mxu0 %v1803
    %1826 = vmatprep.subr.mxu0 0.0
    %1827 = vmatpush1.msra.mxu0 %v1804
    %1828 = vmatprep.subr.mxu0 0.0
    %1829 = vmatpush1.msra.mxu0 %v1805
    %1830 = vmatprep.subr.mxu0 0.0
    %1831 = vmatpush1.msra.mxu0 %v1806
    %1832 = vmatprep.subr.mxu0 0.0
    %1833 = vmatpush1.msra.mxu0 %v1807
    %1834 = vmatprep.subr.mxu0 0.0
    %1835 = vmatpush1.msra.mxu0 %v1808
    %1836 = vmatprep.subr.mxu0 0.0
    %1837 = vmatpush1.msra.mxu0 %v1809
    %1838 = vmatprep.subr.mxu0 0.0
    %1839 = vmatpush1.msra.mxu0 %v1810
    %1840 = vmatprep.subr.mxu0 0.0
    %1841 = vmatpush1.msra.mxu0 %v1811
    %1842 = vmatprep.subr.mxu0 0.0
    %1843 = vmatpush1.msra.mxu0 %v1812
    %1844 = vmatprep.subr.mxu0 0.0
    %1845 = vmatpush1.msra.mxu0 %v1813
    %1846 = vmatprep.subr.mxu0 0.0
    %1847 = vmatpush1.msra.mxu0 0.0
    %1848 = vmatprep.subr.mxu0 0.0
    %1849 = vmatpush1.msra.mxu0 0.0
    %1850 = vmatprep.subr.mxu0 0.0
    %1851 = vmatpush1.msra.mxu0 0.0
    %1852 = vmatprep.subr.mxu0 0.0
    %1853 = vmatpush1.msra.mxu0 0.0
    %1854 = vmatprep.subr.mxu0 0.0
    %1855 = vmatpush1.msra.mxu0 0.0
    %1856 = vmatprep.subr.mxu0 0.0
    %1857 = vmatpush1.msra.mxu0 0.0
    %1858 = vmatprep.subr.mxu0 0.0
    %1859 = vmatpush1.msra.mxu0 0.0
    %1860 = vmatprep.subr.mxu0 0.0
    %1861 = vmatpush1.msra.mxu0 0.0
    %1862 = vmatprep.subr.mxu0 0.0
    %1863 = vmatpush1.msra.mxu0 0.0
    %1864 = vmatprep.subr.mxu0 0.0
    %1865 = vmatpush1.msra.mxu0 0.0
    %1866 = vmatprep.subr.mxu0 0.0
    %1867 = vmatpush1.msra.mxu0 0.0
    %1868 = vmatprep.subr.mxu0 0.0
    %1869 = vmatpush1.msra.mxu0 0.0
    %1870 = vmatprep.subr.mxu0 0.0
    %1871 = vmatpush1.msra.mxu0 0.0
    %1872 = vmatprep.subr.mxu0 0.0
    %1873 = vmatpush1.msra.mxu0 0.0
    %1874 = vmatprep.subr.mxu0 0.0
    %1875 = vmatpush1.msra.mxu0 0.0
    %1876 = vmatprep.subr.mxu0 0.0
    %1877 = vmatpush1.msra.mxu0 0.0
    %1878 = vmatprep.mubr.f32.mxu0 0.0
    %1879 = vmatmul.mubr.f32.gmra.mrb[0].mxu0 %v1790
    %v1880 = vpop.f32.mrb[0].mxu0
    %v1881 = vadd.f32 0.0, %v1880
    %v1882 = vpop.f32.mrb[0].mxu0
    %1883 = vmatprep.mubr.f32.mxu0 0.0
    %1884 = vmatmul.mubr.f32.gmra.mrb[0].mxu0 %v1791
    %v1885 = vpop.f32.mrb[0].mxu0
    %v1886 = vadd.f32 0.0, %v1885
    %v1887 = vpop.f32.mrb[0].mxu0
    %1888 = vmatprep.mubr.f32.mxu0 0.0
    %1889 = vmatmul.mubr.f32.gmra.mrb[0].mxu0 %v1792
    %v1890 = vpop.f32.mrb[0].mxu0
    %v1891 = vadd.f32 0.0, %v1890
    %v1892 = vpop.f32.mrb[0].mxu0
    %1893 = vmatprep.mubr.f32.mxu0 0.0
    %1894 = vmatmul.mubr.f32.gmra.mrb[0].mxu0 %v1793
    %v1895 = vpop.f32.mrb[0].mxu0
    %v1896 = vadd.f32 0.0, %v1895
    %v1897 = vpop.f32.mrb[0].mxu0
    %1898 = vmatprep.mubr.f32.mxu0 0.0
    %1899 = vmatmul.mubr.f32.gmra.mrb[0].mxu0 %v1794
    %v1900 = vpop.f32.mrb[0].mxu0
    %v1901 = vadd.f32 0.0, %v1900
    %v1902 = vpop.f32.mrb[0].mxu0
    %1903 = vmatprep.mubr.f32.mxu0 0.0
    %1904 = vmatmul.mubr.f32.gmra.mrb[0].mxu0 %v1795
    %v1905 = vpop.f32.mrb[0].mxu0
    %v1906 = vadd.f32 0.0, %v1905
    %v1907 = vpop.f32.mrb[0].mxu0
    %1908 = vmatprep.mubr.f32.mxu0 0.0
    %1909 = vmatmul.mubr.f32.gmra.mrb[0].mxu0 %v1796
    %v1910 = vpop.f32.mrb[0].mxu0
    %v1911 = vadd.f32 0.0, %v1910
    %v1912 = vpop.f32.mrb[0].mxu0
    %1913 = vdwg.mxu0
    %v1914 = vadd.f32 %v1781, %v1881
    %v1915 = vadd.f32 %v1782, %v1886
    %v1916 = vadd.f32 %v1783, %v1891
    %v1917 = vadd.f32 %v1784, %v1896
    %v1918 = vadd.f32 %v1785, %v1901
    %v1919 = vadd.f32 %v1786, %v1906
    %v1920 = vadd.f32 %v1787, %v1911
    %s1921 = sadd.s32 %s340, 240
    %s1922 = scalar_lea.vmem [#allocation2], %s1921
    %v1923 = vld [vmem:[%s1922] sm:$0xff]
    %v1924 = vld [vmem:[%s1922 + $0x8] sm:$0xff]
    %v1925 = vld [vmem:[%s1922 + $0x10] sm:$0xff]
    %v1926 = vld [vmem:[%s1922 + $0x18] sm:$0xff]
    %v1927 = vld [vmem:[%s1922 + $0x20] sm:$0xff]
    %v1928 = vld [vmem:[%s1922 + $0x28] sm:$0xff]
    %v1929 = vld [vmem:[%s1922 + $0x30] sm:$0xff]
    %s1930 = scalar_lea.vmem %s3, 1536
    %v1931 = vld [vmem:[%s1930] sm:$0xff]
    %v1932 = vld [vmem:[%s1930 + $0x8] sm:$0xff]
    %v1933 = vld [vmem:[%s1930 + $0x10] sm:$0xff]
    %v1934 = vld [vmem:[%s1930 + $0x18] sm:$0xff]
    %v1935 = vld [vmem:[%s1930 + $0x20] sm:$0xff]
    %v1936 = vld [vmem:[%s1930 + $0x28] sm:$0xff]
    %v1937 = vld [vmem:[%s1930 + $0x30] sm:$0xff]
    %v1938 = vld [vmem:[%s1930 + $0x38] sm:$0xff]
    %v1939 = vld [vmem:[%s1930 + $0x40] sm:$0xff]
    %v1940 = vld [vmem:[%s1930 + $0x48] sm:$0xff]
    %v1941 = vld [vmem:[%s1930 + $0x50] sm:$0xff]
    %v1942 = vld [vmem:[%s1930 + $0x58] sm:$0xff]
    %v1943 = vld [vmem:[%s1930 + $0x60] sm:$0xff]
    %v1944 = vld [vmem:[%s1930 + $0x68] sm:$0xff]
    %v1945 = vld [vmem:[%s1930 + $0x70] sm:$0xff]
    %v1946 = vld [vmem:[%s1930 + $0x78] sm:$0xff]
    %1947 = vmatprep.subr.mxu0 0.0
    %1948 = vmatpush1.msra.mxu0 %v1931
    %1949 = vmatprep.subr.mxu0 0.0
    %1950 = vmatpush1.msra.mxu0 %v1932
    %1951 = vmatprep.subr.mxu0 0.0
    %1952 = vmatpush1.msra.mxu0 %v1933
    %1953 = vmatprep.subr.mxu0 0.0
    %1954 = vmatpush1.msra.mxu0 %v1934
    %1955 = vmatprep.subr.mxu0 0.0
    %1956 = vmatpush1.msra.mxu0 %v1935
    %1957 = vmatprep.subr.mxu0 0.0
    %1958 = vmatpush1.msra.mxu0 %v1936
    %1959 = vmatprep.subr.mxu0 0.0
    %1960 = vmatpush1.msra.mxu0 %v1937
    %1961 = vmatprep.subr.mxu0 0.0
    %1962 = vmatpush1.msra.mxu0 %v1938
    %1963 = vmatprep.subr.mxu0 0.0
    %1964 = vmatpush1.msra.mxu0 %v1939
    %1965 = vmatprep.subr.mxu0 0.0
    %1966 = vmatpush1.msra.mxu0 %v1940
    %1967 = vmatprep.subr.mxu0 0.0
    %1968 = vmatpush1.msra.mxu0 %v1941
    %1969 = vmatprep.subr.mxu0 0.0
    %1970 = vmatpush1.msra.mxu0 %v1942
    %1971 = vmatprep.subr.mxu0 0.0
    %1972 = vmatpush1.msra.mxu0 %v1943
    %1973 = vmatprep.subr.mxu0 0.0
    %1974 = vmatpush1.msra.mxu0 %v1944
    %1975 = vmatprep.subr.mxu0 0.0
    %1976 = vmatpush1.msra.mxu0 %v1945
    %1977 = vmatprep.subr.mxu0 0.0
    %1978 = vmatpush1.msra.mxu0 %v1946
    %1979 = vmatprep.subr.mxu0 0.0
    %1980 = vmatpush1.msra.mxu0 0.0
    %1981 = vmatprep.subr.mxu0 0.0
    %1982 = vmatpush1.msra.mxu0 0.0
    %1983 = vmatprep.subr.mxu0 0.0
    %1984 = vmatpush1.msra.mxu0 0.0
    %1985 = vmatprep.subr.mxu0 0.0
    %1986 = vmatpush1.msra.mxu0 0.0
    %1987 = vmatprep.subr.mxu0 0.0
    %1988 = vmatpush1.msra.mxu0 0.0
    %1989 = vmatprep.subr.mxu0 0.0
    %1990 = vmatpush1.msra.mxu0 0.0
    %1991 = vmatprep.subr.mxu0 0.0
    %1992 = vmatpush1.msra.mxu0 0.0
    %1993 = vmatprep.subr.mxu0 0.0
    %1994 = vmatpush1.msra.mxu0 0.0
    %1995 = vmatprep.subr.mxu0 0.0
    %1996 = vmatpush1.msra.mxu0 0.0
    %1997 = vmatprep.subr.mxu0 0.0
    %1998 = vmatpush1.msra.mxu0 0.0
    %1999 = vmatprep.subr.mxu0 0.0
    %2000 = vmatpush1.msra.mxu0 0.0
    %2001 = vmatprep.subr.mxu0 0.0
    %2002 = vmatpush1.msra.mxu0 0.0
    %2003 = vmatprep.subr.mxu0 0.0
    %2004 = vmatpush1.msra.mxu0 0.0
    %2005 = vmatprep.subr.mxu0 0.0
    %2006 = vmatpush1.msra.mxu0 0.0
    %2007 = vmatprep.subr.mxu0 0.0
    %2008 = vmatpush1.msra.mxu0 0.0
    %2009 = vmatprep.subr.mxu0 0.0
    %2010 = vmatpush1.msra.mxu0 0.0
    %2011 = vmatprep.mubr.f32.mxu0 0.0
    %2012 = vmatmul.mubr.f32.gmra.mrb[0].mxu0 %v1923
    %v2013 = vpop.f32.mrb[0].mxu0
    %v2014 = vadd.f32 0.0, %v2013
    %v2015 = vpop.f32.mrb[0].mxu0
    %2016 = vmatprep.mubr.f32.mxu0 0.0
    %2017 = vmatmul.mubr.f32.gmra.mrb[0].mxu0 %v1924
    %v2018 = vpop.f32.mrb[0].mxu0
    %v2019 = vadd.f32 0.0, %v2018
    %v2020 = vpop.f32.mrb[0].mxu0
    %2021 = vmatprep.mubr.f32.mxu0 0.0
    %2022 = vmatmul.mubr.f32.gmra.mrb[0].mxu0 %v1925
    %v2023 = vpop.f32.mrb[0].mxu0
    %v2024 = vadd.f32 0.0, %v2023
    %v2025 = vpop.f32.mrb[0].mxu0
    %2026 = vmatprep.mubr.f32.mxu0 0.0
    %2027 = vmatmul.mubr.f32.gmra.mrb[0].mxu0 %v1926
    %v2028 = vpop.f32.mrb[0].mxu0
    %v2029 = vadd.f32 0.0, %v2028
    %v2030 = vpop.f32.mrb[0].mxu0
    %2031 = vmatprep.mubr.f32.mxu0 0.0
    %2032 = vmatmul.mubr.f32.gmra.mrb[0].mxu0 %v1927
    %v2033 = vpop.f32.mrb[0].mxu0
    %v2034 = vadd.f32 0.0, %v2033
    %v2035 = vpop.f32.mrb[0].mxu0
    %2036 = vmatprep.mubr.f32.mxu0 0.0
    %2037 = vmatmul.mubr.f32.gmra.mrb[0].mxu0 %v1928
    %v2038 = vpop.f32.mrb[0].mxu0
    %v2039 = vadd.f32 0.0, %v2038
    %v2040 = vpop.f32.mrb[0].mxu0
    %2041 = vmatprep.mubr.f32.mxu0 0.0
    %2042 = vmatmul.mubr.f32.gmra.mrb[0].mxu0 %v1929
    %v2043 = vpop.f32.mrb[0].mxu0
    %v2044 = vadd.f32 0.0, %v2043
    %v2045 = vpop.f32.mrb[0].mxu0
    %2046 = vdwg.mxu0
    %v2047 = vadd.f32 %v1914, %v2014
    %v2048 = vadd.f32 %v1915, %v2019
    %v2049 = vadd.f32 %v1916, %v2024
    %v2050 = vadd.f32 %v1917, %v2029
    %v2051 = vadd.f32 %v1918, %v2034
    %v2052 = vadd.f32 %v1919, %v2039
    %v2053 = vadd.f32 %v1920, %v2044
    %s2054 = sadd.s32 %s340, 248
    %s2055 = scalar_lea.vmem [#allocation2], %s2054
    %v2056 = vld [vmem:[%s2055] sm:$0xff]
    %v2057 = vld [vmem:[%s2055 + $0x8] sm:$0xff]
    %v2058 = vld [vmem:[%s2055 + $0x10] sm:$0xff]
    %v2059 = vld [vmem:[%s2055 + $0x18] sm:$0xff]
    %v2060 = vld [vmem:[%s2055 + $0x20] sm:$0xff]
    %v2061 = vld [vmem:[%s2055 + $0x28] sm:$0xff]
    %v2062 = vld [vmem:[%s2055 + $0x30] sm:$0xff]
    %s2063 = scalar_lea.vmem %s3, 1664
    %v2064 = vld [vmem:[%s2063] sm:$0xff]
    %v2065 = vld [vmem:[%s2063 + $0x8] sm:$0xff]
    %v2066 = vld [vmem:[%s2063 + $0x10] sm:$0xff]
    %v2067 = vld [vmem:[%s2063 + $0x18] sm:$0xff]
    %v2068 = vld [vmem:[%s2063 + $0x20] sm:$0xff]
    %v2069 = vld [vmem:[%s2063 + $0x28] sm:$0xff]
    %v2070 = vld [vmem:[%s2063 + $0x30] sm:$0xff]
    %v2071 = vld [vmem:[%s2063 + $0x38] sm:$0xff]
    %v2072 = vld [vmem:[%s2063 + $0x40] sm:$0xff]
    %v2073 = vld [vmem:[%s2063 + $0x48] sm:$0xff]
    %v2074 = vld [vmem:[%s2063 + $0x50] sm:$0xff]
    %v2075 = vld [vmem:[%s2063 + $0x58] sm:$0xff]
    %v2076 = vld [vmem:[%s2063 + $0x60] sm:$0xff]
    %v2077 = vld [vmem:[%s2063 + $0x68] sm:$0xff]
    %v2078 = vld [vmem:[%s2063 + $0x70] sm:$0xff]
    %v2079 = vld [vmem:[%s2063 + $0x78] sm:$0xff]
    %2080 = vmatprep.subr.mxu0 0.0
    %2081 = vmatpush1.msra.mxu0 %v2064
    %2082 = vmatprep.subr.mxu0 0.0
    %2083 = vmatpush1.msra.mxu0 %v2065
    %2084 = vmatprep.subr.mxu0 0.0
    %2085 = vmatpush1.msra.mxu0 %v2066
    %2086 = vmatprep.subr.mxu0 0.0
    %2087 = vmatpush1.msra.mxu0 %v2067
    %2088 = vmatprep.subr.mxu0 0.0
    %2089 = vmatpush1.msra.mxu0 %v2068
    %2090 = vmatprep.subr.mxu0 0.0
    %2091 = vmatpush1.msra.mxu0 %v2069
    %2092 = vmatprep.subr.mxu0 0.0
    %2093 = vmatpush1.msra.mxu0 %v2070
    %2094 = vmatprep.subr.mxu0 0.0
    %2095 = vmatpush1.msra.mxu0 %v2071
    %2096 = vmatprep.subr.mxu0 0.0
    %2097 = vmatpush1.msra.mxu0 %v2072
    %2098 = vmatprep.subr.mxu0 0.0
    %2099 = vmatpush1.msra.mxu0 %v2073
    %2100 = vmatprep.subr.mxu0 0.0
    %2101 = vmatpush1.msra.mxu0 %v2074
    %2102 = vmatprep.subr.mxu0 0.0
    %2103 = vmatpush1.msra.mxu0 %v2075
    %2104 = vmatprep.subr.mxu0 0.0
    %2105 = vmatpush1.msra.mxu0 %v2076
    %2106 = vmatprep.subr.mxu0 0.0
    %2107 = vmatpush1.msra.mxu0 %v2077
    %2108 = vmatprep.subr.mxu0 0.0
    %2109 = vmatpush1.msra.mxu0 %v2078
    %2110 = vmatprep.subr.mxu0 0.0
    %2111 = vmatpush1.msra.mxu0 %v2079
    %2112 = vmatprep.subr.mxu0 0.0
    %2113 = vmatpush1.msra.mxu0 0.0
    %2114 = vmatprep.subr.mxu0 0.0
    %2115 = vmatpush1.msra.mxu0 0.0
    %2116 = vmatprep.subr.mxu0 0.0
    %2117 = vmatpush1.msra.mxu0 0.0
    %2118 = vmatprep.subr.mxu0 0.0
    %2119 = vmatpush1.msra.mxu0 0.0
    %2120 = vmatprep.subr.mxu0 0.0
    %2121 = vmatpush1.msra.mxu0 0.0
    %2122 = vmatprep.subr.mxu0 0.0
    %2123 = vmatpush1.msra.mxu0 0.0
    %2124 = vmatprep.subr.mxu0 0.0
    %2125 = vmatpush1.msra.mxu0 0.0
    %2126 = vmatprep.subr.mxu0 0.0
    %2127 = vmatpush1.msra.mxu0 0.0
    %2128 = vmatprep.subr.mxu0 0.0
    %2129 = vmatpush1.msra.mxu0 0.0
    %2130 = vmatprep.subr.mxu0 0.0
    %2131 = vmatpush1.msra.mxu0 0.0
    %2132 = vmatprep.subr.mxu0 0.0
    %2133 = vmatpush1.msra.mxu0 0.0
    %2134 = vmatprep.subr.mxu0 0.0
    %2135 = vmatpush1.msra.mxu0 0.0
    %2136 = vmatprep.subr.mxu0 0.0
    %2137 = vmatpush1.msra.mxu0 0.0
    %2138 = vmatprep.subr.mxu0 0.0
    %2139 = vmatpush1.msra.mxu0 0.0
    %2140 = vmatprep.subr.mxu0 0.0
    %2141 = vmatpush1.msra.mxu0 0.0
    %2142 = vmatprep.subr.mxu0 0.0
    %2143 = vmatpush1.msra.mxu0 0.0
    %2144 = vmatprep.mubr.f32.mxu0 0.0
    %2145 = vmatmul.mubr.f32.gmra.mrb[0].mxu0 %v2056
    %v2146 = vpop.f32.mrb[0].mxu0
    %v2147 = vadd.f32 0.0, %v2146
    %v2148 = vpop.f32.mrb[0].mxu0
    %2149 = vmatprep.mubr.f32.mxu0 0.0
    %2150 = vmatmul.mubr.f32.gmra.mrb[0].mxu0 %v2057
    %v2151 = vpop.f32.mrb[0].mxu0
    %v2152 = vadd.f32 0.0, %v2151
    %v2153 = vpop.f32.mrb[0].mxu0
    %2154 = vmatprep.mubr.f32.mxu0 0.0
    %2155 = vmatmul.mubr.f32.gmra.mrb[0].mxu0 %v2058
    %v2156 = vpop.f32.mrb[0].mxu0
    %v2157 = vadd.f32 0.0, %v2156
    %v2158 = vpop.f32.mrb[0].mxu0
    %2159 = vmatprep.mubr.f32.mxu0 0.0
    %2160 = vmatmul.mubr.f32.gmra.mrb[0].mxu0 %v2059
    %v2161 = vpop.f32.mrb[0].mxu0
    %v2162 = vadd.f32 0.0, %v2161
    %v2163 = vpop.f32.mrb[0].mxu0
    %2164 = vmatprep.mubr.f32.mxu0 0.0
    %2165 = vmatmul.mubr.f32.gmra.mrb[0].mxu0 %v2060
    %v2166 = vpop.f32.mrb[0].mxu0
    %v2167 = vadd.f32 0.0, %v2166
    %v2168 = vpop.f32.mrb[0].mxu0
    %2169 = vmatprep.mubr.f32.mxu0 0.0
    %2170 = vmatmul.mubr.f32.gmra.mrb[0].mxu0 %v2061
    %v2171 = vpop.f32.mrb[0].mxu0
    %v2172 = vadd.f32 0.0, %v2171
    %v2173 = vpop.f32.mrb[0].mxu0
    %2174 = vmatprep.mubr.f32.mxu0 0.0
    %2175 = vmatmul.mubr.f32.gmra.mrb[0].mxu0 %v2062
    %v2176 = vpop.f32.mrb[0].mxu0
    %v2177 = vadd.f32 0.0, %v2176
    %v2178 = vpop.f32.mrb[0].mxu0
    %2179 = vdwg.mxu0
    %v2180 = vadd.f32 %v2047, %v2147
    %v2181 = vadd.f32 %v2048, %v2152
    %v2182 = vadd.f32 %v2049, %v2157
    %v2183 = vadd.f32 %v2050, %v2162
    %v2184 = vadd.f32 %v2051, %v2167
    %v2185 = vadd.f32 %v2052, %v2172
    %v2186 = vadd.f32 %v2053, %v2177
    %s2187 = sadd.s32 %s340, 256
    %s2188 = scalar_lea.vmem [#allocation2], %s2187
    %v2189 = vld [vmem:[%s2188] sm:$0xff]
    %v2190 = vld [vmem:[%s2188 + $0x8] sm:$0xff]
    %v2191 = vld [vmem:[%s2188 + $0x10] sm:$0xff]
    %v2192 = vld [vmem:[%s2188 + $0x18] sm:$0xff]
    %v2193 = vld [vmem:[%s2188 + $0x20] sm:$0xff]
    %v2194 = vld [vmem:[%s2188 + $0x28] sm:$0xff]
    %v2195 = vld [vmem:[%s2188 + $0x30] sm:$0xff]
    %s2196 = scalar_lea.vmem %s3, 1792
    %v2197 = vld [vmem:[%s2196] sm:$0xff]
    %v2198 = vld [vmem:[%s2196 + $0x8] sm:$0xff]
    %v2199 = vld [vmem:[%s2196 + $0x10] sm:$0xff]
    %v2200 = vld [vmem:[%s2196 + $0x18] sm:$0xff]
    %v2201 = vld [vmem:[%s2196 + $0x20] sm:$0xff]
    %v2202 = vld [vmem:[%s2196 + $0x28] sm:$0xff]
    %v2203 = vld [vmem:[%s2196 + $0x30] sm:$0xff]
    %v2204 = vld [vmem:[%s2196 + $0x38] sm:$0xff]
    %v2205 = vld [vmem:[%s2196 + $0x40] sm:$0xff]
    %v2206 = vld [vmem:[%s2196 + $0x48] sm:$0xff]
    %v2207 = vld [vmem:[%s2196 + $0x50] sm:$0xff]
    %v2208 = vld [vmem:[%s2196 + $0x58] sm:$0xff]
    %v2209 = vld [vmem:[%s2196 + $0x60] sm:$0xff]
    %v2210 = vld [vmem:[%s2196 + $0x68] sm:$0xff]
    %v2211 = vld [vmem:[%s2196 + $0x70] sm:$0xff]
    %v2212 = vld [vmem:[%s2196 + $0x78] sm:$0xff]
    %2213 = vmatprep.subr.mxu0 0.0
    %2214 = vmatpush1.msra.mxu0 %v2197
    %2215 = vmatprep.subr.mxu0 0.0
    %2216 = vmatpush1.msra.mxu0 %v2198
    %2217 = vmatprep.subr.mxu0 0.0
    %2218 = vmatpush1.msra.mxu0 %v2199
    %2219 = vmatprep.subr.mxu0 0.0
    %2220 = vmatpush1.msra.mxu0 %v2200
    %2221 = vmatprep.subr.mxu0 0.0
    %2222 = vmatpush1.msra.mxu0 %v2201
    %2223 = vmatprep.subr.mxu0 0.0
    %2224 = vmatpush1.msra.mxu0 %v2202
    %2225 = vmatprep.subr.mxu0 0.0
    %2226 = vmatpush1.msra.mxu0 %v2203
    %2227 = vmatprep.subr.mxu0 0.0
    %2228 = vmatpush1.msra.mxu0 %v2204
    %2229 = vmatprep.subr.mxu0 0.0
    %2230 = vmatpush1.msra.mxu0 %v2205
    %2231 = vmatprep.subr.mxu0 0.0
    %2232 = vmatpush1.msra.mxu0 %v2206
    %2233 = vmatprep.subr.mxu0 0.0
    %2234 = vmatpush1.msra.mxu0 %v2207
    %2235 = vmatprep.subr.mxu0 0.0
    %2236 = vmatpush1.msra.mxu0 %v2208
    %2237 = vmatprep.subr.mxu0 0.0
    %2238 = vmatpush1.msra.mxu0 %v2209
    %2239 = vmatprep.subr.mxu0 0.0
    %2240 = vmatpush1.msra.mxu0 %v2210
    %2241 = vmatprep.subr.mxu0 0.0
    %2242 = vmatpush1.msra.mxu0 %v2211
    %2243 = vmatprep.subr.mxu0 0.0
    %2244 = vmatpush1.msra.mxu0 %v2212
    %2245 = vmatprep.subr.mxu0 0.0
    %2246 = vmatpush1.msra.mxu0 0.0
    %2247 = vmatprep.subr.mxu0 0.0
    %2248 = vmatpush1.msra.mxu0 0.0
    %2249 = vmatprep.subr.mxu0 0.0
    %2250 = vmatpush1.msra.mxu0 0.0
    %2251 = vmatprep.subr.mxu0 0.0
    %2252 = vmatpush1.msra.mxu0 0.0
    %2253 = vmatprep.subr.mxu0 0.0
    %2254 = vmatpush1.msra.mxu0 0.0
    %2255 = vmatprep.subr.mxu0 0.0
    %2256 = vmatpush1.msra.mxu0 0.0
    %2257 = vmatprep.subr.mxu0 0.0
    %2258 = vmatpush1.msra.mxu0 0.0
    %2259 = vmatprep.subr.mxu0 0.0
    %2260 = vmatpush1.msra.mxu0 0.0
    %2261 = vmatprep.subr.mxu0 0.0
    %2262 = vmatpush1.msra.mxu0 0.0
    %2263 = vmatprep.subr.mxu0 0.0
    %2264 = vmatpush1.msra.mxu0 0.0
    %2265 = vmatprep.subr.mxu0 0.0
    %2266 = vmatpush1.msra.mxu0 0.0
    %2267 = vmatprep.subr.mxu0 0.0
    %2268 = vmatpush1.msra.mxu0 0.0
    %2269 = vmatprep.subr.mxu0 0.0
    %2270 = vmatpush1.msra.mxu0 0.0
    %2271 = vmatprep.subr.mxu0 0.0
    %2272 = vmatpush1.msra.mxu0 0.0
    %2273 = vmatprep.subr.mxu0 0.0
    %2274 = vmatpush1.msra.mxu0 0.0
    %2275 = vmatprep.subr.mxu0 0.0
    %2276 = vmatpush1.msra.mxu0 0.0
    %2277 = vmatprep.mubr.f32.mxu0 0.0
    %2278 = vmatmul.mubr.f32.gmra.mrb[0].mxu0 %v2189
    %v2279 = vpop.f32.mrb[0].mxu0
    %v2280 = vadd.f32 0.0, %v2279
    %v2281 = vpop.f32.mrb[0].mxu0
    %2282 = vmatprep.mubr.f32.mxu0 0.0
    %2283 = vmatmul.mubr.f32.gmra.mrb[0].mxu0 %v2190
    %v2284 = vpop.f32.mrb[0].mxu0
    %v2285 = vadd.f32 0.0, %v2284
    %v2286 = vpop.f32.mrb[0].mxu0
    %2287 = vmatprep.mubr.f32.mxu0 0.0
    %2288 = vmatmul.mubr.f32.gmra.mrb[0].mxu0 %v2191
    %v2289 = vpop.f32.mrb[0].mxu0
    %v2290 = vadd.f32 0.0, %v2289
    %v2291 = vpop.f32.mrb[0].mxu0
    %2292 = vmatprep.mubr.f32.mxu0 0.0
    %2293 = vmatmul.mubr.f32.gmra.mrb[0].mxu0 %v2192
    %v2294 = vpop.f32.mrb[0].mxu0
    %v2295 = vadd.f32 0.0, %v2294
    %v2296 = vpop.f32.mrb[0].mxu0
    %2297 = vmatprep.mubr.f32.mxu0 0.0
    %2298 = vmatmul.mubr.f32.gmra.mrb[0].mxu0 %v2193
    %v2299 = vpop.f32.mrb[0].mxu0
    %v2300 = vadd.f32 0.0, %v2299
    %v2301 = vpop.f32.mrb[0].mxu0
    %2302 = vmatprep.mubr.f32.mxu0 0.0
    %2303 = vmatmul.mubr.f32.gmra.mrb[0].mxu0 %v2194
    %v2304 = vpop.f32.mrb[0].mxu0
    %v2305 = vadd.f32 0.0, %v2304
    %v2306 = vpop.f32.mrb[0].mxu0
    %2307 = vmatprep.mubr.f32.mxu0 0.0
    %2308 = vmatmul.mubr.f32.gmra.mrb[0].mxu0 %v2195
    %v2309 = vpop.f32.mrb[0].mxu0
    %v2310 = vadd.f32 0.0, %v2309
    %v2311 = vpop.f32.mrb[0].mxu0
    %2312 = vdwg.mxu0
    %v2313 = vadd.f32 %v2180, %v2280
    %v2314 = vadd.f32 %v2181, %v2285
    %v2315 = vadd.f32 %v2182, %v2290
    %v2316 = vadd.f32 %v2183, %v2295
    %v2317 = vadd.f32 %v2184, %v2300
    %v2318 = vadd.f32 %v2185, %v2305
    %v2319 = vadd.f32 %v2186, %v2310
    %s2320 = sadd.s32 %s340, 336
    %s2321 = scalar_lea.vmem [#allocation2], %s2320
    %v2322 = vld [vmem:[%s2321] sm:$0xff]
    %v2323 = vld [vmem:[%s2321 + $0x8] sm:$0xff]
    %v2324 = vld [vmem:[%s2321 + $0x10] sm:$0xff]
    %v2325 = vld [vmem:[%s2321 + $0x18] sm:$0xff]
    %v2326 = vld [vmem:[%s2321 + $0x20] sm:$0xff]
    %v2327 = vld [vmem:[%s2321 + $0x28] sm:$0xff]
    %v2328 = vld [vmem:[%s2321 + $0x30] sm:$0xff]
    %s2329 = scalar_lea.vmem %s3, 1920
    %v2330 = vld [vmem:[%s2329] sm:$0xff]
    %v2331 = vld [vmem:[%s2329 + $0x8] sm:$0xff]
    %v2332 = vld [vmem:[%s2329 + $0x10] sm:$0xff]
    %v2333 = vld [vmem:[%s2329 + $0x18] sm:$0xff]
    %v2334 = vld [vmem:[%s2329 + $0x20] sm:$0xff]
    %v2335 = vld [vmem:[%s2329 + $0x28] sm:$0xff]
    %v2336 = vld [vmem:[%s2329 + $0x30] sm:$0xff]
    %v2337 = vld [vmem:[%s2329 + $0x38] sm:$0xff]
    %v2338 = vld [vmem:[%s2329 + $0x40] sm:$0xff]
    %v2339 = vld [vmem:[%s2329 + $0x48] sm:$0xff]
    %v2340 = vld [vmem:[%s2329 + $0x50] sm:$0xff]
    %v2341 = vld [vmem:[%s2329 + $0x58] sm:$0xff]
    %v2342 = vld [vmem:[%s2329 + $0x60] sm:$0xff]
    %v2343 = vld [vmem:[%s2329 + $0x68] sm:$0xff]
    %v2344 = vld [vmem:[%s2329 + $0x70] sm:$0xff]
    %v2345 = vld [vmem:[%s2329 + $0x78] sm:$0xff]
    %2346 = vmatprep.subr.mxu0 0.0
    %2347 = vmatpush1.msra.mxu0 %v2330
    %2348 = vmatprep.subr.mxu0 0.0
    %2349 = vmatpush1.msra.mxu0 %v2331
    %2350 = vmatprep.subr.mxu0 0.0
    %2351 = vmatpush1.msra.mxu0 %v2332
    %2352 = vmatprep.subr.mxu0 0.0
    %2353 = vmatpush1.msra.mxu0 %v2333
    %2354 = vmatprep.subr.mxu0 0.0
    %2355 = vmatpush1.msra.mxu0 %v2334
    %2356 = vmatprep.subr.mxu0 0.0
    %2357 = vmatpush1.msra.mxu0 %v2335
    %2358 = vmatprep.subr.mxu0 0.0
    %2359 = vmatpush1.msra.mxu0 %v2336
    %2360 = vmatprep.subr.mxu0 0.0
    %2361 = vmatpush1.msra.mxu0 %v2337
    %2362 = vmatprep.subr.mxu0 0.0
    %2363 = vmatpush1.msra.mxu0 %v2338
    %2364 = vmatprep.subr.mxu0 0.0
    %2365 = vmatpush1.msra.mxu0 %v2339
    %2366 = vmatprep.subr.mxu0 0.0
    %2367 = vmatpush1.msra.mxu0 %v2340
    %2368 = vmatprep.subr.mxu0 0.0
    %2369 = vmatpush1.msra.mxu0 %v2341
    %2370 = vmatprep.subr.mxu0 0.0
    %2371 = vmatpush1.msra.mxu0 %v2342
    %2372 = vmatprep.subr.mxu0 0.0
    %2373 = vmatpush1.msra.mxu0 %v2343
    %2374 = vmatprep.subr.mxu0 0.0
    %2375 = vmatpush1.msra.mxu0 %v2344
    %2376 = vmatprep.subr.mxu0 0.0
    %2377 = vmatpush1.msra.mxu0 %v2345
    %2378 = vmatprep.subr.mxu0 0.0
    %2379 = vmatpush1.msra.mxu0 0.0
    %2380 = vmatprep.subr.mxu0 0.0
    %2381 = vmatpush1.msra.mxu0 0.0
    %2382 = vmatprep.subr.mxu0 0.0
    %2383 = vmatpush1.msra.mxu0 0.0
    %2384 = vmatprep.subr.mxu0 0.0
    %2385 = vmatpush1.msra.mxu0 0.0
    %2386 = vmatprep.subr.mxu0 0.0
    %2387 = vmatpush1.msra.mxu0 0.0
    %2388 = vmatprep.subr.mxu0 0.0
    %2389 = vmatpush1.msra.mxu0 0.0
    %2390 = vmatprep.subr.mxu0 0.0
    %2391 = vmatpush1.msra.mxu0 0.0
    %2392 = vmatprep.subr.mxu0 0.0
    %2393 = vmatpush1.msra.mxu0 0.0
    %2394 = vmatprep.subr.mxu0 0.0
    %2395 = vmatpush1.msra.mxu0 0.0
    %2396 = vmatprep.subr.mxu0 0.0
    %2397 = vmatpush1.msra.mxu0 0.0
    %2398 = vmatprep.subr.mxu0 0.0
    %2399 = vmatpush1.msra.mxu0 0.0
    %2400 = vmatprep.subr.mxu0 0.0
    %2401 = vmatpush1.msra.mxu0 0.0
    %2402 = vmatprep.subr.mxu0 0.0
    %2403 = vmatpush1.msra.mxu0 0.0
    %2404 = vmatprep.subr.mxu0 0.0
    %2405 = vmatpush1.msra.mxu0 0.0
    %2406 = vmatprep.subr.mxu0 0.0
    %2407 = vmatpush1.msra.mxu0 0.0
    %2408 = vmatprep.subr.mxu0 0.0
    %2409 = vmatpush1.msra.mxu0 0.0
    %2410 = vmatprep.mubr.f32.mxu0 0.0
    %2411 = vmatmul.mubr.f32.gmra.mrb[0].mxu0 %v2322
    %v2412 = vpop.f32.mrb[0].mxu0
    %v2413 = vadd.f32 0.0, %v2412
    %v2414 = vpop.f32.mrb[0].mxu0
    %2415 = vmatprep.mubr.f32.mxu0 0.0
    %2416 = vmatmul.mubr.f32.gmra.mrb[0].mxu0 %v2323
    %v2417 = vpop.f32.mrb[0].mxu0
    %v2418 = vadd.f32 0.0, %v2417
    %v2419 = vpop.f32.mrb[0].mxu0
    %2420 = vmatprep.mubr.f32.mxu0 0.0
    %2421 = vmatmul.mubr.f32.gmra.mrb[0].mxu0 %v2324
    %v2422 = vpop.f32.mrb[0].mxu0
    %v2423 = vadd.f32 0.0, %v2422
    %v2424 = vpop.f32.mrb[0].mxu0
    %2425 = vmatprep.mubr.f32.mxu0 0.0
    %2426 = vmatmul.mubr.f32.gmra.mrb[0].mxu0 %v2325
    %v2427 = vpop.f32.mrb[0].mxu0
    %v2428 = vadd.f32 0.0, %v2427
    %v2429 = vpop.f32.mrb[0].mxu0
    %2430 = vmatprep.mubr.f32.mxu0 0.0
    %2431 = vmatmul.mubr.f32.gmra.mrb[0].mxu0 %v2326
    %v2432 = vpop.f32.mrb[0].mxu0
    %v2433 = vadd.f32 0.0, %v2432
    %v2434 = vpop.f32.mrb[0].mxu0
    %2435 = vmatprep.mubr.f32.mxu0 0.0
    %2436 = vmatmul.mubr.f32.gmra.mrb[0].mxu0 %v2327
    %v2437 = vpop.f32.mrb[0].mxu0
    %v2438 = vadd.f32 0.0, %v2437
    %v2439 = vpop.f32.mrb[0].mxu0
    %2440 = vmatprep.mubr.f32.mxu0 0.0
    %2441 = vmatmul.mubr.f32.gmra.mrb[0].mxu0 %v2328
    %v2442 = vpop.f32.mrb[0].mxu0
    %v2443 = vadd.f32 0.0, %v2442
    %v2444 = vpop.f32.mrb[0].mxu0
    %2445 = vdwg.mxu0
    %v2446 = vadd.f32 %v2313, %v2413
    %v2447 = vadd.f32 %v2314, %v2418
    %v2448 = vadd.f32 %v2315, %v2423
    %v2449 = vadd.f32 %v2316, %v2428
    %v2450 = vadd.f32 %v2317, %v2433
    %v2451 = vadd.f32 %v2318, %v2438
    %v2452 = vadd.f32 %v2319, %v2443
    %s2453 = sadd.s32 %s340, 344
    %s2454 = scalar_lea.vmem [#allocation2], %s2453
    %v2455 = vld [vmem:[%s2454] sm:$0xff]
    %v2456 = vld [vmem:[%s2454 + $0x8] sm:$0xff]
    %v2457 = vld [vmem:[%s2454 + $0x10] sm:$0xff]
    %v2458 = vld [vmem:[%s2454 + $0x18] sm:$0xff]
    %v2459 = vld [vmem:[%s2454 + $0x20] sm:$0xff]
    %v2460 = vld [vmem:[%s2454 + $0x28] sm:$0xff]
    %v2461 = vld [vmem:[%s2454 + $0x30] sm:$0xff]
    %s2462 = scalar_lea.vmem %s3, 2048
    %v2463 = vld [vmem:[%s2462] sm:$0xff]
    %v2464 = vld [vmem:[%s2462 + $0x8] sm:$0xff]
    %v2465 = vld [vmem:[%s2462 + $0x10] sm:$0xff]
    %v2466 = vld [vmem:[%s2462 + $0x18] sm:$0xff]
    %v2467 = vld [vmem:[%s2462 + $0x20] sm:$0xff]
    %v2468 = vld [vmem:[%s2462 + $0x28] sm:$0xff]
    %v2469 = vld [vmem:[%s2462 + $0x30] sm:$0xff]
    %v2470 = vld [vmem:[%s2462 + $0x38] sm:$0xff]
    %v2471 = vld [vmem:[%s2462 + $0x40] sm:$0xff]
    %v2472 = vld [vmem:[%s2462 + $0x48] sm:$0xff]
    %v2473 = vld [vmem:[%s2462 + $0x50] sm:$0xff]
    %v2474 = vld [vmem:[%s2462 + $0x58] sm:$0xff]
    %v2475 = vld [vmem:[%s2462 + $0x60] sm:$0xff]
    %v2476 = vld [vmem:[%s2462 + $0x68] sm:$0xff]
    %v2477 = vld [vmem:[%s2462 + $0x70] sm:$0xff]
    %v2478 = vld [vmem:[%s2462 + $0x78] sm:$0xff]
    %2479 = vmatprep.subr.mxu0 0.0
    %2480 = vmatpush1.msra.mxu0 %v2463
    %2481 = vmatprep.subr.mxu0 0.0
    %2482 = vmatpush1.msra.mxu0 %v2464
    %2483 = vmatprep.subr.mxu0 0.0
    %2484 = vmatpush1.msra.mxu0 %v2465
    %2485 = vmatprep.subr.mxu0 0.0
    %2486 = vmatpush1.msra.mxu0 %v2466
    %2487 = vmatprep.subr.mxu0 0.0
    %2488 = vmatpush1.msra.mxu0 %v2467
    %2489 = vmatprep.subr.mxu0 0.0
    %2490 = vmatpush1.msra.mxu0 %v2468
    %2491 = vmatprep.subr.mxu0 0.0
    %2492 = vmatpush1.msra.mxu0 %v2469
    %2493 = vmatprep.subr.mxu0 0.0
    %2494 = vmatpush1.msra.mxu0 %v2470
    %2495 = vmatprep.subr.mxu0 0.0
    %2496 = vmatpush1.msra.mxu0 %v2471
    %2497 = vmatprep.subr.mxu0 0.0
    %2498 = vmatpush1.msra.mxu0 %v2472
    %2499 = vmatprep.subr.mxu0 0.0
    %2500 = vmatpush1.msra.mxu0 %v2473
    %2501 = vmatprep.subr.mxu0 0.0
    %2502 = vmatpush1.msra.mxu0 %v2474
    %2503 = vmatprep.subr.mxu0 0.0
    %2504 = vmatpush1.msra.mxu0 %v2475
    %2505 = vmatprep.subr.mxu0 0.0
    %2506 = vmatpush1.msra.mxu0 %v2476
    %2507 = vmatprep.subr.mxu0 0.0
    %2508 = vmatpush1.msra.mxu0 %v2477
    %2509 = vmatprep.subr.mxu0 0.0
    %2510 = vmatpush1.msra.mxu0 %v2478
    %2511 = vmatprep.subr.mxu0 0.0
    %2512 = vmatpush1.msra.mxu0 0.0
    %2513 = vmatprep.subr.mxu0 0.0
    %2514 = vmatpush1.msra.mxu0 0.0
    %2515 = vmatprep.subr.mxu0 0.0
    %2516 = vmatpush1.msra.mxu0 0.0
    %2517 = vmatprep.subr.mxu0 0.0
    %2518 = vmatpush1.msra.mxu0 0.0
    %2519 = vmatprep.subr.mxu0 0.0
    %2520 = vmatpush1.msra.mxu0 0.0
    %2521 = vmatprep.subr.mxu0 0.0
    %2522 = vmatpush1.msra.mxu0 0.0
    %2523 = vmatprep.subr.mxu0 0.0
    %2524 = vmatpush1.msra.mxu0 0.0
    %2525 = vmatprep.subr.mxu0 0.0
    %2526 = vmatpush1.msra.mxu0 0.0
    %2527 = vmatprep.subr.mxu0 0.0
    %2528 = vmatpush1.msra.mxu0 0.0
    %2529 = vmatprep.subr.mxu0 0.0
    %2530 = vmatpush1.msra.mxu0 0.0
    %2531 = vmatprep.subr.mxu0 0.0
    %2532 = vmatpush1.msra.mxu0 0.0
    %2533 = vmatprep.subr.mxu0 0.0
    %2534 = vmatpush1.msra.mxu0 0.0
    %2535 = vmatprep.subr.mxu0 0.0
    %2536 = vmatpush1.msra.mxu0 0.0
    %2537 = vmatprep.subr.mxu0 0.0
    %2538 = vmatpush1.msra.mxu0 0.0
    %2539 = vmatprep.subr.mxu0 0.0
    %2540 = vmatpush1.msra.mxu0 0.0
    %2541 = vmatprep.subr.mxu0 0.0
    %2542 = vmatpush1.msra.mxu0 0.0
    %2543 = vmatprep.mubr.f32.mxu0 0.0
    %2544 = vmatmul.mubr.f32.gmra.mrb[0].mxu0 %v2455
    %v2545 = vpop.f32.mrb[0].mxu0
    %v2546 = vadd.f32 0.0, %v2545
    %v2547 = vpop.f32.mrb[0].mxu0
    %2548 = vmatprep.mubr.f32.mxu0 0.0
    %2549 = vmatmul.mubr.f32.gmra.mrb[0].mxu0 %v2456
    %v2550 = vpop.f32.mrb[0].mxu0
    %v2551 = vadd.f32 0.0, %v2550
    %v2552 = vpop.f32.mrb[0].mxu0
    %2553 = vmatprep.mubr.f32.mxu0 0.0
    %2554 = vmatmul.mubr.f32.gmra.mrb[0].mxu0 %v2457
    %v2555 = vpop.f32.mrb[0].mxu0
    %v2556 = vadd.f32 0.0, %v2555
    %v2557 = vpop.f32.mrb[0].mxu0
    %2558 = vmatprep.mubr.f32.mxu0 0.0
    %2559 = vmatmul.mubr.f32.gmra.mrb[0].mxu0 %v2458
    %v2560 = vpop.f32.mrb[0].mxu0
    %v2561 = vadd.f32 0.0, %v2560
    %v2562 = vpop.f32.mrb[0].mxu0
    %2563 = vmatprep.mubr.f32.mxu0 0.0
    %2564 = vmatmul.mubr.f32.gmra.mrb[0].mxu0 %v2459
    %v2565 = vpop.f32.mrb[0].mxu0
    %v2566 = vadd.f32 0.0, %v2565
    %v2567 = vpop.f32.mrb[0].mxu0
    %2568 = vmatprep.mubr.f32.mxu0 0.0
    %2569 = vmatmul.mubr.f32.gmra.mrb[0].mxu0 %v2460
    %v2570 = vpop.f32.mrb[0].mxu0
    %v2571 = vadd.f32 0.0, %v2570
    %v2572 = vpop.f32.mrb[0].mxu0
    %2573 = vmatprep.mubr.f32.mxu0 0.0
    %2574 = vmatmul.mubr.f32.gmra.mrb[0].mxu0 %v2461
    %v2575 = vpop.f32.mrb[0].mxu0
    %v2576 = vadd.f32 0.0, %v2575
    %v2577 = vpop.f32.mrb[0].mxu0
    %2578 = vdwg.mxu0
    %v2579 = vadd.f32 %v2446, %v2546
    %v2580 = vadd.f32 %v2447, %v2551
    %v2581 = vadd.f32 %v2448, %v2556
    %v2582 = vadd.f32 %v2449, %v2561
    %v2583 = vadd.f32 %v2450, %v2566
    %v2584 = vadd.f32 %v2451, %v2571
    %v2585 = vadd.f32 %v2452, %v2576
    %s2586 = sadd.s32 %s340, 352
    %s2587 = scalar_lea.vmem [#allocation2], %s2586
    %v2588 = vld [vmem:[%s2587] sm:$0xff]
    %v2589 = vld [vmem:[%s2587 + $0x8] sm:$0xff]
    %v2590 = vld [vmem:[%s2587 + $0x10] sm:$0xff]
    %v2591 = vld [vmem:[%s2587 + $0x18] sm:$0xff]
    %v2592 = vld [vmem:[%s2587 + $0x20] sm:$0xff]
    %v2593 = vld [vmem:[%s2587 + $0x28] sm:$0xff]
    %v2594 = vld [vmem:[%s2587 + $0x30] sm:$0xff]
    %s2595 = scalar_lea.vmem %s3, 2176
    %v2596 = vld [vmem:[%s2595] sm:$0xff]
    %v2597 = vld [vmem:[%s2595 + $0x8] sm:$0xff]
    %v2598 = vld [vmem:[%s2595 + $0x10] sm:$0xff]
    %v2599 = vld [vmem:[%s2595 + $0x18] sm:$0xff]
    %v2600 = vld [vmem:[%s2595 + $0x20] sm:$0xff]
    %v2601 = vld [vmem:[%s2595 + $0x28] sm:$0xff]
    %v2602 = vld [vmem:[%s2595 + $0x30] sm:$0xff]
    %v2603 = vld [vmem:[%s2595 + $0x38] sm:$0xff]
    %v2604 = vld [vmem:[%s2595 + $0x40] sm:$0xff]
    %v2605 = vld [vmem:[%s2595 + $0x48] sm:$0xff]
    %v2606 = vld [vmem:[%s2595 + $0x50] sm:$0xff]
    %v2607 = vld [vmem:[%s2595 + $0x58] sm:$0xff]
    %v2608 = vld [vmem:[%s2595 + $0x60] sm:$0xff]
    %v2609 = vld [vmem:[%s2595 + $0x68] sm:$0xff]
    %v2610 = vld [vmem:[%s2595 + $0x70] sm:$0xff]
    %v2611 = vld [vmem:[%s2595 + $0x78] sm:$0xff]
    %2612 = vmatprep.subr.mxu0 0.0
    %2613 = vmatpush1.msra.mxu0 %v2596
    %2614 = vmatprep.subr.mxu0 0.0
    %2615 = vmatpush1.msra.mxu0 %v2597
    %2616 = vmatprep.subr.mxu0 0.0
    %2617 = vmatpush1.msra.mxu0 %v2598
    %2618 = vmatprep.subr.mxu0 0.0
    %2619 = vmatpush1.msra.mxu0 %v2599
    %2620 = vmatprep.subr.mxu0 0.0
    %2621 = vmatpush1.msra.mxu0 %v2600
    %2622 = vmatprep.subr.mxu0 0.0
    %2623 = vmatpush1.msra.mxu0 %v2601
    %2624 = vmatprep.subr.mxu0 0.0
    %2625 = vmatpush1.msra.mxu0 %v2602
    %2626 = vmatprep.subr.mxu0 0.0
    %2627 = vmatpush1.msra.mxu0 %v2603
    %2628 = vmatprep.subr.mxu0 0.0
    %2629 = vmatpush1.msra.mxu0 %v2604
    %2630 = vmatprep.subr.mxu0 0.0
    %2631 = vmatpush1.msra.mxu0 %v2605
    %2632 = vmatprep.subr.mxu0 0.0
    %2633 = vmatpush1.msra.mxu0 %v2606
    %2634 = vmatprep.subr.mxu0 0.0
    %2635 = vmatpush1.msra.mxu0 %v2607
    %2636 = vmatprep.subr.mxu0 0.0
    %2637 = vmatpush1.msra.mxu0 %v2608
    %2638 = vmatprep.subr.mxu0 0.0
    %2639 = vmatpush1.msra.mxu0 %v2609
    %2640 = vmatprep.subr.mxu0 0.0
    %2641 = vmatpush1.msra.mxu0 %v2610
    %2642 = vmatprep.subr.mxu0 0.0
    %2643 = vmatpush1.msra.mxu0 %v2611
    %2644 = vmatprep.subr.mxu0 0.0
    %2645 = vmatpush1.msra.mxu0 0.0
    %2646 = vmatprep.subr.mxu0 0.0
    %2647 = vmatpush1.msra.mxu0 0.0
    %2648 = vmatprep.subr.mxu0 0.0
    %2649 = vmatpush1.msra.mxu0 0.0
    %2650 = vmatprep.subr.mxu0 0.0
    %2651 = vmatpush1.msra.mxu0 0.0
    %2652 = vmatprep.subr.mxu0 0.0
    %2653 = vmatpush1.msra.mxu0 0.0
    %2654 = vmatprep.subr.mxu0 0.0
    %2655 = vmatpush1.msra.mxu0 0.0
    %2656 = vmatprep.subr.mxu0 0.0
    %2657 = vmatpush1.msra.mxu0 0.0
    %2658 = vmatprep.subr.mxu0 0.0
    %2659 = vmatpush1.msra.mxu0 0.0
    %2660 = vmatprep.subr.mxu0 0.0
    %2661 = vmatpush1.msra.mxu0 0.0
    %2662 = vmatprep.subr.mxu0 0.0
    %2663 = vmatpush1.msra.mxu0 0.0
    %2664 = vmatprep.subr.mxu0 0.0
    %2665 = vmatpush1.msra.mxu0 0.0
    %2666 = vmatprep.subr.mxu0 0.0
    %2667 = vmatpush1.msra.mxu0 0.0
    %2668 = vmatprep.subr.mxu0 0.0
    %2669 = vmatpush1.msra.mxu0 0.0
    %2670 = vmatprep.subr.mxu0 0.0
    %2671 = vmatpush1.msra.mxu0 0.0
    %2672 = vmatprep.subr.mxu0 0.0
    %2673 = vmatpush1.msra.mxu0 0.0
    %2674 = vmatprep.subr.mxu0 0.0
    %2675 = vmatpush1.msra.mxu0 0.0
    %2676 = vmatprep.mubr.f32.mxu0 0.0
    %2677 = vmatmul.mubr.f32.gmra.mrb[0].mxu0 %v2588
    %v2678 = vpop.f32.mrb[0].mxu0
    %v2679 = vadd.f32 0.0, %v2678
    %v2680 = vpop.f32.mrb[0].mxu0
    %2681 = vmatprep.mubr.f32.mxu0 0.0
    %2682 = vmatmul.mubr.f32.gmra.mrb[0].mxu0 %v2589
    %v2683 = vpop.f32.mrb[0].mxu0
    %v2684 = vadd.f32 0.0, %v2683
    %v2685 = vpop.f32.mrb[0].mxu0
    %2686 = vmatprep.mubr.f32.mxu0 0.0
    %2687 = vmatmul.mubr.f32.gmra.mrb[0].mxu0 %v2590
    %v2688 = vpop.f32.mrb[0].mxu0
    %v2689 = vadd.f32 0.0, %v2688
    %v2690 = vpop.f32.mrb[0].mxu0
    %2691 = vmatprep.mubr.f32.mxu0 0.0
    %2692 = vmatmul.mubr.f32.gmra.mrb[0].mxu0 %v2591
    %v2693 = vpop.f32.mrb[0].mxu0
    %v2694 = vadd.f32 0.0, %v2693
    %v2695 = vpop.f32.mrb[0].mxu0
    %2696 = vmatprep.mubr.f32.mxu0 0.0
    %2697 = vmatmul.mubr.f32.gmra.mrb[0].mxu0 %v2592
    %v2698 = vpop.f32.mrb[0].mxu0
    %v2699 = vadd.f32 0.0, %v2698
    %v2700 = vpop.f32.mrb[0].mxu0
    %2701 = vmatprep.mubr.f32.mxu0 0.0
    %2702 = vmatmul.mubr.f32.gmra.mrb[0].mxu0 %v2593
    %v2703 = vpop.f32.mrb[0].mxu0
    %v2704 = vadd.f32 0.0, %v2703
    %v2705 = vpop.f32.mrb[0].mxu0
    %2706 = vmatprep.mubr.f32.mxu0 0.0
    %2707 = vmatmul.mubr.f32.gmra.mrb[0].mxu0 %v2594
    %v2708 = vpop.f32.mrb[0].mxu0
    %v2709 = vadd.f32 0.0, %v2708
    %v2710 = vpop.f32.mrb[0].mxu0
    %2711 = vdwg.mxu0
    %v2712 = vadd.f32 %v2579, %v2679
    %v2713 = vadd.f32 %v2580, %v2684
    %v2714 = vadd.f32 %v2581, %v2689
    %v2715 = vadd.f32 %v2582, %v2694
    %v2716 = vadd.f32 %v2583, %v2699
    %v2717 = vadd.f32 %v2584, %v2704
    %v2718 = vadd.f32 %v2585, %v2709
    %s2719 = sadd.s32 %s340, 360
    %s2720 = scalar_lea.vmem [#allocation2], %s2719
    %v2721 = vld [vmem:[%s2720] sm:$0xff]
    %v2722 = vld [vmem:[%s2720 + $0x8] sm:$0xff]
    %v2723 = vld [vmem:[%s2720 + $0x10] sm:$0xff]
    %v2724 = vld [vmem:[%s2720 + $0x18] sm:$0xff]
    %v2725 = vld [vmem:[%s2720 + $0x20] sm:$0xff]
    %v2726 = vld [vmem:[%s2720 + $0x28] sm:$0xff]
    %v2727 = vld [vmem:[%s2720 + $0x30] sm:$0xff]
    %s2728 = scalar_lea.vmem %s3, 2304
    %v2729 = vld [vmem:[%s2728] sm:$0xff]
    %v2730 = vld [vmem:[%s2728 + $0x8] sm:$0xff]
    %v2731 = vld [vmem:[%s2728 + $0x10] sm:$0xff]
    %v2732 = vld [vmem:[%s2728 + $0x18] sm:$0xff]
    %v2733 = vld [vmem:[%s2728 + $0x20] sm:$0xff]
    %v2734 = vld [vmem:[%s2728 + $0x28] sm:$0xff]
    %v2735 = vld [vmem:[%s2728 + $0x30] sm:$0xff]
    %v2736 = vld [vmem:[%s2728 + $0x38] sm:$0xff]
    %v2737 = vld [vmem:[%s2728 + $0x40] sm:$0xff]
    %v2738 = vld [vmem:[%s2728 + $0x48] sm:$0xff]
    %v2739 = vld [vmem:[%s2728 + $0x50] sm:$0xff]
    %v2740 = vld [vmem:[%s2728 + $0x58] sm:$0xff]
    %v2741 = vld [vmem:[%s2728 + $0x60] sm:$0xff]
    %v2742 = vld [vmem:[%s2728 + $0x68] sm:$0xff]
    %v2743 = vld [vmem:[%s2728 + $0x70] sm:$0xff]
    %v2744 = vld [vmem:[%s2728 + $0x78] sm:$0xff]
    %2745 = vmatprep.subr.mxu0 0.0
    %2746 = vmatpush1.msra.mxu0 %v2729
    %2747 = vmatprep.subr.mxu0 0.0
    %2748 = vmatpush1.msra.mxu0 %v2730
    %2749 = vmatprep.subr.mxu0 0.0
    %2750 = vmatpush1.msra.mxu0 %v2731
    %2751 = vmatprep.subr.mxu0 0.0
    %2752 = vmatpush1.msra.mxu0 %v2732
    %2753 = vmatprep.subr.mxu0 0.0
    %2754 = vmatpush1.msra.mxu0 %v2733
    %2755 = vmatprep.subr.mxu0 0.0
    %2756 = vmatpush1.msra.mxu0 %v2734
    %2757 = vmatprep.subr.mxu0 0.0
    %2758 = vmatpush1.msra.mxu0 %v2735
    %2759 = vmatprep.subr.mxu0 0.0
    %2760 = vmatpush1.msra.mxu0 %v2736
    %2761 = vmatprep.subr.mxu0 0.0
    %2762 = vmatpush1.msra.mxu0 %v2737
    %2763 = vmatprep.subr.mxu0 0.0
    %2764 = vmatpush1.msra.mxu0 %v2738
    %2765 = vmatprep.subr.mxu0 0.0
    %2766 = vmatpush1.msra.mxu0 %v2739
    %2767 = vmatprep.subr.mxu0 0.0
    %2768 = vmatpush1.msra.mxu0 %v2740
    %2769 = vmatprep.subr.mxu0 0.0
    %2770 = vmatpush1.msra.mxu0 %v2741
    %2771 = vmatprep.subr.mxu0 0.0
    %2772 = vmatpush1.msra.mxu0 %v2742
    %2773 = vmatprep.subr.mxu0 0.0
    %2774 = vmatpush1.msra.mxu0 %v2743
    %2775 = vmatprep.subr.mxu0 0.0
    %2776 = vmatpush1.msra.mxu0 %v2744
    %2777 = vmatprep.subr.mxu0 0.0
    %2778 = vmatpush1.msra.mxu0 0.0
    %2779 = vmatprep.subr.mxu0 0.0
    %2780 = vmatpush1.msra.mxu0 0.0
    %2781 = vmatprep.subr.mxu0 0.0
    %2782 = vmatpush1.msra.mxu0 0.0
    %2783 = vmatprep.subr.mxu0 0.0
    %2784 = vmatpush1.msra.mxu0 0.0
    %2785 = vmatprep.subr.mxu0 0.0
    %2786 = vmatpush1.msra.mxu0 0.0
    %2787 = vmatprep.subr.mxu0 0.0
    %2788 = vmatpush1.msra.mxu0 0.0
    %2789 = vmatprep.subr.mxu0 0.0
    %2790 = vmatpush1.msra.mxu0 0.0
    %2791 = vmatprep.subr.mxu0 0.0
    %2792 = vmatpush1.msra.mxu0 0.0
    %2793 = vmatprep.subr.mxu0 0.0
    %2794 = vmatpush1.msra.mxu0 0.0
    %2795 = vmatprep.subr.mxu0 0.0
    %2796 = vmatpush1.msra.mxu0 0.0
    %2797 = vmatprep.subr.mxu0 0.0
    %2798 = vmatpush1.msra.mxu0 0.0
    %2799 = vmatprep.subr.mxu0 0.0
    %2800 = vmatpush1.msra.mxu0 0.0
    %2801 = vmatprep.subr.mxu0 0.0
    %2802 = vmatpush1.msra.mxu0 0.0
    %2803 = vmatprep.subr.mxu0 0.0
    %2804 = vmatpush1.msra.mxu0 0.0
    %2805 = vmatprep.subr.mxu0 0.0
    %2806 = vmatpush1.msra.mxu0 0.0
    %2807 = vmatprep.subr.mxu0 0.0
    %2808 = vmatpush1.msra.mxu0 0.0
    %2809 = vmatprep.mubr.f32.mxu0 0.0
    %2810 = vmatmul.mubr.f32.gmra.mrb[0].mxu0 %v2721
    %v2811 = vpop.f32.mrb[0].mxu0
    %v2812 = vadd.f32 0.0, %v2811
    %v2813 = vpop.f32.mrb[0].mxu0
    %2814 = vmatprep.mubr.f32.mxu0 0.0
    %2815 = vmatmul.mubr.f32.gmra.mrb[0].mxu0 %v2722
    %v2816 = vpop.f32.mrb[0].mxu0
    %v2817 = vadd.f32 0.0, %v2816
    %v2818 = vpop.f32.mrb[0].mxu0
    %2819 = vmatprep.mubr.f32.mxu0 0.0
    %2820 = vmatmul.mubr.f32.gmra.mrb[0].mxu0 %v2723
    %v2821 = vpop.f32.mrb[0].mxu0
    %v2822 = vadd.f32 0.0, %v2821
    %v2823 = vpop.f32.mrb[0].mxu0
    %2824 = vmatprep.mubr.f32.mxu0 0.0
    %2825 = vmatmul.mubr.f32.gmra.mrb[0].mxu0 %v2724
    %v2826 = vpop.f32.mrb[0].mxu0
    %v2827 = vadd.f32 0.0, %v2826
    %v2828 = vpop.f32.mrb[0].mxu0
    %2829 = vmatprep.mubr.f32.mxu0 0.0
    %2830 = vmatmul.mubr.f32.gmra.mrb[0].mxu0 %v2725
    %v2831 = vpop.f32.mrb[0].mxu0
    %v2832 = vadd.f32 0.0, %v2831
    %v2833 = vpop.f32.mrb[0].mxu0
    %2834 = vmatprep.mubr.f32.mxu0 0.0
    %2835 = vmatmul.mubr.f32.gmra.mrb[0].mxu0 %v2726
    %v2836 = vpop.f32.mrb[0].mxu0
    %v2837 = vadd.f32 0.0, %v2836
    %v2838 = vpop.f32.mrb[0].mxu0
    %2839 = vmatprep.mubr.f32.mxu0 0.0
    %2840 = vmatmul.mubr.f32.gmra.mrb[0].mxu0 %v2727
    %v2841 = vpop.f32.mrb[0].mxu0
    %v2842 = vadd.f32 0.0, %v2841
    %v2843 = vpop.f32.mrb[0].mxu0
    %2844 = vdwg.mxu0
    %v2845 = vadd.f32 %v2712, %v2812
    %v2846 = vadd.f32 %v2713, %v2817
    %v2847 = vadd.f32 %v2714, %v2822
    %v2848 = vadd.f32 %v2715, %v2827
    %v2849 = vadd.f32 %v2716, %v2832
    %v2850 = vadd.f32 %v2717, %v2837
    %v2851 = vadd.f32 %v2718, %v2842
    %s2852 = sadd.s32 %s340, 368
    %s2853 = scalar_lea.vmem [#allocation2], %s2852
    %v2854 = vld [vmem:[%s2853] sm:$0xff]
    %v2855 = vld [vmem:[%s2853 + $0x8] sm:$0xff]
    %v2856 = vld [vmem:[%s2853 + $0x10] sm:$0xff]
    %v2857 = vld [vmem:[%s2853 + $0x18] sm:$0xff]
    %v2858 = vld [vmem:[%s2853 + $0x20] sm:$0xff]
    %v2859 = vld [vmem:[%s2853 + $0x28] sm:$0xff]
    %v2860 = vld [vmem:[%s2853 + $0x30] sm:$0xff]
    %s2861 = scalar_lea.vmem %s3, 2432
    %v2862 = vld [vmem:[%s2861] sm:$0xff]
    %v2863 = vld [vmem:[%s2861 + $0x8] sm:$0xff]
    %v2864 = vld [vmem:[%s2861 + $0x10] sm:$0xff]
    %v2865 = vld [vmem:[%s2861 + $0x18] sm:$0xff]
    %v2866 = vld [vmem:[%s2861 + $0x20] sm:$0xff]
    %v2867 = vld [vmem:[%s2861 + $0x28] sm:$0xff]
    %v2868 = vld [vmem:[%s2861 + $0x30] sm:$0xff]
    %v2869 = vld [vmem:[%s2861 + $0x38] sm:$0xff]
    %v2870 = vld [vmem:[%s2861 + $0x40] sm:$0xff]
    %v2871 = vld [vmem:[%s2861 + $0x48] sm:$0xff]
    %v2872 = vld [vmem:[%s2861 + $0x50] sm:$0xff]
    %v2873 = vld [vmem:[%s2861 + $0x58] sm:$0xff]
    %v2874 = vld [vmem:[%s2861 + $0x60] sm:$0xff]
    %v2875 = vld [vmem:[%s2861 + $0x68] sm:$0xff]
    %v2876 = vld [vmem:[%s2861 + $0x70] sm:$0xff]
    %v2877 = vld [vmem:[%s2861 + $0x78] sm:$0xff]
    %2878 = vmatprep.subr.mxu0 0.0
    %2879 = vmatpush1.msra.mxu0 %v2862
    %2880 = vmatprep.subr.mxu0 0.0
    %2881 = vmatpush1.msra.mxu0 %v2863
    %2882 = vmatprep.subr.mxu0 0.0
    %2883 = vmatpush1.msra.mxu0 %v2864
    %2884 = vmatprep.subr.mxu0 0.0
    %2885 = vmatpush1.msra.mxu0 %v2865
    %2886 = vmatprep.subr.mxu0 0.0
    %2887 = vmatpush1.msra.mxu0 %v2866
    %2888 = vmatprep.subr.mxu0 0.0
    %2889 = vmatpush1.msra.mxu0 %v2867
    %2890 = vmatprep.subr.mxu0 0.0
    %2891 = vmatpush1.msra.mxu0 %v2868
    %2892 = vmatprep.subr.mxu0 0.0
    %2893 = vmatpush1.msra.mxu0 %v2869
    %2894 = vmatprep.subr.mxu0 0.0
    %2895 = vmatpush1.msra.mxu0 %v2870
    %2896 = vmatprep.subr.mxu0 0.0
    %2897 = vmatpush1.msra.mxu0 %v2871
    %2898 = vmatprep.subr.mxu0 0.0
    %2899 = vmatpush1.msra.mxu0 %v2872
    %2900 = vmatprep.subr.mxu0 0.0
    %2901 = vmatpush1.msra.mxu0 %v2873
    %2902 = vmatprep.subr.mxu0 0.0
    %2903 = vmatpush1.msra.mxu0 %v2874
    %2904 = vmatprep.subr.mxu0 0.0
    %2905 = vmatpush1.msra.mxu0 %v2875
    %2906 = vmatprep.subr.mxu0 0.0
    %2907 = vmatpush1.msra.mxu0 %v2876
    %2908 = vmatprep.subr.mxu0 0.0
    %2909 = vmatpush1.msra.mxu0 %v2877
    %2910 = vmatprep.subr.mxu0 0.0
    %2911 = vmatpush1.msra.mxu0 0.0
    %2912 = vmatprep.subr.mxu0 0.0
    %2913 = vmatpush1.msra.mxu0 0.0
    %2914 = vmatprep.subr.mxu0 0.0
    %2915 = vmatpush1.msra.mxu0 0.0
    %2916 = vmatprep.subr.mxu0 0.0
    %2917 = vmatpush1.msra.mxu0 0.0
    %2918 = vmatprep.subr.mxu0 0.0
    %2919 = vmatpush1.msra.mxu0 0.0
    %2920 = vmatprep.subr.mxu0 0.0
    %2921 = vmatpush1.msra.mxu0 0.0
    %2922 = vmatprep.subr.mxu0 0.0
    %2923 = vmatpush1.msra.mxu0 0.0
    %2924 = vmatprep.subr.mxu0 0.0
    %2925 = vmatpush1.msra.mxu0 0.0
    %2926 = vmatprep.subr.mxu0 0.0
    %2927 = vmatpush1.msra.mxu0 0.0
    %2928 = vmatprep.subr.mxu0 0.0
    %2929 = vmatpush1.msra.mxu0 0.0
    %2930 = vmatprep.subr.mxu0 0.0
    %2931 = vmatpush1.msra.mxu0 0.0
    %2932 = vmatprep.subr.mxu0 0.0
    %2933 = vmatpush1.msra.mxu0 0.0
    %2934 = vmatprep.subr.mxu0 0.0
    %2935 = vmatpush1.msra.mxu0 0.0
    %2936 = vmatprep.subr.mxu0 0.0
    %2937 = vmatpush1.msra.mxu0 0.0
    %2938 = vmatprep.subr.mxu0 0.0
    %2939 = vmatpush1.msra.mxu0 0.0
    %2940 = vmatprep.subr.mxu0 0.0
    %2941 = vmatpush1.msra.mxu0 0.0
    %2942 = vmatprep.mubr.f32.mxu0 0.0
    %2943 = vmatmul.mubr.f32.gmra.mrb[0].mxu0 %v2854
    %v2944 = vpop.f32.mrb[0].mxu0
    %v2945 = vadd.f32 0.0, %v2944
    %v2946 = vpop.f32.mrb[0].mxu0
    %2947 = vmatprep.mubr.f32.mxu0 0.0
    %2948 = vmatmul.mubr.f32.gmra.mrb[0].mxu0 %v2855
    %v2949 = vpop.f32.mrb[0].mxu0
    %v2950 = vadd.f32 0.0, %v2949
    %v2951 = vpop.f32.mrb[0].mxu0
    %2952 = vmatprep.mubr.f32.mxu0 0.0
    %2953 = vmatmul.mubr.f32.gmra.mrb[0].mxu0 %v2856
    %v2954 = vpop.f32.mrb[0].mxu0
    %v2955 = vadd.f32 0.0, %v2954
    %v2956 = vpop.f32.mrb[0].mxu0
    %2957 = vmatprep.mubr.f32.mxu0 0.0
    %2958 = vmatmul.mubr.f32.gmra.mrb[0].mxu0 %v2857
    %v2959 = vpop.f32.mrb[0].mxu0
    %v2960 = vadd.f32 0.0, %v2959
    %v2961 = vpop.f32.mrb[0].mxu0
    %2962 = vmatprep.mubr.f32.mxu0 0.0
    %2963 = vmatmul.mubr.f32.gmra.mrb[0].mxu0 %v2858
    %v2964 = vpop.f32.mrb[0].mxu0
    %v2965 = vadd.f32 0.0, %v2964
    %v2966 = vpop.f32.mrb[0].mxu0
    %2967 = vmatprep.mubr.f32.mxu0 0.0
    %2968 = vmatmul.mubr.f32.gmra.mrb[0].mxu0 %v2859
    %v2969 = vpop.f32.mrb[0].mxu0
    %v2970 = vadd.f32 0.0, %v2969
    %v2971 = vpop.f32.mrb[0].mxu0
    %2972 = vmatprep.mubr.f32.mxu0 0.0
    %2973 = vmatmul.mubr.f32.gmra.mrb[0].mxu0 %v2860
    %v2974 = vpop.f32.mrb[0].mxu0
    %v2975 = vadd.f32 0.0, %v2974
    %v2976 = vpop.f32.mrb[0].mxu0
    %2977 = vdwg.mxu0
    %v2978 = vadd.f32 %v2845, %v2945
    %v2979 = vadd.f32 %v2846, %v2950
    %v2980 = vadd.f32 %v2847, %v2955
    %v2981 = vadd.f32 %v2848, %v2960
    %v2982 = vadd.f32 %v2849, %v2965
    %v2983 = vadd.f32 %v2850, %v2970
    %v2984 = vadd.f32 %v2851, %v2975
    %s2985 = sadd.s32 %s340, 448
    %s2986 = scalar_lea.vmem [#allocation2], %s2985
    %v2987 = vld [vmem:[%s2986] sm:$0xff]
    %v2988 = vld [vmem:[%s2986 + $0x8] sm:$0xff]
    %v2989 = vld [vmem:[%s2986 + $0x10] sm:$0xff]
    %v2990 = vld [vmem:[%s2986 + $0x18] sm:$0xff]
    %v2991 = vld [vmem:[%s2986 + $0x20] sm:$0xff]
    %v2992 = vld [vmem:[%s2986 + $0x28] sm:$0xff]
    %v2993 = vld [vmem:[%s2986 + $0x30] sm:$0xff]
    %s2994 = scalar_lea.vmem %s3, 2560
    %v2995 = vld [vmem:[%s2994] sm:$0xff]
    %v2996 = vld [vmem:[%s2994 + $0x8] sm:$0xff]
    %v2997 = vld [vmem:[%s2994 + $0x10] sm:$0xff]
    %v2998 = vld [vmem:[%s2994 + $0x18] sm:$0xff]
    %v2999 = vld [vmem:[%s2994 + $0x20] sm:$0xff]
    %v3000 = vld [vmem:[%s2994 + $0x28] sm:$0xff]
    %v3001 = vld [vmem:[%s2994 + $0x30] sm:$0xff]
    %v3002 = vld [vmem:[%s2994 + $0x38] sm:$0xff]
    %v3003 = vld [vmem:[%s2994 + $0x40] sm:$0xff]
    %v3004 = vld [vmem:[%s2994 + $0x48] sm:$0xff]
    %v3005 = vld [vmem:[%s2994 + $0x50] sm:$0xff]
    %v3006 = vld [vmem:[%s2994 + $0x58] sm:$0xff]
    %v3007 = vld [vmem:[%s2994 + $0x60] sm:$0xff]
    %v3008 = vld [vmem:[%s2994 + $0x68] sm:$0xff]
    %v3009 = vld [vmem:[%s2994 + $0x70] sm:$0xff]
    %v3010 = vld [vmem:[%s2994 + $0x78] sm:$0xff]
    %3011 = vmatprep.subr.mxu0 0.0
    %3012 = vmatpush1.msra.mxu0 %v2995
    %3013 = vmatprep.subr.mxu0 0.0
    %3014 = vmatpush1.msra.mxu0 %v2996
    %3015 = vmatprep.subr.mxu0 0.0
    %3016 = vmatpush1.msra.mxu0 %v2997
    %3017 = vmatprep.subr.mxu0 0.0
    %3018 = vmatpush1.msra.mxu0 %v2998
    %3019 = vmatprep.subr.mxu0 0.0
    %3020 = vmatpush1.msra.mxu0 %v2999
    %3021 = vmatprep.subr.mxu0 0.0
    %3022 = vmatpush1.msra.mxu0 %v3000
    %3023 = vmatprep.subr.mxu0 0.0
    %3024 = vmatpush1.msra.mxu0 %v3001
    %3025 = vmatprep.subr.mxu0 0.0
    %3026 = vmatpush1.msra.mxu0 %v3002
    %3027 = vmatprep.subr.mxu0 0.0
    %3028 = vmatpush1.msra.mxu0 %v3003
    %3029 = vmatprep.subr.mxu0 0.0
    %3030 = vmatpush1.msra.mxu0 %v3004
    %3031 = vmatprep.subr.mxu0 0.0
    %3032 = vmatpush1.msra.mxu0 %v3005
    %3033 = vmatprep.subr.mxu0 0.0
    %3034 = vmatpush1.msra.mxu0 %v3006
    %3035 = vmatprep.subr.mxu0 0.0
    %3036 = vmatpush1.msra.mxu0 %v3007
    %3037 = vmatprep.subr.mxu0 0.0
    %3038 = vmatpush1.msra.mxu0 %v3008
    %3039 = vmatprep.subr.mxu0 0.0
    %3040 = vmatpush1.msra.mxu0 %v3009
    %3041 = vmatprep.subr.mxu0 0.0
    %3042 = vmatpush1.msra.mxu0 %v3010
    %3043 = vmatprep.subr.mxu0 0.0
    %3044 = vmatpush1.msra.mxu0 0.0
    %3045 = vmatprep.subr.mxu0 0.0
    %3046 = vmatpush1.msra.mxu0 0.0
    %3047 = vmatprep.subr.mxu0 0.0
    %3048 = vmatpush1.msra.mxu0 0.0
    %3049 = vmatprep.subr.mxu0 0.0
    %3050 = vmatpush1.msra.mxu0 0.0
    %3051 = vmatprep.subr.mxu0 0.0
    %3052 = vmatpush1.msra.mxu0 0.0
    %3053 = vmatprep.subr.mxu0 0.0
    %3054 = vmatpush1.msra.mxu0 0.0
    %3055 = vmatprep.subr.mxu0 0.0
    %3056 = vmatpush1.msra.mxu0 0.0
    %3057 = vmatprep.subr.mxu0 0.0
    %3058 = vmatpush1.msra.mxu0 0.0
    %3059 = vmatprep.subr.mxu0 0.0
    %3060 = vmatpush1.msra.mxu0 0.0
    %3061 = vmatprep.subr.mxu0 0.0
    %3062 = vmatpush1.msra.mxu0 0.0
    %3063 = vmatprep.subr.mxu0 0.0
    %3064 = vmatpush1.msra.mxu0 0.0
    %3065 = vmatprep.subr.mxu0 0.0
    %3066 = vmatpush1.msra.mxu0 0.0
    %3067 = vmatprep.subr.mxu0 0.0
    %3068 = vmatpush1.msra.mxu0 0.0
    %3069 = vmatprep.subr.mxu0 0.0
    %3070 = vmatpush1.msra.mxu0 0.0
    %3071 = vmatprep.subr.mxu0 0.0
    %3072 = vmatpush1.msra.mxu0 0.0
    %3073 = vmatprep.subr.mxu0 0.0
    %3074 = vmatpush1.msra.mxu0 0.0
    %3075 = vmatprep.mubr.f32.mxu0 0.0
    %3076 = vmatmul.mubr.f32.gmra.mrb[0].mxu0 %v2987
    %v3077 = vpop.f32.mrb[0].mxu0
    %v3078 = vadd.f32 0.0, %v3077
    %v3079 = vpop.f32.mrb[0].mxu0
    %3080 = vmatprep.mubr.f32.mxu0 0.0
    %3081 = vmatmul.mubr.f32.gmra.mrb[0].mxu0 %v2988
    %v3082 = vpop.f32.mrb[0].mxu0
    %v3083 = vadd.f32 0.0, %v3082
    %v3084 = vpop.f32.mrb[0].mxu0
    %3085 = vmatprep.mubr.f32.mxu0 0.0
    %3086 = vmatmul.mubr.f32.gmra.mrb[0].mxu0 %v2989
    %v3087 = vpop.f32.mrb[0].mxu0
    %v3088 = vadd.f32 0.0, %v3087
    %v3089 = vpop.f32.mrb[0].mxu0
    %3090 = vmatprep.mubr.f32.mxu0 0.0
    %3091 = vmatmul.mubr.f32.gmra.mrb[0].mxu0 %v2990
    %v3092 = vpop.f32.mrb[0].mxu0
    %v3093 = vadd.f32 0.0, %v3092
    %v3094 = vpop.f32.mrb[0].mxu0
    %3095 = vmatprep.mubr.f32.mxu0 0.0
    %3096 = vmatmul.mubr.f32.gmra.mrb[0].mxu0 %v2991
    %v3097 = vpop.f32.mrb[0].mxu0
    %v3098 = vadd.f32 0.0, %v3097
    %v3099 = vpop.f32.mrb[0].mxu0
    %3100 = vmatprep.mubr.f32.mxu0 0.0
    %3101 = vmatmul.mubr.f32.gmra.mrb[0].mxu0 %v2992
    %v3102 = vpop.f32.mrb[0].mxu0
    %v3103 = vadd.f32 0.0, %v3102
    %v3104 = vpop.f32.mrb[0].mxu0
    %3105 = vmatprep.mubr.f32.mxu0 0.0
    %3106 = vmatmul.mubr.f32.gmra.mrb[0].mxu0 %v2993
    %v3107 = vpop.f32.mrb[0].mxu0
    %v3108 = vadd.f32 0.0, %v3107
    %v3109 = vpop.f32.mrb[0].mxu0
    %3110 = vdwg.mxu0
    %v3111 = vadd.f32 %v2978, %v3078
    %v3112 = vadd.f32 %v2979, %v3083
    %v3113 = vadd.f32 %v2980, %v3088
    %v3114 = vadd.f32 %v2981, %v3093
    %v3115 = vadd.f32 %v2982, %v3098
    %v3116 = vadd.f32 %v2983, %v3103
    %v3117 = vadd.f32 %v2984, %v3108
    %s3118 = sadd.s32 %s340, 456
    %s3119 = scalar_lea.vmem [#allocation2], %s3118
    %v3120 = vld [vmem:[%s3119] sm:$0xff]
    %v3121 = vld [vmem:[%s3119 + $0x8] sm:$0xff]
    %v3122 = vld [vmem:[%s3119 + $0x10] sm:$0xff]
    %v3123 = vld [vmem:[%s3119 + $0x18] sm:$0xff]
    %v3124 = vld [vmem:[%s3119 + $0x20] sm:$0xff]
    %v3125 = vld [vmem:[%s3119 + $0x28] sm:$0xff]
    %v3126 = vld [vmem:[%s3119 + $0x30] sm:$0xff]
    %s3127 = scalar_lea.vmem %s3, 2688
    %v3128 = vld [vmem:[%s3127] sm:$0xff]
    %v3129 = vld [vmem:[%s3127 + $0x8] sm:$0xff]
    %v3130 = vld [vmem:[%s3127 + $0x10] sm:$0xff]
    %v3131 = vld [vmem:[%s3127 + $0x18] sm:$0xff]
    %v3132 = vld [vmem:[%s3127 + $0x20] sm:$0xff]
    %v3133 = vld [vmem:[%s3127 + $0x28] sm:$0xff]
    %v3134 = vld [vmem:[%s3127 + $0x30] sm:$0xff]
    %v3135 = vld [vmem:[%s3127 + $0x38] sm:$0xff]
    %v3136 = vld [vmem:[%s3127 + $0x40] sm:$0xff]
    %v3137 = vld [vmem:[%s3127 + $0x48] sm:$0xff]
    %v3138 = vld [vmem:[%s3127 + $0x50] sm:$0xff]
    %v3139 = vld [vmem:[%s3127 + $0x58] sm:$0xff]
    %v3140 = vld [vmem:[%s3127 + $0x60] sm:$0xff]
    %v3141 = vld [vmem:[%s3127 + $0x68] sm:$0xff]
    %v3142 = vld [vmem:[%s3127 + $0x70] sm:$0xff]
    %v3143 = vld [vmem:[%s3127 + $0x78] sm:$0xff]
    %3144 = vmatprep.subr.mxu0 0.0
    %3145 = vmatpush1.msra.mxu0 %v3128
    %3146 = vmatprep.subr.mxu0 0.0
    %3147 = vmatpush1.msra.mxu0 %v3129
    %3148 = vmatprep.subr.mxu0 0.0
    %3149 = vmatpush1.msra.mxu0 %v3130
    %3150 = vmatprep.subr.mxu0 0.0
    %3151 = vmatpush1.msra.mxu0 %v3131
    %3152 = vmatprep.subr.mxu0 0.0
    %3153 = vmatpush1.msra.mxu0 %v3132
    %3154 = vmatprep.subr.mxu0 0.0
    %3155 = vmatpush1.msra.mxu0 %v3133
    %3156 = vmatprep.subr.mxu0 0.0
    %3157 = vmatpush1.msra.mxu0 %v3134
    %3158 = vmatprep.subr.mxu0 0.0
    %3159 = vmatpush1.msra.mxu0 %v3135
    %3160 = vmatprep.subr.mxu0 0.0
    %3161 = vmatpush1.msra.mxu0 %v3136
    %3162 = vmatprep.subr.mxu0 0.0
    %3163 = vmatpush1.msra.mxu0 %v3137
    %3164 = vmatprep.subr.mxu0 0.0
    %3165 = vmatpush1.msra.mxu0 %v3138
    %3166 = vmatprep.subr.mxu0 0.0
    %3167 = vmatpush1.msra.mxu0 %v3139
    %3168 = vmatprep.subr.mxu0 0.0
    %3169 = vmatpush1.msra.mxu0 %v3140
    %3170 = vmatprep.subr.mxu0 0.0
    %3171 = vmatpush1.msra.mxu0 %v3141
    %3172 = vmatprep.subr.mxu0 0.0
    %3173 = vmatpush1.msra.mxu0 %v3142
    %3174 = vmatprep.subr.mxu0 0.0
    %3175 = vmatpush1.msra.mxu0 %v3143
    %3176 = vmatprep.subr.mxu0 0.0
    %3177 = vmatpush1.msra.mxu0 0.0
    %3178 = vmatprep.subr.mxu0 0.0
    %3179 = vmatpush1.msra.mxu0 0.0
    %3180 = vmatprep.subr.mxu0 0.0
    %3181 = vmatpush1.msra.mxu0 0.0
    %3182 = vmatprep.subr.mxu0 0.0
    %3183 = vmatpush1.msra.mxu0 0.0
    %3184 = vmatprep.subr.mxu0 0.0
    %3185 = vmatpush1.msra.mxu0 0.0
    %3186 = vmatprep.subr.mxu0 0.0
    %3187 = vmatpush1.msra.mxu0 0.0
    %3188 = vmatprep.subr.mxu0 0.0
    %3189 = vmatpush1.msra.mxu0 0.0
    %3190 = vmatprep.subr.mxu0 0.0
    %3191 = vmatpush1.msra.mxu0 0.0
    %3192 = vmatprep.subr.mxu0 0.0
    %3193 = vmatpush1.msra.mxu0 0.0
    %3194 = vmatprep.subr.mxu0 0.0
    %3195 = vmatpush1.msra.mxu0 0.0
    %3196 = vmatprep.subr.mxu0 0.0
    %3197 = vmatpush1.msra.mxu0 0.0
    %3198 = vmatprep.subr.mxu0 0.0
    %3199 = vmatpush1.msra.mxu0 0.0
    %3200 = vmatprep.subr.mxu0 0.0
    %3201 = vmatpush1.msra.mxu0 0.0
    %3202 = vmatprep.subr.mxu0 0.0
    %3203 = vmatpush1.msra.mxu0 0.0
    %3204 = vmatprep.subr.mxu0 0.0
    %3205 = vmatpush1.msra.mxu0 0.0
    %3206 = vmatprep.subr.mxu0 0.0
    %3207 = vmatpush1.msra.mxu0 0.0
    %3208 = vmatprep.mubr.f32.mxu0 0.0
    %3209 = vmatmul.mubr.f32.gmra.mrb[0].mxu0 %v3120
    %v3210 = vpop.f32.mrb[0].mxu0
    %v3211 = vadd.f32 0.0, %v3210
    %v3212 = vpop.f32.mrb[0].mxu0
    %3213 = vmatprep.mubr.f32.mxu0 0.0
    %3214 = vmatmul.mubr.f32.gmra.mrb[0].mxu0 %v3121
    %v3215 = vpop.f32.mrb[0].mxu0
    %v3216 = vadd.f32 0.0, %v3215
    %v3217 = vpop.f32.mrb[0].mxu0
    %3218 = vmatprep.mubr.f32.mxu0 0.0
    %3219 = vmatmul.mubr.f32.gmra.mrb[0].mxu0 %v3122
    %v3220 = vpop.f32.mrb[0].mxu0
    %v3221 = vadd.f32 0.0, %v3220
    %v3222 = vpop.f32.mrb[0].mxu0
    %3223 = vmatprep.mubr.f32.mxu0 0.0
    %3224 = vmatmul.mubr.f32.gmra.mrb[0].mxu0 %v3123
    %v3225 = vpop.f32.mrb[0].mxu0
    %v3226 = vadd.f32 0.0, %v3225
    %v3227 = vpop.f32.mrb[0].mxu0
    %3228 = vmatprep.mubr.f32.mxu0 0.0
    %3229 = vmatmul.mubr.f32.gmra.mrb[0].mxu0 %v3124
    %v3230 = vpop.f32.mrb[0].mxu0
    %v3231 = vadd.f32 0.0, %v3230
    %v3232 = vpop.f32.mrb[0].mxu0
    %3233 = vmatprep.mubr.f32.mxu0 0.0
    %3234 = vmatmul.mubr.f32.gmra.mrb[0].mxu0 %v3125
    %v3235 = vpop.f32.mrb[0].mxu0
    %v3236 = vadd.f32 0.0, %v3235
    %v3237 = vpop.f32.mrb[0].mxu0
    %3238 = vmatprep.mubr.f32.mxu0 0.0
    %3239 = vmatmul.mubr.f32.gmra.mrb[0].mxu0 %v3126
    %v3240 = vpop.f32.mrb[0].mxu0
    %v3241 = vadd.f32 0.0, %v3240
    %v3242 = vpop.f32.mrb[0].mxu0
    %3243 = vdwg.mxu0
    %v3244 = vadd.f32 %v3111, %v3211
    %v3245 = vadd.f32 %v3112, %v3216
    %v3246 = vadd.f32 %v3113, %v3221
    %v3247 = vadd.f32 %v3114, %v3226
    %v3248 = vadd.f32 %v3115, %v3231
    %v3249 = vadd.f32 %v3116, %v3236
    %v3250 = vadd.f32 %v3117, %v3241
    %s3251 = sadd.s32 %s340, 464
    %s3252 = scalar_lea.vmem [#allocation2], %s3251
    %v3253 = vld [vmem:[%s3252] sm:$0xff]
    %v3254 = vld [vmem:[%s3252 + $0x8] sm:$0xff]
    %v3255 = vld [vmem:[%s3252 + $0x10] sm:$0xff]
    %v3256 = vld [vmem:[%s3252 + $0x18] sm:$0xff]
    %v3257 = vld [vmem:[%s3252 + $0x20] sm:$0xff]
    %v3258 = vld [vmem:[%s3252 + $0x28] sm:$0xff]
    %v3259 = vld [vmem:[%s3252 + $0x30] sm:$0xff]
    %s3260 = scalar_lea.vmem %s3, 2816
    %v3261 = vld [vmem:[%s3260] sm:$0xff]
    %v3262 = vld [vmem:[%s3260 + $0x8] sm:$0xff]
    %v3263 = vld [vmem:[%s3260 + $0x10] sm:$0xff]
    %v3264 = vld [vmem:[%s3260 + $0x18] sm:$0xff]
    %v3265 = vld [vmem:[%s3260 + $0x20] sm:$0xff]
    %v3266 = vld [vmem:[%s3260 + $0x28] sm:$0xff]
    %v3267 = vld [vmem:[%s3260 + $0x30] sm:$0xff]
    %v3268 = vld [vmem:[%s3260 + $0x38] sm:$0xff]
    %v3269 = vld [vmem:[%s3260 + $0x40] sm:$0xff]
    %v3270 = vld [vmem:[%s3260 + $0x48] sm:$0xff]
    %v3271 = vld [vmem:[%s3260 + $0x50] sm:$0xff]
    %v3272 = vld [vmem:[%s3260 + $0x58] sm:$0xff]
    %v3273 = vld [vmem:[%s3260 + $0x60] sm:$0xff]
    %v3274 = vld [vmem:[%s3260 + $0x68] sm:$0xff]
    %v3275 = vld [vmem:[%s3260 + $0x70] sm:$0xff]
    %v3276 = vld [vmem:[%s3260 + $0x78] sm:$0xff]
    %3277 = vmatprep.subr.mxu0 0.0
    %3278 = vmatpush1.msra.mxu0 %v3261
    %3279 = vmatprep.subr.mxu0 0.0
    %3280 = vmatpush1.msra.mxu0 %v3262
    %3281 = vmatprep.subr.mxu0 0.0
    %3282 = vmatpush1.msra.mxu0 %v3263
    %3283 = vmatprep.subr.mxu0 0.0
    %3284 = vmatpush1.msra.mxu0 %v3264
    %3285 = vmatprep.subr.mxu0 0.0
    %3286 = vmatpush1.msra.mxu0 %v3265
    %3287 = vmatprep.subr.mxu0 0.0
    %3288 = vmatpush1.msra.mxu0 %v3266
    %3289 = vmatprep.subr.mxu0 0.0
    %3290 = vmatpush1.msra.mxu0 %v3267
    %3291 = vmatprep.subr.mxu0 0.0
    %3292 = vmatpush1.msra.mxu0 %v3268
    %3293 = vmatprep.subr.mxu0 0.0
    %3294 = vmatpush1.msra.mxu0 %v3269
    %3295 = vmatprep.subr.mxu0 0.0
    %3296 = vmatpush1.msra.mxu0 %v3270
    %3297 = vmatprep.subr.mxu0 0.0
    %3298 = vmatpush1.msra.mxu0 %v3271
    %3299 = vmatprep.subr.mxu0 0.0
    %3300 = vmatpush1.msra.mxu0 %v3272
    %3301 = vmatprep.subr.mxu0 0.0
    %3302 = vmatpush1.msra.mxu0 %v3273
    %3303 = vmatprep.subr.mxu0 0.0
    %3304 = vmatpush1.msra.mxu0 %v3274
    %3305 = vmatprep.subr.mxu0 0.0
    %3306 = vmatpush1.msra.mxu0 %v3275
    %3307 = vmatprep.subr.mxu0 0.0
    %3308 = vmatpush1.msra.mxu0 %v3276
    %3309 = vmatprep.subr.mxu0 0.0
    %3310 = vmatpush1.msra.mxu0 0.0
    %3311 = vmatprep.subr.mxu0 0.0
    %3312 = vmatpush1.msra.mxu0 0.0
    %3313 = vmatprep.subr.mxu0 0.0
    %3314 = vmatpush1.msra.mxu0 0.0
    %3315 = vmatprep.subr.mxu0 0.0
    %3316 = vmatpush1.msra.mxu0 0.0
    %3317 = vmatprep.subr.mxu0 0.0
    %3318 = vmatpush1.msra.mxu0 0.0
    %3319 = vmatprep.subr.mxu0 0.0
    %3320 = vmatpush1.msra.mxu0 0.0
    %3321 = vmatprep.subr.mxu0 0.0
    %3322 = vmatpush1.msra.mxu0 0.0
    %3323 = vmatprep.subr.mxu0 0.0
    %3324 = vmatpush1.msra.mxu0 0.0
    %3325 = vmatprep.subr.mxu0 0.0
    %3326 = vmatpush1.msra.mxu0 0.0
    %3327 = vmatprep.subr.mxu0 0.0
    %3328 = vmatpush1.msra.mxu0 0.0
    %3329 = vmatprep.subr.mxu0 0.0
    %3330 = vmatpush1.msra.mxu0 0.0
    %3331 = vmatprep.subr.mxu0 0.0
    %3332 = vmatpush1.msra.mxu0 0.0
    %3333 = vmatprep.subr.mxu0 0.0
    %3334 = vmatpush1.msra.mxu0 0.0
    %3335 = vmatprep.subr.mxu0 0.0
    %3336 = vmatpush1.msra.mxu0 0.0
    %3337 = vmatprep.subr.mxu0 0.0
    %3338 = vmatpush1.msra.mxu0 0.0
    %3339 = vmatprep.subr.mxu0 0.0
    %3340 = vmatpush1.msra.mxu0 0.0
    %3341 = vmatprep.mubr.f32.mxu0 0.0
    %3342 = vmatmul.mubr.f32.gmra.mrb[0].mxu0 %v3253
    %v3343 = vpop.f32.mrb[0].mxu0
    %v3344 = vadd.f32 0.0, %v3343
    %v3345 = vpop.f32.mrb[0].mxu0
    %3346 = vmatprep.mubr.f32.mxu0 0.0
    %3347 = vmatmul.mubr.f32.gmra.mrb[0].mxu0 %v3254
    %v3348 = vpop.f32.mrb[0].mxu0
    %v3349 = vadd.f32 0.0, %v3348
    %v3350 = vpop.f32.mrb[0].mxu0
    %3351 = vmatprep.mubr.f32.mxu0 0.0
    %3352 = vmatmul.mubr.f32.gmra.mrb[0].mxu0 %v3255
    %v3353 = vpop.f32.mrb[0].mxu0
    %v3354 = vadd.f32 0.0, %v3353
    %v3355 = vpop.f32.mrb[0].mxu0
    %3356 = vmatprep.mubr.f32.mxu0 0.0
    %3357 = vmatmul.mubr.f32.gmra.mrb[0].mxu0 %v3256
    %v3358 = vpop.f32.mrb[0].mxu0
    %v3359 = vadd.f32 0.0, %v3358
    %v3360 = vpop.f32.mrb[0].mxu0
    %3361 = vmatprep.mubr.f32.mxu0 0.0
    %3362 = vmatmul.mubr.f32.gmra.mrb[0].mxu0 %v3257
    %v3363 = vpop.f32.mrb[0].mxu0
    %v3364 = vadd.f32 0.0, %v3363
    %v3365 = vpop.f32.mrb[0].mxu0
    %3366 = vmatprep.mubr.f32.mxu0 0.0
    %3367 = vmatmul.mubr.f32.gmra.mrb[0].mxu0 %v3258
    %v3368 = vpop.f32.mrb[0].mxu0
    %v3369 = vadd.f32 0.0, %v3368
    %v3370 = vpop.f32.mrb[0].mxu0
    %3371 = vmatprep.mubr.f32.mxu0 0.0
    %3372 = vmatmul.mubr.f32.gmra.mrb[0].mxu0 %v3259
    %v3373 = vpop.f32.mrb[0].mxu0
    %v3374 = vadd.f32 0.0, %v3373
    %v3375 = vpop.f32.mrb[0].mxu0
    %3376 = vdwg.mxu0
    %v3377 = vadd.f32 %v3244, %v3344
    %v3378 = vadd.f32 %v3245, %v3349
    %v3379 = vadd.f32 %v3246, %v3354
    %v3380 = vadd.f32 %v3247, %v3359
    %v3381 = vadd.f32 %v3248, %v3364
    %v3382 = vadd.f32 %v3249, %v3369
    %v3383 = vadd.f32 %v3250, %v3374
    %s3384 = sadd.s32 %s340, 472
    %s3385 = scalar_lea.vmem [#allocation2], %s3384
    %v3386 = vld [vmem:[%s3385] sm:$0xff]
    %v3387 = vld [vmem:[%s3385 + $0x8] sm:$0xff]
    %v3388 = vld [vmem:[%s3385 + $0x10] sm:$0xff]
    %v3389 = vld [vmem:[%s3385 + $0x18] sm:$0xff]
    %v3390 = vld [vmem:[%s3385 + $0x20] sm:$0xff]
    %v3391 = vld [vmem:[%s3385 + $0x28] sm:$0xff]
    %v3392 = vld [vmem:[%s3385 + $0x30] sm:$0xff]
    %s3393 = scalar_lea.vmem %s3, 2944
    %v3394 = vld [vmem:[%s3393] sm:$0xff]
    %v3395 = vld [vmem:[%s3393 + $0x8] sm:$0xff]
    %v3396 = vld [vmem:[%s3393 + $0x10] sm:$0xff]
    %v3397 = vld [vmem:[%s3393 + $0x18] sm:$0xff]
    %v3398 = vld [vmem:[%s3393 + $0x20] sm:$0xff]
    %v3399 = vld [vmem:[%s3393 + $0x28] sm:$0xff]
    %v3400 = vld [vmem:[%s3393 + $0x30] sm:$0xff]
    %v3401 = vld [vmem:[%s3393 + $0x38] sm:$0xff]
    %v3402 = vld [vmem:[%s3393 + $0x40] sm:$0xff]
    %v3403 = vld [vmem:[%s3393 + $0x48] sm:$0xff]
    %v3404 = vld [vmem:[%s3393 + $0x50] sm:$0xff]
    %v3405 = vld [vmem:[%s3393 + $0x58] sm:$0xff]
    %v3406 = vld [vmem:[%s3393 + $0x60] sm:$0xff]
    %v3407 = vld [vmem:[%s3393 + $0x68] sm:$0xff]
    %v3408 = vld [vmem:[%s3393 + $0x70] sm:$0xff]
    %v3409 = vld [vmem:[%s3393 + $0x78] sm:$0xff]
    %3410 = vmatprep.subr.mxu0 0.0
    %3411 = vmatpush1.msra.mxu0 %v3394
    %3412 = vmatprep.subr.mxu0 0.0
    %3413 = vmatpush1.msra.mxu0 %v3395
    %3414 = vmatprep.subr.mxu0 0.0
    %3415 = vmatpush1.msra.mxu0 %v3396
    %3416 = vmatprep.subr.mxu0 0.0
    %3417 = vmatpush1.msra.mxu0 %v3397
    %3418 = vmatprep.subr.mxu0 0.0
    %3419 = vmatpush1.msra.mxu0 %v3398
    %3420 = vmatprep.subr.mxu0 0.0
    %3421 = vmatpush1.msra.mxu0 %v3399
    %3422 = vmatprep.subr.mxu0 0.0
    %3423 = vmatpush1.msra.mxu0 %v3400
    %3424 = vmatprep.subr.mxu0 0.0
    %3425 = vmatpush1.msra.mxu0 %v3401
    %3426 = vmatprep.subr.mxu0 0.0
    %3427 = vmatpush1.msra.mxu0 %v3402
    %3428 = vmatprep.subr.mxu0 0.0
    %3429 = vmatpush1.msra.mxu0 %v3403
    %3430 = vmatprep.subr.mxu0 0.0
    %3431 = vmatpush1.msra.mxu0 %v3404
    %3432 = vmatprep.subr.mxu0 0.0
    %3433 = vmatpush1.msra.mxu0 %v3405
    %3434 = vmatprep.subr.mxu0 0.0
    %3435 = vmatpush1.msra.mxu0 %v3406
    %3436 = vmatprep.subr.mxu0 0.0
    %3437 = vmatpush1.msra.mxu0 %v3407
    %3438 = vmatprep.subr.mxu0 0.0
    %3439 = vmatpush1.msra.mxu0 %v3408
    %3440 = vmatprep.subr.mxu0 0.0
    %3441 = vmatpush1.msra.mxu0 %v3409
    %3442 = vmatprep.subr.mxu0 0.0
    %3443 = vmatpush1.msra.mxu0 0.0
    %3444 = vmatprep.subr.mxu0 0.0
    %3445 = vmatpush1.msra.mxu0 0.0
    %3446 = vmatprep.subr.mxu0 0.0
    %3447 = vmatpush1.msra.mxu0 0.0
    %3448 = vmatprep.subr.mxu0 0.0
    %3449 = vmatpush1.msra.mxu0 0.0
    %3450 = vmatprep.subr.mxu0 0.0
    %3451 = vmatpush1.msra.mxu0 0.0
    %3452 = vmatprep.subr.mxu0 0.0
    %3453 = vmatpush1.msra.mxu0 0.0
    %3454 = vmatprep.subr.mxu0 0.0
    %3455 = vmatpush1.msra.mxu0 0.0
    %3456 = vmatprep.subr.mxu0 0.0
    %3457 = vmatpush1.msra.mxu0 0.0
    %3458 = vmatprep.subr.mxu0 0.0
    %3459 = vmatpush1.msra.mxu0 0.0
    %3460 = vmatprep.subr.mxu0 0.0
    %3461 = vmatpush1.msra.mxu0 0.0
    %3462 = vmatprep.subr.mxu0 0.0
    %3463 = vmatpush1.msra.mxu0 0.0
    %3464 = vmatprep.subr.mxu0 0.0
    %3465 = vmatpush1.msra.mxu0 0.0
    %3466 = vmatprep.subr.mxu0 0.0
    %3467 = vmatpush1.msra.mxu0 0.0
    %3468 = vmatprep.subr.mxu0 0.0
    %3469 = vmatpush1.msra.mxu0 0.0
    %3470 = vmatprep.subr.mxu0 0.0
    %3471 = vmatpush1.msra.mxu0 0.0
    %3472 = vmatprep.subr.mxu0 0.0
    %3473 = vmatpush1.msra.mxu0 0.0
    %3474 = vmatprep.mubr.f32.mxu0 0.0
    %3475 = vmatmul.mubr.f32.gmra.mrb[0].mxu0 %v3386
    %v3476 = vpop.f32.mrb[0].mxu0
    %v3477 = vadd.f32 0.0, %v3476
    %v3478 = vpop.f32.mrb[0].mxu0
    %3479 = vmatprep.mubr.f32.mxu0 0.0
    %3480 = vmatmul.mubr.f32.gmra.mrb[0].mxu0 %v3387
    %v3481 = vpop.f32.mrb[0].mxu0
    %v3482 = vadd.f32 0.0, %v3481
    %v3483 = vpop.f32.mrb[0].mxu0
    %3484 = vmatprep.mubr.f32.mxu0 0.0
    %3485 = vmatmul.mubr.f32.gmra.mrb[0].mxu0 %v3388
    %v3486 = vpop.f32.mrb[0].mxu0
    %v3487 = vadd.f32 0.0, %v3486
    %v3488 = vpop.f32.mrb[0].mxu0
    %3489 = vmatprep.mubr.f32.mxu0 0.0
    %3490 = vmatmul.mubr.f32.gmra.mrb[0].mxu0 %v3389
    %v3491 = vpop.f32.mrb[0].mxu0
    %v3492 = vadd.f32 0.0, %v3491
    %v3493 = vpop.f32.mrb[0].mxu0
    %3494 = vmatprep.mubr.f32.mxu0 0.0
    %3495 = vmatmul.mubr.f32.gmra.mrb[0].mxu0 %v3390
    %v3496 = vpop.f32.mrb[0].mxu0
    %v3497 = vadd.f32 0.0, %v3496
    %v3498 = vpop.f32.mrb[0].mxu0
    %3499 = vmatprep.mubr.f32.mxu0 0.0
    %3500 = vmatmul.mubr.f32.gmra.mrb[0].mxu0 %v3391
    %v3501 = vpop.f32.mrb[0].mxu0
    %v3502 = vadd.f32 0.0, %v3501
    %v3503 = vpop.f32.mrb[0].mxu0
    %3504 = vmatprep.mubr.f32.mxu0 0.0
    %3505 = vmatmul.mubr.f32.gmra.mrb[0].mxu0 %v3392
    %v3506 = vpop.f32.mrb[0].mxu0
    %v3507 = vadd.f32 0.0, %v3506
    %v3508 = vpop.f32.mrb[0].mxu0
    %3509 = vdwg.mxu0
    %v3510 = vadd.f32 %v3377, %v3477
    %v3511 = vadd.f32 %v3378, %v3482
    %v3512 = vadd.f32 %v3379, %v3487
    %v3513 = vadd.f32 %v3380, %v3492
    %v3514 = vadd.f32 %v3381, %v3497
    %v3515 = vadd.f32 %v3382, %v3502
    %v3516 = vadd.f32 %v3383, %v3507
    %s3517 = sadd.s32 %s340, 480
    %s3518 = scalar_lea.vmem [#allocation2], %s3517
    %v3519 = vld [vmem:[%s3518] sm:$0xff]
    %v3520 = vld [vmem:[%s3518 + $0x8] sm:$0xff]
    %v3521 = vld [vmem:[%s3518 + $0x10] sm:$0xff]
    %v3522 = vld [vmem:[%s3518 + $0x18] sm:$0xff]
    %v3523 = vld [vmem:[%s3518 + $0x20] sm:$0xff]
    %v3524 = vld [vmem:[%s3518 + $0x28] sm:$0xff]
    %v3525 = vld [vmem:[%s3518 + $0x30] sm:$0xff]
    %s3526 = scalar_lea.vmem %s3, 3072
    %v3527 = vld [vmem:[%s3526] sm:$0xff]
    %v3528 = vld [vmem:[%s3526 + $0x8] sm:$0xff]
    %v3529 = vld [vmem:[%s3526 + $0x10] sm:$0xff]
    %v3530 = vld [vmem:[%s3526 + $0x18] sm:$0xff]
    %v3531 = vld [vmem:[%s3526 + $0x20] sm:$0xff]
    %v3532 = vld [vmem:[%s3526 + $0x28] sm:$0xff]
    %v3533 = vld [vmem:[%s3526 + $0x30] sm:$0xff]
    %v3534 = vld [vmem:[%s3526 + $0x38] sm:$0xff]
    %v3535 = vld [vmem:[%s3526 + $0x40] sm:$0xff]
    %v3536 = vld [vmem:[%s3526 + $0x48] sm:$0xff]
    %v3537 = vld [vmem:[%s3526 + $0x50] sm:$0xff]
    %v3538 = vld [vmem:[%s3526 + $0x58] sm:$0xff]
    %v3539 = vld [vmem:[%s3526 + $0x60] sm:$0xff]
    %v3540 = vld [vmem:[%s3526 + $0x68] sm:$0xff]
    %v3541 = vld [vmem:[%s3526 + $0x70] sm:$0xff]
    %v3542 = vld [vmem:[%s3526 + $0x78] sm:$0xff]
    %3543 = vmatprep.subr.mxu0 0.0
    %3544 = vmatpush1.msra.mxu0 %v3527
    %3545 = vmatprep.subr.mxu0 0.0
    %3546 = vmatpush1.msra.mxu0 %v3528
    %3547 = vmatprep.subr.mxu0 0.0
    %3548 = vmatpush1.msra.mxu0 %v3529
    %3549 = vmatprep.subr.mxu0 0.0
    %3550 = vmatpush1.msra.mxu0 %v3530
    %3551 = vmatprep.subr.mxu0 0.0
    %3552 = vmatpush1.msra.mxu0 %v3531
    %3553 = vmatprep.subr.mxu0 0.0
    %3554 = vmatpush1.msra.mxu0 %v3532
    %3555 = vmatprep.subr.mxu0 0.0
    %3556 = vmatpush1.msra.mxu0 %v3533
    %3557 = vmatprep.subr.mxu0 0.0
    %3558 = vmatpush1.msra.mxu0 %v3534
    %3559 = vmatprep.subr.mxu0 0.0
    %3560 = vmatpush1.msra.mxu0 %v3535
    %3561 = vmatprep.subr.mxu0 0.0
    %3562 = vmatpush1.msra.mxu0 %v3536
    %3563 = vmatprep.subr.mxu0 0.0
    %3564 = vmatpush1.msra.mxu0 %v3537
    %3565 = vmatprep.subr.mxu0 0.0
    %3566 = vmatpush1.msra.mxu0 %v3538
    %3567 = vmatprep.subr.mxu0 0.0
    %3568 = vmatpush1.msra.mxu0 %v3539
    %3569 = vmatprep.subr.mxu0 0.0
    %3570 = vmatpush1.msra.mxu0 %v3540
    %3571 = vmatprep.subr.mxu0 0.0
    %3572 = vmatpush1.msra.mxu0 %v3541
    %3573 = vmatprep.subr.mxu0 0.0
    %3574 = vmatpush1.msra.mxu0 %v3542
    %3575 = vmatprep.subr.mxu0 0.0
    %3576 = vmatpush1.msra.mxu0 0.0
    %3577 = vmatprep.subr.mxu0 0.0
    %3578 = vmatpush1.msra.mxu0 0.0
    %3579 = vmatprep.subr.mxu0 0.0
    %3580 = vmatpush1.msra.mxu0 0.0
    %3581 = vmatprep.subr.mxu0 0.0
    %3582 = vmatpush1.msra.mxu0 0.0
    %3583 = vmatprep.subr.mxu0 0.0
    %3584 = vmatpush1.msra.mxu0 0.0
    %3585 = vmatprep.subr.mxu0 0.0
    %3586 = vmatpush1.msra.mxu0 0.0
    %3587 = vmatprep.subr.mxu0 0.0
    %3588 = vmatpush1.msra.mxu0 0.0
    %3589 = vmatprep.subr.mxu0 0.0
    %3590 = vmatpush1.msra.mxu0 0.0
    %3591 = vmatprep.subr.mxu0 0.0
    %3592 = vmatpush1.msra.mxu0 0.0
    %3593 = vmatprep.subr.mxu0 0.0
    %3594 = vmatpush1.msra.mxu0 0.0
    %3595 = vmatprep.subr.mxu0 0.0
    %3596 = vmatpush1.msra.mxu0 0.0
    %3597 = vmatprep.subr.mxu0 0.0
    %3598 = vmatpush1.msra.mxu0 0.0
    %3599 = vmatprep.subr.mxu0 0.0
    %3600 = vmatpush1.msra.mxu0 0.0
    %3601 = vmatprep.subr.mxu0 0.0
    %3602 = vmatpush1.msra.mxu0 0.0
    %3603 = vmatprep.subr.mxu0 0.0
    %3604 = vmatpush1.msra.mxu0 0.0
    %3605 = vmatprep.subr.mxu0 0.0
    %3606 = vmatpush1.msra.mxu0 0.0
    %3607 = vmatprep.mubr.f32.mxu0 0.0
    %3608 = vmatmul.mubr.f32.gmra.mrb[0].mxu0 %v3519
    %v3609 = vpop.f32.mrb[0].mxu0
    %v3610 = vadd.f32 0.0, %v3609
    %v3611 = vpop.f32.mrb[0].mxu0
    %3612 = vmatprep.mubr.f32.mxu0 0.0
    %3613 = vmatmul.mubr.f32.gmra.mrb[0].mxu0 %v3520
    %v3614 = vpop.f32.mrb[0].mxu0
    %v3615 = vadd.f32 0.0, %v3614
    %v3616 = vpop.f32.mrb[0].mxu0
    %3617 = vmatprep.mubr.f32.mxu0 0.0
    %3618 = vmatmul.mubr.f32.gmra.mrb[0].mxu0 %v3521
    %v3619 = vpop.f32.mrb[0].mxu0
    %v3620 = vadd.f32 0.0, %v3619
    %v3621 = vpop.f32.mrb[0].mxu0
    %3622 = vmatprep.mubr.f32.mxu0 0.0
    %3623 = vmatmul.mubr.f32.gmra.mrb[0].mxu0 %v3522
    %v3624 = vpop.f32.mrb[0].mxu0
    %v3625 = vadd.f32 0.0, %v3624
    %v3626 = vpop.f32.mrb[0].mxu0
    %3627 = vmatprep.mubr.f32.mxu0 0.0
    %3628 = vmatmul.mubr.f32.gmra.mrb[0].mxu0 %v3523
    %v3629 = vpop.f32.mrb[0].mxu0
    %v3630 = vadd.f32 0.0, %v3629
    %v3631 = vpop.f32.mrb[0].mxu0
    %3632 = vmatprep.mubr.f32.mxu0 0.0
    %3633 = vmatmul.mubr.f32.gmra.mrb[0].mxu0 %v3524
    %v3634 = vpop.f32.mrb[0].mxu0
    %v3635 = vadd.f32 0.0, %v3634
    %v3636 = vpop.f32.mrb[0].mxu0
    %3637 = vmatprep.mubr.f32.mxu0 0.0
    %3638 = vmatmul.mubr.f32.gmra.mrb[0].mxu0 %v3525
    %v3639 = vpop.f32.mrb[0].mxu0
    %v3640 = vadd.f32 0.0, %v3639
    %v3641 = vpop.f32.mrb[0].mxu0
    %3642 = vdwg.mxu0
    %v3643 = vadd.f32 %v3510, %v3610
    %v3644 = vadd.f32 %v3511, %v3615
    %v3645 = vadd.f32 %v3512, %v3620
    %v3646 = vadd.f32 %v3513, %v3625
    %v3647 = vadd.f32 %v3514, %v3630
    %v3648 = vadd.f32 %v3515, %v3635
    %v3649 = vadd.f32 %v3516, %v3640
    %s3650 = scalar_lea.vmem [#allocation3], %s340
    %3651 = vst [vmem:[%s3650] sm:$0xff] %v3643
    %3652 = vst [vmem:[%s3650 + $0x8] sm:$0xff] %v3644
    %3653 = vst [vmem:[%s3650 + $0x10] sm:$0xff] %v3645
    %3654 = vst [vmem:[%s3650 + $0x18] sm:$0xff] %v3646
    %3655 = vst [vmem:[%s3650 + $0x20] sm:$0xff] %v3647
    %3656 = vst [vmem:[%s3650 + $0x28] sm:$0xff] %v3648
    %3657 = vst [vmem:[%s3650 + $0x30] sm:$0xff] %v3649
  $region57: #{net_forward.1} parent=0 // loop_footer
    %s339 = sadd.s32 1, %s335
  $region58: #{net_forward.1} parent=0 // loop_footer_branch
    %334 = sbr.rel target = $region54
  $region59: #{net_forward.1} parent=0 // loop_exit
    _
  %v3658 = vld [vmem:[#allocation3] sm:$0xff]
  %v3659 = vld [vmem:[#allocation3 + $0x8] sm:$0xff]
  %v3660 = vld [vmem:[#allocation3 + $0x70] sm:$0xff]
  %v3661 = vld [vmem:[#allocation3 + $0x78] sm:$0xff]
  %v3662 = vmax.f32 %v3658, %v3659
  %v3663 = vmax.f32 %v3660, %v3661
  %v3664 = vmax.f32 %v3662, %v3663
  %v3666 = vlaneseq
  %v3667 = vshrl.u32 %v3666, 7
  %v3668 = vsub.s32 0, %v3667
  %v3669 = vrot.slane %v55, %v3668
  %v3671 = vadd.f32 %v3664, %v3669
  %v3672 = vmax.f32 %v3671, 0.0
  %v3673 = vld [vmem:[%s5] sm:$0xff]
  %v3674 = vld [vmem:[%s5 + $0x8] sm:$0xff]
  %v3675 = vld [vmem:[%s5 + $0x10] sm:$0xff]
  %v3676 = vld [vmem:[%s5 + $0x18] sm:$0xff]
  %v3677 = vld [vmem:[%s5 + $0x20] sm:$0xff]
  %v3678 = vld [vmem:[%s5 + $0x28] sm:$0xff]
  %v3679 = vld [vmem:[%s5 + $0x30] sm:$0xff]
  %v3680 = vld [vmem:[%s5 + $0x38] sm:$0xff]
  %v3681 = vld [vmem:[%s5 + $0x40] sm:$0xff]
  %v3682 = vld [vmem:[%s5 + $0x48] sm:$0xff]
  %v3683 = vld [vmem:[%s5 + $0x50] sm:$0xff]
  %v3684 = vld [vmem:[%s5 + $0x58] sm:$0xff]
  %v3685 = vld [vmem:[%s5 + $0x60] sm:$0xff]
  %v3686 = vld [vmem:[%s5 + $0x68] sm:$0xff]
  %v3687 = vld [vmem:[%s5 + $0x70] sm:$0xff]
  %v3688 = vld [vmem:[%s5 + $0x78] sm:$0xff]
  %v3689 = vld [vmem:[#allocation3 + $0x10] sm:$0xff]
  %v3690 = vld [vmem:[#allocation3 + $0x18] sm:$0xff]
  %v3691 = vld [vmem:[#allocation3 + $0x80] sm:$0xff]
  %v3692 = vld [vmem:[#allocation3 + $0x88] sm:$0xff]
  %v3693 = vmax.f32 %v3689, %v3690
  %v3694 = vmax.f32 %v3691, %v3692
  %v3695 = vmax.f32 %v3693, %v3694
  %v3696 = vadd.f32 %v3695, %v3669
  %v3697 = vmax.f32 %v3696, 0.0
  %s3698 = scalar_lea.vmem %s5, 128
  %v3699 = vld [vmem:[%s3698] sm:$0xff]
  %v3700 = vld [vmem:[%s3698 + $0x8] sm:$0xff]
  %v3701 = vld [vmem:[%s3698 + $0x10] sm:$0xff]
  %v3702 = vld [vmem:[%s3698 + $0x18] sm:$0xff]
  %v3703 = vld [vmem:[%s3698 + $0x20] sm:$0xff]
  %v3704 = vld [vmem:[%s3698 + $0x28] sm:$0xff]
  %v3705 = vld [vmem:[%s3698 + $0x30] sm:$0xff]
  %v3706 = vld [vmem:[%s3698 + $0x38] sm:$0xff]
  %v3707 = vld [vmem:[%s3698 + $0x40] sm:$0xff]
  %v3708 = vld [vmem:[%s3698 + $0x48] sm:$0xff]
  %v3709 = vld [vmem:[%s3698 + $0x50] sm:$0xff]
  %v3710 = vld [vmem:[%s3698 + $0x58] sm:$0xff]
  %v3711 = vld [vmem:[%s3698 + $0x60] sm:$0xff]
  %v3712 = vld [vmem:[%s3698 + $0x68] sm:$0xff]
  %v3713 = vld [vmem:[%s3698 + $0x70] sm:$0xff]
  %v3714 = vld [vmem:[%s3698 + $0x78] sm:$0xff]
  %3715 = vmatprep.subr.mxu0 0.0
  %3716 = vmatpush1.msra.mxu0 %v3699
  %3717 = vmatprep.subr.mxu0 0.0
  %3718 = vmatpush1.msra.mxu0 %v3700
  %3719 = vmatprep.subr.mxu0 0.0
  %3720 = vmatpush1.msra.mxu0 %v3701
  %3721 = vmatprep.subr.mxu0 0.0
  %3722 = vmatpush1.msra.mxu0 %v3702
  %3723 = vmatprep.subr.mxu0 0.0
  %3724 = vmatpush1.msra.mxu0 %v3703
  %3725 = vmatprep.subr.mxu0 0.0
  %3726 = vmatpush1.msra.mxu0 %v3704
  %3727 = vmatprep.subr.mxu0 0.0
  %3728 = vmatpush1.msra.mxu0 %v3705
  %3729 = vmatprep.subr.mxu0 0.0
  %3730 = vmatpush1.msra.mxu0 %v3706
  %3731 = vmatprep.subr.mxu0 0.0
  %3732 = vmatpush1.msra.mxu0 %v3707
  %3733 = vmatprep.subr.mxu0 0.0
  %3734 = vmatpush1.msra.mxu0 %v3708
  %3735 = vmatprep.subr.mxu0 0.0
  %3736 = vmatpush1.msra.mxu0 %v3709
  %3737 = vmatprep.subr.mxu0 0.0
  %3738 = vmatpush1.msra.mxu0 %v3710
  %3739 = vmatprep.subr.mxu0 0.0
  %3740 = vmatpush1.msra.mxu0 %v3711
  %3741 = vmatprep.subr.mxu0 0.0
  %3742 = vmatpush1.msra.mxu0 %v3712
  %3743 = vmatprep.subr.mxu0 0.0
  %3744 = vmatpush1.msra.mxu0 %v3713
  %3745 = vmatprep.subr.mxu0 0.0
  %3746 = vmatpush1.msra.mxu0 %v3714
  %3747 = vmatprep.subr.mxu0 0.0
  %3748 = vmatpush1.msra.mxu0 0.0
  %3749 = vmatprep.subr.mxu0 0.0
  %3750 = vmatpush1.msra.mxu0 0.0
  %3751 = vmatprep.subr.mxu0 0.0
  %3752 = vmatpush1.msra.mxu0 0.0
  %3753 = vmatprep.subr.mxu0 0.0
  %3754 = vmatpush1.msra.mxu0 0.0
  %3755 = vmatprep.subr.mxu0 0.0
  %3756 = vmatpush1.msra.mxu0 0.0
  %3757 = vmatprep.subr.mxu0 0.0
  %3758 = vmatpush1.msra.mxu0 0.0
  %3759 = vmatprep.subr.mxu0 0.0
  %3760 = vmatpush1.msra.mxu0 0.0
  %3761 = vmatprep.subr.mxu0 0.0
  %3762 = vmatpush1.msra.mxu0 0.0
  %3763 = vmatprep.subr.mxu0 0.0
  %3764 = vmatpush1.msra.mxu0 0.0
  %3765 = vmatprep.subr.mxu0 0.0
  %3766 = vmatpush1.msra.mxu0 0.0
  %3767 = vmatprep.subr.mxu0 0.0
  %3768 = vmatpush1.msra.mxu0 0.0
  %3769 = vmatprep.subr.mxu0 0.0
  %3770 = vmatpush1.msra.mxu0 0.0
  %3771 = vmatprep.subr.mxu0 0.0
  %3772 = vmatpush1.msra.mxu0 0.0
  %3773 = vmatprep.subr.mxu0 0.0
  %3774 = vmatpush1.msra.mxu0 0.0
  %3775 = vmatprep.subr.mxu0 0.0
  %3776 = vmatpush1.msra.mxu0 0.0
  %3777 = vmatprep.subr.mxu0 0.0
  %3778 = vmatpush1.msra.mxu0 0.0
  %3779 = vmatprep.mubr.f32.mxu0 0.0
  %3780 = vmatmul.mubr.f32.gmra.mrb[0].mxu0 %v3697
  %v3781 = vpop.f32.mrb[0].mxu0
  %v3782 = vadd.f32 0.0, %v3781
  %v3783 = vpop.f32.mrb[0].mxu0
  %3784 = vdwg.mxu0
  %3785 = vmatprep.subr.mxu0 0.0
  %3786 = vmatpush1.msra.mxu0 %v3673
  %3787 = vmatprep.subr.mxu0 0.0
  %3788 = vmatpush1.msra.mxu0 %v3674
  %3789 = vmatprep.subr.mxu0 0.0
  %3790 = vmatpush1.msra.mxu0 %v3675
  %3791 = vmatprep.subr.mxu0 0.0
  %3792 = vmatpush1.msra.mxu0 %v3676
  %3793 = vmatprep.subr.mxu0 0.0
  %3794 = vmatpush1.msra.mxu0 %v3677
  %3795 = vmatprep.subr.mxu0 0.0
  %3796 = vmatpush1.msra.mxu0 %v3678
  %3797 = vmatprep.subr.mxu0 0.0
  %3798 = vmatpush1.msra.mxu0 %v3679
  %3799 = vmatprep.subr.mxu0 0.0
  %3800 = vmatpush1.msra.mxu0 %v3680
  %3801 = vmatprep.subr.mxu0 0.0
  %3802 = vmatpush1.msra.mxu0 %v3681
  %3803 = vmatprep.subr.mxu0 0.0
  %3804 = vmatpush1.msra.mxu0 %v3682
  %3805 = vmatprep.subr.mxu0 0.0
  %3806 = vmatpush1.msra.mxu0 %v3683
  %3807 = vmatprep.subr.mxu0 0.0
  %3808 = vmatpush1.msra.mxu0 %v3684
  %3809 = vmatprep.subr.mxu0 0.0
  %3810 = vmatpush1.msra.mxu0 %v3685
  %3811 = vmatprep.subr.mxu0 0.0
  %3812 = vmatpush1.msra.mxu0 %v3686
  %3813 = vmatprep.subr.mxu0 0.0
  %3814 = vmatpush1.msra.mxu0 %v3687
  %3815 = vmatprep.subr.mxu0 0.0
  %3816 = vmatpush1.msra.mxu0 %v3688
  %3817 = vmatprep.subr.mxu0 0.0
  %3818 = vmatpush1.msra.mxu0 0.0
  %3819 = vmatprep.subr.mxu0 0.0
  %3820 = vmatpush1.msra.mxu0 0.0
  %3821 = vmatprep.subr.mxu0 0.0
  %3822 = vmatpush1.msra.mxu0 0.0
  %3823 = vmatprep.subr.mxu0 0.0
  %3824 = vmatpush1.msra.mxu0 0.0
  %3825 = vmatprep.subr.mxu0 0.0
  %3826 = vmatpush1.msra.mxu0 0.0
  %3827 = vmatprep.subr.mxu0 0.0
  %3828 = vmatpush1.msra.mxu0 0.0
  %3829 = vmatprep.subr.mxu0 0.0
  %3830 = vmatpush1.msra.mxu0 0.0
  %3831 = vmatprep.subr.mxu0 0.0
  %3832 = vmatpush1.msra.mxu0 0.0
  %3833 = vmatprep.subr.mxu0 0.0
  %3834 = vmatpush1.msra.mxu0 0.0
  %3835 = vmatprep.subr.mxu0 0.0
  %3836 = vmatpush1.msra.mxu0 0.0
  %3837 = vmatprep.subr.mxu0 0.0
  %3838 = vmatpush1.msra.mxu0 0.0
  %3839 = vmatprep.subr.mxu0 0.0
  %3840 = vmatpush1.msra.mxu0 0.0
  %3841 = vmatprep.subr.mxu0 0.0
  %3842 = vmatpush1.msra.mxu0 0.0
  %3843 = vmatprep.subr.mxu0 0.0
  %3844 = vmatpush1.msra.mxu0 0.0
  %3845 = vmatprep.subr.mxu0 0.0
  %3846 = vmatpush1.msra.mxu0 0.0
  %3847 = vmatprep.subr.mxu0 0.0
  %3848 = vmatpush1.msra.mxu0 0.0
  %3849 = vmatprep.mubr.f32.mxu0 0.0
  %3850 = vmatmul.mubr.f32.gmra.mrb[0].mxu0 %v3672
  %v3851 = vpop.f32.mrb[0].mxu0
  %v3852 = vadd.f32 %v3782, %v3851
  %v3853 = vpop.f32.mrb[0].mxu0
  %3854 = vdwg.mxu0
  %v3855 = vld [vmem:[#allocation3 + $0x20] sm:$0xff]
  %v3856 = vld [vmem:[#allocation3 + $0x28] sm:$0xff]
  %v3857 = vld [vmem:[#allocation3 + $0x90] sm:$0xff]
  %v3858 = vld [vmem:[#allocation3 + $0x98] sm:$0xff]
  %v3859 = vmax.f32 %v3855, %v3856
  %v3860 = vmax.f32 %v3857, %v3858
  %v3861 = vmax.f32 %v3859, %v3860
  %v3862 = vadd.f32 %v3861, %v3669
  %v3863 = vmax.f32 %v3862, 0.0
  %s3864 = scalar_lea.vmem %s5, 256
  %v3865 = vld [vmem:[%s3864] sm:$0xff]
  %v3866 = vld [vmem:[%s3864 + $0x8] sm:$0xff]
  %v3867 = vld [vmem:[%s3864 + $0x10] sm:$0xff]
  %v3868 = vld [vmem:[%s3864 + $0x18] sm:$0xff]
  %v3869 = vld [vmem:[%s3864 + $0x20] sm:$0xff]
  %v3870 = vld [vmem:[%s3864 + $0x28] sm:$0xff]
  %v3871 = vld [vmem:[%s3864 + $0x30] sm:$0xff]
  %v3872 = vld [vmem:[%s3864 + $0x38] sm:$0xff]
  %v3873 = vld [vmem:[%s3864 + $0x40] sm:$0xff]
  %v3874 = vld [vmem:[%s3864 + $0x48] sm:$0xff]
  %v3875 = vld [vmem:[%s3864 + $0x50] sm:$0xff]
  %v3876 = vld [vmem:[%s3864 + $0x58] sm:$0xff]
  %v3877 = vld [vmem:[%s3864 + $0x60] sm:$0xff]
  %v3878 = vld [vmem:[%s3864 + $0x68] sm:$0xff]
  %v3879 = vld [vmem:[%s3864 + $0x70] sm:$0xff]
  %v3880 = vld [vmem:[%s3864 + $0x78] sm:$0xff]
  %3881 = vmatprep.subr.mxu0 0.0
  %3882 = vmatpush1.msra.mxu0 %v3865
  %3883 = vmatprep.subr.mxu0 0.0
  %3884 = vmatpush1.msra.mxu0 %v3866
  %3885 = vmatprep.subr.mxu0 0.0
  %3886 = vmatpush1.msra.mxu0 %v3867
  %3887 = vmatprep.subr.mxu0 0.0
  %3888 = vmatpush1.msra.mxu0 %v3868
  %3889 = vmatprep.subr.mxu0 0.0
  %3890 = vmatpush1.msra.mxu0 %v3869
  %3891 = vmatprep.subr.mxu0 0.0
  %3892 = vmatpush1.msra.mxu0 %v3870
  %3893 = vmatprep.subr.mxu0 0.0
  %3894 = vmatpush1.msra.mxu0 %v3871
  %3895 = vmatprep.subr.mxu0 0.0
  %3896 = vmatpush1.msra.mxu0 %v3872
  %3897 = vmatprep.subr.mxu0 0.0
  %3898 = vmatpush1.msra.mxu0 %v3873
  %3899 = vmatprep.subr.mxu0 0.0
  %3900 = vmatpush1.msra.mxu0 %v3874
  %3901 = vmatprep.subr.mxu0 0.0
  %3902 = vmatpush1.msra.mxu0 %v3875
  %3903 = vmatprep.subr.mxu0 0.0
  %3904 = vmatpush1.msra.mxu0 %v3876
  %3905 = vmatprep.subr.mxu0 0.0
  %3906 = vmatpush1.msra.mxu0 %v3877
  %3907 = vmatprep.subr.mxu0 0.0
  %3908 = vmatpush1.msra.mxu0 %v3878
  %3909 = vmatprep.subr.mxu0 0.0
  %3910 = vmatpush1.msra.mxu0 %v3879
  %3911 = vmatprep.subr.mxu0 0.0
  %3912 = vmatpush1.msra.mxu0 %v3880
  %3913 = vmatprep.subr.mxu0 0.0
  %3914 = vmatpush1.msra.mxu0 0.0
  %3915 = vmatprep.subr.mxu0 0.0
  %3916 = vmatpush1.msra.mxu0 0.0
  %3917 = vmatprep.subr.mxu0 0.0
  %3918 = vmatpush1.msra.mxu0 0.0
  %3919 = vmatprep.subr.mxu0 0.0
  %3920 = vmatpush1.msra.mxu0 0.0
  %3921 = vmatprep.subr.mxu0 0.0
  %3922 = vmatpush1.msra.mxu0 0.0
  %3923 = vmatprep.subr.mxu0 0.0
  %3924 = vmatpush1.msra.mxu0 0.0
  %3925 = vmatprep.subr.mxu0 0.0
  %3926 = vmatpush1.msra.mxu0 0.0
  %3927 = vmatprep.subr.mxu0 0.0
  %3928 = vmatpush1.msra.mxu0 0.0
  %3929 = vmatprep.subr.mxu0 0.0
  %3930 = vmatpush1.msra.mxu0 0.0
  %3931 = vmatprep.subr.mxu0 0.0
  %3932 = vmatpush1.msra.mxu0 0.0
  %3933 = vmatprep.subr.mxu0 0.0
  %3934 = vmatpush1.msra.mxu0 0.0
  %3935 = vmatprep.subr.mxu0 0.0
  %3936 = vmatpush1.msra.mxu0 0.0
  %3937 = vmatprep.subr.mxu0 0.0
  %3938 = vmatpush1.msra.mxu0 0.0
  %3939 = vmatprep.subr.mxu0 0.0
  %3940 = vmatpush1.msra.mxu0 0.0
  %3941 = vmatprep.subr.mxu0 0.0
  %3942 = vmatpush1.msra.mxu0 0.0
  %3943 = vmatprep.subr.mxu0 0.0
  %3944 = vmatpush1.msra.mxu0 0.0
  %3945 = vmatprep.mubr.f32.mxu0 0.0
  %3946 = vmatmul.mubr.f32.gmra.mrb[0].mxu0 %v3863
  %v3947 = vpop.f32.mrb[0].mxu0
  %v3948 = vadd.f32 0.0, %v3947
  %v3949 = vpop.f32.mrb[0].mxu0
  %3950 = vdwg.mxu0
  %v3951 = vadd.f32 %v3852, %v3948
  %v3952 = vld [vmem:[#allocation3 + $0x30] sm:$0xff]
  %v3953 = vld [vmem:[#allocation3 + $0x38] sm:$0xff]
  %v3954 = vld [vmem:[#allocation3 + $0xa0] sm:$0xff]
  %v3955 = vld [vmem:[#allocation3 + $0xa8] sm:$0xff]
  %v3956 = vmax.f32 %v3952, %v3953
  %v3957 = vmax.f32 %v3954, %v3955
  %v3958 = vmax.f32 %v3956, %v3957
  %v3959 = vadd.f32 %v3958, %v3669
  %v3960 = vmax.f32 %v3959, 0.0
  %s3961 = scalar_lea.vmem %s5, 384
  %v3962 = vld [vmem:[%s3961] sm:$0xff]
  %v3963 = vld [vmem:[%s3961 + $0x8] sm:$0xff]
  %v3964 = vld [vmem:[%s3961 + $0x10] sm:$0xff]
  %v3965 = vld [vmem:[%s3961 + $0x18] sm:$0xff]
  %v3966 = vld [vmem:[%s3961 + $0x20] sm:$0xff]
  %v3967 = vld [vmem:[%s3961 + $0x28] sm:$0xff]
  %v3968 = vld [vmem:[%s3961 + $0x30] sm:$0xff]
  %v3969 = vld [vmem:[%s3961 + $0x38] sm:$0xff]
  %v3970 = vld [vmem:[%s3961 + $0x40] sm:$0xff]
  %v3971 = vld [vmem:[%s3961 + $0x48] sm:$0xff]
  %v3972 = vld [vmem:[%s3961 + $0x50] sm:$0xff]
  %v3973 = vld [vmem:[%s3961 + $0x58] sm:$0xff]
  %v3974 = vld [vmem:[%s3961 + $0x60] sm:$0xff]
  %v3975 = vld [vmem:[%s3961 + $0x68] sm:$0xff]
  %v3976 = vld [vmem:[%s3961 + $0x70] sm:$0xff]
  %v3977 = vld [vmem:[%s3961 + $0x78] sm:$0xff]
  %3978 = vmatprep.subr.mxu0 0.0
  %3979 = vmatpush1.msra.mxu0 %v3962
  %3980 = vmatprep.subr.mxu0 0.0
  %3981 = vmatpush1.msra.mxu0 %v3963
  %3982 = vmatprep.subr.mxu0 0.0
  %3983 = vmatpush1.msra.mxu0 %v3964
  %3984 = vmatprep.subr.mxu0 0.0
  %3985 = vmatpush1.msra.mxu0 %v3965
  %3986 = vmatprep.subr.mxu0 0.0
  %3987 = vmatpush1.msra.mxu0 %v3966
  %3988 = vmatprep.subr.mxu0 0.0
  %3989 = vmatpush1.msra.mxu0 %v3967
  %3990 = vmatprep.subr.mxu0 0.0
  %3991 = vmatpush1.msra.mxu0 %v3968
  %3992 = vmatprep.subr.mxu0 0.0
  %3993 = vmatpush1.msra.mxu0 %v3969
  %3994 = vmatprep.subr.mxu0 0.0
  %3995 = vmatpush1.msra.mxu0 %v3970
  %3996 = vmatprep.subr.mxu0 0.0
  %3997 = vmatpush1.msra.mxu0 %v3971
  %3998 = vmatprep.subr.mxu0 0.0
  %3999 = vmatpush1.msra.mxu0 %v3972
  %4000 = vmatprep.subr.mxu0 0.0
  %4001 = vmatpush1.msra.mxu0 %v3973
  %4002 = vmatprep.subr.mxu0 0.0
  %4003 = vmatpush1.msra.mxu0 %v3974
  %4004 = vmatprep.subr.mxu0 0.0
  %4005 = vmatpush1.msra.mxu0 %v3975
  %4006 = vmatprep.subr.mxu0 0.0
  %4007 = vmatpush1.msra.mxu0 %v3976
  %4008 = vmatprep.subr.mxu0 0.0
  %4009 = vmatpush1.msra.mxu0 %v3977
  %4010 = vmatprep.subr.mxu0 0.0
  %4011 = vmatpush1.msra.mxu0 0.0
  %4012 = vmatprep.subr.mxu0 0.0
  %4013 = vmatpush1.msra.mxu0 0.0
  %4014 = vmatprep.subr.mxu0 0.0
  %4015 = vmatpush1.msra.mxu0 0.0
  %4016 = vmatprep.subr.mxu0 0.0
  %4017 = vmatpush1.msra.mxu0 0.0
  %4018 = vmatprep.subr.mxu0 0.0
  %4019 = vmatpush1.msra.mxu0 0.0
  %4020 = vmatprep.subr.mxu0 0.0
  %4021 = vmatpush1.msra.mxu0 0.0
  %4022 = vmatprep.subr.mxu0 0.0
  %4023 = vmatpush1.msra.mxu0 0.0
  %4024 = vmatprep.subr.mxu0 0.0
  %4025 = vmatpush1.msra.mxu0 0.0
  %4026 = vmatprep.subr.mxu0 0.0
  %4027 = vmatpush1.msra.mxu0 0.0
  %4028 = vmatprep.subr.mxu0 0.0
  %4029 = vmatpush1.msra.mxu0 0.0
  %4030 = vmatprep.subr.mxu0 0.0
  %4031 = vmatpush1.msra.mxu0 0.0
  %4032 = vmatprep.subr.mxu0 0.0
  %4033 = vmatpush1.msra.mxu0 0.0
  %4034 = vmatprep.subr.mxu0 0.0
  %4035 = vmatpush1.msra.mxu0 0.0
  %4036 = vmatprep.subr.mxu0 0.0
  %4037 = vmatpush1.msra.mxu0 0.0
  %4038 = vmatprep.subr.mxu0 0.0
  %4039 = vmatpush1.msra.mxu0 0.0
  %4040 = vmatprep.subr.mxu0 0.0
  %4041 = vmatpush1.msra.mxu0 0.0
  %4042 = vmatprep.mubr.f32.mxu0 0.0
  %4043 = vmatmul.mubr.f32.gmra.mrb[0].mxu0 %v3960
  %v4044 = vpop.f32.mrb[0].mxu0
  %v4045 = vadd.f32 0.0, %v4044
  %v4046 = vpop.f32.mrb[0].mxu0
  %4047 = vdwg.mxu0
  %v4048 = vadd.f32 %v3951, %v4045
  %v4049 = vld [vmem:[#allocation3 + $0x40] sm:$0xff]
  %v4050 = vld [vmem:[#allocation3 + $0x48] sm:$0xff]
  %v4051 = vld [vmem:[#allocation3 + $0xb0] sm:$0xff]
  %v4052 = vld [vmem:[#allocation3 + $0xb8] sm:$0xff]
  %v4053 = vmax.f32 %v4049, %v4050
  %v4054 = vmax.f32 %v4051, %v4052
  %v4055 = vmax.f32 %v4053, %v4054
  %v4056 = vadd.f32 %v4055, %v3669
  %v4057 = vmax.f32 %v4056, 0.0
  %s4058 = scalar_lea.vmem %s5, 512
  %v4059 = vld [vmem:[%s4058] sm:$0xff]
  %v4060 = vld [vmem:[%s4058 + $0x8] sm:$0xff]
  %v4061 = vld [vmem:[%s4058 + $0x10] sm:$0xff]
  %v4062 = vld [vmem:[%s4058 + $0x18] sm:$0xff]
  %v4063 = vld [vmem:[%s4058 + $0x20] sm:$0xff]
  %v4064 = vld [vmem:[%s4058 + $0x28] sm:$0xff]
  %v4065 = vld [vmem:[%s4058 + $0x30] sm:$0xff]
  %v4066 = vld [vmem:[%s4058 + $0x38] sm:$0xff]
  %v4067 = vld [vmem:[%s4058 + $0x40] sm:$0xff]
  %v4068 = vld [vmem:[%s4058 + $0x48] sm:$0xff]
  %v4069 = vld [vmem:[%s4058 + $0x50] sm:$0xff]
  %v4070 = vld [vmem:[%s4058 + $0x58] sm:$0xff]
  %v4071 = vld [vmem:[%s4058 + $0x60] sm:$0xff]
  %v4072 = vld [vmem:[%s4058 + $0x68] sm:$0xff]
  %v4073 = vld [vmem:[%s4058 + $0x70] sm:$0xff]
  %v4074 = vld [vmem:[%s4058 + $0x78] sm:$0xff]
  %4075 = vmatprep.subr.mxu0 0.0
  %4076 = vmatpush1.msra.mxu0 %v4059
  %4077 = vmatprep.subr.mxu0 0.0
  %4078 = vmatpush1.msra.mxu0 %v4060
  %4079 = vmatprep.subr.mxu0 0.0
  %4080 = vmatpush1.msra.mxu0 %v4061
  %4081 = vmatprep.subr.mxu0 0.0
  %4082 = vmatpush1.msra.mxu0 %v4062
  %4083 = vmatprep.subr.mxu0 0.0
  %4084 = vmatpush1.msra.mxu0 %v4063
  %4085 = vmatprep.subr.mxu0 0.0
  %4086 = vmatpush1.msra.mxu0 %v4064
  %4087 = vmatprep.subr.mxu0 0.0
  %4088 = vmatpush1.msra.mxu0 %v4065
  %4089 = vmatprep.subr.mxu0 0.0
  %4090 = vmatpush1.msra.mxu0 %v4066
  %4091 = vmatprep.subr.mxu0 0.0
  %4092 = vmatpush1.msra.mxu0 %v4067
  %4093 = vmatprep.subr.mxu0 0.0
  %4094 = vmatpush1.msra.mxu0 %v4068
  %4095 = vmatprep.subr.mxu0 0.0
  %4096 = vmatpush1.msra.mxu0 %v4069
  %4097 = vmatprep.subr.mxu0 0.0
  %4098 = vmatpush1.msra.mxu0 %v4070
  %4099 = vmatprep.subr.mxu0 0.0
  %4100 = vmatpush1.msra.mxu0 %v4071
  %4101 = vmatprep.subr.mxu0 0.0
  %4102 = vmatpush1.msra.mxu0 %v4072
  %4103 = vmatprep.subr.mxu0 0.0
  %4104 = vmatpush1.msra.mxu0 %v4073
  %4105 = vmatprep.subr.mxu0 0.0
  %4106 = vmatpush1.msra.mxu0 %v4074
  %4107 = vmatprep.subr.mxu0 0.0
  %4108 = vmatpush1.msra.mxu0 0.0
  %4109 = vmatprep.subr.mxu0 0.0
  %4110 = vmatpush1.msra.mxu0 0.0
  %4111 = vmatprep.subr.mxu0 0.0
  %4112 = vmatpush1.msra.mxu0 0.0
  %4113 = vmatprep.subr.mxu0 0.0
  %4114 = vmatpush1.msra.mxu0 0.0
  %4115 = vmatprep.subr.mxu0 0.0
  %4116 = vmatpush1.msra.mxu0 0.0
  %4117 = vmatprep.subr.mxu0 0.0
  %4118 = vmatpush1.msra.mxu0 0.0
  %4119 = vmatprep.subr.mxu0 0.0
  %4120 = vmatpush1.msra.mxu0 0.0
  %4121 = vmatprep.subr.mxu0 0.0
  %4122 = vmatpush1.msra.mxu0 0.0
  %4123 = vmatprep.subr.mxu0 0.0
  %4124 = vmatpush1.msra.mxu0 0.0
  %4125 = vmatprep.subr.mxu0 0.0
  %4126 = vmatpush1.msra.mxu0 0.0
  %4127 = vmatprep.subr.mxu0 0.0
  %4128 = vmatpush1.msra.mxu0 0.0
  %4129 = vmatprep.subr.mxu0 0.0
  %4130 = vmatpush1.msra.mxu0 0.0
  %4131 = vmatprep.subr.mxu0 0.0
  %4132 = vmatpush1.msra.mxu0 0.0
  %4133 = vmatprep.subr.mxu0 0.0
  %4134 = vmatpush1.msra.mxu0 0.0
  %4135 = vmatprep.subr.mxu0 0.0
  %4136 = vmatpush1.msra.mxu0 0.0
  %4137 = vmatprep.subr.mxu0 0.0
  %4138 = vmatpush1.msra.mxu0 0.0
  %4139 = vmatprep.mubr.f32.mxu0 0.0
  %4140 = vmatmul.mubr.f32.gmra.mrb[0].mxu0 %v4057
  %v4141 = vpop.f32.mrb[0].mxu0
  %v4142 = vadd.f32 0.0, %v4141
  %v4143 = vpop.f32.mrb[0].mxu0
  %4144 = vdwg.mxu0
  %v4145 = vadd.f32 %v4048, %v4142
  %v4146 = vld [vmem:[#allocation3 + $0xe0] sm:$0xff]
  %v4147 = vld [vmem:[#allocation3 + $0xe8] sm:$0xff]
  %v4148 = vld [vmem:[#allocation3 + $0x150] sm:$0xff]
  %v4149 = vld [vmem:[#allocation3 + $0x158] sm:$0xff]
  %v4150 = vmax.f32 %v4146, %v4147
  %v4151 = vmax.f32 %v4148, %v4149
  %v4152 = vmax.f32 %v4150, %v4151
  %v4153 = vadd.f32 %v4152, %v3669
  %v4154 = vmax.f32 %v4153, 0.0
  %s4155 = scalar_lea.vmem %s5, 640
  %v4156 = vld [vmem:[%s4155] sm:$0xff]
  %v4157 = vld [vmem:[%s4155 + $0x8] sm:$0xff]
  %v4158 = vld [vmem:[%s4155 + $0x10] sm:$0xff]
  %v4159 = vld [vmem:[%s4155 + $0x18] sm:$0xff]
  %v4160 = vld [vmem:[%s4155 + $0x20] sm:$0xff]
  %v4161 = vld [vmem:[%s4155 + $0x28] sm:$0xff]
  %v4162 = vld [vmem:[%s4155 + $0x30] sm:$0xff]
  %v4163 = vld [vmem:[%s4155 + $0x38] sm:$0xff]
  %v4164 = vld [vmem:[%s4155 + $0x40] sm:$0xff]
  %v4165 = vld [vmem:[%s4155 + $0x48] sm:$0xff]
  %v4166 = vld [vmem:[%s4155 + $0x50] sm:$0xff]
  %v4167 = vld [vmem:[%s4155 + $0x58] sm:$0xff]
  %v4168 = vld [vmem:[%s4155 + $0x60] sm:$0xff]
  %v4169 = vld [vmem:[%s4155 + $0x68] sm:$0xff]
  %v4170 = vld [vmem:[%s4155 + $0x70] sm:$0xff]
  %v4171 = vld [vmem:[%s4155 + $0x78] sm:$0xff]
  %4172 = vmatprep.subr.mxu0 0.0
  %4173 = vmatpush1.msra.mxu0 %v4156
  %4174 = vmatprep.subr.mxu0 0.0
  %4175 = vmatpush1.msra.mxu0 %v4157
  %4176 = vmatprep.subr.mxu0 0.0
  %4177 = vmatpush1.msra.mxu0 %v4158
  %4178 = vmatprep.subr.mxu0 0.0
  %4179 = vmatpush1.msra.mxu0 %v4159
  %4180 = vmatprep.subr.mxu0 0.0
  %4181 = vmatpush1.msra.mxu0 %v4160
  %4182 = vmatprep.subr.mxu0 0.0
  %4183 = vmatpush1.msra.mxu0 %v4161
  %4184 = vmatprep.subr.mxu0 0.0
  %4185 = vmatpush1.msra.mxu0 %v4162
  %4186 = vmatprep.subr.mxu0 0.0
  %4187 = vmatpush1.msra.mxu0 %v4163
  %4188 = vmatprep.subr.mxu0 0.0
  %4189 = vmatpush1.msra.mxu0 %v4164
  %4190 = vmatprep.subr.mxu0 0.0
  %4191 = vmatpush1.msra.mxu0 %v4165
  %4192 = vmatprep.subr.mxu0 0.0
  %4193 = vmatpush1.msra.mxu0 %v4166
  %4194 = vmatprep.subr.mxu0 0.0
  %4195 = vmatpush1.msra.mxu0 %v4167
  %4196 = vmatprep.subr.mxu0 0.0
  %4197 = vmatpush1.msra.mxu0 %v4168
  %4198 = vmatprep.subr.mxu0 0.0
  %4199 = vmatpush1.msra.mxu0 %v4169
  %4200 = vmatprep.subr.mxu0 0.0
  %4201 = vmatpush1.msra.mxu0 %v4170
  %4202 = vmatprep.subr.mxu0 0.0
  %4203 = vmatpush1.msra.mxu0 %v4171
  %4204 = vmatprep.subr.mxu0 0.0
  %4205 = vmatpush1.msra.mxu0 0.0
  %4206 = vmatprep.subr.mxu0 0.0
  %4207 = vmatpush1.msra.mxu0 0.0
  %4208 = vmatprep.subr.mxu0 0.0
  %4209 = vmatpush1.msra.mxu0 0.0
  %4210 = vmatprep.subr.mxu0 0.0
  %4211 = vmatpush1.msra.mxu0 0.0
  %4212 = vmatprep.subr.mxu0 0.0
  %4213 = vmatpush1.msra.mxu0 0.0
  %4214 = vmatprep.subr.mxu0 0.0
  %4215 = vmatpush1.msra.mxu0 0.0
  %4216 = vmatprep.subr.mxu0 0.0
  %4217 = vmatpush1.msra.mxu0 0.0
  %4218 = vmatprep.subr.mxu0 0.0
  %4219 = vmatpush1.msra.mxu0 0.0
  %4220 = vmatprep.subr.mxu0 0.0
  %4221 = vmatpush1.msra.mxu0 0.0
  %4222 = vmatprep.subr.mxu0 0.0
  %4223 = vmatpush1.msra.mxu0 0.0
  %4224 = vmatprep.subr.mxu0 0.0
  %4225 = vmatpush1.msra.mxu0 0.0
  %4226 = vmatprep.subr.mxu0 0.0
  %4227 = vmatpush1.msra.mxu0 0.0
  %4228 = vmatprep.subr.mxu0 0.0
  %4229 = vmatpush1.msra.mxu0 0.0
  %4230 = vmatprep.subr.mxu0 0.0
  %4231 = vmatpush1.msra.mxu0 0.0
  %4232 = vmatprep.subr.mxu0 0.0
  %4233 = vmatpush1.msra.mxu0 0.0
  %4234 = vmatprep.subr.mxu0 0.0
  %4235 = vmatpush1.msra.mxu0 0.0
  %4236 = vmatprep.mubr.f32.mxu0 0.0
  %4237 = vmatmul.mubr.f32.gmra.mrb[0].mxu0 %v4154
  %v4238 = vpop.f32.mrb[0].mxu0
  %v4239 = vadd.f32 0.0, %v4238
  %v4240 = vpop.f32.mrb[0].mxu0
  %4241 = vdwg.mxu0
  %v4242 = vadd.f32 %v4145, %v4239
  %v4243 = vld [vmem:[#allocation3 + $0xf0] sm:$0xff]
  %v4244 = vld [vmem:[#allocation3 + $0xf8] sm:$0xff]
  %v4245 = vld [vmem:[#allocation3 + $0x160] sm:$0xff]
  %v4246 = vld [vmem:[#allocation3 + $0x168] sm:$0xff]
  %v4247 = vmax.f32 %v4243, %v4244
  %v4248 = vmax.f32 %v4245, %v4246
  %v4249 = vmax.f32 %v4247, %v4248
  %v4250 = vadd.f32 %v4249, %v3669
  %v4251 = vmax.f32 %v4250, 0.0
  %s4252 = scalar_lea.vmem %s5, 768
  %v4253 = vld [vmem:[%s4252] sm:$0xff]
  %v4254 = vld [vmem:[%s4252 + $0x8] sm:$0xff]
  %v4255 = vld [vmem:[%s4252 + $0x10] sm:$0xff]
  %v4256 = vld [vmem:[%s4252 + $0x18] sm:$0xff]
  %v4257 = vld [vmem:[%s4252 + $0x20] sm:$0xff]
  %v4258 = vld [vmem:[%s4252 + $0x28] sm:$0xff]
  %v4259 = vld [vmem:[%s4252 + $0x30] sm:$0xff]
  %v4260 = vld [vmem:[%s4252 + $0x38] sm:$0xff]
  %v4261 = vld [vmem:[%s4252 + $0x40] sm:$0xff]
  %v4262 = vld [vmem:[%s4252 + $0x48] sm:$0xff]
  %v4263 = vld [vmem:[%s4252 + $0x50] sm:$0xff]
  %v4264 = vld [vmem:[%s4252 + $0x58] sm:$0xff]
  %v4265 = vld [vmem:[%s4252 + $0x60] sm:$0xff]
  %v4266 = vld [vmem:[%s4252 + $0x68] sm:$0xff]
  %v4267 = vld [vmem:[%s4252 + $0x70] sm:$0xff]
  %v4268 = vld [vmem:[%s4252 + $0x78] sm:$0xff]
  %4269 = vmatprep.subr.mxu0 0.0
  %4270 = vmatpush1.msra.mxu0 %v4253
  %4271 = vmatprep.subr.mxu0 0.0
  %4272 = vmatpush1.msra.mxu0 %v4254
  %4273 = vmatprep.subr.mxu0 0.0
  %4274 = vmatpush1.msra.mxu0 %v4255
  %4275 = vmatprep.subr.mxu0 0.0
  %4276 = vmatpush1.msra.mxu0 %v4256
  %4277 = vmatprep.subr.mxu0 0.0
  %4278 = vmatpush1.msra.mxu0 %v4257
  %4279 = vmatprep.subr.mxu0 0.0
  %4280 = vmatpush1.msra.mxu0 %v4258
  %4281 = vmatprep.subr.mxu0 0.0
  %4282 = vmatpush1.msra.mxu0 %v4259
  %4283 = vmatprep.subr.mxu0 0.0
  %4284 = vmatpush1.msra.mxu0 %v4260
  %4285 = vmatprep.subr.mxu0 0.0
  %4286 = vmatpush1.msra.mxu0 %v4261
  %4287 = vmatprep.subr.mxu0 0.0
  %4288 = vmatpush1.msra.mxu0 %v4262
  %4289 = vmatprep.subr.mxu0 0.0
  %4290 = vmatpush1.msra.mxu0 %v4263
  %4291 = vmatprep.subr.mxu0 0.0
  %4292 = vmatpush1.msra.mxu0 %v4264
  %4293 = vmatprep.subr.mxu0 0.0
  %4294 = vmatpush1.msra.mxu0 %v4265
  %4295 = vmatprep.subr.mxu0 0.0
  %4296 = vmatpush1.msra.mxu0 %v4266
  %4297 = vmatprep.subr.mxu0 0.0
  %4298 = vmatpush1.msra.mxu0 %v4267
  %4299 = vmatprep.subr.mxu0 0.0
  %4300 = vmatpush1.msra.mxu0 %v4268
  %4301 = vmatprep.subr.mxu0 0.0
  %4302 = vmatpush1.msra.mxu0 0.0
  %4303 = vmatprep.subr.mxu0 0.0
  %4304 = vmatpush1.msra.mxu0 0.0
  %4305 = vmatprep.subr.mxu0 0.0
  %4306 = vmatpush1.msra.mxu0 0.0
  %4307 = vmatprep.subr.mxu0 0.0
  %4308 = vmatpush1.msra.mxu0 0.0
  %4309 = vmatprep.subr.mxu0 0.0
  %4310 = vmatpush1.msra.mxu0 0.0
  %4311 = vmatprep.subr.mxu0 0.0
  %4312 = vmatpush1.msra.mxu0 0.0
  %4313 = vmatprep.subr.mxu0 0.0
  %4314 = vmatpush1.msra.mxu0 0.0
  %4315 = vmatprep.subr.mxu0 0.0
  %4316 = vmatpush1.msra.mxu0 0.0
  %4317 = vmatprep.subr.mxu0 0.0
  %4318 = vmatpush1.msra.mxu0 0.0
  %4319 = vmatprep.subr.mxu0 0.0
  %4320 = vmatpush1.msra.mxu0 0.0
  %4321 = vmatprep.subr.mxu0 0.0
  %4322 = vmatpush1.msra.mxu0 0.0
  %4323 = vmatprep.subr.mxu0 0.0
  %4324 = vmatpush1.msra.mxu0 0.0
  %4325 = vmatprep.subr.mxu0 0.0
  %4326 = vmatpush1.msra.mxu0 0.0
  %4327 = vmatprep.subr.mxu0 0.0
  %4328 = vmatpush1.msra.mxu0 0.0
  %4329 = vmatprep.subr.mxu0 0.0
  %4330 = vmatpush1.msra.mxu0 0.0
  %4331 = vmatprep.subr.mxu0 0.0
  %4332 = vmatpush1.msra.mxu0 0.0
  %4333 = vmatprep.mubr.f32.mxu0 0.0
  %4334 = vmatmul.mubr.f32.gmra.mrb[0].mxu0 %v4251
  %v4335 = vpop.f32.mrb[0].mxu0
  %v4336 = vadd.f32 0.0, %v4335
  %v4337 = vpop.f32.mrb[0].mxu0
  %4338 = vdwg.mxu0
  %v4339 = vadd.f32 %v4242, %v4336
  %v4340 = vld [vmem:[#allocation3 + $0x100] sm:$0xff]
  %v4341 = vld [vmem:[#allocation3 + $0x108] sm:$0xff]
  %v4342 = vld [vmem:[#allocation3 + $0x170] sm:$0xff]
  %v4343 = vld [vmem:[#allocation3 + $0x178] sm:$0xff]
  %v4344 = vmax.f32 %v4340, %v4341
  %v4345 = vmax.f32 %v4342, %v4343
  %v4346 = vmax.f32 %v4344, %v4345
  %v4347 = vadd.f32 %v4346, %v3669
  %v4348 = vmax.f32 %v4347, 0.0
  %s4349 = scalar_lea.vmem %s5, 896
  %v4350 = vld [vmem:[%s4349] sm:$0xff]
  %v4351 = vld [vmem:[%s4349 + $0x8] sm:$0xff]
  %v4352 = vld [vmem:[%s4349 + $0x10] sm:$0xff]
  %v4353 = vld [vmem:[%s4349 + $0x18] sm:$0xff]
  %v4354 = vld [vmem:[%s4349 + $0x20] sm:$0xff]
  %v4355 = vld [vmem:[%s4349 + $0x28] sm:$0xff]
  %v4356 = vld [vmem:[%s4349 + $0x30] sm:$0xff]
  %v4357 = vld [vmem:[%s4349 + $0x38] sm:$0xff]
  %v4358 = vld [vmem:[%s4349 + $0x40] sm:$0xff]
  %v4359 = vld [vmem:[%s4349 + $0x48] sm:$0xff]
  %v4360 = vld [vmem:[%s4349 + $0x50] sm:$0xff]
  %v4361 = vld [vmem:[%s4349 + $0x58] sm:$0xff]
  %v4362 = vld [vmem:[%s4349 + $0x60] sm:$0xff]
  %v4363 = vld [vmem:[%s4349 + $0x68] sm:$0xff]
  %v4364 = vld [vmem:[%s4349 + $0x70] sm:$0xff]
  %v4365 = vld [vmem:[%s4349 + $0x78] sm:$0xff]
  %4366 = vmatprep.subr.mxu0 0.0
  %4367 = vmatpush1.msra.mxu0 %v4350
  %4368 = vmatprep.subr.mxu0 0.0
  %4369 = vmatpush1.msra.mxu0 %v4351
  %4370 = vmatprep.subr.mxu0 0.0
  %4371 = vmatpush1.msra.mxu0 %v4352
  %4372 = vmatprep.subr.mxu0 0.0
  %4373 = vmatpush1.msra.mxu0 %v4353
  %4374 = vmatprep.subr.mxu0 0.0
  %4375 = vmatpush1.msra.mxu0 %v4354
  %4376 = vmatprep.subr.mxu0 0.0
  %4377 = vmatpush1.msra.mxu0 %v4355
  %4378 = vmatprep.subr.mxu0 0.0
  %4379 = vmatpush1.msra.mxu0 %v4356
  %4380 = vmatprep.subr.mxu0 0.0
  %4381 = vmatpush1.msra.mxu0 %v4357
  %4382 = vmatprep.subr.mxu0 0.0
  %4383 = vmatpush1.msra.mxu0 %v4358
  %4384 = vmatprep.subr.mxu0 0.0
  %4385 = vmatpush1.msra.mxu0 %v4359
  %4386 = vmatprep.subr.mxu0 0.0
  %4387 = vmatpush1.msra.mxu0 %v4360
  %4388 = vmatprep.subr.mxu0 0.0
  %4389 = vmatpush1.msra.mxu0 %v4361
  %4390 = vmatprep.subr.mxu0 0.0
  %4391 = vmatpush1.msra.mxu0 %v4362
  %4392 = vmatprep.subr.mxu0 0.0
  %4393 = vmatpush1.msra.mxu0 %v4363
  %4394 = vmatprep.subr.mxu0 0.0
  %4395 = vmatpush1.msra.mxu0 %v4364
  %4396 = vmatprep.subr.mxu0 0.0
  %4397 = vmatpush1.msra.mxu0 %v4365
  %4398 = vmatprep.subr.mxu0 0.0
  %4399 = vmatpush1.msra.mxu0 0.0
  %4400 = vmatprep.subr.mxu0 0.0
  %4401 = vmatpush1.msra.mxu0 0.0
  %4402 = vmatprep.subr.mxu0 0.0
  %4403 = vmatpush1.msra.mxu0 0.0
  %4404 = vmatprep.subr.mxu0 0.0
  %4405 = vmatpush1.msra.mxu0 0.0
  %4406 = vmatprep.subr.mxu0 0.0
  %4407 = vmatpush1.msra.mxu0 0.0
  %4408 = vmatprep.subr.mxu0 0.0
  %4409 = vmatpush1.msra.mxu0 0.0
  %4410 = vmatprep.subr.mxu0 0.0
  %4411 = vmatpush1.msra.mxu0 0.0
  %4412 = vmatprep.subr.mxu0 0.0
  %4413 = vmatpush1.msra.mxu0 0.0
  %4414 = vmatprep.subr.mxu0 0.0
  %4415 = vmatpush1.msra.mxu0 0.0
  %4416 = vmatprep.subr.mxu0 0.0
  %4417 = vmatpush1.msra.mxu0 0.0
  %4418 = vmatprep.subr.mxu0 0.0
  %4419 = vmatpush1.msra.mxu0 0.0
  %4420 = vmatprep.subr.mxu0 0.0
  %4421 = vmatpush1.msra.mxu0 0.0
  %4422 = vmatprep.subr.mxu0 0.0
  %4423 = vmatpush1.msra.mxu0 0.0
  %4424 = vmatprep.subr.mxu0 0.0
  %4425 = vmatpush1.msra.mxu0 0.0
  %4426 = vmatprep.subr.mxu0 0.0
  %4427 = vmatpush1.msra.mxu0 0.0
  %4428 = vmatprep.subr.mxu0 0.0
  %4429 = vmatpush1.msra.mxu0 0.0
  %4430 = vmatprep.mubr.f32.mxu0 0.0
  %4431 = vmatmul.mubr.f32.gmra.mrb[0].mxu0 %v4348
  %v4432 = vpop.f32.mrb[0].mxu0
  %v4433 = vadd.f32 0.0, %v4432
  %v4434 = vpop.f32.mrb[0].mxu0
  %4435 = vdwg.mxu0
  %v4436 = vadd.f32 %v4339, %v4433
  %v4437 = vld [vmem:[#allocation3 + $0x110] sm:$0xff]
  %v4438 = vld [vmem:[#allocation3 + $0x118] sm:$0xff]
  %v4439 = vld [vmem:[#allocation3 + $0x180] sm:$0xff]
  %v4440 = vld [vmem:[#allocation3 + $0x188] sm:$0xff]
  %v4441 = vmax.f32 %v4437, %v4438
  %v4442 = vmax.f32 %v4439, %v4440
  %v4443 = vmax.f32 %v4441, %v4442
  %v4444 = vadd.f32 %v4443, %v3669
  %v4445 = vmax.f32 %v4444, 0.0
  %s4446 = scalar_lea.vmem %s5, 1024
  %v4447 = vld [vmem:[%s4446] sm:$0xff]
  %v4448 = vld [vmem:[%s4446 + $0x8] sm:$0xff]
  %v4449 = vld [vmem:[%s4446 + $0x10] sm:$0xff]
  %v4450 = vld [vmem:[%s4446 + $0x18] sm:$0xff]
  %v4451 = vld [vmem:[%s4446 + $0x20] sm:$0xff]
  %v4452 = vld [vmem:[%s4446 + $0x28] sm:$0xff]
  %v4453 = vld [vmem:[%s4446 + $0x30] sm:$0xff]
  %v4454 = vld [vmem:[%s4446 + $0x38] sm:$0xff]
  %v4455 = vld [vmem:[%s4446 + $0x40] sm:$0xff]
  %v4456 = vld [vmem:[%s4446 + $0x48] sm:$0xff]
  %v4457 = vld [vmem:[%s4446 + $0x50] sm:$0xff]
  %v4458 = vld [vmem:[%s4446 + $0x58] sm:$0xff]
  %v4459 = vld [vmem:[%s4446 + $0x60] sm:$0xff]
  %v4460 = vld [vmem:[%s4446 + $0x68] sm:$0xff]
  %v4461 = vld [vmem:[%s4446 + $0x70] sm:$0xff]
  %v4462 = vld [vmem:[%s4446 + $0x78] sm:$0xff]
  %4463 = vmatprep.subr.mxu0 0.0
  %4464 = vmatpush1.msra.mxu0 %v4447
  %4465 = vmatprep.subr.mxu0 0.0
  %4466 = vmatpush1.msra.mxu0 %v4448
  %4467 = vmatprep.subr.mxu0 0.0
  %4468 = vmatpush1.msra.mxu0 %v4449
  %4469 = vmatprep.subr.mxu0 0.0
  %4470 = vmatpush1.msra.mxu0 %v4450
  %4471 = vmatprep.subr.mxu0 0.0
  %4472 = vmatpush1.msra.mxu0 %v4451
  %4473 = vmatprep.subr.mxu0 0.0
  %4474 = vmatpush1.msra.mxu0 %v4452
  %4475 = vmatprep.subr.mxu0 0.0
  %4476 = vmatpush1.msra.mxu0 %v4453
  %4477 = vmatprep.subr.mxu0 0.0
  %4478 = vmatpush1.msra.mxu0 %v4454
  %4479 = vmatprep.subr.mxu0 0.0
  %4480 = vmatpush1.msra.mxu0 %v4455
  %4481 = vmatprep.subr.mxu0 0.0
  %4482 = vmatpush1.msra.mxu0 %v4456
  %4483 = vmatprep.subr.mxu0 0.0
  %4484 = vmatpush1.msra.mxu0 %v4457
  %4485 = vmatprep.subr.mxu0 0.0
  %4486 = vmatpush1.msra.mxu0 %v4458
  %4487 = vmatprep.subr.mxu0 0.0
  %4488 = vmatpush1.msra.mxu0 %v4459
  %4489 = vmatprep.subr.mxu0 0.0
  %4490 = vmatpush1.msra.mxu0 %v4460
  %4491 = vmatprep.subr.mxu0 0.0
  %4492 = vmatpush1.msra.mxu0 %v4461
  %4493 = vmatprep.subr.mxu0 0.0
  %4494 = vmatpush1.msra.mxu0 %v4462
  %4495 = vmatprep.subr.mxu0 0.0
  %4496 = vmatpush1.msra.mxu0 0.0
  %4497 = vmatprep.subr.mxu0 0.0
  %4498 = vmatpush1.msra.mxu0 0.0
  %4499 = vmatprep.subr.mxu0 0.0
  %4500 = vmatpush1.msra.mxu0 0.0
  %4501 = vmatprep.subr.mxu0 0.0
  %4502 = vmatpush1.msra.mxu0 0.0
  %4503 = vmatprep.subr.mxu0 0.0
  %4504 = vmatpush1.msra.mxu0 0.0
  %4505 = vmatprep.subr.mxu0 0.0
  %4506 = vmatpush1.msra.mxu0 0.0
  %4507 = vmatprep.subr.mxu0 0.0
  %4508 = vmatpush1.msra.mxu0 0.0
  %4509 = vmatprep.subr.mxu0 0.0
  %4510 = vmatpush1.msra.mxu0 0.0
  %4511 = vmatprep.subr.mxu0 0.0
  %4512 = vmatpush1.msra.mxu0 0.0
  %4513 = vmatprep.subr.mxu0 0.0
  %4514 = vmatpush1.msra.mxu0 0.0
  %4515 = vmatprep.subr.mxu0 0.0
  %4516 = vmatpush1.msra.mxu0 0.0
  %4517 = vmatprep.subr.mxu0 0.0
  %4518 = vmatpush1.msra.mxu0 0.0
  %4519 = vmatprep.subr.mxu0 0.0
  %4520 = vmatpush1.msra.mxu0 0.0
  %4521 = vmatprep.subr.mxu0 0.0
  %4522 = vmatpush1.msra.mxu0 0.0
  %4523 = vmatprep.subr.mxu0 0.0
  %4524 = vmatpush1.msra.mxu0 0.0
  %4525 = vmatprep.subr.mxu0 0.0
  %4526 = vmatpush1.msra.mxu0 0.0
  %4527 = vmatprep.mubr.f32.mxu0 0.0
  %4528 = vmatmul.mubr.f32.gmra.mrb[0].mxu0 %v4445
  %v4529 = vpop.f32.mrb[0].mxu0
  %v4530 = vadd.f32 0.0, %v4529
  %v4531 = vpop.f32.mrb[0].mxu0
  %4532 = vdwg.mxu0
  %v4533 = vadd.f32 %v4436, %v4530
  %v4534 = vld [vmem:[#allocation3 + $0x120] sm:$0xff]
  %v4535 = vld [vmem:[#allocation3 + $0x128] sm:$0xff]
  %v4536 = vld [vmem:[#allocation3 + $0x190] sm:$0xff]
  %v4537 = vld [vmem:[#allocation3 + $0x198] sm:$0xff]
  %v4538 = vmax.f32 %v4534, %v4535
  %v4539 = vmax.f32 %v4536, %v4537
  %v4540 = vmax.f32 %v4538, %v4539
  %v4541 = vadd.f32 %v4540, %v3669
  %v4542 = vmax.f32 %v4541, 0.0
  %s4543 = scalar_lea.vmem %s5, 1152
  %v4544 = vld [vmem:[%s4543] sm:$0xff]
  %v4545 = vld [vmem:[%s4543 + $0x8] sm:$0xff]
  %v4546 = vld [vmem:[%s4543 + $0x10] sm:$0xff]
  %v4547 = vld [vmem:[%s4543 + $0x18] sm:$0xff]
  %v4548 = vld [vmem:[%s4543 + $0x20] sm:$0xff]
  %v4549 = vld [vmem:[%s4543 + $0x28] sm:$0xff]
  %v4550 = vld [vmem:[%s4543 + $0x30] sm:$0xff]
  %v4551 = vld [vmem:[%s4543 + $0x38] sm:$0xff]
  %v4552 = vld [vmem:[%s4543 + $0x40] sm:$0xff]
  %v4553 = vld [vmem:[%s4543 + $0x48] sm:$0xff]
  %v4554 = vld [vmem:[%s4543 + $0x50] sm:$0xff]
  %v4555 = vld [vmem:[%s4543 + $0x58] sm:$0xff]
  %v4556 = vld [vmem:[%s4543 + $0x60] sm:$0xff]
  %v4557 = vld [vmem:[%s4543 + $0x68] sm:$0xff]
  %v4558 = vld [vmem:[%s4543 + $0x70] sm:$0xff]
  %v4559 = vld [vmem:[%s4543 + $0x78] sm:$0xff]
  %4560 = vmatprep.subr.mxu0 0.0
  %4561 = vmatpush1.msra.mxu0 %v4544
  %4562 = vmatprep.subr.mxu0 0.0
  %4563 = vmatpush1.msra.mxu0 %v4545
  %4564 = vmatprep.subr.mxu0 0.0
  %4565 = vmatpush1.msra.mxu0 %v4546
  %4566 = vmatprep.subr.mxu0 0.0
  %4567 = vmatpush1.msra.mxu0 %v4547
  %4568 = vmatprep.subr.mxu0 0.0
  %4569 = vmatpush1.msra.mxu0 %v4548
  %4570 = vmatprep.subr.mxu0 0.0
  %4571 = vmatpush1.msra.mxu0 %v4549
  %4572 = vmatprep.subr.mxu0 0.0
  %4573 = vmatpush1.msra.mxu0 %v4550
  %4574 = vmatprep.subr.mxu0 0.0
  %4575 = vmatpush1.msra.mxu0 %v4551
  %4576 = vmatprep.subr.mxu0 0.0
  %4577 = vmatpush1.msra.mxu0 %v4552
  %4578 = vmatprep.subr.mxu0 0.0
  %4579 = vmatpush1.msra.mxu0 %v4553
  %4580 = vmatprep.subr.mxu0 0.0
  %4581 = vmatpush1.msra.mxu0 %v4554
  %4582 = vmatprep.subr.mxu0 0.0
  %4583 = vmatpush1.msra.mxu0 %v4555
  %4584 = vmatprep.subr.mxu0 0.0
  %4585 = vmatpush1.msra.mxu0 %v4556
  %4586 = vmatprep.subr.mxu0 0.0
  %4587 = vmatpush1.msra.mxu0 %v4557
  %4588 = vmatprep.subr.mxu0 0.0
  %4589 = vmatpush1.msra.mxu0 %v4558
  %4590 = vmatprep.subr.mxu0 0.0
  %4591 = vmatpush1.msra.mxu0 %v4559
  %4592 = vmatprep.subr.mxu0 0.0
  %4593 = vmatpush1.msra.mxu0 0.0
  %4594 = vmatprep.subr.mxu0 0.0
  %4595 = vmatpush1.msra.mxu0 0.0
  %4596 = vmatprep.subr.mxu0 0.0
  %4597 = vmatpush1.msra.mxu0 0.0
  %4598 = vmatprep.subr.mxu0 0.0
  %4599 = vmatpush1.msra.mxu0 0.0
  %4600 = vmatprep.subr.mxu0 0.0
  %4601 = vmatpush1.msra.mxu0 0.0
  %4602 = vmatprep.subr.mxu0 0.0
  %4603 = vmatpush1.msra.mxu0 0.0
  %4604 = vmatprep.subr.mxu0 0.0
  %4605 = vmatpush1.msra.mxu0 0.0
  %4606 = vmatprep.subr.mxu0 0.0
  %4607 = vmatpush1.msra.mxu0 0.0
  %4608 = vmatprep.subr.mxu0 0.0
  %4609 = vmatpush1.msra.mxu0 0.0
  %4610 = vmatprep.subr.mxu0 0.0
  %4611 = vmatpush1.msra.mxu0 0.0
  %4612 = vmatprep.subr.mxu0 0.0
  %4613 = vmatpush1.msra.mxu0 0.0
  %4614 = vmatprep.subr.mxu0 0.0
  %4615 = vmatpush1.msra.mxu0 0.0
  %4616 = vmatprep.subr.mxu0 0.0
  %4617 = vmatpush1.msra.mxu0 0.0
  %4618 = vmatprep.subr.mxu0 0.0
  %4619 = vmatpush1.msra.mxu0 0.0
  %4620 = vmatprep.subr.mxu0 0.0
  %4621 = vmatpush1.msra.mxu0 0.0
  %4622 = vmatprep.subr.mxu0 0.0
  %4623 = vmatpush1.msra.mxu0 0.0
  %4624 = vmatprep.mubr.f32.mxu0 0.0
  %4625 = vmatmul.mubr.f32.gmra.mrb[0].mxu0 %v4542
  %v4626 = vpop.f32.mrb[0].mxu0
  %v4627 = vadd.f32 0.0, %v4626
  %v4628 = vpop.f32.mrb[0].mxu0
  %4629 = vdwg.mxu0
  %v4630 = vadd.f32 %v4533, %v4627
  %v4631 = vld [vmem:[#allocation3 + $0x1c0] sm:$0xff]
  %v4632 = vld [vmem:[#allocation3 + $0x1c8] sm:$0xff]
  %v4633 = vld [vmem:[#allocation3 + $0x230] sm:$0xff]
  %v4634 = vld [vmem:[#allocation3 + $0x238] sm:$0xff]
  %v4635 = vmax.f32 %v4631, %v4632
  %v4636 = vmax.f32 %v4633, %v4634
  %v4637 = vmax.f32 %v4635, %v4636
  %v4638 = vadd.f32 %v4637, %v3669
  %v4639 = vmax.f32 %v4638, 0.0
  %s4640 = scalar_lea.vmem %s5, 1280
  %v4641 = vld [vmem:[%s4640] sm:$0xff]
  %v4642 = vld [vmem:[%s4640 + $0x8] sm:$0xff]
  %v4643 = vld [vmem:[%s4640 + $0x10] sm:$0xff]
  %v4644 = vld [vmem:[%s4640 + $0x18] sm:$0xff]
  %v4645 = vld [vmem:[%s4640 + $0x20] sm:$0xff]
  %v4646 = vld [vmem:[%s4640 + $0x28] sm:$0xff]
  %v4647 = vld [vmem:[%s4640 + $0x30] sm:$0xff]
  %v4648 = vld [vmem:[%s4640 + $0x38] sm:$0xff]
  %v4649 = vld [vmem:[%s4640 + $0x40] sm:$0xff]
  %v4650 = vld [vmem:[%s4640 + $0x48] sm:$0xff]
  %v4651 = vld [vmem:[%s4640 + $0x50] sm:$0xff]
  %v4652 = vld [vmem:[%s4640 + $0x58] sm:$0xff]
  %v4653 = vld [vmem:[%s4640 + $0x60] sm:$0xff]
  %v4654 = vld [vmem:[%s4640 + $0x68] sm:$0xff]
  %v4655 = vld [vmem:[%s4640 + $0x70] sm:$0xff]
  %v4656 = vld [vmem:[%s4640 + $0x78] sm:$0xff]
  %4657 = vmatprep.subr.mxu0 0.0
  %4658 = vmatpush1.msra.mxu0 %v4641
  %4659 = vmatprep.subr.mxu0 0.0
  %4660 = vmatpush1.msra.mxu0 %v4642
  %4661 = vmatprep.subr.mxu0 0.0
  %4662 = vmatpush1.msra.mxu0 %v4643
  %4663 = vmatprep.subr.mxu0 0.0
  %4664 = vmatpush1.msra.mxu0 %v4644
  %4665 = vmatprep.subr.mxu0 0.0
  %4666 = vmatpush1.msra.mxu0 %v4645
  %4667 = vmatprep.subr.mxu0 0.0
  %4668 = vmatpush1.msra.mxu0 %v4646
  %4669 = vmatprep.subr.mxu0 0.0
  %4670 = vmatpush1.msra.mxu0 %v4647
  %4671 = vmatprep.subr.mxu0 0.0
  %4672 = vmatpush1.msra.mxu0 %v4648
  %4673 = vmatprep.subr.mxu0 0.0
  %4674 = vmatpush1.msra.mxu0 %v4649
  %4675 = vmatprep.subr.mxu0 0.0
  %4676 = vmatpush1.msra.mxu0 %v4650
  %4677 = vmatprep.subr.mxu0 0.0
  %4678 = vmatpush1.msra.mxu0 %v4651
  %4679 = vmatprep.subr.mxu0 0.0
  %4680 = vmatpush1.msra.mxu0 %v4652
  %4681 = vmatprep.subr.mxu0 0.0
  %4682 = vmatpush1.msra.mxu0 %v4653
  %4683 = vmatprep.subr.mxu0 0.0
  %4684 = vmatpush1.msra.mxu0 %v4654
  %4685 = vmatprep.subr.mxu0 0.0
  %4686 = vmatpush1.msra.mxu0 %v4655
  %4687 = vmatprep.subr.mxu0 0.0
  %4688 = vmatpush1.msra.mxu0 %v4656
  %4689 = vmatprep.subr.mxu0 0.0
  %4690 = vmatpush1.msra.mxu0 0.0
  %4691 = vmatprep.subr.mxu0 0.0
  %4692 = vmatpush1.msra.mxu0 0.0
  %4693 = vmatprep.subr.mxu0 0.0
  %4694 = vmatpush1.msra.mxu0 0.0
  %4695 = vmatprep.subr.mxu0 0.0
  %4696 = vmatpush1.msra.mxu0 0.0
  %4697 = vmatprep.subr.mxu0 0.0
  %4698 = vmatpush1.msra.mxu0 0.0
  %4699 = vmatprep.subr.mxu0 0.0
  %4700 = vmatpush1.msra.mxu0 0.0
  %4701 = vmatprep.subr.mxu0 0.0
  %4702 = vmatpush1.msra.mxu0 0.0
  %4703 = vmatprep.subr.mxu0 0.0
  %4704 = vmatpush1.msra.mxu0 0.0
  %4705 = vmatprep.subr.mxu0 0.0
  %4706 = vmatpush1.msra.mxu0 0.0
  %4707 = vmatprep.subr.mxu0 0.0
  %4708 = vmatpush1.msra.mxu0 0.0
  %4709 = vmatprep.subr.mxu0 0.0
  %4710 = vmatpush1.msra.mxu0 0.0
  %4711 = vmatprep.subr.mxu0 0.0
  %4712 = vmatpush1.msra.mxu0 0.0
  %4713 = vmatprep.subr.mxu0 0.0
  %4714 = vmatpush1.msra.mxu0 0.0
  %4715 = vmatprep.subr.mxu0 0.0
  %4716 = vmatpush1.msra.mxu0 0.0
  %4717 = vmatprep.subr.mxu0 0.0
  %4718 = vmatpush1.msra.mxu0 0.0
  %4719 = vmatprep.subr.mxu0 0.0
  %4720 = vmatpush1.msra.mxu0 0.0
  %4721 = vmatprep.mubr.f32.mxu0 0.0
  %4722 = vmatmul.mubr.f32.gmra.mrb[0].mxu0 %v4639
  %v4723 = vpop.f32.mrb[0].mxu0
  %v4724 = vadd.f32 0.0, %v4723
  %v4725 = vpop.f32.mrb[0].mxu0
  %4726 = vdwg.mxu0
  %v4727 = vadd.f32 %v4630, %v4724
  %v4728 = vld [vmem:[#allocation3 + $0x1d0] sm:$0xff]
  %v4729 = vld [vmem:[#allocation3 + $0x1d8] sm:$0xff]
  %v4730 = vld [vmem:[#allocation3 + $0x240] sm:$0xff]
  %v4731 = vld [vmem:[#allocation3 + $0x248] sm:$0xff]
  %v4732 = vmax.f32 %v4728, %v4729
  %v4733 = vmax.f32 %v4730, %v4731
  %v4734 = vmax.f32 %v4732, %v4733
  %v4735 = vadd.f32 %v4734, %v3669
  %v4736 = vmax.f32 %v4735, 0.0
  %s4737 = scalar_lea.vmem %s5, 1408
  %v4738 = vld [vmem:[%s4737] sm:$0xff]
  %v4739 = vld [vmem:[%s4737 + $0x8] sm:$0xff]
  %v4740 = vld [vmem:[%s4737 + $0x10] sm:$0xff]
  %v4741 = vld [vmem:[%s4737 + $0x18] sm:$0xff]
  %v4742 = vld [vmem:[%s4737 + $0x20] sm:$0xff]
  %v4743 = vld [vmem:[%s4737 + $0x28] sm:$0xff]
  %v4744 = vld [vmem:[%s4737 + $0x30] sm:$0xff]
  %v4745 = vld [vmem:[%s4737 + $0x38] sm:$0xff]
  %v4746 = vld [vmem:[%s4737 + $0x40] sm:$0xff]
  %v4747 = vld [vmem:[%s4737 + $0x48] sm:$0xff]
  %v4748 = vld [vmem:[%s4737 + $0x50] sm:$0xff]
  %v4749 = vld [vmem:[%s4737 + $0x58] sm:$0xff]
  %v4750 = vld [vmem:[%s4737 + $0x60] sm:$0xff]
  %v4751 = vld [vmem:[%s4737 + $0x68] sm:$0xff]
  %v4752 = vld [vmem:[%s4737 + $0x70] sm:$0xff]
  %v4753 = vld [vmem:[%s4737 + $0x78] sm:$0xff]
  %4754 = vmatprep.subr.mxu0 0.0
  %4755 = vmatpush1.msra.mxu0 %v4738
  %4756 = vmatprep.subr.mxu0 0.0
  %4757 = vmatpush1.msra.mxu0 %v4739
  %4758 = vmatprep.subr.mxu0 0.0
  %4759 = vmatpush1.msra.mxu0 %v4740
  %4760 = vmatprep.subr.mxu0 0.0
  %4761 = vmatpush1.msra.mxu0 %v4741
  %4762 = vmatprep.subr.mxu0 0.0
  %4763 = vmatpush1.msra.mxu0 %v4742
  %4764 = vmatprep.subr.mxu0 0.0
  %4765 = vmatpush1.msra.mxu0 %v4743
  %4766 = vmatprep.subr.mxu0 0.0
  %4767 = vmatpush1.msra.mxu0 %v4744
  %4768 = vmatprep.subr.mxu0 0.0
  %4769 = vmatpush1.msra.mxu0 %v4745
  %4770 = vmatprep.subr.mxu0 0.0
  %4771 = vmatpush1.msra.mxu0 %v4746
  %4772 = vmatprep.subr.mxu0 0.0
  %4773 = vmatpush1.msra.mxu0 %v4747
  %4774 = vmatprep.subr.mxu0 0.0
  %4775 = vmatpush1.msra.mxu0 %v4748
  %4776 = vmatprep.subr.mxu0 0.0
  %4777 = vmatpush1.msra.mxu0 %v4749
  %4778 = vmatprep.subr.mxu0 0.0
  %4779 = vmatpush1.msra.mxu0 %v4750
  %4780 = vmatprep.subr.mxu0 0.0
  %4781 = vmatpush1.msra.mxu0 %v4751
  %4782 = vmatprep.subr.mxu0 0.0
  %4783 = vmatpush1.msra.mxu0 %v4752
  %4784 = vmatprep.subr.mxu0 0.0
  %4785 = vmatpush1.msra.mxu0 %v4753
  %4786 = vmatprep.subr.mxu0 0.0
  %4787 = vmatpush1.msra.mxu0 0.0
  %4788 = vmatprep.subr.mxu0 0.0
  %4789 = vmatpush1.msra.mxu0 0.0
  %4790 = vmatprep.subr.mxu0 0.0
  %4791 = vmatpush1.msra.mxu0 0.0
  %4792 = vmatprep.subr.mxu0 0.0
  %4793 = vmatpush1.msra.mxu0 0.0
  %4794 = vmatprep.subr.mxu0 0.0
  %4795 = vmatpush1.msra.mxu0 0.0
  %4796 = vmatprep.subr.mxu0 0.0
  %4797 = vmatpush1.msra.mxu0 0.0
  %4798 = vmatprep.subr.mxu0 0.0
  %4799 = vmatpush1.msra.mxu0 0.0
  %4800 = vmatprep.subr.mxu0 0.0
  %4801 = vmatpush1.msra.mxu0 0.0
  %4802 = vmatprep.subr.mxu0 0.0
  %4803 = vmatpush1.msra.mxu0 0.0
  %4804 = vmatprep.subr.mxu0 0.0
  %4805 = vmatpush1.msra.mxu0 0.0
  %4806 = vmatprep.subr.mxu0 0.0
  %4807 = vmatpush1.msra.mxu0 0.0
  %4808 = vmatprep.subr.mxu0 0.0
  %4809 = vmatpush1.msra.mxu0 0.0
  %4810 = vmatprep.subr.mxu0 0.0
  %4811 = vmatpush1.msra.mxu0 0.0
  %4812 = vmatprep.subr.mxu0 0.0
  %4813 = vmatpush1.msra.mxu0 0.0
  %4814 = vmatprep.subr.mxu0 0.0
  %4815 = vmatpush1.msra.mxu0 0.0
  %4816 = vmatprep.subr.mxu0 0.0
  %4817 = vmatpush1.msra.mxu0 0.0
  %4818 = vmatprep.mubr.f32.mxu0 0.0
  %4819 = vmatmul.mubr.f32.gmra.mrb[0].mxu0 %v4736
  %v4820 = vpop.f32.mrb[0].mxu0
  %v4821 = vadd.f32 0.0, %v4820
  %v4822 = vpop.f32.mrb[0].mxu0
  %4823 = vdwg.mxu0
  %v4824 = vadd.f32 %v4727, %v4821
  %v4825 = vld [vmem:[#allocation3 + $0x1e0] sm:$0xff]
  %v4826 = vld [vmem:[#allocation3 + $0x1e8] sm:$0xff]
  %v4827 = vld [vmem:[#allocation3 + $0x250] sm:$0xff]
  %v4828 = vld [vmem:[#allocation3 + $0x258] sm:$0xff]
  %v4829 = vmax.f32 %v4825, %v4826
  %v4830 = vmax.f32 %v4827, %v4828
  %v4831 = vmax.f32 %v4829, %v4830
  %v4832 = vadd.f32 %v4831, %v3669
  %v4833 = vmax.f32 %v4832, 0.0
  %s4834 = scalar_lea.vmem %s5, 1536
  %v4835 = vld [vmem:[%s4834] sm:$0xff]
  %v4836 = vld [vmem:[%s4834 + $0x8] sm:$0xff]
  %v4837 = vld [vmem:[%s4834 + $0x10] sm:$0xff]
  %v4838 = vld [vmem:[%s4834 + $0x18] sm:$0xff]
  %v4839 = vld [vmem:[%s4834 + $0x20] sm:$0xff]
  %v4840 = vld [vmem:[%s4834 + $0x28] sm:$0xff]
  %v4841 = vld [vmem:[%s4834 + $0x30] sm:$0xff]
  %v4842 = vld [vmem:[%s4834 + $0x38] sm:$0xff]
  %v4843 = vld [vmem:[%s4834 + $0x40] sm:$0xff]
  %v4844 = vld [vmem:[%s4834 + $0x48] sm:$0xff]
  %v4845 = vld [vmem:[%s4834 + $0x50] sm:$0xff]
  %v4846 = vld [vmem:[%s4834 + $0x58] sm:$0xff]
  %v4847 = vld [vmem:[%s4834 + $0x60] sm:$0xff]
  %v4848 = vld [vmem:[%s4834 + $0x68] sm:$0xff]
  %v4849 = vld [vmem:[%s4834 + $0x70] sm:$0xff]
  %v4850 = vld [vmem:[%s4834 + $0x78] sm:$0xff]
  %4851 = vmatprep.subr.mxu0 0.0
  %4852 = vmatpush1.msra.mxu0 %v4835
  %4853 = vmatprep.subr.mxu0 0.0
  %4854 = vmatpush1.msra.mxu0 %v4836
  %4855 = vmatprep.subr.mxu0 0.0
  %4856 = vmatpush1.msra.mxu0 %v4837
  %4857 = vmatprep.subr.mxu0 0.0
  %4858 = vmatpush1.msra.mxu0 %v4838
  %4859 = vmatprep.subr.mxu0 0.0
  %4860 = vmatpush1.msra.mxu0 %v4839
  %4861 = vmatprep.subr.mxu0 0.0
  %4862 = vmatpush1.msra.mxu0 %v4840
  %4863 = vmatprep.subr.mxu0 0.0
  %4864 = vmatpush1.msra.mxu0 %v4841
  %4865 = vmatprep.subr.mxu0 0.0
  %4866 = vmatpush1.msra.mxu0 %v4842
  %4867 = vmatprep.subr.mxu0 0.0
  %4868 = vmatpush1.msra.mxu0 %v4843
  %4869 = vmatprep.subr.mxu0 0.0
  %4870 = vmatpush1.msra.mxu0 %v4844
  %4871 = vmatprep.subr.mxu0 0.0
  %4872 = vmatpush1.msra.mxu0 %v4845
  %4873 = vmatprep.subr.mxu0 0.0
  %4874 = vmatpush1.msra.mxu0 %v4846
  %4875 = vmatprep.subr.mxu0 0.0
  %4876 = vmatpush1.msra.mxu0 %v4847
  %4877 = vmatprep.subr.mxu0 0.0
  %4878 = vmatpush1.msra.mxu0 %v4848
  %4879 = vmatprep.subr.mxu0 0.0
  %4880 = vmatpush1.msra.mxu0 %v4849
  %4881 = vmatprep.subr.mxu0 0.0
  %4882 = vmatpush1.msra.mxu0 %v4850
  %4883 = vmatprep.subr.mxu0 0.0
  %4884 = vmatpush1.msra.mxu0 0.0
  %4885 = vmatprep.subr.mxu0 0.0
  %4886 = vmatpush1.msra.mxu0 0.0
  %4887 = vmatprep.subr.mxu0 0.0
  %4888 = vmatpush1.msra.mxu0 0.0
  %4889 = vmatprep.subr.mxu0 0.0
  %4890 = vmatpush1.msra.mxu0 0.0
  %4891 = vmatprep.subr.mxu0 0.0
  %4892 = vmatpush1.msra.mxu0 0.0
  %4893 = vmatprep.subr.mxu0 0.0
  %4894 = vmatpush1.msra.mxu0 0.0
  %4895 = vmatprep.subr.mxu0 0.0
  %4896 = vmatpush1.msra.mxu0 0.0
  %4897 = vmatprep.subr.mxu0 0.0
  %4898 = vmatpush1.msra.mxu0 0.0
  %4899 = vmatprep.subr.mxu0 0.0
  %4900 = vmatpush1.msra.mxu0 0.0
  %4901 = vmatprep.subr.mxu0 0.0
  %4902 = vmatpush1.msra.mxu0 0.0
  %4903 = vmatprep.subr.mxu0 0.0
  %4904 = vmatpush1.msra.mxu0 0.0
  %4905 = vmatprep.subr.mxu0 0.0
  %4906 = vmatpush1.msra.mxu0 0.0
  %4907 = vmatprep.subr.mxu0 0.0
  %4908 = vmatpush1.msra.mxu0 0.0
  %4909 = vmatprep.subr.mxu0 0.0
  %4910 = vmatpush1.msra.mxu0 0.0
  %4911 = vmatprep.subr.mxu0 0.0
  %4912 = vmatpush1.msra.mxu0 0.0
  %4913 = vmatprep.subr.mxu0 0.0
  %4914 = vmatpush1.msra.mxu0 0.0
  %4915 = vmatprep.mubr.f32.mxu0 0.0
  %4916 = vmatmul.mubr.f32.gmra.mrb[0].mxu0 %v4833
  %v4917 = vpop.f32.mrb[0].mxu0
  %v4918 = vadd.f32 0.0, %v4917
  %v4919 = vpop.f32.mrb[0].mxu0
  %4920 = vdwg.mxu0
  %v4921 = vadd.f32 %v4824, %v4918
  %v4922 = vld [vmem:[#allocation3 + $0x1f0] sm:$0xff]
  %v4923 = vld [vmem:[#allocation3 + $0x1f8] sm:$0xff]
  %v4924 = vld [vmem:[#allocation3 + $0x260] sm:$0xff]
  %v4925 = vld [vmem:[#allocation3 + $0x268] sm:$0xff]
  %v4926 = vmax.f32 %v4922, %v4923
  %v4927 = vmax.f32 %v4924, %v4925
  %v4928 = vmax.f32 %v4926, %v4927
  %v4929 = vadd.f32 %v4928, %v3669
  %v4930 = vmax.f32 %v4929, 0.0
  %s4931 = scalar_lea.vmem %s5, 1664
  %v4932 = vld [vmem:[%s4931] sm:$0xff]
  %v4933 = vld [vmem:[%s4931 + $0x8] sm:$0xff]
  %v4934 = vld [vmem:[%s4931 + $0x10] sm:$0xff]
  %v4935 = vld [vmem:[%s4931 + $0x18] sm:$0xff]
  %v4936 = vld [vmem:[%s4931 + $0x20] sm:$0xff]
  %v4937 = vld [vmem:[%s4931 + $0x28] sm:$0xff]
  %v4938 = vld [vmem:[%s4931 + $0x30] sm:$0xff]
  %v4939 = vld [vmem:[%s4931 + $0x38] sm:$0xff]
  %v4940 = vld [vmem:[%s4931 + $0x40] sm:$0xff]
  %v4941 = vld [vmem:[%s4931 + $0x48] sm:$0xff]
  %v4942 = vld [vmem:[%s4931 + $0x50] sm:$0xff]
  %v4943 = vld [vmem:[%s4931 + $0x58] sm:$0xff]
  %v4944 = vld [vmem:[%s4931 + $0x60] sm:$0xff]
  %v4945 = vld [vmem:[%s4931 + $0x68] sm:$0xff]
  %v4946 = vld [vmem:[%s4931 + $0x70] sm:$0xff]
  %v4947 = vld [vmem:[%s4931 + $0x78] sm:$0xff]
  %4948 = vmatprep.subr.mxu0 0.0
  %4949 = vmatpush1.msra.mxu0 %v4932
  %4950 = vmatprep.subr.mxu0 0.0
  %4951 = vmatpush1.msra.mxu0 %v4933
  %4952 = vmatprep.subr.mxu0 0.0
  %4953 = vmatpush1.msra.mxu0 %v4934
  %4954 = vmatprep.subr.mxu0 0.0
  %4955 = vmatpush1.msra.mxu0 %v4935
  %4956 = vmatprep.subr.mxu0 0.0
  %4957 = vmatpush1.msra.mxu0 %v4936
  %4958 = vmatprep.subr.mxu0 0.0
  %4959 = vmatpush1.msra.mxu0 %v4937
  %4960 = vmatprep.subr.mxu0 0.0
  %4961 = vmatpush1.msra.mxu0 %v4938
  %4962 = vmatprep.subr.mxu0 0.0
  %4963 = vmatpush1.msra.mxu0 %v4939
  %4964 = vmatprep.subr.mxu0 0.0
  %4965 = vmatpush1.msra.mxu0 %v4940
  %4966 = vmatprep.subr.mxu0 0.0
  %4967 = vmatpush1.msra.mxu0 %v4941
  %4968 = vmatprep.subr.mxu0 0.0
  %4969 = vmatpush1.msra.mxu0 %v4942
  %4970 = vmatprep.subr.mxu0 0.0
  %4971 = vmatpush1.msra.mxu0 %v4943
  %4972 = vmatprep.subr.mxu0 0.0
  %4973 = vmatpush1.msra.mxu0 %v4944
  %4974 = vmatprep.subr.mxu0 0.0
  %4975 = vmatpush1.msra.mxu0 %v4945
  %4976 = vmatprep.subr.mxu0 0.0
  %4977 = vmatpush1.msra.mxu0 %v4946
  %4978 = vmatprep.subr.mxu0 0.0
  %4979 = vmatpush1.msra.mxu0 %v4947
  %4980 = vmatprep.subr.mxu0 0.0
  %4981 = vmatpush1.msra.mxu0 0.0
  %4982 = vmatprep.subr.mxu0 0.0
  %4983 = vmatpush1.msra.mxu0 0.0
  %4984 = vmatprep.subr.mxu0 0.0
  %4985 = vmatpush1.msra.mxu0 0.0
  %4986 = vmatprep.subr.mxu0 0.0
  %4987 = vmatpush1.msra.mxu0 0.0
  %4988 = vmatprep.subr.mxu0 0.0
  %4989 = vmatpush1.msra.mxu0 0.0
  %4990 = vmatprep.subr.mxu0 0.0
  %4991 = vmatpush1.msra.mxu0 0.0
  %4992 = vmatprep.subr.mxu0 0.0
  %4993 = vmatpush1.msra.mxu0 0.0
  %4994 = vmatprep.subr.mxu0 0.0
  %4995 = vmatpush1.msra.mxu0 0.0
  %4996 = vmatprep.subr.mxu0 0.0
  %4997 = vmatpush1.msra.mxu0 0.0
  %4998 = vmatprep.subr.mxu0 0.0
  %4999 = vmatpush1.msra.mxu0 0.0
  %5000 = vmatprep.subr.mxu0 0.0
  %5001 = vmatpush1.msra.mxu0 0.0
  %5002 = vmatprep.subr.mxu0 0.0
  %5003 = vmatpush1.msra.mxu0 0.0
  %5004 = vmatprep.subr.mxu0 0.0
  %5005 = vmatpush1.msra.mxu0 0.0
  %5006 = vmatprep.subr.mxu0 0.0
  %5007 = vmatpush1.msra.mxu0 0.0
  %5008 = vmatprep.subr.mxu0 0.0
  %5009 = vmatpush1.msra.mxu0 0.0
  %5010 = vmatprep.subr.mxu0 0.0
  %5011 = vmatpush1.msra.mxu0 0.0
  %5012 = vmatprep.mubr.f32.mxu0 0.0
  %5013 = vmatmul.mubr.f32.gmra.mrb[0].mxu0 %v4930
  %v5014 = vpop.f32.mrb[0].mxu0
  %v5015 = vadd.f32 0.0, %v5014
  %v5016 = vpop.f32.mrb[0].mxu0
  %5017 = vdwg.mxu0
  %v5018 = vadd.f32 %v4921, %v5015
  %v5019 = vld [vmem:[#allocation3 + $0x200] sm:$0xff]
  %v5020 = vld [vmem:[#allocation3 + $0x208] sm:$0xff]
  %v5021 = vld [vmem:[#allocation3 + $0x270] sm:$0xff]
  %v5022 = vld [vmem:[#allocation3 + $0x278] sm:$0xff]
  %v5023 = vmax.f32 %v5019, %v5020
  %v5024 = vmax.f32 %v5021, %v5022
  %v5025 = vmax.f32 %v5023, %v5024
  %v5026 = vadd.f32 %v5025, %v3669
  %v5027 = vmax.f32 %v5026, 0.0
  %s5028 = scalar_lea.vmem %s5, 1792
  %v5029 = vld [vmem:[%s5028] sm:$0xff]
  %v5030 = vld [vmem:[%s5028 + $0x8] sm:$0xff]
  %v5031 = vld [vmem:[%s5028 + $0x10] sm:$0xff]
  %v5032 = vld [vmem:[%s5028 + $0x18] sm:$0xff]
  %v5033 = vld [vmem:[%s5028 + $0x20] sm:$0xff]
  %v5034 = vld [vmem:[%s5028 + $0x28] sm:$0xff]
  %v5035 = vld [vmem:[%s5028 + $0x30] sm:$0xff]
  %v5036 = vld [vmem:[%s5028 + $0x38] sm:$0xff]
  %v5037 = vld [vmem:[%s5028 + $0x40] sm:$0xff]
  %v5038 = vld [vmem:[%s5028 + $0x48] sm:$0xff]
  %v5039 = vld [vmem:[%s5028 + $0x50] sm:$0xff]
  %v5040 = vld [vmem:[%s5028 + $0x58] sm:$0xff]
  %v5041 = vld [vmem:[%s5028 + $0x60] sm:$0xff]
  %v5042 = vld [vmem:[%s5028 + $0x68] sm:$0xff]
  %v5043 = vld [vmem:[%s5028 + $0x70] sm:$0xff]
  %v5044 = vld [vmem:[%s5028 + $0x78] sm:$0xff]
  %5045 = vmatprep.subr.mxu0 0.0
  %5046 = vmatpush1.msra.mxu0 %v5029
  %5047 = vmatprep.subr.mxu0 0.0
  %5048 = vmatpush1.msra.mxu0 %v5030
  %5049 = vmatprep.subr.mxu0 0.0
  %5050 = vmatpush1.msra.mxu0 %v5031
  %5051 = vmatprep.subr.mxu0 0.0
  %5052 = vmatpush1.msra.mxu0 %v5032
  %5053 = vmatprep.subr.mxu0 0.0
  %5054 = vmatpush1.msra.mxu0 %v5033
  %5055 = vmatprep.subr.mxu0 0.0
  %5056 = vmatpush1.msra.mxu0 %v5034
  %5057 = vmatprep.subr.mxu0 0.0
  %5058 = vmatpush1.msra.mxu0 %v5035
  %5059 = vmatprep.subr.mxu0 0.0
  %5060 = vmatpush1.msra.mxu0 %v5036
  %5061 = vmatprep.subr.mxu0 0.0
  %5062 = vmatpush1.msra.mxu0 %v5037
  %5063 = vmatprep.subr.mxu0 0.0
  %5064 = vmatpush1.msra.mxu0 %v5038
  %5065 = vmatprep.subr.mxu0 0.0
  %5066 = vmatpush1.msra.mxu0 %v5039
  %5067 = vmatprep.subr.mxu0 0.0
  %5068 = vmatpush1.msra.mxu0 %v5040
  %5069 = vmatprep.subr.mxu0 0.0
  %5070 = vmatpush1.msra.mxu0 %v5041
  %5071 = vmatprep.subr.mxu0 0.0
  %5072 = vmatpush1.msra.mxu0 %v5042
  %5073 = vmatprep.subr.mxu0 0.0
  %5074 = vmatpush1.msra.mxu0 %v5043
  %5075 = vmatprep.subr.mxu0 0.0
  %5076 = vmatpush1.msra.mxu0 %v5044
  %5077 = vmatprep.subr.mxu0 0.0
  %5078 = vmatpush1.msra.mxu0 0.0
  %5079 = vmatprep.subr.mxu0 0.0
  %5080 = vmatpush1.msra.mxu0 0.0
  %5081 = vmatprep.subr.mxu0 0.0
  %5082 = vmatpush1.msra.mxu0 0.0
  %5083 = vmatprep.subr.mxu0 0.0
  %5084 = vmatpush1.msra.mxu0 0.0
  %5085 = vmatprep.subr.mxu0 0.0
  %5086 = vmatpush1.msra.mxu0 0.0
  %5087 = vmatprep.subr.mxu0 0.0
  %5088 = vmatpush1.msra.mxu0 0.0
  %5089 = vmatprep.subr.mxu0 0.0
  %5090 = vmatpush1.msra.mxu0 0.0
  %5091 = vmatprep.subr.mxu0 0.0
  %5092 = vmatpush1.msra.mxu0 0.0
  %5093 = vmatprep.subr.mxu0 0.0
  %5094 = vmatpush1.msra.mxu0 0.0
  %5095 = vmatprep.subr.mxu0 0.0
  %5096 = vmatpush1.msra.mxu0 0.0
  %5097 = vmatprep.subr.mxu0 0.0
  %5098 = vmatpush1.msra.mxu0 0.0
  %5099 = vmatprep.subr.mxu0 0.0
  %5100 = vmatpush1.msra.mxu0 0.0
  %5101 = vmatprep.subr.mxu0 0.0
  %5102 = vmatpush1.msra.mxu0 0.0
  %5103 = vmatprep.subr.mxu0 0.0
  %5104 = vmatpush1.msra.mxu0 0.0
  %5105 = vmatprep.subr.mxu0 0.0
  %5106 = vmatpush1.msra.mxu0 0.0
  %5107 = vmatprep.subr.mxu0 0.0
  %5108 = vmatpush1.msra.mxu0 0.0
  %5109 = vmatprep.mubr.f32.mxu0 0.0
  %5110 = vmatmul.mubr.f32.gmra.mrb[0].mxu0 %v5027
  %v5111 = vpop.f32.mrb[0].mxu0
  %v5112 = vadd.f32 0.0, %v5111
  %v5113 = vpop.f32.mrb[0].mxu0
  %5114 = vdwg.mxu0
  %v5115 = vadd.f32 %v5018, %v5112
  %v5116 = vld [vmem:[#allocation3 + $0x2a0] sm:$0xff]
  %v5117 = vld [vmem:[#allocation3 + $0x2a8] sm:$0xff]
  %v5118 = vld [vmem:[#allocation3 + $0x310] sm:$0xff]
  %v5119 = vld [vmem:[#allocation3 + $0x318] sm:$0xff]
  %v5120 = vmax.f32 %v5116, %v5117
  %v5121 = vmax.f32 %v5118, %v5119
  %v5122 = vmax.f32 %v5120, %v5121
  %v5123 = vadd.f32 %v5122, %v3669
  %v5124 = vmax.f32 %v5123, 0.0
  %s5125 = scalar_lea.vmem %s5, 1920
  %v5126 = vld [vmem:[%s5125] sm:$0xff]
  %v5127 = vld [vmem:[%s5125 + $0x8] sm:$0xff]
  %v5128 = vld [vmem:[%s5125 + $0x10] sm:$0xff]
  %v5129 = vld [vmem:[%s5125 + $0x18] sm:$0xff]
  %v5130 = vld [vmem:[%s5125 + $0x20] sm:$0xff]
  %v5131 = vld [vmem:[%s5125 + $0x28] sm:$0xff]
  %v5132 = vld [vmem:[%s5125 + $0x30] sm:$0xff]
  %v5133 = vld [vmem:[%s5125 + $0x38] sm:$0xff]
  %v5134 = vld [vmem:[%s5125 + $0x40] sm:$0xff]
  %v5135 = vld [vmem:[%s5125 + $0x48] sm:$0xff]
  %v5136 = vld [vmem:[%s5125 + $0x50] sm:$0xff]
  %v5137 = vld [vmem:[%s5125 + $0x58] sm:$0xff]
  %v5138 = vld [vmem:[%s5125 + $0x60] sm:$0xff]
  %v5139 = vld [vmem:[%s5125 + $0x68] sm:$0xff]
  %v5140 = vld [vmem:[%s5125 + $0x70] sm:$0xff]
  %v5141 = vld [vmem:[%s5125 + $0x78] sm:$0xff]
  %5142 = vmatprep.subr.mxu0 0.0
  %5143 = vmatpush1.msra.mxu0 %v5126
  %5144 = vmatprep.subr.mxu0 0.0
  %5145 = vmatpush1.msra.mxu0 %v5127
  %5146 = vmatprep.subr.mxu0 0.0
  %5147 = vmatpush1.msra.mxu0 %v5128
  %5148 = vmatprep.subr.mxu0 0.0
  %5149 = vmatpush1.msra.mxu0 %v5129
  %5150 = vmatprep.subr.mxu0 0.0
  %5151 = vmatpush1.msra.mxu0 %v5130
  %5152 = vmatprep.subr.mxu0 0.0
  %5153 = vmatpush1.msra.mxu0 %v5131
  %5154 = vmatprep.subr.mxu0 0.0
  %5155 = vmatpush1.msra.mxu0 %v5132
  %5156 = vmatprep.subr.mxu0 0.0
  %5157 = vmatpush1.msra.mxu0 %v5133
  %5158 = vmatprep.subr.mxu0 0.0
  %5159 = vmatpush1.msra.mxu0 %v5134
  %5160 = vmatprep.subr.mxu0 0.0
  %5161 = vmatpush1.msra.mxu0 %v5135
  %5162 = vmatprep.subr.mxu0 0.0
  %5163 = vmatpush1.msra.mxu0 %v5136
  %5164 = vmatprep.subr.mxu0 0.0
  %5165 = vmatpush1.msra.mxu0 %v5137
  %5166 = vmatprep.subr.mxu0 0.0
  %5167 = vmatpush1.msra.mxu0 %v5138
  %5168 = vmatprep.subr.mxu0 0.0
  %5169 = vmatpush1.msra.mxu0 %v5139
  %5170 = vmatprep.subr.mxu0 0.0
  %5171 = vmatpush1.msra.mxu0 %v5140
  %5172 = vmatprep.subr.mxu0 0.0
  %5173 = vmatpush1.msra.mxu0 %v5141
  %5174 = vmatprep.subr.mxu0 0.0
  %5175 = vmatpush1.msra.mxu0 0.0
  %5176 = vmatprep.subr.mxu0 0.0
  %5177 = vmatpush1.msra.mxu0 0.0
  %5178 = vmatprep.subr.mxu0 0.0
  %5179 = vmatpush1.msra.mxu0 0.0
  %5180 = vmatprep.subr.mxu0 0.0
  %5181 = vmatpush1.msra.mxu0 0.0
  %5182 = vmatprep.subr.mxu0 0.0
  %5183 = vmatpush1.msra.mxu0 0.0
  %5184 = vmatprep.subr.mxu0 0.0
  %5185 = vmatpush1.msra.mxu0 0.0
  %5186 = vmatprep.subr.mxu0 0.0
  %5187 = vmatpush1.msra.mxu0 0.0
  %5188 = vmatprep.subr.mxu0 0.0
  %5189 = vmatpush1.msra.mxu0 0.0
  %5190 = vmatprep.subr.mxu0 0.0
  %5191 = vmatpush1.msra.mxu0 0.0
  %5192 = vmatprep.subr.mxu0 0.0
  %5193 = vmatpush1.msra.mxu0 0.0
  %5194 = vmatprep.subr.mxu0 0.0
  %5195 = vmatpush1.msra.mxu0 0.0
  %5196 = vmatprep.subr.mxu0 0.0
  %5197 = vmatpush1.msra.mxu0 0.0
  %5198 = vmatprep.subr.mxu0 0.0
  %5199 = vmatpush1.msra.mxu0 0.0
  %5200 = vmatprep.subr.mxu0 0.0
  %5201 = vmatpush1.msra.mxu0 0.0
  %5202 = vmatprep.subr.mxu0 0.0
  %5203 = vmatpush1.msra.mxu0 0.0
  %5204 = vmatprep.subr.mxu0 0.0
  %5205 = vmatpush1.msra.mxu0 0.0
  %5206 = vmatprep.mubr.f32.mxu0 0.0
  %5207 = vmatmul.mubr.f32.gmra.mrb[0].mxu0 %v5124
  %v5208 = vpop.f32.mrb[0].mxu0
  %v5209 = vadd.f32 0.0, %v5208
  %v5210 = vpop.f32.mrb[0].mxu0
  %5211 = vdwg.mxu0
  %v5212 = vadd.f32 %v5115, %v5209
  %v5213 = vld [vmem:[#allocation3 + $0x2b0] sm:$0xff]
  %v5214 = vld [vmem:[#allocation3 + $0x2b8] sm:$0xff]
  %v5215 = vld [vmem:[#allocation3 + $0x320] sm:$0xff]
  %v5216 = vld [vmem:[#allocation3 + $0x328] sm:$0xff]
  %v5217 = vmax.f32 %v5213, %v5214
  %v5218 = vmax.f32 %v5215, %v5216
  %v5219 = vmax.f32 %v5217, %v5218
  %v5220 = vadd.f32 %v5219, %v3669
  %v5221 = vmax.f32 %v5220, 0.0
  %s5222 = scalar_lea.vmem %s5, 2048
  %v5223 = vld [vmem:[%s5222] sm:$0xff]
  %v5224 = vld [vmem:[%s5222 + $0x8] sm:$0xff]
  %v5225 = vld [vmem:[%s5222 + $0x10] sm:$0xff]
  %v5226 = vld [vmem:[%s5222 + $0x18] sm:$0xff]
  %v5227 = vld [vmem:[%s5222 + $0x20] sm:$0xff]
  %v5228 = vld [vmem:[%s5222 + $0x28] sm:$0xff]
  %v5229 = vld [vmem:[%s5222 + $0x30] sm:$0xff]
  %v5230 = vld [vmem:[%s5222 + $0x38] sm:$0xff]
  %v5231 = vld [vmem:[%s5222 + $0x40] sm:$0xff]
  %v5232 = vld [vmem:[%s5222 + $0x48] sm:$0xff]
  %v5233 = vld [vmem:[%s5222 + $0x50] sm:$0xff]
  %v5234 = vld [vmem:[%s5222 + $0x58] sm:$0xff]
  %v5235 = vld [vmem:[%s5222 + $0x60] sm:$0xff]
  %v5236 = vld [vmem:[%s5222 + $0x68] sm:$0xff]
  %v5237 = vld [vmem:[%s5222 + $0x70] sm:$0xff]
  %v5238 = vld [vmem:[%s5222 + $0x78] sm:$0xff]
  %5239 = vmatprep.subr.mxu0 0.0
  %5240 = vmatpush1.msra.mxu0 %v5223
  %5241 = vmatprep.subr.mxu0 0.0
  %5242 = vmatpush1.msra.mxu0 %v5224
  %5243 = vmatprep.subr.mxu0 0.0
  %5244 = vmatpush1.msra.mxu0 %v5225
  %5245 = vmatprep.subr.mxu0 0.0
  %5246 = vmatpush1.msra.mxu0 %v5226
  %5247 = vmatprep.subr.mxu0 0.0
  %5248 = vmatpush1.msra.mxu0 %v5227
  %5249 = vmatprep.subr.mxu0 0.0
  %5250 = vmatpush1.msra.mxu0 %v5228
  %5251 = vmatprep.subr.mxu0 0.0
  %5252 = vmatpush1.msra.mxu0 %v5229
  %5253 = vmatprep.subr.mxu0 0.0
  %5254 = vmatpush1.msra.mxu0 %v5230
  %5255 = vmatprep.subr.mxu0 0.0
  %5256 = vmatpush1.msra.mxu0 %v5231
  %5257 = vmatprep.subr.mxu0 0.0
  %5258 = vmatpush1.msra.mxu0 %v5232
  %5259 = vmatprep.subr.mxu0 0.0
  %5260 = vmatpush1.msra.mxu0 %v5233
  %5261 = vmatprep.subr.mxu0 0.0
  %5262 = vmatpush1.msra.mxu0 %v5234
  %5263 = vmatprep.subr.mxu0 0.0
  %5264 = vmatpush1.msra.mxu0 %v5235
  %5265 = vmatprep.subr.mxu0 0.0
  %5266 = vmatpush1.msra.mxu0 %v5236
  %5267 = vmatprep.subr.mxu0 0.0
  %5268 = vmatpush1.msra.mxu0 %v5237
  %5269 = vmatprep.subr.mxu0 0.0
  %5270 = vmatpush1.msra.mxu0 %v5238
  %5271 = vmatprep.subr.mxu0 0.0
  %5272 = vmatpush1.msra.mxu0 0.0
  %5273 = vmatprep.subr.mxu0 0.0
  %5274 = vmatpush1.msra.mxu0 0.0
  %5275 = vmatprep.subr.mxu0 0.0
  %5276 = vmatpush1.msra.mxu0 0.0
  %5277 = vmatprep.subr.mxu0 0.0
  %5278 = vmatpush1.msra.mxu0 0.0
  %5279 = vmatprep.subr.mxu0 0.0
  %5280 = vmatpush1.msra.mxu0 0.0
  %5281 = vmatprep.subr.mxu0 0.0
  %5282 = vmatpush1.msra.mxu0 0.0
  %5283 = vmatprep.subr.mxu0 0.0
  %5284 = vmatpush1.msra.mxu0 0.0
  %5285 = vmatprep.subr.mxu0 0.0
  %5286 = vmatpush1.msra.mxu0 0.0
  %5287 = vmatprep.subr.mxu0 0.0
  %5288 = vmatpush1.msra.mxu0 0.0
  %5289 = vmatprep.subr.mxu0 0.0
  %5290 = vmatpush1.msra.mxu0 0.0
  %5291 = vmatprep.subr.mxu0 0.0
  %5292 = vmatpush1.msra.mxu0 0.0
  %5293 = vmatprep.subr.mxu0 0.0
  %5294 = vmatpush1.msra.mxu0 0.0
  %5295 = vmatprep.subr.mxu0 0.0
  %5296 = vmatpush1.msra.mxu0 0.0
  %5297 = vmatprep.subr.mxu0 0.0
  %5298 = vmatpush1.msra.mxu0 0.0
  %5299 = vmatprep.subr.mxu0 0.0
  %5300 = vmatpush1.msra.mxu0 0.0
  %5301 = vmatprep.subr.mxu0 0.0
  %5302 = vmatpush1.msra.mxu0 0.0
  %5303 = vmatprep.mubr.f32.mxu0 0.0
  %5304 = vmatmul.mubr.f32.gmra.mrb[0].mxu0 %v5221
  %v5305 = vpop.f32.mrb[0].mxu0
  %v5306 = vadd.f32 0.0, %v5305
  %v5307 = vpop.f32.mrb[0].mxu0
  %5308 = vdwg.mxu0
  %v5309 = vadd.f32 %v5212, %v5306
  %v5310 = vld [vmem:[#allocation3 + $0x2c0] sm:$0xff]
  %v5311 = vld [vmem:[#allocation3 + $0x2c8] sm:$0xff]
  %v5312 = vld [vmem:[#allocation3 + $0x330] sm:$0xff]
  %v5313 = vld [vmem:[#allocation3 + $0x338] sm:$0xff]
  %v5314 = vmax.f32 %v5310, %v5311
  %v5315 = vmax.f32 %v5312, %v5313
  %v5316 = vmax.f32 %v5314, %v5315
  %v5317 = vadd.f32 %v5316, %v3669
  %v5318 = vmax.f32 %v5317, 0.0
  %s5319 = scalar_lea.vmem %s5, 2176
  %v5320 = vld [vmem:[%s5319] sm:$0xff]
  %v5321 = vld [vmem:[%s5319 + $0x8] sm:$0xff]
  %v5322 = vld [vmem:[%s5319 + $0x10] sm:$0xff]
  %v5323 = vld [vmem:[%s5319 + $0x18] sm:$0xff]
  %v5324 = vld [vmem:[%s5319 + $0x20] sm:$0xff]
  %v5325 = vld [vmem:[%s5319 + $0x28] sm:$0xff]
  %v5326 = vld [vmem:[%s5319 + $0x30] sm:$0xff]
  %v5327 = vld [vmem:[%s5319 + $0x38] sm:$0xff]
  %v5328 = vld [vmem:[%s5319 + $0x40] sm:$0xff]
  %v5329 = vld [vmem:[%s5319 + $0x48] sm:$0xff]
  %v5330 = vld [vmem:[%s5319 + $0x50] sm:$0xff]
  %v5331 = vld [vmem:[%s5319 + $0x58] sm:$0xff]
  %v5332 = vld [vmem:[%s5319 + $0x60] sm:$0xff]
  %v5333 = vld [vmem:[%s5319 + $0x68] sm:$0xff]
  %v5334 = vld [vmem:[%s5319 + $0x70] sm:$0xff]
  %v5335 = vld [vmem:[%s5319 + $0x78] sm:$0xff]
  %5336 = vmatprep.subr.mxu0 0.0
  %5337 = vmatpush1.msra.mxu0 %v5320
  %5338 = vmatprep.subr.mxu0 0.0
  %5339 = vmatpush1.msra.mxu0 %v5321
  %5340 = vmatprep.subr.mxu0 0.0
  %5341 = vmatpush1.msra.mxu0 %v5322
  %5342 = vmatprep.subr.mxu0 0.0
  %5343 = vmatpush1.msra.mxu0 %v5323
  %5344 = vmatprep.subr.mxu0 0.0
  %5345 = vmatpush1.msra.mxu0 %v5324
  %5346 = vmatprep.subr.mxu0 0.0
  %5347 = vmatpush1.msra.mxu0 %v5325
  %5348 = vmatprep.subr.mxu0 0.0
  %5349 = vmatpush1.msra.mxu0 %v5326
  %5350 = vmatprep.subr.mxu0 0.0
  %5351 = vmatpush1.msra.mxu0 %v5327
  %5352 = vmatprep.subr.mxu0 0.0
  %5353 = vmatpush1.msra.mxu0 %v5328
  %5354 = vmatprep.subr.mxu0 0.0
  %5355 = vmatpush1.msra.mxu0 %v5329
  %5356 = vmatprep.subr.mxu0 0.0
  %5357 = vmatpush1.msra.mxu0 %v5330
  %5358 = vmatprep.subr.mxu0 0.0
  %5359 = vmatpush1.msra.mxu0 %v5331
  %5360 = vmatprep.subr.mxu0 0.0
  %5361 = vmatpush1.msra.mxu0 %v5332
  %5362 = vmatprep.subr.mxu0 0.0
  %5363 = vmatpush1.msra.mxu0 %v5333
  %5364 = vmatprep.subr.mxu0 0.0
  %5365 = vmatpush1.msra.mxu0 %v5334
  %5366 = vmatprep.subr.mxu0 0.0
  %5367 = vmatpush1.msra.mxu0 %v5335
  %5368 = vmatprep.subr.mxu0 0.0
  %5369 = vmatpush1.msra.mxu0 0.0
  %5370 = vmatprep.subr.mxu0 0.0
  %5371 = vmatpush1.msra.mxu0 0.0
  %5372 = vmatprep.subr.mxu0 0.0
  %5373 = vmatpush1.msra.mxu0 0.0
  %5374 = vmatprep.subr.mxu0 0.0
  %5375 = vmatpush1.msra.mxu0 0.0
  %5376 = vmatprep.subr.mxu0 0.0
  %5377 = vmatpush1.msra.mxu0 0.0
  %5378 = vmatprep.subr.mxu0 0.0
  %5379 = vmatpush1.msra.mxu0 0.0
  %5380 = vmatprep.subr.mxu0 0.0
  %5381 = vmatpush1.msra.mxu0 0.0
  %5382 = vmatprep.subr.mxu0 0.0
  %5383 = vmatpush1.msra.mxu0 0.0
  %5384 = vmatprep.subr.mxu0 0.0
  %5385 = vmatpush1.msra.mxu0 0.0
  %5386 = vmatprep.subr.mxu0 0.0
  %5387 = vmatpush1.msra.mxu0 0.0
  %5388 = vmatprep.subr.mxu0 0.0
  %5389 = vmatpush1.msra.mxu0 0.0
  %5390 = vmatprep.subr.mxu0 0.0
  %5391 = vmatpush1.msra.mxu0 0.0
  %5392 = vmatprep.subr.mxu0 0.0
  %5393 = vmatpush1.msra.mxu0 0.0
  %5394 = vmatprep.subr.mxu0 0.0
  %5395 = vmatpush1.msra.mxu0 0.0
  %5396 = vmatprep.subr.mxu0 0.0
  %5397 = vmatpush1.msra.mxu0 0.0
  %5398 = vmatprep.subr.mxu0 0.0
  %5399 = vmatpush1.msra.mxu0 0.0
  %5400 = vmatprep.mubr.f32.mxu0 0.0
  %5401 = vmatmul.mubr.f32.gmra.mrb[0].mxu0 %v5318
  %v5402 = vpop.f32.mrb[0].mxu0
  %v5403 = vadd.f32 0.0, %v5402
  %v5404 = vpop.f32.mrb[0].mxu0
  %5405 = vdwg.mxu0
  %v5406 = vadd.f32 %v5309, %v5403
  %v5407 = vld [vmem:[#allocation3 + $0x2d0] sm:$0xff]
  %v5408 = vld [vmem:[#allocation3 + $0x2d8] sm:$0xff]
  %v5409 = vld [vmem:[#allocation3 + $0x340] sm:$0xff]
  %v5410 = vld [vmem:[#allocation3 + $0x348] sm:$0xff]
  %v5411 = vmax.f32 %v5407, %v5408
  %v5412 = vmax.f32 %v5409, %v5410
  %v5413 = vmax.f32 %v5411, %v5412
  %v5414 = vadd.f32 %v5413, %v3669
  %v5415 = vmax.f32 %v5414, 0.0
  %s5416 = scalar_lea.vmem %s5, 2304
  %v5417 = vld [vmem:[%s5416] sm:$0xff]
  %v5418 = vld [vmem:[%s5416 + $0x8] sm:$0xff]
  %v5419 = vld [vmem:[%s5416 + $0x10] sm:$0xff]
  %v5420 = vld [vmem:[%s5416 + $0x18] sm:$0xff]
  %v5421 = vld [vmem:[%s5416 + $0x20] sm:$0xff]
  %v5422 = vld [vmem:[%s5416 + $0x28] sm:$0xff]
  %v5423 = vld [vmem:[%s5416 + $0x30] sm:$0xff]
  %v5424 = vld [vmem:[%s5416 + $0x38] sm:$0xff]
  %v5425 = vld [vmem:[%s5416 + $0x40] sm:$0xff]
  %v5426 = vld [vmem:[%s5416 + $0x48] sm:$0xff]
  %v5427 = vld [vmem:[%s5416 + $0x50] sm:$0xff]
  %v5428 = vld [vmem:[%s5416 + $0x58] sm:$0xff]
  %v5429 = vld [vmem:[%s5416 + $0x60] sm:$0xff]
  %v5430 = vld [vmem:[%s5416 + $0x68] sm:$0xff]
  %v5431 = vld [vmem:[%s5416 + $0x70] sm:$0xff]
  %v5432 = vld [vmem:[%s5416 + $0x78] sm:$0xff]
  %5433 = vmatprep.subr.mxu0 0.0
  %5434 = vmatpush1.msra.mxu0 %v5417
  %5435 = vmatprep.subr.mxu0 0.0
  %5436 = vmatpush1.msra.mxu0 %v5418
  %5437 = vmatprep.subr.mxu0 0.0
  %5438 = vmatpush1.msra.mxu0 %v5419
  %5439 = vmatprep.subr.mxu0 0.0
  %5440 = vmatpush1.msra.mxu0 %v5420
  %5441 = vmatprep.subr.mxu0 0.0
  %5442 = vmatpush1.msra.mxu0 %v5421
  %5443 = vmatprep.subr.mxu0 0.0
  %5444 = vmatpush1.msra.mxu0 %v5422
  %5445 = vmatprep.subr.mxu0 0.0
  %5446 = vmatpush1.msra.mxu0 %v5423
  %5447 = vmatprep.subr.mxu0 0.0
  %5448 = vmatpush1.msra.mxu0 %v5424
  %5449 = vmatprep.subr.mxu0 0.0
  %5450 = vmatpush1.msra.mxu0 %v5425
  %5451 = vmatprep.subr.mxu0 0.0
  %5452 = vmatpush1.msra.mxu0 %v5426
  %5453 = vmatprep.subr.mxu0 0.0
  %5454 = vmatpush1.msra.mxu0 %v5427
  %5455 = vmatprep.subr.mxu0 0.0
  %5456 = vmatpush1.msra.mxu0 %v5428
  %5457 = vmatprep.subr.mxu0 0.0
  %5458 = vmatpush1.msra.mxu0 %v5429
  %5459 = vmatprep.subr.mxu0 0.0
  %5460 = vmatpush1.msra.mxu0 %v5430
  %5461 = vmatprep.subr.mxu0 0.0
  %5462 = vmatpush1.msra.mxu0 %v5431
  %5463 = vmatprep.subr.mxu0 0.0
  %5464 = vmatpush1.msra.mxu0 %v5432
  %5465 = vmatprep.subr.mxu0 0.0
  %5466 = vmatpush1.msra.mxu0 0.0
  %5467 = vmatprep.subr.mxu0 0.0
  %5468 = vmatpush1.msra.mxu0 0.0
  %5469 = vmatprep.subr.mxu0 0.0
  %5470 = vmatpush1.msra.mxu0 0.0
  %5471 = vmatprep.subr.mxu0 0.0
  %5472 = vmatpush1.msra.mxu0 0.0
  %5473 = vmatprep.subr.mxu0 0.0
  %5474 = vmatpush1.msra.mxu0 0.0
  %5475 = vmatprep.subr.mxu0 0.0
  %5476 = vmatpush1.msra.mxu0 0.0
  %5477 = vmatprep.subr.mxu0 0.0
  %5478 = vmatpush1.msra.mxu0 0.0
  %5479 = vmatprep.subr.mxu0 0.0
  %5480 = vmatpush1.msra.mxu0 0.0
  %5481 = vmatprep.subr.mxu0 0.0
  %5482 = vmatpush1.msra.mxu0 0.0
  %5483 = vmatprep.subr.mxu0 0.0
  %5484 = vmatpush1.msra.mxu0 0.0
  %5485 = vmatprep.subr.mxu0 0.0
  %5486 = vmatpush1.msra.mxu0 0.0
  %5487 = vmatprep.subr.mxu0 0.0
  %5488 = vmatpush1.msra.mxu0 0.0
  %5489 = vmatprep.subr.mxu0 0.0
  %5490 = vmatpush1.msra.mxu0 0.0
  %5491 = vmatprep.subr.mxu0 0.0
  %5492 = vmatpush1.msra.mxu0 0.0
  %5493 = vmatprep.subr.mxu0 0.0
  %5494 = vmatpush1.msra.mxu0 0.0
  %5495 = vmatprep.subr.mxu0 0.0
  %5496 = vmatpush1.msra.mxu0 0.0
  %5497 = vmatprep.mubr.f32.mxu0 0.0
  %5498 = vmatmul.mubr.f32.gmra.mrb[0].mxu0 %v5415
  %v5499 = vpop.f32.mrb[0].mxu0
  %v5500 = vadd.f32 0.0, %v5499
  %v5501 = vpop.f32.mrb[0].mxu0
  %5502 = vdwg.mxu0
  %v5503 = vadd.f32 %v5406, %v5500
  %v5504 = vld [vmem:[#allocation3 + $0x2e0] sm:$0xff]
  %v5505 = vld [vmem:[#allocation3 + $0x2e8] sm:$0xff]
  %v5506 = vld [vmem:[#allocation3 + $0x350] sm:$0xff]
  %v5507 = vld [vmem:[#allocation3 + $0x358] sm:$0xff]
  %v5508 = vmax.f32 %v5504, %v5505
  %v5509 = vmax.f32 %v5506, %v5507
  %v5510 = vmax.f32 %v5508, %v5509
  %v5511 = vadd.f32 %v5510, %v3669
  %v5512 = vmax.f32 %v5511, 0.0
  %s5513 = scalar_lea.vmem %s5, 2432
  %v5514 = vld [vmem:[%s5513] sm:$0xff]
  %v5515 = vld [vmem:[%s5513 + $0x8] sm:$0xff]
  %v5516 = vld [vmem:[%s5513 + $0x10] sm:$0xff]
  %v5517 = vld [vmem:[%s5513 + $0x18] sm:$0xff]
  %v5518 = vld [vmem:[%s5513 + $0x20] sm:$0xff]
  %v5519 = vld [vmem:[%s5513 + $0x28] sm:$0xff]
  %v5520 = vld [vmem:[%s5513 + $0x30] sm:$0xff]
  %v5521 = vld [vmem:[%s5513 + $0x38] sm:$0xff]
  %v5522 = vld [vmem:[%s5513 + $0x40] sm:$0xff]
  %v5523 = vld [vmem:[%s5513 + $0x48] sm:$0xff]
  %v5524 = vld [vmem:[%s5513 + $0x50] sm:$0xff]
  %v5525 = vld [vmem:[%s5513 + $0x58] sm:$0xff]
  %v5526 = vld [vmem:[%s5513 + $0x60] sm:$0xff]
  %v5527 = vld [vmem:[%s5513 + $0x68] sm:$0xff]
  %v5528 = vld [vmem:[%s5513 + $0x70] sm:$0xff]
  %v5529 = vld [vmem:[%s5513 + $0x78] sm:$0xff]
  %5530 = vmatprep.subr.mxu0 0.0
  %5531 = vmatpush1.msra.mxu0 %v5514
  %5532 = vmatprep.subr.mxu0 0.0
  %5533 = vmatpush1.msra.mxu0 %v5515
  %5534 = vmatprep.subr.mxu0 0.0
  %5535 = vmatpush1.msra.mxu0 %v5516
  %5536 = vmatprep.subr.mxu0 0.0
  %5537 = vmatpush1.msra.mxu0 %v5517
  %5538 = vmatprep.subr.mxu0 0.0
  %5539 = vmatpush1.msra.mxu0 %v5518
  %5540 = vmatprep.subr.mxu0 0.0
  %5541 = vmatpush1.msra.mxu0 %v5519
  %5542 = vmatprep.subr.mxu0 0.0
  %5543 = vmatpush1.msra.mxu0 %v5520
  %5544 = vmatprep.subr.mxu0 0.0
  %5545 = vmatpush1.msra.mxu0 %v5521
  %5546 = vmatprep.subr.mxu0 0.0
  %5547 = vmatpush1.msra.mxu0 %v5522
  %5548 = vmatprep.subr.mxu0 0.0
  %5549 = vmatpush1.msra.mxu0 %v5523
  %5550 = vmatprep.subr.mxu0 0.0
  %5551 = vmatpush1.msra.mxu0 %v5524
  %5552 = vmatprep.subr.mxu0 0.0
  %5553 = vmatpush1.msra.mxu0 %v5525
  %5554 = vmatprep.subr.mxu0 0.0
  %5555 = vmatpush1.msra.mxu0 %v5526
  %5556 = vmatprep.subr.mxu0 0.0
  %5557 = vmatpush1.msra.mxu0 %v5527
  %5558 = vmatprep.subr.mxu0 0.0
  %5559 = vmatpush1.msra.mxu0 %v5528
  %5560 = vmatprep.subr.mxu0 0.0
  %5561 = vmatpush1.msra.mxu0 %v5529
  %5562 = vmatprep.subr.mxu0 0.0
  %5563 = vmatpush1.msra.mxu0 0.0
  %5564 = vmatprep.subr.mxu0 0.0
  %5565 = vmatpush1.msra.mxu0 0.0
  %5566 = vmatprep.subr.mxu0 0.0
  %5567 = vmatpush1.msra.mxu0 0.0
  %5568 = vmatprep.subr.mxu0 0.0
  %5569 = vmatpush1.msra.mxu0 0.0
  %5570 = vmatprep.subr.mxu0 0.0
  %5571 = vmatpush1.msra.mxu0 0.0
  %5572 = vmatprep.subr.mxu0 0.0
  %5573 = vmatpush1.msra.mxu0 0.0
  %5574 = vmatprep.subr.mxu0 0.0
  %5575 = vmatpush1.msra.mxu0 0.0
  %5576 = vmatprep.subr.mxu0 0.0
  %5577 = vmatpush1.msra.mxu0 0.0
  %5578 = vmatprep.subr.mxu0 0.0
  %5579 = vmatpush1.msra.mxu0 0.0
  %5580 = vmatprep.subr.mxu0 0.0
  %5581 = vmatpush1.msra.mxu0 0.0
  %5582 = vmatprep.subr.mxu0 0.0
  %5583 = vmatpush1.msra.mxu0 0.0
  %5584 = vmatprep.subr.mxu0 0.0
  %5585 = vmatpush1.msra.mxu0 0.0
  %5586 = vmatprep.subr.mxu0 0.0
  %5587 = vmatpush1.msra.mxu0 0.0
  %5588 = vmatprep.subr.mxu0 0.0
  %5589 = vmatpush1.msra.mxu0 0.0
  %5590 = vmatprep.subr.mxu0 0.0
  %5591 = vmatpush1.msra.mxu0 0.0
  %5592 = vmatprep.subr.mxu0 0.0
  %5593 = vmatpush1.msra.mxu0 0.0
  %5594 = vmatprep.mubr.f32.mxu0 0.0
  %5595 = vmatmul.mubr.f32.gmra.mrb[0].mxu0 %v5512
  %v5596 = vpop.f32.mrb[0].mxu0
  %v5597 = vadd.f32 0.0, %v5596
  %v5598 = vpop.f32.mrb[0].mxu0
  %5599 = vdwg.mxu0
  %v5600 = vadd.f32 %v5503, %v5597
  %v5601 = vld [vmem:[#allocation3 + $0x380] sm:$0xff]
  %v5602 = vld [vmem:[#allocation3 + $0x388] sm:$0xff]
  %v5603 = vld [vmem:[#allocation3 + $0x3f0] sm:$0xff]
  %v5604 = vld [vmem:[#allocation3 + $0x3f8] sm:$0xff]
  %v5605 = vmax.f32 %v5601, %v5602
  %v5606 = vmax.f32 %v5603, %v5604
  %v5607 = vmax.f32 %v5605, %v5606
  %v5608 = vadd.f32 %v5607, %v3669
  %v5609 = vmax.f32 %v5608, 0.0
  %s5610 = scalar_lea.vmem %s5, 2560
  %v5611 = vld [vmem:[%s5610] sm:$0xff]
  %v5612 = vld [vmem:[%s5610 + $0x8] sm:$0xff]
  %v5613 = vld [vmem:[%s5610 + $0x10] sm:$0xff]
  %v5614 = vld [vmem:[%s5610 + $0x18] sm:$0xff]
  %v5615 = vld [vmem:[%s5610 + $0x20] sm:$0xff]
  %v5616 = vld [vmem:[%s5610 + $0x28] sm:$0xff]
  %v5617 = vld [vmem:[%s5610 + $0x30] sm:$0xff]
  %v5618 = vld [vmem:[%s5610 + $0x38] sm:$0xff]
  %v5619 = vld [vmem:[%s5610 + $0x40] sm:$0xff]
  %v5620 = vld [vmem:[%s5610 + $0x48] sm:$0xff]
  %v5621 = vld [vmem:[%s5610 + $0x50] sm:$0xff]
  %v5622 = vld [vmem:[%s5610 + $0x58] sm:$0xff]
  %v5623 = vld [vmem:[%s5610 + $0x60] sm:$0xff]
  %v5624 = vld [vmem:[%s5610 + $0x68] sm:$0xff]
  %v5625 = vld [vmem:[%s5610 + $0x70] sm:$0xff]
  %v5626 = vld [vmem:[%s5610 + $0x78] sm:$0xff]
  %5627 = vmatprep.subr.mxu0 0.0
  %5628 = vmatpush1.msra.mxu0 %v5611
  %5629 = vmatprep.subr.mxu0 0.0
  %5630 = vmatpush1.msra.mxu0 %v5612
  %5631 = vmatprep.subr.mxu0 0.0
  %5632 = vmatpush1.msra.mxu0 %v5613
  %5633 = vmatprep.subr.mxu0 0.0
  %5634 = vmatpush1.msra.mxu0 %v5614
  %5635 = vmatprep.subr.mxu0 0.0
  %5636 = vmatpush1.msra.mxu0 %v5615
  %5637 = vmatprep.subr.mxu0 0.0
  %5638 = vmatpush1.msra.mxu0 %v5616
  %5639 = vmatprep.subr.mxu0 0.0
  %5640 = vmatpush1.msra.mxu0 %v5617
  %5641 = vmatprep.subr.mxu0 0.0
  %5642 = vmatpush1.msra.mxu0 %v5618
  %5643 = vmatprep.subr.mxu0 0.0
  %5644 = vmatpush1.msra.mxu0 %v5619
  %5645 = vmatprep.subr.mxu0 0.0
  %5646 = vmatpush1.msra.mxu0 %v5620
  %5647 = vmatprep.subr.mxu0 0.0
  %5648 = vmatpush1.msra.mxu0 %v5621
  %5649 = vmatprep.subr.mxu0 0.0
  %5650 = vmatpush1.msra.mxu0 %v5622
  %5651 = vmatprep.subr.mxu0 0.0
  %5652 = vmatpush1.msra.mxu0 %v5623
  %5653 = vmatprep.subr.mxu0 0.0
  %5654 = vmatpush1.msra.mxu0 %v5624
  %5655 = vmatprep.subr.mxu0 0.0
  %5656 = vmatpush1.msra.mxu0 %v5625
  %5657 = vmatprep.subr.mxu0 0.0
  %5658 = vmatpush1.msra.mxu0 %v5626
  %5659 = vmatprep.subr.mxu0 0.0
  %5660 = vmatpush1.msra.mxu0 0.0
  %5661 = vmatprep.subr.mxu0 0.0
  %5662 = vmatpush1.msra.mxu0 0.0
  %5663 = vmatprep.subr.mxu0 0.0
  %5664 = vmatpush1.msra.mxu0 0.0
  %5665 = vmatprep.subr.mxu0 0.0
  %5666 = vmatpush1.msra.mxu0 0.0
  %5667 = vmatprep.subr.mxu0 0.0
  %5668 = vmatpush1.msra.mxu0 0.0
  %5669 = vmatprep.subr.mxu0 0.0
  %5670 = vmatpush1.msra.mxu0 0.0
  %5671 = vmatprep.subr.mxu0 0.0
  %5672 = vmatpush1.msra.mxu0 0.0
  %5673 = vmatprep.subr.mxu0 0.0
  %5674 = vmatpush1.msra.mxu0 0.0
  %5675 = vmatprep.subr.mxu0 0.0
  %5676 = vmatpush1.msra.mxu0 0.0
  %5677 = vmatprep.subr.mxu0 0.0
  %5678 = vmatpush1.msra.mxu0 0.0
  %5679 = vmatprep.subr.mxu0 0.0
  %5680 = vmatpush1.msra.mxu0 0.0
  %5681 = vmatprep.subr.mxu0 0.0
  %5682 = vmatpush1.msra.mxu0 0.0
  %5683 = vmatprep.subr.mxu0 0.0
  %5684 = vmatpush1.msra.mxu0 0.0
  %5685 = vmatprep.subr.mxu0 0.0
  %5686 = vmatpush1.msra.mxu0 0.0
  %5687 = vmatprep.subr.mxu0 0.0
  %5688 = vmatpush1.msra.mxu0 0.0
  %5689 = vmatprep.subr.mxu0 0.0
  %5690 = vmatpush1.msra.mxu0 0.0
  %5691 = vmatprep.mubr.f32.mxu0 0.0
  %5692 = vmatmul.mubr.f32.gmra.mrb[0].mxu0 %v5609
  %v5693 = vpop.f32.mrb[0].mxu0
  %v5694 = vadd.f32 0.0, %v5693
  %v5695 = vpop.f32.mrb[0].mxu0
  %5696 = vdwg.mxu0
  %v5697 = vadd.f32 %v5600, %v5694
  %v5698 = vld [vmem:[#allocation3 + $0x390] sm:$0xff]
  %v5699 = vld [vmem:[#allocation3 + $0x398] sm:$0xff]
  %v5700 = vld [vmem:[#allocation3 + $0x400] sm:$0xff]
  %v5701 = vld [vmem:[#allocation3 + $0x408] sm:$0xff]
  %v5702 = vmax.f32 %v5698, %v5699
  %v5703 = vmax.f32 %v5700, %v5701
  %v5704 = vmax.f32 %v5702, %v5703
  %v5705 = vadd.f32 %v5704, %v3669
  %v5706 = vmax.f32 %v5705, 0.0
  %s5707 = scalar_lea.vmem %s5, 2688
  %v5708 = vld [vmem:[%s5707] sm:$0xff]
  %v5709 = vld [vmem:[%s5707 + $0x8] sm:$0xff]
  %v5710 = vld [vmem:[%s5707 + $0x10] sm:$0xff]
  %v5711 = vld [vmem:[%s5707 + $0x18] sm:$0xff]
  %v5712 = vld [vmem:[%s5707 + $0x20] sm:$0xff]
  %v5713 = vld [vmem:[%s5707 + $0x28] sm:$0xff]
  %v5714 = vld [vmem:[%s5707 + $0x30] sm:$0xff]
  %v5715 = vld [vmem:[%s5707 + $0x38] sm:$0xff]
  %v5716 = vld [vmem:[%s5707 + $0x40] sm:$0xff]
  %v5717 = vld [vmem:[%s5707 + $0x48] sm:$0xff]
  %v5718 = vld [vmem:[%s5707 + $0x50] sm:$0xff]
  %v5719 = vld [vmem:[%s5707 + $0x58] sm:$0xff]
  %v5720 = vld [vmem:[%s5707 + $0x60] sm:$0xff]
  %v5721 = vld [vmem:[%s5707 + $0x68] sm:$0xff]
  %v5722 = vld [vmem:[%s5707 + $0x70] sm:$0xff]
  %v5723 = vld [vmem:[%s5707 + $0x78] sm:$0xff]
  %5724 = vmatprep.subr.mxu0 0.0
  %5725 = vmatpush1.msra.mxu0 %v5708
  %5726 = vmatprep.subr.mxu0 0.0
  %5727 = vmatpush1.msra.mxu0 %v5709
  %5728 = vmatprep.subr.mxu0 0.0
  %5729 = vmatpush1.msra.mxu0 %v5710
  %5730 = vmatprep.subr.mxu0 0.0
  %5731 = vmatpush1.msra.mxu0 %v5711
  %5732 = vmatprep.subr.mxu0 0.0
  %5733 = vmatpush1.msra.mxu0 %v5712
  %5734 = vmatprep.subr.mxu0 0.0
  %5735 = vmatpush1.msra.mxu0 %v5713
  %5736 = vmatprep.subr.mxu0 0.0
  %5737 = vmatpush1.msra.mxu0 %v5714
  %5738 = vmatprep.subr.mxu0 0.0
  %5739 = vmatpush1.msra.mxu0 %v5715
  %5740 = vmatprep.subr.mxu0 0.0
  %5741 = vmatpush1.msra.mxu0 %v5716
  %5742 = vmatprep.subr.mxu0 0.0
  %5743 = vmatpush1.msra.mxu0 %v5717
  %5744 = vmatprep.subr.mxu0 0.0
  %5745 = vmatpush1.msra.mxu0 %v5718
  %5746 = vmatprep.subr.mxu0 0.0
  %5747 = vmatpush1.msra.mxu0 %v5719
  %5748 = vmatprep.subr.mxu0 0.0
  %5749 = vmatpush1.msra.mxu0 %v5720
  %5750 = vmatprep.subr.mxu0 0.0
  %5751 = vmatpush1.msra.mxu0 %v5721
  %5752 = vmatprep.subr.mxu0 0.0
  %5753 = vmatpush1.msra.mxu0 %v5722
  %5754 = vmatprep.subr.mxu0 0.0
  %5755 = vmatpush1.msra.mxu0 %v5723
  %5756 = vmatprep.subr.mxu0 0.0
  %5757 = vmatpush1.msra.mxu0 0.0
  %5758 = vmatprep.subr.mxu0 0.0
  %5759 = vmatpush1.msra.mxu0 0.0
  %5760 = vmatprep.subr.mxu0 0.0
  %5761 = vmatpush1.msra.mxu0 0.0
  %5762 = vmatprep.subr.mxu0 0.0
  %5763 = vmatpush1.msra.mxu0 0.0
  %5764 = vmatprep.subr.mxu0 0.0
  %5765 = vmatpush1.msra.mxu0 0.0
  %5766 = vmatprep.subr.mxu0 0.0
  %5767 = vmatpush1.msra.mxu0 0.0
  %5768 = vmatprep.subr.mxu0 0.0
  %5769 = vmatpush1.msra.mxu0 0.0
  %5770 = vmatprep.subr.mxu0 0.0
  %5771 = vmatpush1.msra.mxu0 0.0
  %5772 = vmatprep.subr.mxu0 0.0
  %5773 = vmatpush1.msra.mxu0 0.0
  %5774 = vmatprep.subr.mxu0 0.0
  %5775 = vmatpush1.msra.mxu0 0.0
  %5776 = vmatprep.subr.mxu0 0.0
  %5777 = vmatpush1.msra.mxu0 0.0
  %5778 = vmatprep.subr.mxu0 0.0
  %5779 = vmatpush1.msra.mxu0 0.0
  %5780 = vmatprep.subr.mxu0 0.0
  %5781 = vmatpush1.msra.mxu0 0.0
  %5782 = vmatprep.subr.mxu0 0.0
  %5783 = vmatpush1.msra.mxu0 0.0
  %5784 = vmatprep.subr.mxu0 0.0
  %5785 = vmatpush1.msra.mxu0 0.0
  %5786 = vmatprep.subr.mxu0 0.0
  %5787 = vmatpush1.msra.mxu0 0.0
  %5788 = vmatprep.mubr.f32.mxu0 0.0
  %5789 = vmatmul.mubr.f32.gmra.mrb[0].mxu0 %v5706
  %v5790 = vpop.f32.mrb[0].mxu0
  %v5791 = vadd.f32 0.0, %v5790
  %v5792 = vpop.f32.mrb[0].mxu0
  %5793 = vdwg.mxu0
  %v5794 = vadd.f32 %v5697, %v5791
  %v5795 = vld [vmem:[#allocation3 + $0x3a0] sm:$0xff]
  %v5796 = vld [vmem:[#allocation3 + $0x3a8] sm:$0xff]
  %v5797 = vld [vmem:[#allocation3 + $0x410] sm:$0xff]
  %v5798 = vld [vmem:[#allocation3 + $0x418] sm:$0xff]
  %v5799 = vmax.f32 %v5795, %v5796
  %v5800 = vmax.f32 %v5797, %v5798
  %v5801 = vmax.f32 %v5799, %v5800
  %v5802 = vadd.f32 %v5801, %v3669
  %v5803 = vmax.f32 %v5802, 0.0
  %s5804 = scalar_lea.vmem %s5, 2816
  %v5805 = vld [vmem:[%s5804] sm:$0xff]
  %v5806 = vld [vmem:[%s5804 + $0x8] sm:$0xff]
  %v5807 = vld [vmem:[%s5804 + $0x10] sm:$0xff]
  %v5808 = vld [vmem:[%s5804 + $0x18] sm:$0xff]
  %v5809 = vld [vmem:[%s5804 + $0x20] sm:$0xff]
  %v5810 = vld [vmem:[%s5804 + $0x28] sm:$0xff]
  %v5811 = vld [vmem:[%s5804 + $0x30] sm:$0xff]
  %v5812 = vld [vmem:[%s5804 + $0x38] sm:$0xff]
  %v5813 = vld [vmem:[%s5804 + $0x40] sm:$0xff]
  %v5814 = vld [vmem:[%s5804 + $0x48] sm:$0xff]
  %v5815 = vld [vmem:[%s5804 + $0x50] sm:$0xff]
  %v5816 = vld [vmem:[%s5804 + $0x58] sm:$0xff]
  %v5817 = vld [vmem:[%s5804 + $0x60] sm:$0xff]
  %v5818 = vld [vmem:[%s5804 + $0x68] sm:$0xff]
  %v5819 = vld [vmem:[%s5804 + $0x70] sm:$0xff]
  %v5820 = vld [vmem:[%s5804 + $0x78] sm:$0xff]
  %5821 = vmatprep.subr.mxu0 0.0
  %5822 = vmatpush1.msra.mxu0 %v5805
  %5823 = vmatprep.subr.mxu0 0.0
  %5824 = vmatpush1.msra.mxu0 %v5806
  %5825 = vmatprep.subr.mxu0 0.0
  %5826 = vmatpush1.msra.mxu0 %v5807
  %5827 = vmatprep.subr.mxu0 0.0
  %5828 = vmatpush1.msra.mxu0 %v5808
  %5829 = vmatprep.subr.mxu0 0.0
  %5830 = vmatpush1.msra.mxu0 %v5809
  %5831 = vmatprep.subr.mxu0 0.0
  %5832 = vmatpush1.msra.mxu0 %v5810
  %5833 = vmatprep.subr.mxu0 0.0
  %5834 = vmatpush1.msra.mxu0 %v5811
  %5835 = vmatprep.subr.mxu0 0.0
  %5836 = vmatpush1.msra.mxu0 %v5812
  %5837 = vmatprep.subr.mxu0 0.0
  %5838 = vmatpush1.msra.mxu0 %v5813
  %5839 = vmatprep.subr.mxu0 0.0
  %5840 = vmatpush1.msra.mxu0 %v5814
  %5841 = vmatprep.subr.mxu0 0.0
  %5842 = vmatpush1.msra.mxu0 %v5815
  %5843 = vmatprep.subr.mxu0 0.0
  %5844 = vmatpush1.msra.mxu0 %v5816
  %5845 = vmatprep.subr.mxu0 0.0
  %5846 = vmatpush1.msra.mxu0 %v5817
  %5847 = vmatprep.subr.mxu0 0.0
  %5848 = vmatpush1.msra.mxu0 %v5818
  %5849 = vmatprep.subr.mxu0 0.0
  %5850 = vmatpush1.msra.mxu0 %v5819
  %5851 = vmatprep.subr.mxu0 0.0
  %5852 = vmatpush1.msra.mxu0 %v5820
  %5853 = vmatprep.subr.mxu0 0.0
  %5854 = vmatpush1.msra.mxu0 0.0
  %5855 = vmatprep.subr.mxu0 0.0
  %5856 = vmatpush1.msra.mxu0 0.0
  %5857 = vmatprep.subr.mxu0 0.0
  %5858 = vmatpush1.msra.mxu0 0.0
  %5859 = vmatprep.subr.mxu0 0.0
  %5860 = vmatpush1.msra.mxu0 0.0
  %5861 = vmatprep.subr.mxu0 0.0
  %5862 = vmatpush1.msra.mxu0 0.0
  %5863 = vmatprep.subr.mxu0 0.0
  %5864 = vmatpush1.msra.mxu0 0.0
  %5865 = vmatprep.subr.mxu0 0.0
  %5866 = vmatpush1.msra.mxu0 0.0
  %5867 = vmatprep.subr.mxu0 0.0
  %5868 = vmatpush1.msra.mxu0 0.0
  %5869 = vmatprep.subr.mxu0 0.0
  %5870 = vmatpush1.msra.mxu0 0.0
  %5871 = vmatprep.subr.mxu0 0.0
  %5872 = vmatpush1.msra.mxu0 0.0
  %5873 = vmatprep.subr.mxu0 0.0
  %5874 = vmatpush1.msra.mxu0 0.0
  %5875 = vmatprep.subr.mxu0 0.0
  %5876 = vmatpush1.msra.mxu0 0.0
  %5877 = vmatprep.subr.mxu0 0.0
  %5878 = vmatpush1.msra.mxu0 0.0
  %5879 = vmatprep.subr.mxu0 0.0
  %5880 = vmatpush1.msra.mxu0 0.0
  %5881 = vmatprep.subr.mxu0 0.0
  %5882 = vmatpush1.msra.mxu0 0.0
  %5883 = vmatprep.subr.mxu0 0.0
  %5884 = vmatpush1.msra.mxu0 0.0
  %5885 = vmatprep.mubr.f32.mxu0 0.0
  %5886 = vmatmul.mubr.f32.gmra.mrb[0].mxu0 %v5803
  %v5887 = vpop.f32.mrb[0].mxu0
  %v5888 = vadd.f32 0.0, %v5887
  %v5889 = vpop.f32.mrb[0].mxu0
  %5890 = vdwg.mxu0
  %v5891 = vadd.f32 %v5794, %v5888
  %v5892 = vld [vmem:[#allocation3 + $0x3b0] sm:$0xff]
  %v5893 = vld [vmem:[#allocation3 + $0x3b8] sm:$0xff]
  %v5894 = vld [vmem:[#allocation3 + $0x420] sm:$0xff]
  %v5895 = vld [vmem:[#allocation3 + $0x428] sm:$0xff]
  %v5896 = vmax.f32 %v5892, %v5893
  %v5897 = vmax.f32 %v5894, %v5895
  %v5898 = vmax.f32 %v5896, %v5897
  %v5899 = vadd.f32 %v5898, %v3669
  %v5900 = vmax.f32 %v5899, 0.0
  %s5901 = scalar_lea.vmem %s5, 2944
  %v5902 = vld [vmem:[%s5901] sm:$0xff]
  %v5903 = vld [vmem:[%s5901 + $0x8] sm:$0xff]
  %v5904 = vld [vmem:[%s5901 + $0x10] sm:$0xff]
  %v5905 = vld [vmem:[%s5901 + $0x18] sm:$0xff]
  %v5906 = vld [vmem:[%s5901 + $0x20] sm:$0xff]
  %v5907 = vld [vmem:[%s5901 + $0x28] sm:$0xff]
  %v5908 = vld [vmem:[%s5901 + $0x30] sm:$0xff]
  %v5909 = vld [vmem:[%s5901 + $0x38] sm:$0xff]
  %v5910 = vld [vmem:[%s5901 + $0x40] sm:$0xff]
  %v5911 = vld [vmem:[%s5901 + $0x48] sm:$0xff]
  %v5912 = vld [vmem:[%s5901 + $0x50] sm:$0xff]
  %v5913 = vld [vmem:[%s5901 + $0x58] sm:$0xff]
  %v5914 = vld [vmem:[%s5901 + $0x60] sm:$0xff]
  %v5915 = vld [vmem:[%s5901 + $0x68] sm:$0xff]
  %v5916 = vld [vmem:[%s5901 + $0x70] sm:$0xff]
  %v5917 = vld [vmem:[%s5901 + $0x78] sm:$0xff]
  %5918 = vmatprep.subr.mxu0 0.0
  %5919 = vmatpush1.msra.mxu0 %v5902
  %5920 = vmatprep.subr.mxu0 0.0
  %5921 = vmatpush1.msra.mxu0 %v5903
  %5922 = vmatprep.subr.mxu0 0.0
  %5923 = vmatpush1.msra.mxu0 %v5904
  %5924 = vmatprep.subr.mxu0 0.0
  %5925 = vmatpush1.msra.mxu0 %v5905
  %5926 = vmatprep.subr.mxu0 0.0
  %5927 = vmatpush1.msra.mxu0 %v5906
  %5928 = vmatprep.subr.mxu0 0.0
  %5929 = vmatpush1.msra.mxu0 %v5907
  %5930 = vmatprep.subr.mxu0 0.0
  %5931 = vmatpush1.msra.mxu0 %v5908
  %5932 = vmatprep.subr.mxu0 0.0
  %5933 = vmatpush1.msra.mxu0 %v5909
  %5934 = vmatprep.subr.mxu0 0.0
  %5935 = vmatpush1.msra.mxu0 %v5910
  %5936 = vmatprep.subr.mxu0 0.0
  %5937 = vmatpush1.msra.mxu0 %v5911
  %5938 = vmatprep.subr.mxu0 0.0
  %5939 = vmatpush1.msra.mxu0 %v5912
  %5940 = vmatprep.subr.mxu0 0.0
  %5941 = vmatpush1.msra.mxu0 %v5913
  %5942 = vmatprep.subr.mxu0 0.0
  %5943 = vmatpush1.msra.mxu0 %v5914
  %5944 = vmatprep.subr.mxu0 0.0
  %5945 = vmatpush1.msra.mxu0 %v5915
  %5946 = vmatprep.subr.mxu0 0.0
  %5947 = vmatpush1.msra.mxu0 %v5916
  %5948 = vmatprep.subr.mxu0 0.0
  %5949 = vmatpush1.msra.mxu0 %v5917
  %5950 = vmatprep.subr.mxu0 0.0
  %5951 = vmatpush1.msra.mxu0 0.0
  %5952 = vmatprep.subr.mxu0 0.0
  %5953 = vmatpush1.msra.mxu0 0.0
  %5954 = vmatprep.subr.mxu0 0.0
  %5955 = vmatpush1.msra.mxu0 0.0
  %5956 = vmatprep.subr.mxu0 0.0
  %5957 = vmatpush1.msra.mxu0 0.0
  %5958 = vmatprep.subr.mxu0 0.0
  %5959 = vmatpush1.msra.mxu0 0.0
  %5960 = vmatprep.subr.mxu0 0.0
  %5961 = vmatpush1.msra.mxu0 0.0
  %5962 = vmatprep.subr.mxu0 0.0
  %5963 = vmatpush1.msra.mxu0 0.0
  %5964 = vmatprep.subr.mxu0 0.0
  %5965 = vmatpush1.msra.mxu0 0.0
  %5966 = vmatprep.subr.mxu0 0.0
  %5967 = vmatpush1.msra.mxu0 0.0
  %5968 = vmatprep.subr.mxu0 0.0
  %5969 = vmatpush1.msra.mxu0 0.0
  %5970 = vmatprep.subr.mxu0 0.0
  %5971 = vmatpush1.msra.mxu0 0.0
  %5972 = vmatprep.subr.mxu0 0.0
  %5973 = vmatpush1.msra.mxu0 0.0
  %5974 = vmatprep.subr.mxu0 0.0
  %5975 = vmatpush1.msra.mxu0 0.0
  %5976 = vmatprep.subr.mxu0 0.0
  %5977 = vmatpush1.msra.mxu0 0.0
  %5978 = vmatprep.subr.mxu0 0.0
  %5979 = vmatpush1.msra.mxu0 0.0
  %5980 = vmatprep.subr.mxu0 0.0
  %5981 = vmatpush1.msra.mxu0 0.0
  %5982 = vmatprep.mubr.f32.mxu0 0.0
  %5983 = vmatmul.mubr.f32.gmra.mrb[0].mxu0 %v5900
  %v5984 = vpop.f32.mrb[0].mxu0
  %v5985 = vadd.f32 0.0, %v5984
  %v5986 = vpop.f32.mrb[0].mxu0
  %5987 = vdwg.mxu0
  %v5988 = vadd.f32 %v5891, %v5985
  %v5989 = vld [vmem:[#allocation3 + $0x3c0] sm:$0xff]
  %v5990 = vld [vmem:[#allocation3 + $0x3c8] sm:$0xff]
  %v5991 = vld [vmem:[#allocation3 + $0x430] sm:$0xff]
  %v5992 = vld [vmem:[#allocation3 + $0x438] sm:$0xff]
  %v5993 = vmax.f32 %v5989, %v5990
  %v5994 = vmax.f32 %v5991, %v5992
  %v5995 = vmax.f32 %v5993, %v5994
  %v5996 = vadd.f32 %v5995, %v3669
  %v5997 = vmax.f32 %v5996, 0.0
  %s5998 = scalar_lea.vmem %s5, 3072
  %v5999 = vld [vmem:[%s5998] sm:$0xff]
  %v6000 = vld [vmem:[%s5998 + $0x8] sm:$0xff]
  %v6001 = vld [vmem:[%s5998 + $0x10] sm:$0xff]
  %v6002 = vld [vmem:[%s5998 + $0x18] sm:$0xff]
  %v6003 = vld [vmem:[%s5998 + $0x20] sm:$0xff]
  %v6004 = vld [vmem:[%s5998 + $0x28] sm:$0xff]
  %v6005 = vld [vmem:[%s5998 + $0x30] sm:$0xff]
  %v6006 = vld [vmem:[%s5998 + $0x38] sm:$0xff]
  %v6007 = vld [vmem:[%s5998 + $0x40] sm:$0xff]
  %v6008 = vld [vmem:[%s5998 + $0x48] sm:$0xff]
  %v6009 = vld [vmem:[%s5998 + $0x50] sm:$0xff]
  %v6010 = vld [vmem:[%s5998 + $0x58] sm:$0xff]
  %v6011 = vld [vmem:[%s5998 + $0x60] sm:$0xff]
  %v6012 = vld [vmem:[%s5998 + $0x68] sm:$0xff]
  %v6013 = vld [vmem:[%s5998 + $0x70] sm:$0xff]
  %v6014 = vld [vmem:[%s5998 + $0x78] sm:$0xff]
  %6015 = vmatprep.subr.mxu0 0.0
  %6016 = vmatpush1.msra.mxu0 %v5999
  %6017 = vmatprep.subr.mxu0 0.0
  %6018 = vmatpush1.msra.mxu0 %v6000
  %6019 = vmatprep.subr.mxu0 0.0
  %6020 = vmatpush1.msra.mxu0 %v6001
  %6021 = vmatprep.subr.mxu0 0.0
  %6022 = vmatpush1.msra.mxu0 %v6002
  %6023 = vmatprep.subr.mxu0 0.0
  %6024 = vmatpush1.msra.mxu0 %v6003
  %6025 = vmatprep.subr.mxu0 0.0
  %6026 = vmatpush1.msra.mxu0 %v6004
  %6027 = vmatprep.subr.mxu0 0.0
  %6028 = vmatpush1.msra.mxu0 %v6005
  %6029 = vmatprep.subr.mxu0 0.0
  %6030 = vmatpush1.msra.mxu0 %v6006
  %6031 = vmatprep.subr.mxu0 0.0
  %6032 = vmatpush1.msra.mxu0 %v6007
  %6033 = vmatprep.subr.mxu0 0.0
  %6034 = vmatpush1.msra.mxu0 %v6008
  %6035 = vmatprep.subr.mxu0 0.0
  %6036 = vmatpush1.msra.mxu0 %v6009
  %6037 = vmatprep.subr.mxu0 0.0
  %6038 = vmatpush1.msra.mxu0 %v6010
  %6039 = vmatprep.subr.mxu0 0.0
  %6040 = vmatpush1.msra.mxu0 %v6011
  %6041 = vmatprep.subr.mxu0 0.0
  %6042 = vmatpush1.msra.mxu0 %v6012
  %6043 = vmatprep.subr.mxu0 0.0
  %6044 = vmatpush1.msra.mxu0 %v6013
  %6045 = vmatprep.subr.mxu0 0.0
  %6046 = vmatpush1.msra.mxu0 %v6014
  %6047 = vmatprep.subr.mxu0 0.0
  %6048 = vmatpush1.msra.mxu0 0.0
  %6049 = vmatprep.subr.mxu0 0.0
  %6050 = vmatpush1.msra.mxu0 0.0
  %6051 = vmatprep.subr.mxu0 0.0
  %6052 = vmatpush1.msra.mxu0 0.0
  %6053 = vmatprep.subr.mxu0 0.0
  %6054 = vmatpush1.msra.mxu0 0.0
  %6055 = vmatprep.subr.mxu0 0.0
  %6056 = vmatpush1.msra.mxu0 0.0
  %6057 = vmatprep.subr.mxu0 0.0
  %6058 = vmatpush1.msra.mxu0 0.0
  %6059 = vmatprep.subr.mxu0 0.0
  %6060 = vmatpush1.msra.mxu0 0.0
  %6061 = vmatprep.subr.mxu0 0.0
  %6062 = vmatpush1.msra.mxu0 0.0
  %6063 = vmatprep.subr.mxu0 0.0
  %6064 = vmatpush1.msra.mxu0 0.0
  %6065 = vmatprep.subr.mxu0 0.0
  %6066 = vmatpush1.msra.mxu0 0.0
  %6067 = vmatprep.subr.mxu0 0.0
  %6068 = vmatpush1.msra.mxu0 0.0
  %6069 = vmatprep.subr.mxu0 0.0
  %6070 = vmatpush1.msra.mxu0 0.0
  %6071 = vmatprep.subr.mxu0 0.0
  %6072 = vmatpush1.msra.mxu0 0.0
  %6073 = vmatprep.subr.mxu0 0.0
  %6074 = vmatpush1.msra.mxu0 0.0
  %6075 = vmatprep.subr.mxu0 0.0
  %6076 = vmatpush1.msra.mxu0 0.0
  %6077 = vmatprep.subr.mxu0 0.0
  %6078 = vmatpush1.msra.mxu0 0.0
  %6079 = vmatprep.mubr.f32.mxu0 0.0
  %6080 = vmatmul.mubr.f32.gmra.mrb[0].mxu0 %v5997
  %v6081 = vpop.f32.mrb[0].mxu0
  %v6082 = vadd.f32 0.0, %v6081
  %v6083 = vpop.f32.mrb[0].mxu0
  %6084 = vdwg.mxu0
  %v6085 = vadd.f32 %v5988, %v6082
  %v6086 = vld [vmem:[%s6] sm:$0x1]
  %v6088 = vlaneseq
  %v6089 = vshrl.u32 %v6088, 7
  %v6090 = vsub.s32 0, %v6089
  %v6091 = vrot.slane %v6086, %v6090
  %v6093 = vadd.f32 %v6085, %v6091
  %v6094 = vmax.f32 %v6093, 0.0
  %v6095 = vld [vmem:[%s7] sm:$0xff]
  %v6096 = vld [vmem:[%s7 + $0x8] sm:$0xff]
  %v6097 = vld [vmem:[%s7 + $0x10] sm:$0xff]
  %v6098 = vld [vmem:[%s7 + $0x18] sm:$0xff]
  %v6099 = vld [vmem:[%s7 + $0x20] sm:$0xff]
  %v6100 = vld [vmem:[%s7 + $0x28] sm:$0xff]
  %v6101 = vld [vmem:[%s7 + $0x30] sm:$0xff]
  %v6102 = vld [vmem:[%s7 + $0x38] sm:$0xff]
  %v6103 = vld [vmem:[%s7 + $0x40] sm:$0xff]
  %v6104 = vld [vmem:[%s7 + $0x48] sm:$0xff]
  %v6105 = vld [vmem:[%s7 + $0x50] sm:$0xff]
  %v6106 = vld [vmem:[%s7 + $0x58] sm:$0xff]
  %v6107 = vld [vmem:[%s7 + $0x60] sm:$0xff]
  %v6108 = vld [vmem:[%s7 + $0x68] sm:$0xff]
  %v6109 = vld [vmem:[%s7 + $0x70] sm:$0xff]
  %v6110 = vld [vmem:[%s7 + $0x78] sm:$0xff]
  %v6111 = vld [vmem:[%s8] sm:$0x1]
  %v6113 = vlaneseq
  %v6114 = vshrl.u32 %v6113, 7
  %v6115 = vsub.s32 0, %v6114
  %v6116 = vrot.slane %v6111, %v6115
  %6118 = vmatprep.subr.mxu0 0.0
  %6119 = vmatpush1.msra.mxu0 %v6095
  %6120 = vmatprep.subr.mxu0 0.0
  %6121 = vmatpush1.msra.mxu0 %v6096
  %6122 = vmatprep.subr.mxu0 0.0
  %6123 = vmatpush1.msra.mxu0 %v6097
  %6124 = vmatprep.subr.mxu0 0.0
  %6125 = vmatpush1.msra.mxu0 %v6098
  %6126 = vmatprep.subr.mxu0 0.0
  %6127 = vmatpush1.msra.mxu0 %v6099
  %6128 = vmatprep.subr.mxu0 0.0
  %6129 = vmatpush1.msra.mxu0 %v6100
  %6130 = vmatprep.subr.mxu0 0.0
  %6131 = vmatpush1.msra.mxu0 %v6101
  %6132 = vmatprep.subr.mxu0 0.0
  %6133 = vmatpush1.msra.mxu0 %v6102
  %6134 = vmatprep.subr.mxu0 0.0
  %6135 = vmatpush1.msra.mxu0 %v6103
  %6136 = vmatprep.subr.mxu0 0.0
  %6137 = vmatpush1.msra.mxu0 %v6104
  %6138 = vmatprep.subr.mxu0 0.0
  %6139 = vmatpush1.msra.mxu0 %v6105
  %6140 = vmatprep.subr.mxu0 0.0
  %6141 = vmatpush1.msra.mxu0 %v6106
  %6142 = vmatprep.subr.mxu0 0.0
  %6143 = vmatpush1.msra.mxu0 %v6107
  %6144 = vmatprep.subr.mxu0 0.0
  %6145 = vmatpush1.msra.mxu0 %v6108
  %6146 = vmatprep.subr.mxu0 0.0
  %6147 = vmatpush1.msra.mxu0 %v6109
  %6148 = vmatprep.subr.mxu0 0.0
  %6149 = vmatpush1.msra.mxu0 %v6110
  %6150 = vmatprep.subr.mxu0 0.0
  %6151 = vmatpush1.msra.mxu0 0.0
  %6152 = vmatprep.subr.mxu0 0.0
  %6153 = vmatpush1.msra.mxu0 0.0
  %6154 = vmatprep.subr.mxu0 0.0
  %6155 = vmatpush1.msra.mxu0 0.0
  %6156 = vmatprep.subr.mxu0 0.0
  %6157 = vmatpush1.msra.mxu0 0.0
  %6158 = vmatprep.subr.mxu0 0.0
  %6159 = vmatpush1.msra.mxu0 0.0
  %6160 = vmatprep.subr.mxu0 0.0
  %6161 = vmatpush1.msra.mxu0 0.0
  %6162 = vmatprep.subr.mxu0 0.0
  %6163 = vmatpush1.msra.mxu0 0.0
  %6164 = vmatprep.subr.mxu0 0.0
  %6165 = vmatpush1.msra.mxu0 0.0
  %6166 = vmatprep.subr.mxu0 0.0
  %6167 = vmatpush1.msra.mxu0 0.0
  %6168 = vmatprep.subr.mxu0 0.0
  %6169 = vmatpush1.msra.mxu0 0.0
  %6170 = vmatprep.subr.mxu0 0.0
  %6171 = vmatpush1.msra.mxu0 0.0
  %6172 = vmatprep.subr.mxu0 0.0
  %6173 = vmatpush1.msra.mxu0 0.0
  %6174 = vmatprep.subr.mxu0 0.0
  %6175 = vmatpush1.msra.mxu0 0.0
  %6176 = vmatprep.subr.mxu0 0.0
  %6177 = vmatpush1.msra.mxu0 0.0
  %6178 = vmatprep.subr.mxu0 0.0
  %6179 = vmatpush1.msra.mxu0 0.0
  %6180 = vmatprep.subr.mxu0 0.0
  %6181 = vmatpush1.msra.mxu0 0.0
  %6182 = vmatprep.mubr.f32.mxu0 0.0
  %6183 = vmatmul.mubr.f32.gmra.mrb[0].mxu0 %v6094
  %v6184 = vpop.f32.mrb[0].mxu0
  %v6185 = vadd.f32 %v6116, %v6184
  %v6186 = vpop.f32.mrb[0].mxu0
  %6187 = vdwg.mxu0
  %v6188 = vmax.f32 %v6185, 0.0
  %v6189 = vld [vmem:[%s9] sm:$0xff]
  %v6190 = vld [vmem:[%s9 + $0x8] sm:$0xff]
  %v6191 = vld [vmem:[%s9 + $0x10] sm:$0xff]
  %v6192 = vld [vmem:[%s9 + $0x18] sm:$0xff]
  %v6193 = vld [vmem:[%s9 + $0x20] sm:$0xff]
  %v6194 = vld [vmem:[%s9 + $0x28] sm:$0xff]
  %v6195 = vld [vmem:[%s9 + $0x30] sm:$0xff]
  %v6196 = vld [vmem:[%s9 + $0x38] sm:$0xff]
  %v6197 = vld [vmem:[%s9 + $0x40] sm:$0xff]
  %v6198 = vld [vmem:[%s9 + $0x48] sm:$0xff]
  %v6199 = vld [vmem:[%s9 + $0x50] sm:$0xff]
  %v6200 = vld [vmem:[%s9 + $0x58] sm:$0xff]
  %v6201 = vld [vmem:[%s9 + $0x60] sm:$0xff]
  %v6202 = vld [vmem:[%s9 + $0x68] sm:$0xff]
  %v6203 = vld [vmem:[%s9 + $0x70] sm:$0xff]
  %v6204 = vld [vmem:[%s9 + $0x78] sm:$0xff]
  %v6205 = vld [vmem:[%s10] sm:$0x1]
  %v6207 = vlaneseq
  %v6208 = vshrl.u32 %v6207, 7
  %v6209 = vsub.s32 0, %v6208
  %v6210 = vrot.slane %v6205, %v6209
  %6212 = vmatprep.subr.mxu0 0.0
  %6213 = vmatpush1.msra.mxu0 %v6189
  %6214 = vmatprep.subr.mxu0 0.0
  %6215 = vmatpush1.msra.mxu0 %v6190
  %6216 = vmatprep.subr.mxu0 0.0
  %6217 = vmatpush1.msra.mxu0 %v6191
  %6218 = vmatprep.subr.mxu0 0.0
  %6219 = vmatpush1.msra.mxu0 %v6192
  %6220 = vmatprep.subr.mxu0 0.0
  %6221 = vmatpush1.msra.mxu0 %v6193
  %6222 = vmatprep.subr.mxu0 0.0
  %6223 = vmatpush1.msra.mxu0 %v6194
  %6224 = vmatprep.subr.mxu0 0.0
  %6225 = vmatpush1.msra.mxu0 %v6195
  %6226 = vmatprep.subr.mxu0 0.0
  %6227 = vmatpush1.msra.mxu0 %v6196
  %6228 = vmatprep.subr.mxu0 0.0
  %6229 = vmatpush1.msra.mxu0 %v6197
  %6230 = vmatprep.subr.mxu0 0.0
  %6231 = vmatpush1.msra.mxu0 %v6198
  %6232 = vmatprep.subr.mxu0 0.0
  %6233 = vmatpush1.msra.mxu0 %v6199
  %6234 = vmatprep.subr.mxu0 0.0
  %6235 = vmatpush1.msra.mxu0 %v6200
  %6236 = vmatprep.subr.mxu0 0.0
  %6237 = vmatpush1.msra.mxu0 %v6201
  %6238 = vmatprep.subr.mxu0 0.0
  %6239 = vmatpush1.msra.mxu0 %v6202
  %6240 = vmatprep.subr.mxu0 0.0
  %6241 = vmatpush1.msra.mxu0 %v6203
  %6242 = vmatprep.subr.mxu0 0.0
  %6243 = vmatpush1.msra.mxu0 %v6204
  %6244 = vmatprep.subr.mxu0 0.0
  %6245 = vmatpush1.msra.mxu0 0.0
  %6246 = vmatprep.subr.mxu0 0.0
  %6247 = vmatpush1.msra.mxu0 0.0
  %6248 = vmatprep.subr.mxu0 0.0
  %6249 = vmatpush1.msra.mxu0 0.0
  %6250 = vmatprep.subr.mxu0 0.0
  %6251 = vmatpush1.msra.mxu0 0.0
  %6252 = vmatprep.subr.mxu0 0.0
  %6253 = vmatpush1.msra.mxu0 0.0
  %6254 = vmatprep.subr.mxu0 0.0
  %6255 = vmatpush1.msra.mxu0 0.0
  %6256 = vmatprep.subr.mxu0 0.0
  %6257 = vmatpush1.msra.mxu0 0.0
  %6258 = vmatprep.subr.mxu0 0.0
  %6259 = vmatpush1.msra.mxu0 0.0
  %6260 = vmatprep.subr.mxu0 0.0
  %6261 = vmatpush1.msra.mxu0 0.0
  %6262 = vmatprep.subr.mxu0 0.0
  %6263 = vmatpush1.msra.mxu0 0.0
  %6264 = vmatprep.subr.mxu0 0.0
  %6265 = vmatpush1.msra.mxu0 0.0
  %6266 = vmatprep.subr.mxu0 0.0
  %6267 = vmatpush1.msra.mxu0 0.0
  %6268 = vmatprep.subr.mxu0 0.0
  %6269 = vmatpush1.msra.mxu0 0.0
  %6270 = vmatprep.subr.mxu0 0.0
  %6271 = vmatpush1.msra.mxu0 0.0
  %6272 = vmatprep.subr.mxu0 0.0
  %6273 = vmatpush1.msra.mxu0 0.0
  %6274 = vmatprep.subr.mxu0 0.0
  %6275 = vmatpush1.msra.mxu0 0.0
  %6276 = vmatprep.mubr.f32.mxu0 0.0
  %6277 = vmatmul.mubr.f32.gmra.mrb[0].mxu0 %v6188
  %v6278 = vpop.f32.mrb[0].mxu0
  %v6279 = vadd.f32 %v6210, %v6278
  %v6280 = vpop.f32.mrb[0].mxu0
  %6281 = vdwg.mxu0
  %6282 = vst [vmem:[%s11] sm:$0xff] %v6279
  // Predicated region
  $region60: #{net_forward.1} parent=0 // pred_check
    _
  $region61: #{net_forward.1} parent=0 // pred_check_branch
    %6284 = sbr.rel (0) target = $region63
  $region62: #{net_forward.1} parent=0 // pred_region
    _
  $region63: #{net_forward.1} parent=0 // pred_fallthru
    _
  // Predicated region
  $region64: #{net_forward.1} parent=0 // pred_check
    _
  $region65: #{net_forward.1} parent=0 // pred_check_branch
    %6286 = sbr.rel (0) target = $region67
  $region66: #{net_forward.1} parent=0 // pred_region
    _
  $region67: #{net_forward.1} parent=0 // pred_fallthru
    _

</llo_original>
